<compile_context>
chip_gen: v7x
topology: tpu7x:2x2x1
jax: 0.10.0
libtpu: 0.0.40
codegen_flags: <defaults>
</compile_context>

<pallas_src>
import functools
import math

import jax
import jax.numpy as jnp
from jax import lax
from jax.experimental import pallas as pl
from jax.experimental.pallas import tpu as pltpu

LN_EPS = 1e-5          # torch.nn.LayerNorm default
LANE = 128
NEG_INF = -1e30
VMEM_LIMIT = 32 * 1024 * 1024   # safe on v5e (16 MiB scoped default) and v7x


def _round_up(x, m):
    return (x + m - 1) // m * m


def _row_tiling(n, max_tile):
    """Row tile: multiple of 8, <= max_tile, and when possible sized so the
    grid has >= 2 steps (lets the "parallel" axis shard across v7x's 2 TCs)."""
    rows = min(max_tile, _round_up(max((n + 1) // 2, 1), 8))
    n_pad = _round_up(n, rows)
    return rows, n_pad


# --------------------------------------------------------------------------
# Kernel 1: fused one-hot embedding gather + scale + pos-encoding + LayerNorm
# --------------------------------------------------------------------------

def _embed_ln_kernel(x_ref, p_ref, emb_ref, pe_ref, g_ref, b_ref, out_ref,
                     *, scale):
    rows = out_ref.shape[0]
    vocab = emb_ref.shape[0]
    max_len = pe_ref.shape[0]

    # MXU one-hot gathers (bounds-safe: OOB id -> all-zero one-hot row).
    x_ids = x_ref[...]                                        # (rows, 1) int32
    p_ids = p_ref[...]                                        # (rows, 1) int32
    oh_x = (lax.broadcasted_iota(jnp.int32, (rows, vocab), 1) == x_ids
            ).astype(jnp.float32)
    oh_p = (lax.broadcasted_iota(jnp.int32, (rows, max_len), 1) == p_ids
            ).astype(jnp.float32)
    # HIGHEST keeps the gathered f32 table rows exact (one operand is 0/1).
    emb = jnp.dot(oh_x, emb_ref[...], preferred_element_type=jnp.float32,
                  precision=lax.Precision.HIGHEST)
    pe = jnp.dot(oh_p, pe_ref[...], preferred_element_type=jnp.float32,
                 precision=lax.Precision.HIGHEST)

    # tile-wide scale + PE add, then LayerNorm (biased variance, like torch).
    x = emb * scale + pe
    mean = jnp.mean(x, axis=-1, keepdims=True)
    xc = x - mean
    var = jnp.mean(xc * xc, axis=-1, keepdims=True)
    inv = lax.rsqrt(var + LN_EPS)
    out_ref[...] = xc * inv * g_ref[...] + b_ref[...]


def embed_pos_layernorm(x_ids, pos_ids, embed_tbl, pe_tbl, gamma, beta,
                        *, scale, row_tile=512):
    n = x_ids.shape[0]
    vocab, d = embed_tbl.shape
    max_len = pe_tbl.shape[0]

    rows, n_pad = _row_tiling(n, row_tile)
    x2 = x_ids.astype(jnp.int32).reshape(n, 1)
    p2 = pos_ids.astype(jnp.int32).reshape(n, 1)
    if n_pad != n:
        x2 = jnp.pad(x2, ((0, n_pad - n), (0, 0)))
        p2 = jnp.pad(p2, ((0, n_pad - n), (0, 0)))

    kernel = functools.partial(_embed_ln_kernel, scale=scale)
    h = pl.pallas_call(
        kernel,
        out_shape=jax.ShapeDtypeStruct((n_pad, d), jnp.float32),
        grid_spec=pltpu.PrefetchScalarGridSpec(
            num_scalar_prefetch=0,
            grid=(n_pad // rows,),
            in_specs=[
                pl.BlockSpec((rows, 1), lambda i: (i, 0)),      # token ids
                pl.BlockSpec((rows, 1), lambda i: (i, 0)),      # positions
                pl.BlockSpec((vocab, d), lambda i: (0, 0)),     # embed tbl (resident)
                pl.BlockSpec((max_len, d), lambda i: (0, 0)),   # PE tbl (resident)
                pl.BlockSpec((1, d), lambda i: (0, 0)),         # gamma
                pl.BlockSpec((1, d), lambda i: (0, 0)),         # beta
            ],
            out_specs=pl.BlockSpec((rows, d), lambda i: (i, 0)),
        ),
        compiler_params=pltpu.CompilerParams(
            dimension_semantics=("parallel",),
            vmem_limit_bytes=VMEM_LIMIT,
        ),
    )(x2, p2, embed_tbl, pe_tbl, gamma.reshape(1, d), beta.reshape(1, d))
    return h if n_pad == n else h[:n]


# --------------------------------------------------------------------------
# Kernel 2: fused readout pair one-hot gather + 2-layer generator + log_softmax
# --------------------------------------------------------------------------

def _readout_generator_kernel(a_ref, b_ref, h_ref, w1_ref, b1_ref,
                              w2_ref, b2_ref, out_ref, *, dim):
    rows = out_ref.shape[0]
    n_h = h_ref.shape[0]

    # MXU one-hot gather of the two readout nodes of each pair.
    node_iota = lax.broadcasted_iota(jnp.int32, (rows, n_h), 1)
    oh_a = (node_iota == a_ref[...]).astype(jnp.float32)
    oh_b = (node_iota == b_ref[...]).astype(jnp.float32)
    h = h_ref[...]
    ha = jnp.dot(oh_a, h, preferred_element_type=jnp.float32,
                 precision=lax.Precision.HIGHEST)
    hb = jnp.dot(oh_b, h, preferred_element_type=jnp.float32,
                 precision=lax.Precision.HIGHEST)

    # Linear(2D -> D) split into two DxD halves: ha @ W1[:D] + hb @ W1[D:] + b1
    # (never materializes a (rows, 2D) pair tensor straddling two lane tiles).
    # bf16 operands / f32 accumulation -> single MXU pass; bias stays f32.
    w1a = w1_ref[0:dim, :]
    w1b = w1_ref[dim:2 * dim, :]
    z1 = (jnp.dot(ha.astype(jnp.bfloat16), w1a, preferred_element_type=jnp.float32)
          + jnp.dot(hb.astype(jnp.bfloat16), w1b, preferred_element_type=jnp.float32)
          + b1_ref[...])
    z1 = jnp.maximum(z1, 0.0)

    # Linear(D -> C_pad); padded class lanes carry a -1e30 bias (kept in f32).
    logits = jnp.dot(z1.astype(jnp.bfloat16), w2_ref[...],
                     preferred_element_type=jnp.float32) + b2_ref[...]

    # stable log_softmax in f32 (padded lanes never win the max, exp -> 0)
    m = jnp.max(logits, axis=-1, keepdims=True)
    z = logits - m
    lse = jnp.log(jnp.sum(jnp.exp(z), axis=-1, keepdims=True))
    out_ref[...] = z - lse


def readout_generator(h, readout_ids, w1_t, b1, w2_t, b2, n_classes,
                      *, pair_tile=256):
    n_h, d = h.shape
    r = readout_ids.shape[0]
    assert r % 2 == 0, "readout nodes are consumed in pairs (view(-1, 2*dim))"
    n_pairs = r // 2

    # lane-dense class dim: pad weight cols with zeros, bias with -inf mask
    c_pad = _round_up(n_classes, LANE)
    if c_pad != n_classes:
        w2_t = jnp.pad(w2_t, ((0, 0), (0, c_pad - n_classes)))
        b2 = jnp.concatenate(
            [b2, jnp.full((c_pad - n_classes,), NEG_INF, jnp.float32)])

    rows, p_pad = _row_tiling(n_pairs, pair_tile)
    pairs = readout_ids.astype(jnp.int32).reshape(n_pairs, 2)
    if p_pad != n_pairs:
        pairs = jnp.pad(pairs, ((0, p_pad - n_pairs), (0, 0)))
    a_ids = pairs[:, 0:1]
    b_ids = pairs[:, 1:2]

    # one-time cast of the MLP weights to bf16 (single-pass MXU everywhere)
    w1_bf = w1_t.astype(jnp.bfloat16)
    w2_bf = w2_t.astype(jnp.bfloat16)

    kernel = functools.partial(_readout_generator_kernel, dim=d)
    out = pl.pallas_call(
        kernel,
        out_shape=jax.ShapeDtypeStruct((p_pad, c_pad), jnp.float32),
        grid_spec=pltpu.PrefetchScalarGridSpec(
            num_scalar_prefetch=0,
            grid=(p_pad // rows,),
            in_specs=[
                pl.BlockSpec((rows, 1), lambda i: (i, 0)),      # first node of pair
                pl.BlockSpec((rows, 1), lambda i: (i, 0)),      # second node of pair
                pl.BlockSpec((n_h, d), lambda i: (0, 0)),       # h (VMEM resident)
                pl.BlockSpec((2 * d, d), lambda i: (0, 0)),     # W1^T (bf16)
                pl.BlockSpec((1, d), lambda i: (0, 0)),         # b1 (f32)
                pl.BlockSpec((d, c_pad), lambda i: (0, 0)),     # W2^T (bf16, padded)
                pl.BlockSpec((1, c_pad), lambda i: (0, 0)),     # b2 (f32, padded)
            ],
            out_specs=pl.BlockSpec((rows, c_pad), lambda i: (i, 0)),
        ),
        compiler_params=pltpu.CompilerParams(
            dimension_semantics=("parallel",),
            vmem_limit_bytes=VMEM_LIMIT,
        ),
    )(a_ids, b_ids, h, w1_bf, b1.reshape(1, d), w2_bf, b2.reshape(1, c_pad))
    return out[:n_pairs, :n_classes]


# ------------------------------ model glue ---------------------------------

def sinusoidal_pos_encoding(max_len, dim):
    pos = jnp.arange(max_len, dtype=jnp.float32)[:, None]
    div = jnp.exp(jnp.arange(0, dim, 2, dtype=jnp.float32)
                  * (-math.log(10000.0) / dim))
    pe = jnp.zeros((max_len, dim), jnp.float32)
    pe = pe.at[:, 0::2].set(jnp.sin(pos * div))
    pe = pe.at[:, 1::2].set(jnp.cos(pos * div))
    return pe


def init_params(key, vocab_size, dim_embed, dim_model, n_classes, max_len):
    assert dim_embed == dim_model  # embed_to_hidden == nn.Identity in the module
    k = jax.random.split(key, 5)
    return {
        "dim_embed": dim_embed,
        "dim_model": dim_model,
        "n_classes": n_classes,
        "embed": jax.random.normal(k[0], (vocab_size, dim_embed), jnp.float32) * 0.02,
        "pos_enc": sinusoidal_pos_encoding(max_len, dim_embed),
        "ln_gamma": jnp.ones((dim_model,), jnp.float32),
        "ln_beta": jnp.zeros((dim_model,), jnp.float32),
        # generator: Linear(2D, D) -> ReLU -> Linear(D, C); weights stored transposed
        "gen_w1_t": jax.random.normal(k[1], (2 * dim_model, dim_model), jnp.float32)
                    * (1.0 / math.sqrt(2 * dim_model)),
        "gen_b1": jax.random.normal(k[2], (dim_model,), jnp.float32) * 0.01,
        "gen_w2_t": jax.random.normal(k[3], (dim_model, n_classes), jnp.float32)
                    * (1.0 / math.sqrt(dim_model)),
        "gen_b2": jax.random.normal(k[4], (n_classes,), jnp.float32) * 0.01,
    }


def forward(params, batch):
    # Embedding scales its lookup by sqrt(dim_embed) (transformer convention).
    scale = math.sqrt(params["dim_embed"])

    # leaf nodes: embed + pos_enc, emb_dropout (identity, eval), self.norm
    h = embed_pos_layernorm(
        batch["x"], batch["pos"],
        params["embed"], params["pos_enc"],
        params["ln_gamma"], params["ln_beta"],
        scale=scale)

    # TODO(synk): BPTBlock encoder layers and BPTMemBlock decoder layers are
    # sparse DGL graph / memory cross-attention over external CSR structures
    # (not part of the provided module source); treated as identity on h here.

    # readout pairs -> generator MLP -> log_softmax (cls_dropout identity, eval)
    return readout_generator(
        h, batch["readout_ids"],
        params["gen_w1_t"], params["gen_b1"],
        params["gen_w2_t"], params["gen_b2"],
        params["n_classes"])


# --------------------------- pure-JAX references -----------------------------

def _reference(params, batch, *, bf16_matmul):
    """bf16_matmul=True mirrors the kernel's precision choices exactly
    (bf16 operands / f32 accumulation in the MLP); False is the full-f32
    torch-faithful path used as a looser sanity check."""
    scale = math.sqrt(params["dim_embed"])
    h = params["embed"][batch["x"]] * scale + params["pos_enc"][batch["pos"]]
    mean = h.mean(-1, keepdims=True)
    var = ((h - mean) ** 2).mean(-1, keepdims=True)
    h = (h - mean) * lax.rsqrt(var + LN_EPS) * params["ln_gamma"] + params["ln_beta"]

    r = h[batch["readout_ids"]].reshape(-1, 2 * params["dim_model"])
    if bf16_matmul:
        z1 = jnp.dot(r.astype(jnp.bfloat16),
                     params["gen_w1_t"].astype(jnp.bfloat16),
                     preferred_element_type=jnp.float32) + params["gen_b1"]
        z1 = jnp.maximum(z1, 0.0)
        logits = jnp.dot(z1.astype(jnp.bfloat16),
                         params["gen_w2_t"].astype(jnp.bfloat16),
                         preferred_element_type=jnp.float32) + params["gen_b2"]
    else:
        z1 = jnp.maximum(
            jnp.dot(r, params["gen_w1_t"], precision=lax.Precision.HIGHEST)
            + params["gen_b1"], 0.0)
        logits = jnp.dot(z1, params["gen_w2_t"],
                         precision=lax.Precision.HIGHEST) + params["gen_b2"]
    return jax.nn.log_softmax(logits, axis=-1)


# --------------------------------- main -------------------------------------

if __name__ == "__main__":
    key = jax.random.PRNGKey(0)

    vocab_size = 64
    dim_embed = dim_model = 128   # lane-dense; embed_to_hidden == Identity
    n_classes = 40                # padded to 128 lanes inside the kernel
    max_len = 512
    n_leaves = 512                # row grid of 2 x 256 -> both v7x TCs busy
    n_readout = 16                # 8 generator rows (pairs)

    params = init_params(key, vocab_size, dim_embed, dim_model, n_classes, max_len)

    kb = jax.random.split(key, 3)
    batch = {
        "x": jax.random.randint(kb[0], (n_leaves,), 0, vocab_size, dtype=jnp.int32),
        "pos": (jnp.arange(n_leaves, dtype=jnp.int32) % max_len),
        "readout_ids": jax.random.permutation(kb[1], n_leaves)[:n_readout]
                       .astype(jnp.int32),
    }

    out = jax.block_until_ready(forward(params, batch))
    ref_matched = _reference(params, batch, bf16_matmul=True)
    ref_f32 = _reference(params, batch, bf16_matmul=False)

    assert out.shape == (n_readout // 2, n_classes), out.shape
    assert bool(jnp.all(jnp.isfinite(out))), "non-finite output"
    err_m = float(jnp.max(jnp.abs(out - ref_matched)))
    assert jnp.allclose(out, ref_matched, atol=2e-3, rtol=2e-3), \
        f"mismatch vs precision-matched reference: max err {err_m}"
    err_f = float(jnp.max(jnp.abs(out - ref_f32)))
    assert jnp.allclose(out, ref_f32, atol=5e-2, rtol=5e-2), \
        f"mismatch vs full-f32 reference: max err {err_f}"

    print("KERNEL_OK")
</pallas_src>

<mosaic_0001>
module attributes {stable_mosaic.version = 11 : i64} {
  func.func @_embed_ln_kernel(%arg0: i32, %arg1: memref<256x1xi32, #tpu.memory_space<vmem>>, %arg2: memref<256x1xi32, #tpu.memory_space<vmem>>, %arg3: memref<64x128xf32, #tpu.memory_space<vmem>>, %arg4: memref<512x128xf32, #tpu.memory_space<vmem>>, %arg5: memref<1x128xf32, #tpu.memory_space<vmem>>, %arg6: memref<1x128xf32, #tpu.memory_space<vmem>>, %arg7: memref<256x128xf32, #tpu.memory_space<vmem>>) attributes {dimension_semantics = [#tpu.dimension_semantics<parallel>], iteration_bounds = array<i64: 2>, scalar_prefetch = 0 : i64, scratch_operands = 0 : i64, tpu.core_type = #tpu.core_type<tc>, window_params = [{transform_indices = @transform_0, window_bounds = array<i64: 256, 1>}, {transform_indices = @transform_1, window_bounds = array<i64: 256, 1>}, {pipeline_mode = #tpu.pipeline_mode<synchronous>, transform_indices = @transform_2, window_bounds = array<i64: 64, 128>}, {pipeline_mode = #tpu.pipeline_mode<synchronous>, transform_indices = @transform_3, window_bounds = array<i64: 512, 128>}, {pipeline_mode = #tpu.pipeline_mode<synchronous>, transform_indices = @transform_4, window_bounds = array<i64: 1, 128>}, {pipeline_mode = #tpu.pipeline_mode<synchronous>, transform_indices = @transform_5, window_bounds = array<i64: 1, 128>}, {transform_indices = @transform_6, window_bounds = array<i64: 256, 128>}]} {
    %c0 = arith.constant 0 : index
    %c0_0 = arith.constant 0 : index
    %0 = vector.load %arg1[%c0, %c0_0] : memref<256x1xi32, #tpu.memory_space<vmem>>, vector<256x1xi32>
    %c0_1 = arith.constant 0 : index
    %c0_2 = arith.constant 0 : index
    %1 = vector.load %arg2[%c0_1, %c0_2] : memref<256x1xi32, #tpu.memory_space<vmem>>, vector<256x1xi32>
    %2 = tpu.iota {dimensions = array<i32: 1>} : vector<256x64xi32>
    %3 = vector.broadcast %0 : vector<256x1xi32> to vector<256x64xi32>
    %4 = arith.cmpi eq, %2, %3 : vector<256x64xi32>
    %5 = arith.extui %4 : vector<256x64xi1> to vector<256x64xi32>
    %6 = arith.sitofp %5 : vector<256x64xi32> to vector<256x64xf32>
    %7 = tpu.iota {dimensions = array<i32: 1>} : vector<256x512xi32>
    %8 = vector.broadcast %1 : vector<256x1xi32> to vector<256x512xi32>
    %9 = arith.cmpi eq, %7, %8 : vector<256x512xi32>
    %10 = arith.extui %9 : vector<256x512xi1> to vector<256x512xi32>
    %11 = arith.sitofp %10 : vector<256x512xi32> to vector<256x512xf32>
    %c0_3 = arith.constant 0 : index
    %c0_4 = arith.constant 0 : index
    %12 = vector.load %arg3[%c0_3, %c0_4] : memref<64x128xf32, #tpu.memory_space<vmem>>, vector<64x128xf32>
    %cst = arith.constant dense<0.000000e+00> : vector<256x128xf32>
    %13 = tpu.matmul %6, %12, %cst {dimension_numbers = #tpu.dot_dimension_numbers<[1], [0], [0], [1], [0, 0, 1, 1], [], []>, precision = #tpu.contract_precision<fp32>} : vector<256x64xf32>, vector<64x128xf32>, vector<256x128xf32> -> vector<256x128xf32>
    %c0_5 = arith.constant 0 : index
    %c0_6 = arith.constant 0 : index
    %14 = vector.load %arg4[%c0_5, %c0_6] : memref<512x128xf32, #tpu.memory_space<vmem>>, vector<512x128xf32>
    %cst_7 = arith.constant dense<0.000000e+00> : vector<256x128xf32>
    %15 = tpu.matmul %11, %14, %cst_7 {dimension_numbers = #tpu.dot_dimension_numbers<[1], [0], [0], [1], [0, 0, 1, 1], [], []>, precision = #tpu.contract_precision<fp32>} : vector<256x512xf32>, vector<512x128xf32>, vector<256x128xf32> -> vector<256x128xf32>
    %cst_8 = arith.constant 11.3137083 : f32
    %16 = vector.broadcast %cst_8 : f32 to vector<256x128xf32>
    %17 = arith.mulf %13, %16 : vector<256x128xf32>
    %18 = arith.addf %17, %15 : vector<256x128xf32>
    %cst_9 = arith.constant dense<0.000000e+00> : vector<256xf32>
    %19 = vector.multi_reduction <add>, %18, %cst_9 [1] : vector<256x128xf32> to vector<256xf32>
    %20 = vector.shape_cast %19 : vector<256xf32> to vector<256x1xf32>
    %cst_10 = arith.constant 1.280000e+02 : f32
    %21 = vector.broadcast %cst_10 : f32 to vector<256x1xf32>
    %22 = arith.divf %20, %21 : vector<256x1xf32>
    %23 = vector.broadcast %22 : vector<256x1xf32> to vector<256x128xf32>
    %24 = arith.subf %18, %23 : vector<256x128xf32>
    %25 = arith.mulf %24, %24 : vector<256x128xf32>
    %cst_11 = arith.constant dense<0.000000e+00> : vector<256xf32>
    %26 = vector.multi_reduction <add>, %25, %cst_11 [1] : vector<256x128xf32> to vector<256xf32>
    %27 = vector.shape_cast %26 : vector<256xf32> to vector<256x1xf32>
    %cst_12 = arith.constant 1.280000e+02 : f32
    %28 = vector.broadcast %cst_12 : f32 to vector<256x1xf32>
    %29 = arith.divf %27, %28 : vector<256x1xf32>
    %cst_13 = arith.constant 9.99999974E-6 : f32
    %30 = vector.broadcast %cst_13 : f32 to vector<256x1xf32>
    %31 = arith.addf %29, %30 : vector<256x1xf32>
    %32 = math.rsqrt %31 : vector<256x1xf32>
    %33 = vector.broadcast %32 : vector<256x1xf32> to vector<256x128xf32>
    %34 = arith.mulf %24, %33 : vector<256x128xf32>
    %c0_14 = arith.constant 0 : index
    %c0_15 = arith.constant 0 : index
    %35 = vector.load %arg5[%c0_14, %c0_15] : memref<1x128xf32, #tpu.memory_space<vmem>>, vector<1x128xf32>
    %36 = vector.broadcast %35 : vector<1x128xf32> to vector<256x128xf32>
    %37 = arith.mulf %34, %36 : vector<256x128xf32>
    %c0_16 = arith.constant 0 : index
    %c0_17 = arith.constant 0 : index
    %38 = vector.load %arg6[%c0_16, %c0_17] : memref<1x128xf32, #tpu.memory_space<vmem>>, vector<1x128xf32>
    %39 = vector.broadcast %38 : vector<1x128xf32> to vector<256x128xf32>
    %40 = arith.addf %37, %39 : vector<256x128xf32>
    %c0_18 = arith.constant 0 : index
    %c0_19 = arith.constant 0 : index
    %41 = vector.load %arg7[%c0_18, %c0_19] : memref<256x128xf32, #tpu.memory_space<vmem>>, vector<256x128xf32>
    tpu.vector_store %arg7[%c0_18, %c0_19], %40 {strides = array<i32>} : memref<256x128xf32, #tpu.memory_space<vmem>>, vector<256x128xf32>,
    return
  }
  func.func @transform_0(%arg0: i32) -> (i32, i32) {
    %c0_i32 = arith.constant 0 : i32
    %c0_i32_0 = arith.constant 0 : i32
    return %arg0, %c0_i32 : i32, i32
  }
  func.func @transform_1(%arg0: i32) -> (i32, i32) {
    %c0_i32 = arith.constant 0 : i32
    %c0_i32_0 = arith.constant 0 : i32
    return %arg0, %c0_i32 : i32, i32
  }
  func.func @transform_2(%arg0: i32) -> (i32, i32) {
    %c0_i32 = arith.constant 0 : i32
    %c0_i32_0 = arith.constant 0 : i32
    %c0_i32_1 = arith.constant 0 : i32
    return %c0_i32, %c0_i32_0 : i32, i32
  }
  func.func @transform_3(%arg0: i32) -> (i32, i32) {
    %c0_i32 = arith.constant 0 : i32
    %c0_i32_0 = arith.constant 0 : i32
    %c0_i32_1 = arith.constant 0 : i32
    return %c0_i32, %c0_i32_0 : i32, i32
  }
  func.func @transform_4(%arg0: i32) -> (i32, i32) {
    %c0_i32 = arith.constant 0 : i32
    %c0_i32_0 = arith.constant 0 : i32
    %c0_i32_1 = arith.constant 0 : i32
    return %c0_i32, %c0_i32_0 : i32, i32
  }
  func.func @transform_5(%arg0: i32) -> (i32, i32) {
    %c0_i32 = arith.constant 0 : i32
    %c0_i32_0 = arith.constant 0 : i32
    %c0_i32_1 = arith.constant 0 : i32
    return %c0_i32, %c0_i32_0 : i32, i32
  }
  func.func @transform_6(%arg0: i32) -> (i32, i32) {
    %c0_i32 = arith.constant 0 : i32
    %c0_i32_0 = arith.constant 0 : i32
    return %arg0, %c0_i32 : i32, i32
  }
}

</mosaic_0001>

<llo_original>
// kernel: tpu_custom_call.1
$region0: #{tpu_custom_call.1}
  #allocation0 [shape = 'u32[]', space=smem, size = 0x4, offset = 0x4, fixed_abs, tag = 'smem constant byte address 0x4 - core index']
  #allocation1 [shape = 'u32[144,128]{1,0:T(1,128)}', space=vmem, size = 0x12000, scoped, tag = 'internal scratch']
  %s0 = inlined_call_operand.vmem [shape: s32[512,1], index: 0, kind: input, shape index: {}]
  %s1 = inlined_call_operand.vmem [shape: s32[512,1], index: 1, kind: input, shape index: {}]
  %s2 = inlined_call_operand.vmem [shape: f32[64,128], index: 2, kind: input, shape index: {}]
  %s3 = inlined_call_operand.vmem [shape: f32[512,128], index: 3, kind: input, shape index: {}]
  %s4 = inlined_call_operand.vmem [shape: f32[1,128], index: 4, kind: input, shape index: {}]
  %s5 = inlined_call_operand.vmem [shape: f32[1,128], index: 5, kind: input, shape index: {}]
  %s6 = inlined_call_operand.hbm [shape: f32[512,128], index: 6, kind: output, shape index: {}]
  %s7 = sld [smem:[#allocation0]]
  $region57: #{tpu_custom_call.1} parent=0
    _
  %s9 = ssub.s32 1, %s7
  %s10 = scalar_select 0, %s9, %s7
  $region1: #{tpu_custom_call.1} parent=0
    #allocation2 [shape = 'u8[262144]{0}', space=vmem, size = 0x40000, scoped, tag = 'output window, operand 0']
    #allocation3 [shape = 's32[2]{0}', space=sflag, size = 0x8, scoped, tag = 'scoped memory for tpu_custom_call.1']
    %11 = vsyncpa [#allocation3], 0
    %s12 = scalar_lea.sflag [#allocation3], 1
    %13 = vsyncpa %s12, 0
    loop: start=0, step=1, limit=4
    $region2: #{tpu_custom_call.1} parent=1 // loop_pre_header
      _
    $region3: #{tpu_custom_call.1} parent=1 // loop_header
      %s15 = sphi 0, %s19
      %p16 = scmp.ge.s32.totalorder %s15, 4
      %s25 = sphi 0, %s27
      %s28 = sphi 0, %s25
      %s29 = sphi 0, %s28
      %s45 = sphi 0, %s29
      %s51 = sphi 0, %s53
      %s54 = sphi 0, %s51
      %s55 = sphi 0, %s54
      %s71 = sphi 0, %s55
      %s75 = sphi 0, %s75
      %s77 = sphi 0, %s75
      %s78 = sphi 0, %s77
      %s92 = sphi 0, %s78
      %s96 = sphi 0, %s96
      %s98 = sphi 0, %s96
      %s99 = sphi 0, %s98
      %s113 = sphi 0, %s99
      %s117 = sphi 0, %s117
      %s119 = sphi 0, %s117
      %s120 = sphi 0, %s119
      %s134 = sphi 0, %s120
      %s138 = sphi 0, %s138
      %s140 = sphi 0, %s138
      %s141 = sphi 0, %s140
      %s155 = sphi 0, %s141
      %s161 = sphi 0, %s163
      %s164 = sphi 0, %s161
      %s165 = sphi 0, %s164
      %s181 = sphi 0, %s165
    $region4: #{tpu_custom_call.1} parent=1 // loop_header_branch
      %18 = sbr.rel (%p16) target = $region8
    $region5: #{tpu_custom_call.1} parent=1 // loop_body
      %s20 = ssub.s32 %s15, 1
      %s21 = ssub.s32 %s15, 2
      %s22 = sadd.s32 %s15, 1
      %s23 = ssub.s32 %s15, %s22
      %p24 = scmp.eq.s32.totalorder %s23, 0
      %s26 = sadd.s32 %s25, 1
      %s27 = scalar_select %p24, %s25, %s26
      %p30 = pneg %p24
      %p31 = scmp.eq.s32.totalorder %s15, 1
      %p32 = por %p30, %p31
      %p33 = scmp.ne.s32.totalorder %s25, %s28
      %p34 = scmp.eq.s32.totalorder %s15, 0
      %p35 = por %p33, %p34
      %p36 = scmp.ne.s32.totalorder %s25, %s28
      %p37 = scmp.eq.s32.totalorder %s20, 1
      %p38 = por %p36, %p37
      %p39 = scmp.ne.s32.totalorder %s28, %s29
      %p40 = scmp.eq.s32.totalorder %s20, 0
      %p41 = por %p39, %p40
      %p42 = scmp.ne.s32.totalorder %s28, %s29
      %p43 = scmp.eq.s32.totalorder %s21, 1
      %p44 = por %p42, %p43
      %p46 = scmp.ne.s32.totalorder %s29, %s45
      %p47 = scmp.eq.s32.totalorder %s21, 0
      %p48 = por %p46, %p47
      %s49 = ssub.s32 %s15, %s22
      %p50 = scmp.eq.s32.totalorder %s49, 0
      %s52 = sadd.s32 %s51, 1
      %s53 = scalar_select %p50, %s51, %s52
      %p56 = pneg %p50
      %p57 = scmp.eq.s32.totalorder %s15, 1
      %p58 = por %p56, %p57
      %p59 = scmp.ne.s32.totalorder %s51, %s54
      %p60 = scmp.eq.s32.totalorder %s15, 0
      %p61 = por %p59, %p60
      %p62 = scmp.ne.s32.totalorder %s51, %s54
      %p63 = scmp.eq.s32.totalorder %s20, 1
      %p64 = por %p62, %p63
      %p65 = scmp.ne.s32.totalorder %s54, %s55
      %p66 = scmp.eq.s32.totalorder %s20, 0
      %p67 = por %p65, %p66
      %p68 = scmp.ne.s32.totalorder %s54, %s55
      %p69 = scmp.eq.s32.totalorder %s21, 1
      %p70 = por %p68, %p69
      %p72 = scmp.ne.s32.totalorder %s55, %s71
      %p73 = scmp.eq.s32.totalorder %s21, 0
      %p74 = por %p72, %p73
      %s76 = sadd.s32 %s75, 1
      %p79 = scmp.eq.s32.totalorder %s15, 1
      %p80 = scmp.ne.s32.totalorder %s75, %s77
      %p81 = scmp.eq.s32.totalorder %s15, 0
      %p82 = por %p80, %p81
      %p83 = scmp.ne.s32.totalorder %s75, %s77
      %p84 = scmp.eq.s32.totalorder %s20, 1
      %p85 = por %p83, %p84
      %p86 = scmp.ne.s32.totalorder %s77, %s78
      %p87 = scmp.eq.s32.totalorder %s20, 0
      %p88 = por %p86, %p87
      %p89 = scmp.ne.s32.totalorder %s77, %s78
      %p90 = scmp.eq.s32.totalorder %s21, 1
      %p91 = por %p89, %p90
      %p93 = scmp.ne.s32.totalorder %s78, %s92
      %p94 = scmp.eq.s32.totalorder %s21, 0
      %p95 = por %p93, %p94
      %s97 = sadd.s32 %s96, 1
      %p100 = scmp.eq.s32.totalorder %s15, 1
      %p101 = scmp.ne.s32.totalorder %s96, %s98
      %p102 = scmp.eq.s32.totalorder %s15, 0
      %p103 = por %p101, %p102
      %p104 = scmp.ne.s32.totalorder %s96, %s98
      %p105 = scmp.eq.s32.totalorder %s20, 1
      %p106 = por %p104, %p105
      %p107 = scmp.ne.s32.totalorder %s98, %s99
      %p108 = scmp.eq.s32.totalorder %s20, 0
      %p109 = por %p107, %p108
      %p110 = scmp.ne.s32.totalorder %s98, %s99
      %p111 = scmp.eq.s32.totalorder %s21, 1
      %p112 = por %p110, %p111
      %p114 = scmp.ne.s32.totalorder %s99, %s113
      %p115 = scmp.eq.s32.totalorder %s21, 0
      %p116 = por %p114, %p115
      %s118 = sadd.s32 %s117, 1
      %p121 = scmp.eq.s32.totalorder %s15, 1
      %p122 = scmp.ne.s32.totalorder %s117, %s119
      %p123 = scmp.eq.s32.totalorder %s15, 0
      %p124 = por %p122, %p123
      %p125 = scmp.ne.s32.totalorder %s117, %s119
      %p126 = scmp.eq.s32.totalorder %s20, 1
      %p127 = por %p125, %p126
      %p128 = scmp.ne.s32.totalorder %s119, %s120
      %p129 = scmp.eq.s32.totalorder %s20, 0
      %p130 = por %p128, %p129
      %p131 = scmp.ne.s32.totalorder %s119, %s120
      %p132 = scmp.eq.s32.totalorder %s21, 1
      %p133 = por %p131, %p132
      %p135 = scmp.ne.s32.totalorder %s120, %s134
      %p136 = scmp.eq.s32.totalorder %s21, 0
      %p137 = por %p135, %p136
      %s139 = sadd.s32 %s138, 1
      %p142 = scmp.eq.s32.totalorder %s15, 1
      %p143 = scmp.ne.s32.totalorder %s138, %s140
      %p144 = scmp.eq.s32.totalorder %s15, 0
      %p145 = por %p143, %p144
      %p146 = scmp.ne.s32.totalorder %s138, %s140
      %p147 = scmp.eq.s32.totalorder %s20, 1
      %p148 = por %p146, %p147
      %p149 = scmp.ne.s32.totalorder %s140, %s141
      %p150 = scmp.eq.s32.totalorder %s20, 0
      %p151 = por %p149, %p150
      %p152 = scmp.ne.s32.totalorder %s140, %s141
      %p153 = scmp.eq.s32.totalorder %s21, 1
      %p154 = por %p152, %p153
      %p156 = scmp.ne.s32.totalorder %s141, %s155
      %p157 = scmp.eq.s32.totalorder %s21, 0
      %p158 = por %p156, %p157
      %s159 = ssub.s32 %s15, %s22
      %p160 = scmp.eq.s32.totalorder %s159, 0
      %s162 = sadd.s32 %s161, 1
      %s163 = scalar_select %p160, %s161, %s162
      %p166 = pneg %p160
      %p167 = scmp.eq.s32.totalorder %s15, 1
      %p168 = por %p166, %p167
      %p169 = scmp.ne.s32.totalorder %s161, %s164
      %p170 = scmp.eq.s32.totalorder %s15, 0
      %p171 = por %p169, %p170
      %p172 = scmp.ne.s32.totalorder %s161, %s164
      %p173 = scmp.eq.s32.totalorder %s20, 1
      %p174 = por %p172, %p173
      %p175 = scmp.ne.s32.totalorder %s164, %s165
      %p176 = scmp.eq.s32.totalorder %s20, 0
      %p177 = por %p175, %p176
      %p178 = scmp.ne.s32.totalorder %s164, %s165
      %p179 = scmp.eq.s32.totalorder %s21, 1
      %p180 = por %p178, %p179
      %p182 = scmp.ne.s32.totalorder %s165, %s181
      %p183 = scmp.eq.s32.totalorder %s21, 0
      %p184 = por %p182, %p183
      %p185 = scmp.le.s32.totalorder 1, %s15
      %p186 = scmp.lt.s32.totalorder %s15, 3
      %p187 = pnand %p185, %p186
      %p188 = pneg %p187
      // Predicated region
      $region9: #{tpu_custom_call.1} parent=5 // pred_check
        _
      $region10: #{tpu_custom_call.1} parent=5 // pred_check_branch
        %190 = sbr.rel (%p187) target = $region12
      $region11: #{tpu_custom_call.1} parent=5 // pred_region
        %s191 = ssub.s32 %s15, 1
        // Predicated region
        $region13: #{tpu_custom_call.1} parent=11 // pred_check
          %p192 = pneg %p88
        $region14: #{tpu_custom_call.1} parent=11 // pred_check_branch
          %194 = sbr.rel (%p192) target = $region16
        $region15: #{tpu_custom_call.1} parent=11 // pred_region
          _
        $region16: #{tpu_custom_call.1} parent=11 // pred_fallthru
          _
        // Predicated region
        $region17: #{tpu_custom_call.1} parent=11 // pred_check
          %p195 = pneg %p109
        $region18: #{tpu_custom_call.1} parent=11 // pred_check_branch
          %197 = sbr.rel (%p195) target = $region20
        $region19: #{tpu_custom_call.1} parent=11 // pred_region
          _
        $region20: #{tpu_custom_call.1} parent=11 // pred_fallthru
          _
        // Predicated region
        $region21: #{tpu_custom_call.1} parent=11 // pred_check
          %p198 = pneg %p130
        $region22: #{tpu_custom_call.1} parent=11 // pred_check_branch
          %200 = sbr.rel (%p198) target = $region24
        $region23: #{tpu_custom_call.1} parent=11 // pred_region
          _
        $region24: #{tpu_custom_call.1} parent=11 // pred_fallthru
          _
        // Predicated region
        $region25: #{tpu_custom_call.1} parent=11 // pred_check
          %p201 = pneg %p151
        $region26: #{tpu_custom_call.1} parent=11 // pred_check_branch
          %203 = sbr.rel (%p201) target = $region28
        $region27: #{tpu_custom_call.1} parent=11 // pred_region
          _
        $region28: #{tpu_custom_call.1} parent=11 // pred_fallthru
          _
      $region12: #{tpu_custom_call.1} parent=5 // pred_fallthru
        _
      %p204 = scmp.lt.s32.totalorder %s15, 2
      // Predicated region
      $region29: #{tpu_custom_call.1} parent=5 // pred_check
        %p205 = pneg %p204
      $region30: #{tpu_custom_call.1} parent=5 // pred_check_branch
        %207 = sbr.rel (%p205) target = $region32
      $region31: #{tpu_custom_call.1} parent=5 // pred_region
        // Predicated region
        $region33: #{tpu_custom_call.1} parent=31 // pred_check
          %p208 = pneg %p35
        $region34: #{tpu_custom_call.1} parent=31 // pred_check_branch
          %210 = sbr.rel (%p208) target = $region36
        $region35: #{tpu_custom_call.1} parent=31 // pred_region
          %s211 = smul.u32 32, %s15
          %p212 = scmp.lt.s32.totalorder %s211, 63
          %s213 = scalar_select %p212, %s211, 63
          %s214 = smul.addr %s213, 8
          %s215 = scalar_lea.vmem %s0, %s214
          %s216 = smul.u32 32, %s15
        $region36: #{tpu_custom_call.1} parent=31 // pred_fallthru
          _
        // Predicated region
        $region37: #{tpu_custom_call.1} parent=31 // pred_check
          %p217 = pneg %p61
        $region38: #{tpu_custom_call.1} parent=31 // pred_check_branch
          %219 = sbr.rel (%p217) target = $region40
        $region39: #{tpu_custom_call.1} parent=31 // pred_region
          %s220 = smul.u32 32, %s15
          %p221 = scmp.lt.s32.totalorder %s220, 63
          %s222 = scalar_select %p221, %s220, 63
          %s223 = smul.addr %s222, 8
          %s224 = scalar_lea.vmem %s1, %s223
          %s225 = smul.u32 32, %s15
        $region40: #{tpu_custom_call.1} parent=31 // pred_fallthru
          _
      $region32: #{tpu_custom_call.1} parent=5 // pred_fallthru
        _
      %p226 = scmp.le.s32.totalorder 1, %s15
      %p227 = scmp.lt.s32.totalorder %s15, 3
      %p228 = pnand %p226, %p227
      %p229 = pneg %p228
      // Predicated region
      $region41: #{tpu_custom_call.1} parent=5 // pred_check
        _
      $region42: #{tpu_custom_call.1} parent=5 // pred_check_branch
        %231 = sbr.rel (%p228) target = $region44
      $region43: #{tpu_custom_call.1} parent=5 // pred_region
        %s232 = ssub.s32 %s15, 1
        %s233 = smul.u32 32, %s20
        %p234 = scmp.lt.s32.totalorder %s233, 63
        %s235 = scalar_select %p234, %s233, 63
        %s236 = smul.addr %s235, 8
        %s237 = scalar_lea.vmem %s0, %s236
        %p238 = pneg %p41
        %p239 = pneg %p38
        %s240 = smul.u32 32, %s20
        %p241 = scmp.lt.s32.totalorder %s240, 63
        %s242 = scalar_select %p241, %s240, 63
        %s243 = smul.addr %s242, 8
        %s244 = scalar_lea.vmem %s1, %s243
        %p245 = pneg %p67
        %p246 = pneg %p64
        %p247 = pneg %p88
        %p248 = pneg %p85
        %p249 = pneg %p109
        %p250 = pneg %p106
        %p251 = pneg %p130
        %p252 = pneg %p127
        %p253 = pneg %p151
        %p254 = pneg %p148
        %p255 = pneg %p177
        %p256 = pneg %p174
        %s257 = sand.u32 %s164, 1
        %s258 = scalar_lea.sflag [#allocation3], %s257
        %s259 = sand.u32 %s164, 1
        %s260 = smul.addr %s259, 256
        %s261 = scalar_lea.vmem [#allocation2], %s260
        %s262 = smul.u32 32, %s20
        %p263 = scmp.lt.s32.totalorder %s262, 63
        %s264 = scalar_select %p263, %s262, 63
        %s265 = smul.addr %s264, 8
        %s266 = scalar_lea.vmem %s0, %s265
        %s267 = smul.u32 32, %s20
        %s268 = smul.u32 32, %s20
        %p269 = scmp.lt.s32.totalorder %s268, 63
        %s270 = scalar_select %p269, %s268, 63
        %s271 = smul.addr %s270, 8
        %s272 = scalar_lea.vmem %s1, %s271
        %s273 = smul.u32 32, %s20
        %s274 = smul.u32 32, %s20
        %v275 = vld [vmem:[%s266] sm:$0xff]
        %v276 = vld [vmem:[%s266 + $0x8] sm:$0xff]
        %v277 = vld [vmem:[%s266 + $0x10] sm:$0xff]
        %v278 = vld [vmem:[%s266 + $0x18] sm:$0xff]
        %v279 = vld [vmem:[%s266 + $0x20] sm:$0xff]
        %v280 = vld [vmem:[%s266 + $0x28] sm:$0xff]
        %v281 = vld [vmem:[%s266 + $0x30] sm:$0xff]
        %v282 = vld [vmem:[%s266 + $0x38] sm:$0xff]
        %v283 = vld [vmem:[%s266 + $0x40] sm:$0xff]
        %v284 = vld [vmem:[%s266 + $0x48] sm:$0xff]
        %v285 = vld [vmem:[%s266 + $0x50] sm:$0xff]
        %v286 = vld [vmem:[%s266 + $0x58] sm:$0xff]
        %v287 = vld [vmem:[%s266 + $0x60] sm:$0xff]
        %v288 = vld [vmem:[%s266 + $0x68] sm:$0xff]
        %v289 = vld [vmem:[%s266 + $0x70] sm:$0xff]
        %v290 = vld [vmem:[%s266 + $0x78] sm:$0xff]
        %v291 = vld [vmem:[%s266 + $0x80] sm:$0xff]
        %v292 = vld [vmem:[%s266 + $0x88] sm:$0xff]
        %v293 = vld [vmem:[%s266 + $0x90] sm:$0xff]
        %v294 = vld [vmem:[%s266 + $0x98] sm:$0xff]
        %v295 = vld [vmem:[%s266 + $0xa0] sm:$0xff]
        %v296 = vld [vmem:[%s266 + $0xa8] sm:$0xff]
        %v297 = vld [vmem:[%s266 + $0xb0] sm:$0xff]
        %v298 = vld [vmem:[%s266 + $0xb8] sm:$0xff]
        %v299 = vld [vmem:[%s266 + $0xc0] sm:$0xff]
        %v300 = vld [vmem:[%s266 + $0xc8] sm:$0xff]
        %v301 = vld [vmem:[%s266 + $0xd0] sm:$0xff]
        %v302 = vld [vmem:[%s266 + $0xd8] sm:$0xff]
        %v303 = vld [vmem:[%s266 + $0xe0] sm:$0xff]
        %v304 = vld [vmem:[%s266 + $0xe8] sm:$0xff]
        %v305 = vld [vmem:[%s266 + $0xf0] sm:$0xff]
        %v306 = vld [vmem:[%s266 + $0xf8] sm:$0xff]
        %v307 = vld [vmem:[%s272] sm:$0xff]
        %v308 = vld [vmem:[%s272 + $0x8] sm:$0xff]
        %v309 = vld [vmem:[%s272 + $0x10] sm:$0xff]
        %v310 = vld [vmem:[%s272 + $0x18] sm:$0xff]
        %v311 = vld [vmem:[%s272 + $0x20] sm:$0xff]
        %v312 = vld [vmem:[%s272 + $0x28] sm:$0xff]
        %v313 = vld [vmem:[%s272 + $0x30] sm:$0xff]
        %v314 = vld [vmem:[%s272 + $0x38] sm:$0xff]
        %v315 = vld [vmem:[%s272 + $0x40] sm:$0xff]
        %v316 = vld [vmem:[%s272 + $0x48] sm:$0xff]
        %v317 = vld [vmem:[%s272 + $0x50] sm:$0xff]
        %v318 = vld [vmem:[%s272 + $0x58] sm:$0xff]
        %v319 = vld [vmem:[%s272 + $0x60] sm:$0xff]
        %v320 = vld [vmem:[%s272 + $0x68] sm:$0xff]
        %v321 = vld [vmem:[%s272 + $0x70] sm:$0xff]
        %v322 = vld [vmem:[%s272 + $0x78] sm:$0xff]
        %v323 = vld [vmem:[%s272 + $0x80] sm:$0xff]
        %v324 = vld [vmem:[%s272 + $0x88] sm:$0xff]
        %v325 = vld [vmem:[%s272 + $0x90] sm:$0xff]
        %v326 = vld [vmem:[%s272 + $0x98] sm:$0xff]
        %v327 = vld [vmem:[%s272 + $0xa0] sm:$0xff]
        %v328 = vld [vmem:[%s272 + $0xa8] sm:$0xff]
        %v329 = vld [vmem:[%s272 + $0xb0] sm:$0xff]
        %v330 = vld [vmem:[%s272 + $0xb8] sm:$0xff]
        %v331 = vld [vmem:[%s272 + $0xc0] sm:$0xff]
        %v332 = vld [vmem:[%s272 + $0xc8] sm:$0xff]
        %v333 = vld [vmem:[%s272 + $0xd0] sm:$0xff]
        %v334 = vld [vmem:[%s272 + $0xd8] sm:$0xff]
        %v335 = vld [vmem:[%s272 + $0xe0] sm:$0xff]
        %v336 = vld [vmem:[%s272 + $0xe8] sm:$0xff]
        %v337 = vld [vmem:[%s272 + $0xf0] sm:$0xff]
        %v338 = vld [vmem:[%s272 + $0xf8] sm:$0xff]
        %v339 = vlaneseq
        %v340 = vand.u32 %v339, 127
        %341 = vset.pattern.permute.xlu0 0
        %342 = vperm.xlu0 %341, %v275
        %v343 = vpop.permute.xlu0 %342
        %344 = vset.pattern.permute.xlu0 0
        %345 = vperm.xlu0 %344, %v276
        %v346 = vpop.permute.xlu0 %345
        %347 = vset.pattern.permute.xlu0 0
        %348 = vperm.xlu0 %347, %v277
        %v349 = vpop.permute.xlu0 %348
        %350 = vset.pattern.permute.xlu0 0
        %351 = vperm.xlu0 %350, %v278
        %v352 = vpop.permute.xlu0 %351
        %353 = vset.pattern.permute.xlu0 0
        %354 = vperm.xlu0 %353, %v279
        %v355 = vpop.permute.xlu0 %354
        %356 = vset.pattern.permute.xlu0 0
        %357 = vperm.xlu0 %356, %v280
        %v358 = vpop.permute.xlu0 %357
        %359 = vset.pattern.permute.xlu0 0
        %360 = vperm.xlu0 %359, %v281
        %v361 = vpop.permute.xlu0 %360
        %362 = vset.pattern.permute.xlu0 0
        %363 = vperm.xlu0 %362, %v282
        %v364 = vpop.permute.xlu0 %363
        %365 = vset.pattern.permute.xlu0 0
        %366 = vperm.xlu0 %365, %v283
        %v367 = vpop.permute.xlu0 %366
        %368 = vset.pattern.permute.xlu0 0
        %369 = vperm.xlu0 %368, %v284
        %v370 = vpop.permute.xlu0 %369
        %371 = vset.pattern.permute.xlu0 0
        %372 = vperm.xlu0 %371, %v285
        %v373 = vpop.permute.xlu0 %372
        %374 = vset.pattern.permute.xlu0 0
        %375 = vperm.xlu0 %374, %v286
        %v376 = vpop.permute.xlu0 %375
        %377 = vset.pattern.permute.xlu0 0
        %378 = vperm.xlu0 %377, %v287
        %v379 = vpop.permute.xlu0 %378
        %380 = vset.pattern.permute.xlu0 0
        %381 = vperm.xlu0 %380, %v288
        %v382 = vpop.permute.xlu0 %381
        %383 = vset.pattern.permute.xlu0 0
        %384 = vperm.xlu0 %383, %v289
        %v385 = vpop.permute.xlu0 %384
        %386 = vset.pattern.permute.xlu0 0
        %387 = vperm.xlu0 %386, %v290
        %v388 = vpop.permute.xlu0 %387
        %389 = vset.pattern.permute.xlu0 0
        %390 = vperm.xlu0 %389, %v291
        %v391 = vpop.permute.xlu0 %390
        %392 = vset.pattern.permute.xlu0 0
        %393 = vperm.xlu0 %392, %v292
        %v394 = vpop.permute.xlu0 %393
        %395 = vset.pattern.permute.xlu0 0
        %396 = vperm.xlu0 %395, %v293
        %v397 = vpop.permute.xlu0 %396
        %398 = vset.pattern.permute.xlu0 0
        %399 = vperm.xlu0 %398, %v294
        %v400 = vpop.permute.xlu0 %399
        %401 = vset.pattern.permute.xlu0 0
        %402 = vperm.xlu0 %401, %v295
        %v403 = vpop.permute.xlu0 %402
        %404 = vset.pattern.permute.xlu0 0
        %405 = vperm.xlu0 %404, %v296
        %v406 = vpop.permute.xlu0 %405
        %407 = vset.pattern.permute.xlu0 0
        %408 = vperm.xlu0 %407, %v297
        %v409 = vpop.permute.xlu0 %408
        %410 = vset.pattern.permute.xlu0 0
        %411 = vperm.xlu0 %410, %v298
        %v412 = vpop.permute.xlu0 %411
        %413 = vset.pattern.permute.xlu0 0
        %414 = vperm.xlu0 %413, %v299
        %v415 = vpop.permute.xlu0 %414
        %416 = vset.pattern.permute.xlu0 0
        %417 = vperm.xlu0 %416, %v300
        %v418 = vpop.permute.xlu0 %417
        %419 = vset.pattern.permute.xlu0 0
        %420 = vperm.xlu0 %419, %v301
        %v421 = vpop.permute.xlu0 %420
        %422 = vset.pattern.permute.xlu0 0
        %423 = vperm.xlu0 %422, %v302
        %v424 = vpop.permute.xlu0 %423
        %425 = vset.pattern.permute.xlu0 0
        %426 = vperm.xlu0 %425, %v303
        %v427 = vpop.permute.xlu0 %426
        %428 = vset.pattern.permute.xlu0 0
        %429 = vperm.xlu0 %428, %v304
        %v430 = vpop.permute.xlu0 %429
        %431 = vset.pattern.permute.xlu0 0
        %432 = vperm.xlu0 %431, %v305
        %v433 = vpop.permute.xlu0 %432
        %434 = vset.pattern.permute.xlu0 0
        %435 = vperm.xlu0 %434, %v306
        %v436 = vpop.permute.xlu0 %435
        %vm437 = vcmp.eq.s32.totalorder %v340, %v343
        %vm438 = vcmp.eq.s32.totalorder %v340, %v346
        %vm439 = vcmp.eq.s32.totalorder %v340, %v349
        %vm440 = vcmp.eq.s32.totalorder %v340, %v352
        %vm441 = vcmp.eq.s32.totalorder %v340, %v355
        %vm442 = vcmp.eq.s32.totalorder %v340, %v358
        %vm443 = vcmp.eq.s32.totalorder %v340, %v361
        %vm444 = vcmp.eq.s32.totalorder %v340, %v364
        %vm445 = vcmp.eq.s32.totalorder %v340, %v367
        %vm446 = vcmp.eq.s32.totalorder %v340, %v370
        %vm447 = vcmp.eq.s32.totalorder %v340, %v373
        %vm448 = vcmp.eq.s32.totalorder %v340, %v376
        %vm449 = vcmp.eq.s32.totalorder %v340, %v379
        %vm450 = vcmp.eq.s32.totalorder %v340, %v382
        %vm451 = vcmp.eq.s32.totalorder %v340, %v385
        %vm452 = vcmp.eq.s32.totalorder %v340, %v388
        %vm453 = vcmp.eq.s32.totalorder %v340, %v391
        %vm454 = vcmp.eq.s32.totalorder %v340, %v394
        %vm455 = vcmp.eq.s32.totalorder %v340, %v397
        %vm456 = vcmp.eq.s32.totalorder %v340, %v400
        %vm457 = vcmp.eq.s32.totalorder %v340, %v403
        %vm458 = vcmp.eq.s32.totalorder %v340, %v406
        %vm459 = vcmp.eq.s32.totalorder %v340, %v409
        %vm460 = vcmp.eq.s32.totalorder %v340, %v412
        %vm461 = vcmp.eq.s32.totalorder %v340, %v415
        %vm462 = vcmp.eq.s32.totalorder %v340, %v418
        %vm463 = vcmp.eq.s32.totalorder %v340, %v421
        %vm464 = vcmp.eq.s32.totalorder %v340, %v424
        %vm465 = vcmp.eq.s32.totalorder %v340, %v427
        %vm466 = vcmp.eq.s32.totalorder %v340, %v430
        %vm467 = vcmp.eq.s32.totalorder %v340, %v433
        %vm468 = vcmp.eq.s32.totalorder %v340, %v436
        %v469 = vsel %vm437, 1, 0
        %v470 = vsel %vm438, 1, 0
        %v471 = vsel %vm439, 1, 0
        %v472 = vsel %vm440, 1, 0
        %v473 = vsel %vm441, 1, 0
        %v474 = vsel %vm442, 1, 0
        %v475 = vsel %vm443, 1, 0
        %v476 = vsel %vm444, 1, 0
        %v477 = vsel %vm445, 1, 0
        %v478 = vsel %vm446, 1, 0
        %v479 = vsel %vm447, 1, 0
        %v480 = vsel %vm448, 1, 0
        %v481 = vsel %vm449, 1, 0
        %v482 = vsel %vm450, 1, 0
        %v483 = vsel %vm451, 1, 0
        %v484 = vsel %vm452, 1, 0
        %v485 = vsel %vm453, 1, 0
        %v486 = vsel %vm454, 1, 0
        %v487 = vsel %vm455, 1, 0
        %v488 = vsel %vm456, 1, 0
        %v489 = vsel %vm457, 1, 0
        %v490 = vsel %vm458, 1, 0
        %v491 = vsel %vm459, 1, 0
        %v492 = vsel %vm460, 1, 0
        %v493 = vsel %vm461, 1, 0
        %v494 = vsel %vm462, 1, 0
        %v495 = vsel %vm463, 1, 0
        %v496 = vsel %vm464, 1, 0
        %v497 = vsel %vm465, 1, 0
        %v498 = vsel %vm466, 1, 0
        %v499 = vsel %vm467, 1, 0
        %v500 = vsel %vm468, 1, 0
        %v501 = vcvt.s32.f32 %v469
        %v502 = vcvt.s32.f32 %v470
        %v503 = vcvt.s32.f32 %v471
        %v504 = vcvt.s32.f32 %v472
        %v505 = vcvt.s32.f32 %v473
        %v506 = vcvt.s32.f32 %v474
        %v507 = vcvt.s32.f32 %v475
        %v508 = vcvt.s32.f32 %v476
        %v509 = vcvt.s32.f32 %v477
        %v510 = vcvt.s32.f32 %v478
        %v511 = vcvt.s32.f32 %v479
        %v512 = vcvt.s32.f32 %v480
        %v513 = vcvt.s32.f32 %v481
        %v514 = vcvt.s32.f32 %v482
        %v515 = vcvt.s32.f32 %v483
        %v516 = vcvt.s32.f32 %v484
        %v517 = vcvt.s32.f32 %v485
        %v518 = vcvt.s32.f32 %v486
        %v519 = vcvt.s32.f32 %v487
        %v520 = vcvt.s32.f32 %v488
        %v521 = vcvt.s32.f32 %v489
        %v522 = vcvt.s32.f32 %v490
        %v523 = vcvt.s32.f32 %v491
        %v524 = vcvt.s32.f32 %v492
        %v525 = vcvt.s32.f32 %v493
        %v526 = vcvt.s32.f32 %v494
        %v527 = vcvt.s32.f32 %v495
        %v528 = vcvt.s32.f32 %v496
        %v529 = vcvt.s32.f32 %v497
        %v530 = vcvt.s32.f32 %v498
        %v531 = vcvt.s32.f32 %v499
        %v532 = vcvt.s32.f32 %v500
        %v533 = vadd.s32 %v340, 128
        %v534 = vadd.s32 %v340, 256
        %v535 = vadd.s32 %v340, 384
        %536 = vset.pattern.permute.xlu0 0
        %537 = vperm.xlu0 %536, %v307
        %v538 = vpop.permute.xlu0 %537
        %539 = vset.pattern.permute.xlu0 0
        %540 = vperm.xlu0 %539, %v308
        %v541 = vpop.permute.xlu0 %540
        %542 = vset.pattern.permute.xlu0 0
        %543 = vperm.xlu0 %542, %v309
        %v544 = vpop.permute.xlu0 %543
        %545 = vset.pattern.permute.xlu0 0
        %546 = vperm.xlu0 %545, %v310
        %v547 = vpop.permute.xlu0 %546
        %548 = vset.pattern.permute.xlu0 0
        %549 = vperm.xlu0 %548, %v311
        %v550 = vpop.permute.xlu0 %549
        %551 = vset.pattern.permute.xlu0 0
        %552 = vperm.xlu0 %551, %v312
        %v553 = vpop.permute.xlu0 %552
        %554 = vset.pattern.permute.xlu0 0
        %555 = vperm.xlu0 %554, %v313
        %v556 = vpop.permute.xlu0 %555
        %557 = vset.pattern.permute.xlu0 0
        %558 = vperm.xlu0 %557, %v314
        %v559 = vpop.permute.xlu0 %558
        %560 = vset.pattern.permute.xlu0 0
        %561 = vperm.xlu0 %560, %v315
        %v562 = vpop.permute.xlu0 %561
        %563 = vset.pattern.permute.xlu0 0
        %564 = vperm.xlu0 %563, %v316
        %v565 = vpop.permute.xlu0 %564
        %566 = vset.pattern.permute.xlu0 0
        %567 = vperm.xlu0 %566, %v317
        %v568 = vpop.permute.xlu0 %567
        %569 = vset.pattern.permute.xlu0 0
        %570 = vperm.xlu0 %569, %v318
        %v571 = vpop.permute.xlu0 %570
        %572 = vset.pattern.permute.xlu0 0
        %573 = vperm.xlu0 %572, %v319
        %v574 = vpop.permute.xlu0 %573
        %575 = vset.pattern.permute.xlu0 0
        %576 = vperm.xlu0 %575, %v320
        %v577 = vpop.permute.xlu0 %576
        %578 = vset.pattern.permute.xlu0 0
        %579 = vperm.xlu0 %578, %v321
        %v580 = vpop.permute.xlu0 %579
        %581 = vset.pattern.permute.xlu0 0
        %582 = vperm.xlu0 %581, %v322
        %v583 = vpop.permute.xlu0 %582
        %584 = vset.pattern.permute.xlu0 0
        %585 = vperm.xlu0 %584, %v323
        %v586 = vpop.permute.xlu0 %585
        %587 = vset.pattern.permute.xlu0 0
        %588 = vperm.xlu0 %587, %v324
        %v589 = vpop.permute.xlu0 %588
        %590 = vset.pattern.permute.xlu0 0
        %591 = vperm.xlu0 %590, %v325
        %v592 = vpop.permute.xlu0 %591
        %593 = vset.pattern.permute.xlu0 0
        %594 = vperm.xlu0 %593, %v326
        %v595 = vpop.permute.xlu0 %594
        %596 = vset.pattern.permute.xlu0 0
        %597 = vperm.xlu0 %596, %v327
        %v598 = vpop.permute.xlu0 %597
        %599 = vset.pattern.permute.xlu0 0
        %600 = vperm.xlu0 %599, %v328
        %v601 = vpop.permute.xlu0 %600
        %602 = vset.pattern.permute.xlu0 0
        %603 = vperm.xlu0 %602, %v329
        %v604 = vpop.permute.xlu0 %603
        %605 = vset.pattern.permute.xlu0 0
        %606 = vperm.xlu0 %605, %v330
        %v607 = vpop.permute.xlu0 %606
        %608 = vset.pattern.permute.xlu0 0
        %609 = vperm.xlu0 %608, %v331
        %v610 = vpop.permute.xlu0 %609
        %611 = vset.pattern.permute.xlu0 0
        %612 = vperm.xlu0 %611, %v332
        %v613 = vpop.permute.xlu0 %612
        %614 = vset.pattern.permute.xlu0 0
        %615 = vperm.xlu0 %614, %v333
        %v616 = vpop.permute.xlu0 %615
        %617 = vset.pattern.permute.xlu0 0
        %618 = vperm.xlu0 %617, %v334
        %v619 = vpop.permute.xlu0 %618
        %620 = vset.pattern.permute.xlu0 0
        %621 = vperm.xlu0 %620, %v335
        %v622 = vpop.permute.xlu0 %621
        %623 = vset.pattern.permute.xlu0 0
        %624 = vperm.xlu0 %623, %v336
        %v625 = vpop.permute.xlu0 %624
        %626 = vset.pattern.permute.xlu0 0
        %627 = vperm.xlu0 %626, %v337
        %v628 = vpop.permute.xlu0 %627
        %629 = vset.pattern.permute.xlu0 0
        %630 = vperm.xlu0 %629, %v338
        %v631 = vpop.permute.xlu0 %630
        %vm632 = vcmp.eq.s32.totalorder %v340, %v538
        %vm633 = vcmp.eq.s32.totalorder %v533, %v538
        %vm634 = vcmp.eq.s32.totalorder %v534, %v538
        %vm635 = vcmp.eq.s32.totalorder %v535, %v538
        %vm636 = vcmp.eq.s32.totalorder %v340, %v541
        %vm637 = vcmp.eq.s32.totalorder %v533, %v541
        %vm638 = vcmp.eq.s32.totalorder %v534, %v541
        %vm639 = vcmp.eq.s32.totalorder %v535, %v541
        %vm640 = vcmp.eq.s32.totalorder %v340, %v544
        %vm641 = vcmp.eq.s32.totalorder %v533, %v544
        %vm642 = vcmp.eq.s32.totalorder %v534, %v544
        %vm643 = vcmp.eq.s32.totalorder %v535, %v544
        %vm644 = vcmp.eq.s32.totalorder %v340, %v547
        %vm645 = vcmp.eq.s32.totalorder %v533, %v547
        %vm646 = vcmp.eq.s32.totalorder %v534, %v547
        %vm647 = vcmp.eq.s32.totalorder %v535, %v547
        %vm648 = vcmp.eq.s32.totalorder %v340, %v550
        %vm649 = vcmp.eq.s32.totalorder %v533, %v550
        %vm650 = vcmp.eq.s32.totalorder %v534, %v550
        %vm651 = vcmp.eq.s32.totalorder %v535, %v550
        %vm652 = vcmp.eq.s32.totalorder %v340, %v553
        %vm653 = vcmp.eq.s32.totalorder %v533, %v553
        %vm654 = vcmp.eq.s32.totalorder %v534, %v553
        %vm655 = vcmp.eq.s32.totalorder %v535, %v553
        %vm656 = vcmp.eq.s32.totalorder %v340, %v556
        %vm657 = vcmp.eq.s32.totalorder %v533, %v556
        %vm658 = vcmp.eq.s32.totalorder %v534, %v556
        %vm659 = vcmp.eq.s32.totalorder %v535, %v556
        %vm660 = vcmp.eq.s32.totalorder %v340, %v559
        %vm661 = vcmp.eq.s32.totalorder %v533, %v559
        %vm662 = vcmp.eq.s32.totalorder %v534, %v559
        %vm663 = vcmp.eq.s32.totalorder %v535, %v559
        %vm664 = vcmp.eq.s32.totalorder %v340, %v562
        %vm665 = vcmp.eq.s32.totalorder %v533, %v562
        %vm666 = vcmp.eq.s32.totalorder %v534, %v562
        %vm667 = vcmp.eq.s32.totalorder %v535, %v562
        %vm668 = vcmp.eq.s32.totalorder %v340, %v565
        %vm669 = vcmp.eq.s32.totalorder %v533, %v565
        %vm670 = vcmp.eq.s32.totalorder %v534, %v565
        %vm671 = vcmp.eq.s32.totalorder %v535, %v565
        %vm672 = vcmp.eq.s32.totalorder %v340, %v568
        %vm673 = vcmp.eq.s32.totalorder %v533, %v568
        %vm674 = vcmp.eq.s32.totalorder %v534, %v568
        %vm675 = vcmp.eq.s32.totalorder %v535, %v568
        %vm676 = vcmp.eq.s32.totalorder %v340, %v571
        %vm677 = vcmp.eq.s32.totalorder %v533, %v571
        %vm678 = vcmp.eq.s32.totalorder %v534, %v571
        %vm679 = vcmp.eq.s32.totalorder %v535, %v571
        %vm680 = vcmp.eq.s32.totalorder %v340, %v574
        %vm681 = vcmp.eq.s32.totalorder %v533, %v574
        %vm682 = vcmp.eq.s32.totalorder %v534, %v574
        %vm683 = vcmp.eq.s32.totalorder %v535, %v574
        %vm684 = vcmp.eq.s32.totalorder %v340, %v577
        %vm685 = vcmp.eq.s32.totalorder %v533, %v577
        %vm686 = vcmp.eq.s32.totalorder %v534, %v577
        %vm687 = vcmp.eq.s32.totalorder %v535, %v577
        %vm688 = vcmp.eq.s32.totalorder %v340, %v580
        %vm689 = vcmp.eq.s32.totalorder %v533, %v580
        %vm690 = vcmp.eq.s32.totalorder %v534, %v580
        %vm691 = vcmp.eq.s32.totalorder %v535, %v580
        %vm692 = vcmp.eq.s32.totalorder %v340, %v583
        %vm693 = vcmp.eq.s32.totalorder %v533, %v583
        %vm694 = vcmp.eq.s32.totalorder %v534, %v583
        %vm695 = vcmp.eq.s32.totalorder %v535, %v583
        %vm696 = vcmp.eq.s32.totalorder %v340, %v586
        %vm697 = vcmp.eq.s32.totalorder %v533, %v586
        %vm698 = vcmp.eq.s32.totalorder %v534, %v586
        %vm699 = vcmp.eq.s32.totalorder %v535, %v586
        %vm700 = vcmp.eq.s32.totalorder %v340, %v589
        %vm701 = vcmp.eq.s32.totalorder %v533, %v589
        %vm702 = vcmp.eq.s32.totalorder %v534, %v589
        %vm703 = vcmp.eq.s32.totalorder %v535, %v589
        %vm704 = vcmp.eq.s32.totalorder %v340, %v592
        %vm705 = vcmp.eq.s32.totalorder %v533, %v592
        %vm706 = vcmp.eq.s32.totalorder %v534, %v592
        %vm707 = vcmp.eq.s32.totalorder %v535, %v592
        %vm708 = vcmp.eq.s32.totalorder %v340, %v595
        %vm709 = vcmp.eq.s32.totalorder %v533, %v595
        %vm710 = vcmp.eq.s32.totalorder %v534, %v595
        %vm711 = vcmp.eq.s32.totalorder %v535, %v595
        %vm712 = vcmp.eq.s32.totalorder %v340, %v598
        %vm713 = vcmp.eq.s32.totalorder %v533, %v598
        %vm714 = vcmp.eq.s32.totalorder %v534, %v598
        %vm715 = vcmp.eq.s32.totalorder %v535, %v598
        %vm716 = vcmp.eq.s32.totalorder %v340, %v601
        %vm717 = vcmp.eq.s32.totalorder %v533, %v601
        %vm718 = vcmp.eq.s32.totalorder %v534, %v601
        %vm719 = vcmp.eq.s32.totalorder %v535, %v601
        %vm720 = vcmp.eq.s32.totalorder %v340, %v604
        %vm721 = vcmp.eq.s32.totalorder %v533, %v604
        %vm722 = vcmp.eq.s32.totalorder %v534, %v604
        %vm723 = vcmp.eq.s32.totalorder %v535, %v604
        %vm724 = vcmp.eq.s32.totalorder %v340, %v607
        %vm725 = vcmp.eq.s32.totalorder %v533, %v607
        %vm726 = vcmp.eq.s32.totalorder %v534, %v607
        %vm727 = vcmp.eq.s32.totalorder %v535, %v607
        %vm728 = vcmp.eq.s32.totalorder %v340, %v610
        %vm729 = vcmp.eq.s32.totalorder %v533, %v610
        %vm730 = vcmp.eq.s32.totalorder %v534, %v610
        %vm731 = vcmp.eq.s32.totalorder %v535, %v610
        %vm732 = vcmp.eq.s32.totalorder %v340, %v613
        %vm733 = vcmp.eq.s32.totalorder %v533, %v613
        %vm734 = vcmp.eq.s32.totalorder %v534, %v613
        %vm735 = vcmp.eq.s32.totalorder %v535, %v613
        %vm736 = vcmp.eq.s32.totalorder %v340, %v616
        %vm737 = vcmp.eq.s32.totalorder %v533, %v616
        %vm738 = vcmp.eq.s32.totalorder %v534, %v616
        %vm739 = vcmp.eq.s32.totalorder %v535, %v616
        %vm740 = vcmp.eq.s32.totalorder %v340, %v619
        %vm741 = vcmp.eq.s32.totalorder %v533, %v619
        %vm742 = vcmp.eq.s32.totalorder %v534, %v619
        %vm743 = vcmp.eq.s32.totalorder %v535, %v619
        %vm744 = vcmp.eq.s32.totalorder %v340, %v622
        %vm745 = vcmp.eq.s32.totalorder %v533, %v622
        %vm746 = vcmp.eq.s32.totalorder %v534, %v622
        %vm747 = vcmp.eq.s32.totalorder %v535, %v622
        %vm748 = vcmp.eq.s32.totalorder %v340, %v625
        %vm749 = vcmp.eq.s32.totalorder %v533, %v625
        %vm750 = vcmp.eq.s32.totalorder %v534, %v625
        %vm751 = vcmp.eq.s32.totalorder %v535, %v625
        %vm752 = vcmp.eq.s32.totalorder %v340, %v628
        %vm753 = vcmp.eq.s32.totalorder %v533, %v628
        %vm754 = vcmp.eq.s32.totalorder %v534, %v628
        %vm755 = vcmp.eq.s32.totalorder %v535, %v628
        %vm756 = vcmp.eq.s32.totalorder %v340, %v631
        %vm757 = vcmp.eq.s32.totalorder %v533, %v631
        %vm758 = vcmp.eq.s32.totalorder %v534, %v631
        %vm759 = vcmp.eq.s32.totalorder %v535, %v631
        %v760 = vsel %vm632, 1, 0
        %v761 = vsel %vm633, 1, 0
        %v762 = vsel %vm634, 1, 0
        %v763 = vsel %vm635, 1, 0
        %v764 = vsel %vm636, 1, 0
        %v765 = vsel %vm637, 1, 0
        %v766 = vsel %vm638, 1, 0
        %v767 = vsel %vm639, 1, 0
        %v768 = vsel %vm640, 1, 0
        %v769 = vsel %vm641, 1, 0
        %v770 = vsel %vm642, 1, 0
        %v771 = vsel %vm643, 1, 0
        %v772 = vsel %vm644, 1, 0
        %v773 = vsel %vm645, 1, 0
        %v774 = vsel %vm646, 1, 0
        %v775 = vsel %vm647, 1, 0
        %v776 = vsel %vm648, 1, 0
        %v777 = vsel %vm649, 1, 0
        %v778 = vsel %vm650, 1, 0
        %v779 = vsel %vm651, 1, 0
        %v780 = vsel %vm652, 1, 0
        %v781 = vsel %vm653, 1, 0
        %v782 = vsel %vm654, 1, 0
        %v783 = vsel %vm655, 1, 0
        %v784 = vsel %vm656, 1, 0
        %v785 = vsel %vm657, 1, 0
        %v786 = vsel %vm658, 1, 0
        %v787 = vsel %vm659, 1, 0
        %v788 = vsel %vm660, 1, 0
        %v789 = vsel %vm661, 1, 0
        %v790 = vsel %vm662, 1, 0
        %v791 = vsel %vm663, 1, 0
        %v792 = vsel %vm664, 1, 0
        %v793 = vsel %vm665, 1, 0
        %v794 = vsel %vm666, 1, 0
        %v795 = vsel %vm667, 1, 0
        %v796 = vsel %vm668, 1, 0
        %v797 = vsel %vm669, 1, 0
        %v798 = vsel %vm670, 1, 0
        %v799 = vsel %vm671, 1, 0
        %v800 = vsel %vm672, 1, 0
        %v801 = vsel %vm673, 1, 0
        %v802 = vsel %vm674, 1, 0
        %v803 = vsel %vm675, 1, 0
        %v804 = vsel %vm676, 1, 0
        %v805 = vsel %vm677, 1, 0
        %v806 = vsel %vm678, 1, 0
        %v807 = vsel %vm679, 1, 0
        %v808 = vsel %vm680, 1, 0
        %v809 = vsel %vm681, 1, 0
        %v810 = vsel %vm682, 1, 0
        %v811 = vsel %vm683, 1, 0
        %v812 = vsel %vm684, 1, 0
        %v813 = vsel %vm685, 1, 0
        %v814 = vsel %vm686, 1, 0
        %v815 = vsel %vm687, 1, 0
        %v816 = vsel %vm688, 1, 0
        %v817 = vsel %vm689, 1, 0
        %v818 = vsel %vm690, 1, 0
        %v819 = vsel %vm691, 1, 0
        %v820 = vsel %vm692, 1, 0
        %v821 = vsel %vm693, 1, 0
        %v822 = vsel %vm694, 1, 0
        %v823 = vsel %vm695, 1, 0
        %v824 = vsel %vm696, 1, 0
        %v825 = vsel %vm697, 1, 0
        %v826 = vsel %vm698, 1, 0
        %v827 = vsel %vm699, 1, 0
        %v828 = vsel %vm700, 1, 0
        %v829 = vsel %vm701, 1, 0
        %v830 = vsel %vm702, 1, 0
        %v831 = vsel %vm703, 1, 0
        %v832 = vsel %vm704, 1, 0
        %v833 = vsel %vm705, 1, 0
        %v834 = vsel %vm706, 1, 0
        %v835 = vsel %vm707, 1, 0
        %v836 = vsel %vm708, 1, 0
        %v837 = vsel %vm709, 1, 0
        %v838 = vsel %vm710, 1, 0
        %v839 = vsel %vm711, 1, 0
        %v840 = vsel %vm712, 1, 0
        %v841 = vsel %vm713, 1, 0
        %v842 = vsel %vm714, 1, 0
        %v843 = vsel %vm715, 1, 0
        %v844 = vsel %vm716, 1, 0
        %v845 = vsel %vm717, 1, 0
        %v846 = vsel %vm718, 1, 0
        %v847 = vsel %vm719, 1, 0
        %v848 = vsel %vm720, 1, 0
        %v849 = vsel %vm721, 1, 0
        %v850 = vsel %vm722, 1, 0
        %v851 = vsel %vm723, 1, 0
        %v852 = vsel %vm724, 1, 0
        %v853 = vsel %vm725, 1, 0
        %v854 = vsel %vm726, 1, 0
        %v855 = vsel %vm727, 1, 0
        %v856 = vsel %vm728, 1, 0
        %v857 = vsel %vm729, 1, 0
        %v858 = vsel %vm730, 1, 0
        %v859 = vsel %vm731, 1, 0
        %v860 = vsel %vm732, 1, 0
        %v861 = vsel %vm733, 1, 0
        %v862 = vsel %vm734, 1, 0
        %v863 = vsel %vm735, 1, 0
        %v864 = vsel %vm736, 1, 0
        %v865 = vsel %vm737, 1, 0
        %v866 = vsel %vm738, 1, 0
        %v867 = vsel %vm739, 1, 0
        %v868 = vsel %vm740, 1, 0
        %v869 = vsel %vm741, 1, 0
        %v870 = vsel %vm742, 1, 0
        %v871 = vsel %vm743, 1, 0
        %v872 = vsel %vm744, 1, 0
        %v873 = vsel %vm745, 1, 0
        %v874 = vsel %vm746, 1, 0
        %v875 = vsel %vm747, 1, 0
        %v876 = vsel %vm748, 1, 0
        %v877 = vsel %vm749, 1, 0
        %v878 = vsel %vm750, 1, 0
        %v879 = vsel %vm751, 1, 0
        %v880 = vsel %vm752, 1, 0
        %v881 = vsel %vm753, 1, 0
        %v882 = vsel %vm754, 1, 0
        %v883 = vsel %vm755, 1, 0
        %v884 = vsel %vm756, 1, 0
        %v885 = vsel %vm757, 1, 0
        %v886 = vsel %vm758, 1, 0
        %v887 = vsel %vm759, 1, 0
        %v888 = vcvt.s32.f32 %v760
        %v889 = vcvt.s32.f32 %v761
        %v890 = vcvt.s32.f32 %v762
        %v891 = vcvt.s32.f32 %v763
        %v892 = vcvt.s32.f32 %v764
        %v893 = vcvt.s32.f32 %v765
        %v894 = vcvt.s32.f32 %v766
        %v895 = vcvt.s32.f32 %v767
        %v896 = vcvt.s32.f32 %v768
        %v897 = vcvt.s32.f32 %v769
        %v898 = vcvt.s32.f32 %v770
        %v899 = vcvt.s32.f32 %v771
        %v900 = vcvt.s32.f32 %v772
        %v901 = vcvt.s32.f32 %v773
        %v902 = vcvt.s32.f32 %v774
        %v903 = vcvt.s32.f32 %v775
        %v904 = vcvt.s32.f32 %v776
        %v905 = vcvt.s32.f32 %v777
        %v906 = vcvt.s32.f32 %v778
        %v907 = vcvt.s32.f32 %v779
        %v908 = vcvt.s32.f32 %v780
        %v909 = vcvt.s32.f32 %v781
        %v910 = vcvt.s32.f32 %v782
        %v911 = vcvt.s32.f32 %v783
        %v912 = vcvt.s32.f32 %v784
        %v913 = vcvt.s32.f32 %v785
        %v914 = vcvt.s32.f32 %v786
        %v915 = vcvt.s32.f32 %v787
        %v916 = vcvt.s32.f32 %v788
        %v917 = vcvt.s32.f32 %v789
        %v918 = vcvt.s32.f32 %v790
        %v919 = vcvt.s32.f32 %v791
        %v920 = vcvt.s32.f32 %v792
        %v921 = vcvt.s32.f32 %v793
        %v922 = vcvt.s32.f32 %v794
        %v923 = vcvt.s32.f32 %v795
        %v924 = vcvt.s32.f32 %v796
        %v925 = vcvt.s32.f32 %v797
        %v926 = vcvt.s32.f32 %v798
        %v927 = vcvt.s32.f32 %v799
        %v928 = vcvt.s32.f32 %v800
        %v929 = vcvt.s32.f32 %v801
        %v930 = vcvt.s32.f32 %v802
        %v931 = vcvt.s32.f32 %v803
        %v932 = vcvt.s32.f32 %v804
        %v933 = vcvt.s32.f32 %v805
        %v934 = vcvt.s32.f32 %v806
        %v935 = vcvt.s32.f32 %v807
        %v936 = vcvt.s32.f32 %v808
        %v937 = vcvt.s32.f32 %v809
        %v938 = vcvt.s32.f32 %v810
        %v939 = vcvt.s32.f32 %v811
        %v940 = vcvt.s32.f32 %v812
        %v941 = vcvt.s32.f32 %v813
        %v942 = vcvt.s32.f32 %v814
        %v943 = vcvt.s32.f32 %v815
        %v944 = vcvt.s32.f32 %v816
        %v945 = vcvt.s32.f32 %v817
        %v946 = vcvt.s32.f32 %v818
        %v947 = vcvt.s32.f32 %v819
        %v948 = vcvt.s32.f32 %v820
        %v949 = vcvt.s32.f32 %v821
        %v950 = vcvt.s32.f32 %v822
        %v951 = vcvt.s32.f32 %v823
        %v952 = vcvt.s32.f32 %v824
        %v953 = vcvt.s32.f32 %v825
        %v954 = vcvt.s32.f32 %v826
        %v955 = vcvt.s32.f32 %v827
        %v956 = vcvt.s32.f32 %v828
        %v957 = vcvt.s32.f32 %v829
        %v958 = vcvt.s32.f32 %v830
        %v959 = vcvt.s32.f32 %v831
        %v960 = vcvt.s32.f32 %v832
        %v961 = vcvt.s32.f32 %v833
        %v962 = vcvt.s32.f32 %v834
        %v963 = vcvt.s32.f32 %v835
        %v964 = vcvt.s32.f32 %v836
        %v965 = vcvt.s32.f32 %v837
        %v966 = vcvt.s32.f32 %v838
        %v967 = vcvt.s32.f32 %v839
        %v968 = vcvt.s32.f32 %v840
        %v969 = vcvt.s32.f32 %v841
        %v970 = vcvt.s32.f32 %v842
        %v971 = vcvt.s32.f32 %v843
        %v972 = vcvt.s32.f32 %v844
        %v973 = vcvt.s32.f32 %v845
        %v974 = vcvt.s32.f32 %v846
        %v975 = vcvt.s32.f32 %v847
        %v976 = vcvt.s32.f32 %v848
        %v977 = vcvt.s32.f32 %v849
        %v978 = vcvt.s32.f32 %v850
        %v979 = vcvt.s32.f32 %v851
        %v980 = vcvt.s32.f32 %v852
        %v981 = vcvt.s32.f32 %v853
        %v982 = vcvt.s32.f32 %v854
        %v983 = vcvt.s32.f32 %v855
        %v984 = vcvt.s32.f32 %v856
        %v985 = vcvt.s32.f32 %v857
        %v986 = vcvt.s32.f32 %v858
        %v987 = vcvt.s32.f32 %v859
        %v988 = vcvt.s32.f32 %v860
        %v989 = vcvt.s32.f32 %v861
        %v990 = vcvt.s32.f32 %v862
        %v991 = vcvt.s32.f32 %v863
        %v992 = vcvt.s32.f32 %v864
        %v993 = vcvt.s32.f32 %v865
        %v994 = vcvt.s32.f32 %v866
        %v995 = vcvt.s32.f32 %v867
        %v996 = vcvt.s32.f32 %v868
        %v997 = vcvt.s32.f32 %v869
        %v998 = vcvt.s32.f32 %v870
        %v999 = vcvt.s32.f32 %v871
        %v1000 = vcvt.s32.f32 %v872
        %v1001 = vcvt.s32.f32 %v873
        %v1002 = vcvt.s32.f32 %v874
        %v1003 = vcvt.s32.f32 %v875
        %v1004 = vcvt.s32.f32 %v876
        %v1005 = vcvt.s32.f32 %v877
        %v1006 = vcvt.s32.f32 %v878
        %v1007 = vcvt.s32.f32 %v879
        %v1008 = vcvt.s32.f32 %v880
        %v1009 = vcvt.s32.f32 %v881
        %v1010 = vcvt.s32.f32 %v882
        %v1011 = vcvt.s32.f32 %v883
        %v1012 = vcvt.s32.f32 %v884
        %v1013 = vcvt.s32.f32 %v885
        %v1014 = vcvt.s32.f32 %v886
        %v1015 = vcvt.s32.f32 %v887
        %v1016 = vld [vmem:[%s2] sm:$0xff]
        %v1017 = vld [vmem:[%s2 + $0x8] sm:$0xff]
        %v1018 = vld [vmem:[%s2 + $0x10] sm:$0xff]
        %v1019 = vld [vmem:[%s2 + $0x18] sm:$0xff]
        %v1020 = vld [vmem:[%s2 + $0x20] sm:$0xff]
        %v1021 = vld [vmem:[%s2 + $0x28] sm:$0xff]
        %v1022 = vld [vmem:[%s2 + $0x30] sm:$0xff]
        %v1023 = vld [vmem:[%s2 + $0x38] sm:$0xff]
        %vm1024 = vcmask 523264
        %v1026 = vsel %vm1024, %v501, 0
        %v1029 = vsel %vm1024, %v502, 0
        %v1032 = vsel %vm1024, %v503, 0
        %v1035 = vsel %vm1024, %v504, 0
        %v1038 = vsel %vm1024, %v505, 0
        %v1041 = vsel %vm1024, %v506, 0
        %v1044 = vsel %vm1024, %v507, 0
        %v1047 = vsel %vm1024, %v508, 0
        %v1050 = vsel %vm1024, %v509, 0
        %v1053 = vsel %vm1024, %v510, 0
        %v1056 = vsel %vm1024, %v511, 0
        %v1059 = vsel %vm1024, %v512, 0
        %v1062 = vsel %vm1024, %v513, 0
        %v1065 = vsel %vm1024, %v514, 0
        %v1068 = vsel %vm1024, %v515, 0
        %v1071 = vsel %vm1024, %v516, 0
        %v1074 = vsel %vm1024, %v517, 0
        %v1077 = vsel %vm1024, %v518, 0
        %v1080 = vsel %vm1024, %v519, 0
        %v1083 = vsel %vm1024, %v520, 0
        %v1086 = vsel %vm1024, %v521, 0
        %v1089 = vsel %vm1024, %v522, 0
        %v1092 = vsel %vm1024, %v523, 0
        %v1095 = vsel %vm1024, %v524, 0
        %v1098 = vsel %vm1024, %v525, 0
        %v1101 = vsel %vm1024, %v526, 0
        %v1104 = vsel %vm1024, %v527, 0
        %v1107 = vsel %vm1024, %v528, 0
        %v1110 = vsel %vm1024, %v529, 0
        %v1113 = vsel %vm1024, %v530, 0
        %v1116 = vsel %vm1024, %v531, 0
        %v1119 = vsel %vm1024, %v532, 0
        %1121 = vmatprep.subr.mxu0 0.0
        %v1122 = vand.u32 %v1016, 4294901760
        %1123 = vmatpush1.msra.mxu0 %v1122
        %1124 = vmatprep.subr.mxu0 0.0
        %v1125 = vand.u32 %v1017, 4294901760
        %1126 = vmatpush1.msra.mxu0 %v1125
        %1127 = vmatprep.subr.mxu0 0.0
        %v1128 = vand.u32 %v1018, 4294901760
        %1129 = vmatpush1.msra.mxu0 %v1128
        %1130 = vmatprep.subr.mxu0 0.0
        %v1131 = vand.u32 %v1019, 4294901760
        %1132 = vmatpush1.msra.mxu0 %v1131
        %1133 = vmatprep.subr.mxu0 0.0
        %v1134 = vand.u32 %v1020, 4294901760
        %1135 = vmatpush1.msra.mxu0 %v1134
        %1136 = vmatprep.subr.mxu0 0.0
        %v1137 = vand.u32 %v1021, 4294901760
        %1138 = vmatpush1.msra.mxu0 %v1137
        %1139 = vmatprep.subr.mxu0 0.0
        %v1140 = vand.u32 %v1022, 4294901760
        %1141 = vmatpush1.msra.mxu0 %v1140
        %1142 = vmatprep.subr.mxu0 0.0
        %v1143 = vand.u32 %v1023, 4294901760
        %1144 = vmatpush1.msra.mxu0 %v1143
        %1145 = vmatprep.subr.mxu0 0.0
        %1146 = vmatpush1.msra.mxu0 0.0
        %1147 = vmatprep.subr.mxu0 0.0
        %1148 = vmatpush1.msra.mxu0 0.0
        %1149 = vmatprep.subr.mxu0 0.0
        %1150 = vmatpush1.msra.mxu0 0.0
        %1151 = vmatprep.subr.mxu0 0.0
        %1152 = vmatpush1.msra.mxu0 0.0
        %1153 = vmatprep.subr.mxu0 0.0
        %1154 = vmatpush1.msra.mxu0 0.0
        %1155 = vmatprep.subr.mxu0 0.0
        %1156 = vmatpush1.msra.mxu0 0.0
        %1157 = vmatprep.subr.mxu0 0.0
        %1158 = vmatpush1.msra.mxu0 0.0
        %1159 = vmatprep.subr.mxu0 0.0
        %1160 = vmatpush1.msra.mxu0 0.0
        %1161 = vmatprep.subr.mxu0 0.0
        %1162 = vmatpush1.msra.mxu0 0.0
        %1163 = vmatprep.subr.mxu0 0.0
        %1164 = vmatpush1.msra.mxu0 0.0
        %1165 = vmatprep.subr.mxu0 0.0
        %1166 = vmatpush1.msra.mxu0 0.0
        %1167 = vmatprep.subr.mxu0 0.0
        %1168 = vmatpush1.msra.mxu0 0.0
        %1169 = vmatprep.subr.mxu0 0.0
        %1170 = vmatpush1.msra.mxu0 0.0
        %1171 = vmatprep.subr.mxu0 0.0
        %1172 = vmatpush1.msra.mxu0 0.0
        %1173 = vmatprep.subr.mxu0 0.0
        %1174 = vmatpush1.msra.mxu0 0.0
        %1175 = vmatprep.subr.mxu0 0.0
        %1176 = vmatpush1.msra.mxu0 0.0
        %1177 = vmatprep.subr.mxu0 0.0
        %1178 = vmatpush1.msra.mxu0 0.0
        %1179 = vmatprep.subr.mxu0 0.0
        %1180 = vmatpush1.msra.mxu0 0.0
        %1181 = vmatprep.subr.mxu0 0.0
        %1182 = vmatpush1.msra.mxu0 0.0
        %1183 = vmatprep.subr.mxu0 0.0
        %1184 = vmatpush1.msra.mxu0 0.0
        %1185 = vmatprep.subr.mxu0 0.0
        %1186 = vmatpush1.msra.mxu0 0.0
        %1187 = vmatprep.subr.mxu0 0.0
        %1188 = vmatpush1.msra.mxu0 0.0
        %1189 = vmatprep.subr.mxu0 0.0
        %1190 = vmatpush1.msra.mxu0 0.0
        %1191 = vmatprep.subr.mxu0 0.0
        %1192 = vmatpush1.msra.mxu0 0.0
        %1193 = vmatprep.mubr.f32.mxu0 0.0
        %v1194 = vand.u32 %v1026, 4294901760
        %v1195 = vsub.f32 %v1026, %v1194
        %v1196 = vand.u32 %v1195, 4294901760
        %v1197 = vsub.f32 %v1195, %v1196
        %v1198 = vand.u32 %v1197, 4294901760
        %1199 = vmatmul.mubr.f32.gmra.mrb[0].mxu0 %v1198
        %v1200 = vpop.f32.mrb[0].mxu0
        %v1201 = vadd.f32 0.0, %v1200
        %v1202 = vpop.f32.mrb[0].mxu0
        %1203 = vmatprep.mubr.f32.mxu0 0.0
        %v1204 = vand.u32 %v1029, 4294901760
        %v1205 = vsub.f32 %v1029, %v1204
        %v1206 = vand.u32 %v1205, 4294901760
        %v1207 = vsub.f32 %v1205, %v1206
        %v1208 = vand.u32 %v1207, 4294901760
        %1209 = vmatmul.mubr.f32.gmra.mrb[0].mxu0 %v1208
        %v1210 = vpop.f32.mrb[0].mxu0
        %v1211 = vadd.f32 0.0, %v1210
        %v1212 = vpop.f32.mrb[0].mxu0
        %1213 = vmatprep.mubr.f32.mxu0 0.0
        %v1214 = vand.u32 %v1032, 4294901760
        %v1215 = vsub.f32 %v1032, %v1214
        %v1216 = vand.u32 %v1215, 4294901760
        %v1217 = vsub.f32 %v1215, %v1216
        %v1218 = vand.u32 %v1217, 4294901760
        %1219 = vmatmul.mubr.f32.gmra.mrb[0].mxu0 %v1218
        %v1220 = vpop.f32.mrb[0].mxu0
        %v1221 = vadd.f32 0.0, %v1220
        %v1222 = vpop.f32.mrb[0].mxu0
        %1223 = vmatprep.mubr.f32.mxu0 0.0
        %v1224 = vand.u32 %v1035, 4294901760
        %v1225 = vsub.f32 %v1035, %v1224
        %v1226 = vand.u32 %v1225, 4294901760
        %v1227 = vsub.f32 %v1225, %v1226
        %v1228 = vand.u32 %v1227, 4294901760
        %1229 = vmatmul.mubr.f32.gmra.mrb[0].mxu0 %v1228
        %v1230 = vpop.f32.mrb[0].mxu0
        %v1231 = vadd.f32 0.0, %v1230
        %v1232 = vpop.f32.mrb[0].mxu0
        %1233 = vmatprep.mubr.f32.mxu0 0.0
        %v1234 = vand.u32 %v1038, 4294901760
        %v1235 = vsub.f32 %v1038, %v1234
        %v1236 = vand.u32 %v1235, 4294901760
        %v1237 = vsub.f32 %v1235, %v1236
        %v1238 = vand.u32 %v1237, 4294901760
        %1239 = vmatmul.mubr.f32.gmra.mrb[0].mxu0 %v1238
        %v1240 = vpop.f32.mrb[0].mxu0
        %v1241 = vadd.f32 0.0, %v1240
        %v1242 = vpop.f32.mrb[0].mxu0
        %1243 = vmatprep.mubr.f32.mxu0 0.0
        %v1244 = vand.u32 %v1041, 4294901760
        %v1245 = vsub.f32 %v1041, %v1244
        %v1246 = vand.u32 %v1245, 4294901760
        %v1247 = vsub.f32 %v1245, %v1246
        %v1248 = vand.u32 %v1247, 4294901760
        %1249 = vmatmul.mubr.f32.gmra.mrb[0].mxu0 %v1248
        %v1250 = vpop.f32.mrb[0].mxu0
        %v1251 = vadd.f32 0.0, %v1250
        %v1252 = vpop.f32.mrb[0].mxu0
        %1253 = vmatprep.mubr.f32.mxu0 0.0
        %v1254 = vand.u32 %v1044, 4294901760
        %v1255 = vsub.f32 %v1044, %v1254
        %v1256 = vand.u32 %v1255, 4294901760
        %v1257 = vsub.f32 %v1255, %v1256
        %v1258 = vand.u32 %v1257, 4294901760
        %1259 = vmatmul.mubr.f32.gmra.mrb[0].mxu0 %v1258
        %v1260 = vpop.f32.mrb[0].mxu0
        %v1261 = vadd.f32 0.0, %v1260
        %v1262 = vpop.f32.mrb[0].mxu0
        %1263 = vmatprep.mubr.f32.mxu0 0.0
        %v1264 = vand.u32 %v1047, 4294901760
        %v1265 = vsub.f32 %v1047, %v1264
        %v1266 = vand.u32 %v1265, 4294901760
        %v1267 = vsub.f32 %v1265, %v1266
        %v1268 = vand.u32 %v1267, 4294901760
        %1269 = vmatmul.mubr.f32.gmra.mrb[0].mxu0 %v1268
        %v1270 = vpop.f32.mrb[0].mxu0
        %v1271 = vadd.f32 0.0, %v1270
        %v1272 = vpop.f32.mrb[0].mxu0
        %1273 = vmatprep.mubr.f32.mxu0 0.0
        %v1274 = vand.u32 %v1050, 4294901760
        %v1275 = vsub.f32 %v1050, %v1274
        %v1276 = vand.u32 %v1275, 4294901760
        %v1277 = vsub.f32 %v1275, %v1276
        %v1278 = vand.u32 %v1277, 4294901760
        %1279 = vmatmul.mubr.f32.gmra.mrb[0].mxu0 %v1278
        %v1280 = vpop.f32.mrb[0].mxu0
        %v1281 = vadd.f32 0.0, %v1280
        %v1282 = vpop.f32.mrb[0].mxu0
        %1283 = vmatprep.mubr.f32.mxu0 0.0
        %v1284 = vand.u32 %v1053, 4294901760
        %v1285 = vsub.f32 %v1053, %v1284
        %v1286 = vand.u32 %v1285, 4294901760
        %v1287 = vsub.f32 %v1285, %v1286
        %v1288 = vand.u32 %v1287, 4294901760
        %1289 = vmatmul.mubr.f32.gmra.mrb[0].mxu0 %v1288
        %v1290 = vpop.f32.mrb[0].mxu0
        %v1291 = vadd.f32 0.0, %v1290
        %v1292 = vpop.f32.mrb[0].mxu0
        %1293 = vmatprep.mubr.f32.mxu0 0.0
        %v1294 = vand.u32 %v1056, 4294901760
        %v1295 = vsub.f32 %v1056, %v1294
        %v1296 = vand.u32 %v1295, 4294901760
        %v1297 = vsub.f32 %v1295, %v1296
        %v1298 = vand.u32 %v1297, 4294901760
        %1299 = vmatmul.mubr.f32.gmra.mrb[0].mxu0 %v1298
        %v1300 = vpop.f32.mrb[0].mxu0
        %v1301 = vadd.f32 0.0, %v1300
        %v1302 = vpop.f32.mrb[0].mxu0
        %1303 = vmatprep.mubr.f32.mxu0 0.0
        %v1304 = vand.u32 %v1059, 4294901760
        %v1305 = vsub.f32 %v1059, %v1304
        %v1306 = vand.u32 %v1305, 4294901760
        %v1307 = vsub.f32 %v1305, %v1306
        %v1308 = vand.u32 %v1307, 4294901760
        %1309 = vmatmul.mubr.f32.gmra.mrb[0].mxu0 %v1308
        %v1310 = vpop.f32.mrb[0].mxu0
        %v1311 = vadd.f32 0.0, %v1310
        %v1312 = vpop.f32.mrb[0].mxu0
        %1313 = vmatprep.mubr.f32.mxu0 0.0
        %v1314 = vand.u32 %v1062, 4294901760
        %v1315 = vsub.f32 %v1062, %v1314
        %v1316 = vand.u32 %v1315, 4294901760
        %v1317 = vsub.f32 %v1315, %v1316
        %v1318 = vand.u32 %v1317, 4294901760
        %1319 = vmatmul.mubr.f32.gmra.mrb[0].mxu0 %v1318
        %v1320 = vpop.f32.mrb[0].mxu0
        %v1321 = vadd.f32 0.0, %v1320
        %v1322 = vpop.f32.mrb[0].mxu0
        %1323 = vmatprep.mubr.f32.mxu0 0.0
        %v1324 = vand.u32 %v1065, 4294901760
        %v1325 = vsub.f32 %v1065, %v1324
        %v1326 = vand.u32 %v1325, 4294901760
        %v1327 = vsub.f32 %v1325, %v1326
        %v1328 = vand.u32 %v1327, 4294901760
        %1329 = vmatmul.mubr.f32.gmra.mrb[0].mxu0 %v1328
        %v1330 = vpop.f32.mrb[0].mxu0
        %v1331 = vadd.f32 0.0, %v1330
        %v1332 = vpop.f32.mrb[0].mxu0
        %1333 = vmatprep.mubr.f32.mxu0 0.0
        %v1334 = vand.u32 %v1068, 4294901760
        %v1335 = vsub.f32 %v1068, %v1334
        %v1336 = vand.u32 %v1335, 4294901760
        %v1337 = vsub.f32 %v1335, %v1336
        %v1338 = vand.u32 %v1337, 4294901760
        %1339 = vmatmul.mubr.f32.gmra.mrb[0].mxu0 %v1338
        %v1340 = vpop.f32.mrb[0].mxu0
        %v1341 = vadd.f32 0.0, %v1340
        %v1342 = vpop.f32.mrb[0].mxu0
        %1343 = vmatprep.mubr.f32.mxu0 0.0
        %v1344 = vand.u32 %v1071, 4294901760
        %v1345 = vsub.f32 %v1071, %v1344
        %v1346 = vand.u32 %v1345, 4294901760
        %v1347 = vsub.f32 %v1345, %v1346
        %v1348 = vand.u32 %v1347, 4294901760
        %1349 = vmatmul.mubr.f32.gmra.mrb[0].mxu0 %v1348
        %v1350 = vpop.f32.mrb[0].mxu0
        %v1351 = vadd.f32 0.0, %v1350
        %v1352 = vpop.f32.mrb[0].mxu0
        %1353 = vmatprep.mubr.f32.mxu0 0.0
        %v1354 = vand.u32 %v1074, 4294901760
        %v1355 = vsub.f32 %v1074, %v1354
        %v1356 = vand.u32 %v1355, 4294901760
        %v1357 = vsub.f32 %v1355, %v1356
        %v1358 = vand.u32 %v1357, 4294901760
        %1359 = vmatmul.mubr.f32.gmra.mrb[0].mxu0 %v1358
        %v1360 = vpop.f32.mrb[0].mxu0
        %v1361 = vadd.f32 0.0, %v1360
        %v1362 = vpop.f32.mrb[0].mxu0
        %1363 = vmatprep.mubr.f32.mxu0 0.0
        %v1364 = vand.u32 %v1077, 4294901760
        %v1365 = vsub.f32 %v1077, %v1364
        %v1366 = vand.u32 %v1365, 4294901760
        %v1367 = vsub.f32 %v1365, %v1366
        %v1368 = vand.u32 %v1367, 4294901760
        %1369 = vmatmul.mubr.f32.gmra.mrb[0].mxu0 %v1368
        %v1370 = vpop.f32.mrb[0].mxu0
        %v1371 = vadd.f32 0.0, %v1370
        %v1372 = vpop.f32.mrb[0].mxu0
        %1373 = vmatprep.mubr.f32.mxu0 0.0
        %v1374 = vand.u32 %v1080, 4294901760
        %v1375 = vsub.f32 %v1080, %v1374
        %v1376 = vand.u32 %v1375, 4294901760
        %v1377 = vsub.f32 %v1375, %v1376
        %v1378 = vand.u32 %v1377, 4294901760
        %1379 = vmatmul.mubr.f32.gmra.mrb[0].mxu0 %v1378
        %v1380 = vpop.f32.mrb[0].mxu0
        %v1381 = vadd.f32 0.0, %v1380
        %v1382 = vpop.f32.mrb[0].mxu0
        %1383 = vmatprep.mubr.f32.mxu0 0.0
        %v1384 = vand.u32 %v1083, 4294901760
        %v1385 = vsub.f32 %v1083, %v1384
        %v1386 = vand.u32 %v1385, 4294901760
        %v1387 = vsub.f32 %v1385, %v1386
        %v1388 = vand.u32 %v1387, 4294901760
        %1389 = vmatmul.mubr.f32.gmra.mrb[0].mxu0 %v1388
        %v1390 = vpop.f32.mrb[0].mxu0
        %v1391 = vadd.f32 0.0, %v1390
        %v1392 = vpop.f32.mrb[0].mxu0
        %1393 = vmatprep.mubr.f32.mxu0 0.0
        %v1394 = vand.u32 %v1086, 4294901760
        %v1395 = vsub.f32 %v1086, %v1394
        %v1396 = vand.u32 %v1395, 4294901760
        %v1397 = vsub.f32 %v1395, %v1396
        %v1398 = vand.u32 %v1397, 4294901760
        %1399 = vmatmul.mubr.f32.gmra.mrb[0].mxu0 %v1398
        %v1400 = vpop.f32.mrb[0].mxu0
        %v1401 = vadd.f32 0.0, %v1400
        %v1402 = vpop.f32.mrb[0].mxu0
        %1403 = vmatprep.mubr.f32.mxu0 0.0
        %v1404 = vand.u32 %v1089, 4294901760
        %v1405 = vsub.f32 %v1089, %v1404
        %v1406 = vand.u32 %v1405, 4294901760
        %v1407 = vsub.f32 %v1405, %v1406
        %v1408 = vand.u32 %v1407, 4294901760
        %1409 = vmatmul.mubr.f32.gmra.mrb[0].mxu0 %v1408
        %v1410 = vpop.f32.mrb[0].mxu0
        %v1411 = vadd.f32 0.0, %v1410
        %v1412 = vpop.f32.mrb[0].mxu0
        %1413 = vmatprep.mubr.f32.mxu0 0.0
        %v1414 = vand.u32 %v1092, 4294901760
        %v1415 = vsub.f32 %v1092, %v1414
        %v1416 = vand.u32 %v1415, 4294901760
        %v1417 = vsub.f32 %v1415, %v1416
        %v1418 = vand.u32 %v1417, 4294901760
        %1419 = vmatmul.mubr.f32.gmra.mrb[0].mxu0 %v1418
        %v1420 = vpop.f32.mrb[0].mxu0
        %v1421 = vadd.f32 0.0, %v1420
        %v1422 = vpop.f32.mrb[0].mxu0
        %1423 = vmatprep.mubr.f32.mxu0 0.0
        %v1424 = vand.u32 %v1095, 4294901760
        %v1425 = vsub.f32 %v1095, %v1424
        %v1426 = vand.u32 %v1425, 4294901760
        %v1427 = vsub.f32 %v1425, %v1426
        %v1428 = vand.u32 %v1427, 4294901760
        %1429 = vmatmul.mubr.f32.gmra.mrb[0].mxu0 %v1428
        %v1430 = vpop.f32.mrb[0].mxu0
        %v1431 = vadd.f32 0.0, %v1430
        %v1432 = vpop.f32.mrb[0].mxu0
        %1433 = vmatprep.mubr.f32.mxu0 0.0
        %v1434 = vand.u32 %v1098, 4294901760
        %v1435 = vsub.f32 %v1098, %v1434
        %v1436 = vand.u32 %v1435, 4294901760
        %v1437 = vsub.f32 %v1435, %v1436
        %v1438 = vand.u32 %v1437, 4294901760
        %1439 = vmatmul.mubr.f32.gmra.mrb[0].mxu0 %v1438
        %v1440 = vpop.f32.mrb[0].mxu0
        %v1441 = vadd.f32 0.0, %v1440
        %v1442 = vpop.f32.mrb[0].mxu0
        %1443 = vmatprep.mubr.f32.mxu0 0.0
        %v1444 = vand.u32 %v1101, 4294901760
        %v1445 = vsub.f32 %v1101, %v1444
        %v1446 = vand.u32 %v1445, 4294901760
        %v1447 = vsub.f32 %v1445, %v1446
        %v1448 = vand.u32 %v1447, 4294901760
        %1449 = vmatmul.mubr.f32.gmra.mrb[0].mxu0 %v1448
        %v1450 = vpop.f32.mrb[0].mxu0
        %v1451 = vadd.f32 0.0, %v1450
        %v1452 = vpop.f32.mrb[0].mxu0
        %1453 = vmatprep.mubr.f32.mxu0 0.0
        %v1454 = vand.u32 %v1104, 4294901760
        %v1455 = vsub.f32 %v1104, %v1454
        %v1456 = vand.u32 %v1455, 4294901760
        %v1457 = vsub.f32 %v1455, %v1456
        %v1458 = vand.u32 %v1457, 4294901760
        %1459 = vmatmul.mubr.f32.gmra.mrb[0].mxu0 %v1458
        %v1460 = vpop.f32.mrb[0].mxu0
        %v1461 = vadd.f32 0.0, %v1460
        %v1462 = vpop.f32.mrb[0].mxu0
        %1463 = vmatprep.mubr.f32.mxu0 0.0
        %v1464 = vand.u32 %v1107, 4294901760
        %v1465 = vsub.f32 %v1107, %v1464
        %v1466 = vand.u32 %v1465, 4294901760
        %v1467 = vsub.f32 %v1465, %v1466
        %v1468 = vand.u32 %v1467, 4294901760
        %1469 = vmatmul.mubr.f32.gmra.mrb[0].mxu0 %v1468
        %v1470 = vpop.f32.mrb[0].mxu0
        %v1471 = vadd.f32 0.0, %v1470
        %v1472 = vpop.f32.mrb[0].mxu0
        %1473 = vmatprep.mubr.f32.mxu0 0.0
        %v1474 = vand.u32 %v1110, 4294901760
        %v1475 = vsub.f32 %v1110, %v1474
        %v1476 = vand.u32 %v1475, 4294901760
        %v1477 = vsub.f32 %v1475, %v1476
        %v1478 = vand.u32 %v1477, 4294901760
        %1479 = vmatmul.mubr.f32.gmra.mrb[0].mxu0 %v1478
        %v1480 = vpop.f32.mrb[0].mxu0
        %v1481 = vadd.f32 0.0, %v1480
        %v1482 = vpop.f32.mrb[0].mxu0
        %1483 = vmatprep.mubr.f32.mxu0 0.0
        %v1484 = vand.u32 %v1113, 4294901760
        %v1485 = vsub.f32 %v1113, %v1484
        %v1486 = vand.u32 %v1485, 4294901760
        %v1487 = vsub.f32 %v1485, %v1486
        %v1488 = vand.u32 %v1487, 4294901760
        %1489 = vmatmul.mubr.f32.gmra.mrb[0].mxu0 %v1488
        %v1490 = vpop.f32.mrb[0].mxu0
        %v1491 = vadd.f32 0.0, %v1490
        %v1492 = vpop.f32.mrb[0].mxu0
        %1493 = vmatprep.mubr.f32.mxu0 0.0
        %v1494 = vand.u32 %v1116, 4294901760
        %v1495 = vsub.f32 %v1116, %v1494
        %v1496 = vand.u32 %v1495, 4294901760
        %v1497 = vsub.f32 %v1495, %v1496
        %v1498 = vand.u32 %v1497, 4294901760
        %1499 = vmatmul.mubr.f32.gmra.mrb[0].mxu0 %v1498
        %v1500 = vpop.f32.mrb[0].mxu0
        %v1501 = vadd.f32 0.0, %v1500
        %v1502 = vpop.f32.mrb[0].mxu0
        %1503 = vmatprep.mubr.f32.mxu0 0.0
        %v1504 = vand.u32 %v1119, 4294901760
        %v1505 = vsub.f32 %v1119, %v1504
        %v1506 = vand.u32 %v1505, 4294901760
        %v1507 = vsub.f32 %v1505, %v1506
        %v1508 = vand.u32 %v1507, 4294901760
        %1509 = vmatmul.mubr.f32.gmra.mrb[0].mxu0 %v1508
        %v1510 = vpop.f32.mrb[0].mxu0
        %v1511 = vadd.f32 0.0, %v1510
        %v1512 = vpop.f32.mrb[0].mxu0
        %1513 = vdwg.mxu0
        %1514 = vmatprep.subr.mxu0 0.0
        %v1515 = vand.u32 %v1016, 4294901760
        %v1516 = vsub.f32 %v1016, %v1515
        %v1517 = vand.u32 %v1516, 4294901760
        %v1518 = vsub.f32 %v1516, %v1517
        %v1519 = vand.u32 %v1518, 4294901760
        %1520 = vmatpush1.msra.mxu0 %v1519
        %1521 = vmatprep.subr.mxu0 0.0
        %v1522 = vand.u32 %v1017, 4294901760
        %v1523 = vsub.f32 %v1017, %v1522
        %v1524 = vand.u32 %v1523, 4294901760
        %v1525 = vsub.f32 %v1523, %v1524
        %v1526 = vand.u32 %v1525, 4294901760
        %1527 = vmatpush1.msra.mxu0 %v1526
        %1528 = vmatprep.subr.mxu0 0.0
        %v1529 = vand.u32 %v1018, 4294901760
        %v1530 = vsub.f32 %v1018, %v1529
        %v1531 = vand.u32 %v1530, 4294901760
        %v1532 = vsub.f32 %v1530, %v1531
        %v1533 = vand.u32 %v1532, 4294901760
        %1534 = vmatpush1.msra.mxu0 %v1533
        %1535 = vmatprep.subr.mxu0 0.0
        %v1536 = vand.u32 %v1019, 4294901760
        %v1537 = vsub.f32 %v1019, %v1536
        %v1538 = vand.u32 %v1537, 4294901760
        %v1539 = vsub.f32 %v1537, %v1538
        %v1540 = vand.u32 %v1539, 4294901760
        %1541 = vmatpush1.msra.mxu0 %v1540
        %1542 = vmatprep.subr.mxu0 0.0
        %v1543 = vand.u32 %v1020, 4294901760
        %v1544 = vsub.f32 %v1020, %v1543
        %v1545 = vand.u32 %v1544, 4294901760
        %v1546 = vsub.f32 %v1544, %v1545
        %v1547 = vand.u32 %v1546, 4294901760
        %1548 = vmatpush1.msra.mxu0 %v1547
        %1549 = vmatprep.subr.mxu0 0.0
        %v1550 = vand.u32 %v1021, 4294901760
        %v1551 = vsub.f32 %v1021, %v1550
        %v1552 = vand.u32 %v1551, 4294901760
        %v1553 = vsub.f32 %v1551, %v1552
        %v1554 = vand.u32 %v1553, 4294901760
        %1555 = vmatpush1.msra.mxu0 %v1554
        %1556 = vmatprep.subr.mxu0 0.0
        %v1557 = vand.u32 %v1022, 4294901760
        %v1558 = vsub.f32 %v1022, %v1557
        %v1559 = vand.u32 %v1558, 4294901760
        %v1560 = vsub.f32 %v1558, %v1559
        %v1561 = vand.u32 %v1560, 4294901760
        %1562 = vmatpush1.msra.mxu0 %v1561
        %1563 = vmatprep.subr.mxu0 0.0
        %v1564 = vand.u32 %v1023, 4294901760
        %v1565 = vsub.f32 %v1023, %v1564
        %v1566 = vand.u32 %v1565, 4294901760
        %v1567 = vsub.f32 %v1565, %v1566
        %v1568 = vand.u32 %v1567, 4294901760
        %1569 = vmatpush1.msra.mxu0 %v1568
        %1570 = vmatprep.subr.mxu0 0.0
        %1571 = vmatpush1.msra.mxu0 0.0
        %1572 = vmatprep.subr.mxu0 0.0
        %1573 = vmatpush1.msra.mxu0 0.0
        %1574 = vmatprep.subr.mxu0 0.0
        %1575 = vmatpush1.msra.mxu0 0.0
        %1576 = vmatprep.subr.mxu0 0.0
        %1577 = vmatpush1.msra.mxu0 0.0
        %1578 = vmatprep.subr.mxu0 0.0
        %1579 = vmatpush1.msra.mxu0 0.0
        %1580 = vmatprep.subr.mxu0 0.0
        %1581 = vmatpush1.msra.mxu0 0.0
        %1582 = vmatprep.subr.mxu0 0.0
        %1583 = vmatpush1.msra.mxu0 0.0
        %1584 = vmatprep.subr.mxu0 0.0
        %1585 = vmatpush1.msra.mxu0 0.0
        %1586 = vmatprep.subr.mxu0 0.0
        %1587 = vmatpush1.msra.mxu0 0.0
        %1588 = vmatprep.subr.mxu0 0.0
        %1589 = vmatpush1.msra.mxu0 0.0
        %1590 = vmatprep.subr.mxu0 0.0
        %1591 = vmatpush1.msra.mxu0 0.0
        %1592 = vmatprep.subr.mxu0 0.0
        %1593 = vmatpush1.msra.mxu0 0.0
        %1594 = vmatprep.subr.mxu0 0.0
        %1595 = vmatpush1.msra.mxu0 0.0
        %1596 = vmatprep.subr.mxu0 0.0
        %1597 = vmatpush1.msra.mxu0 0.0
        %1598 = vmatprep.subr.mxu0 0.0
        %1599 = vmatpush1.msra.mxu0 0.0
        %1600 = vmatprep.subr.mxu0 0.0
        %1601 = vmatpush1.msra.mxu0 0.0
        %1602 = vmatprep.subr.mxu0 0.0
        %1603 = vmatpush1.msra.mxu0 0.0
        %1604 = vmatprep.subr.mxu0 0.0
        %1605 = vmatpush1.msra.mxu0 0.0
        %1606 = vmatprep.subr.mxu0 0.0
        %1607 = vmatpush1.msra.mxu0 0.0
        %1608 = vmatprep.subr.mxu0 0.0
        %1609 = vmatpush1.msra.mxu0 0.0
        %1610 = vmatprep.subr.mxu0 0.0
        %1611 = vmatpush1.msra.mxu0 0.0
        %1612 = vmatprep.subr.mxu0 0.0
        %1613 = vmatpush1.msra.mxu0 0.0
        %1614 = vmatprep.subr.mxu0 0.0
        %1615 = vmatpush1.msra.mxu0 0.0
        %1616 = vmatprep.subr.mxu0 0.0
        %1617 = vmatpush1.msra.mxu0 0.0
        %1618 = vmatprep.mubr.f32.mxu0 0.0
        %v1619 = vand.u32 %v1026, 4294901760
        %1620 = vmatmul.mubr.f32.gmra.mrb[0].mxu0 %v1619
        %v1621 = vpop.f32.mrb[0].mxu0
        %v1622 = vadd.f32 %v1201, %v1621
        %v1623 = vpop.f32.mrb[0].mxu0
        %1624 = vmatprep.mubr.f32.mxu0 0.0
        %v1625 = vand.u32 %v1029, 4294901760
        %1626 = vmatmul.mubr.f32.gmra.mrb[0].mxu0 %v1625
        %v1627 = vpop.f32.mrb[0].mxu0
        %v1628 = vadd.f32 %v1211, %v1627
        %v1629 = vpop.f32.mrb[0].mxu0
        %1630 = vmatprep.mubr.f32.mxu0 0.0
        %v1631 = vand.u32 %v1032, 4294901760
        %1632 = vmatmul.mubr.f32.gmra.mrb[0].mxu0 %v1631
        %v1633 = vpop.f32.mrb[0].mxu0
        %v1634 = vadd.f32 %v1221, %v1633
        %v1635 = vpop.f32.mrb[0].mxu0
        %1636 = vmatprep.mubr.f32.mxu0 0.0
        %v1637 = vand.u32 %v1035, 4294901760
        %1638 = vmatmul.mubr.f32.gmra.mrb[0].mxu0 %v1637
        %v1639 = vpop.f32.mrb[0].mxu0
        %v1640 = vadd.f32 %v1231, %v1639
        %v1641 = vpop.f32.mrb[0].mxu0
        %1642 = vmatprep.mubr.f32.mxu0 0.0
        %v1643 = vand.u32 %v1038, 4294901760
        %1644 = vmatmul.mubr.f32.gmra.mrb[0].mxu0 %v1643
        %v1645 = vpop.f32.mrb[0].mxu0
        %v1646 = vadd.f32 %v1241, %v1645
        %v1647 = vpop.f32.mrb[0].mxu0
        %1648 = vmatprep.mubr.f32.mxu0 0.0
        %v1649 = vand.u32 %v1041, 4294901760
        %1650 = vmatmul.mubr.f32.gmra.mrb[0].mxu0 %v1649
        %v1651 = vpop.f32.mrb[0].mxu0
        %v1652 = vadd.f32 %v1251, %v1651
        %v1653 = vpop.f32.mrb[0].mxu0
        %1654 = vmatprep.mubr.f32.mxu0 0.0
        %v1655 = vand.u32 %v1044, 4294901760
        %1656 = vmatmul.mubr.f32.gmra.mrb[0].mxu0 %v1655
        %v1657 = vpop.f32.mrb[0].mxu0
        %v1658 = vadd.f32 %v1261, %v1657
        %v1659 = vpop.f32.mrb[0].mxu0
        %1660 = vmatprep.mubr.f32.mxu0 0.0
        %v1661 = vand.u32 %v1047, 4294901760
        %1662 = vmatmul.mubr.f32.gmra.mrb[0].mxu0 %v1661
        %v1663 = vpop.f32.mrb[0].mxu0
        %v1664 = vadd.f32 %v1271, %v1663
        %v1665 = vpop.f32.mrb[0].mxu0
        %1666 = vmatprep.mubr.f32.mxu0 0.0
        %v1667 = vand.u32 %v1050, 4294901760
        %1668 = vmatmul.mubr.f32.gmra.mrb[0].mxu0 %v1667
        %v1669 = vpop.f32.mrb[0].mxu0
        %v1670 = vadd.f32 %v1281, %v1669
        %v1671 = vpop.f32.mrb[0].mxu0
        %1672 = vmatprep.mubr.f32.mxu0 0.0
        %v1673 = vand.u32 %v1053, 4294901760
        %1674 = vmatmul.mubr.f32.gmra.mrb[0].mxu0 %v1673
        %v1675 = vpop.f32.mrb[0].mxu0
        %v1676 = vadd.f32 %v1291, %v1675
        %v1677 = vpop.f32.mrb[0].mxu0
        %1678 = vmatprep.mubr.f32.mxu0 0.0
        %v1679 = vand.u32 %v1056, 4294901760
        %1680 = vmatmul.mubr.f32.gmra.mrb[0].mxu0 %v1679
        %v1681 = vpop.f32.mrb[0].mxu0
        %v1682 = vadd.f32 %v1301, %v1681
        %v1683 = vpop.f32.mrb[0].mxu0
        %1684 = vmatprep.mubr.f32.mxu0 0.0
        %v1685 = vand.u32 %v1059, 4294901760
        %1686 = vmatmul.mubr.f32.gmra.mrb[0].mxu0 %v1685
        %v1687 = vpop.f32.mrb[0].mxu0
        %v1688 = vadd.f32 %v1311, %v1687
        %v1689 = vpop.f32.mrb[0].mxu0
        %1690 = vmatprep.mubr.f32.mxu0 0.0
        %v1691 = vand.u32 %v1062, 4294901760
        %1692 = vmatmul.mubr.f32.gmra.mrb[0].mxu0 %v1691
        %v1693 = vpop.f32.mrb[0].mxu0
        %v1694 = vadd.f32 %v1321, %v1693
        %v1695 = vpop.f32.mrb[0].mxu0
        %1696 = vmatprep.mubr.f32.mxu0 0.0
        %v1697 = vand.u32 %v1065, 4294901760
        %1698 = vmatmul.mubr.f32.gmra.mrb[0].mxu0 %v1697
        %v1699 = vpop.f32.mrb[0].mxu0
        %v1700 = vadd.f32 %v1331, %v1699
        %v1701 = vpop.f32.mrb[0].mxu0
        %1702 = vmatprep.mubr.f32.mxu0 0.0
        %v1703 = vand.u32 %v1068, 4294901760
        %1704 = vmatmul.mubr.f32.gmra.mrb[0].mxu0 %v1703
        %v1705 = vpop.f32.mrb[0].mxu0
        %v1706 = vadd.f32 %v1341, %v1705
        %v1707 = vpop.f32.mrb[0].mxu0
        %1708 = vmatprep.mubr.f32.mxu0 0.0
        %v1709 = vand.u32 %v1071, 4294901760
        %1710 = vmatmul.mubr.f32.gmra.mrb[0].mxu0 %v1709
        %v1711 = vpop.f32.mrb[0].mxu0
        %v1712 = vadd.f32 %v1351, %v1711
        %v1713 = vpop.f32.mrb[0].mxu0
        %1714 = vmatprep.mubr.f32.mxu0 0.0
        %v1715 = vand.u32 %v1074, 4294901760
        %1716 = vmatmul.mubr.f32.gmra.mrb[0].mxu0 %v1715
        %v1717 = vpop.f32.mrb[0].mxu0
        %v1718 = vadd.f32 %v1361, %v1717
        %v1719 = vpop.f32.mrb[0].mxu0
        %1720 = vmatprep.mubr.f32.mxu0 0.0
        %v1721 = vand.u32 %v1077, 4294901760
        %1722 = vmatmul.mubr.f32.gmra.mrb[0].mxu0 %v1721
        %v1723 = vpop.f32.mrb[0].mxu0
        %v1724 = vadd.f32 %v1371, %v1723
        %v1725 = vpop.f32.mrb[0].mxu0
        %1726 = vmatprep.mubr.f32.mxu0 0.0
        %v1727 = vand.u32 %v1080, 4294901760
        %1728 = vmatmul.mubr.f32.gmra.mrb[0].mxu0 %v1727
        %v1729 = vpop.f32.mrb[0].mxu0
        %v1730 = vadd.f32 %v1381, %v1729
        %v1731 = vpop.f32.mrb[0].mxu0
        %1732 = vmatprep.mubr.f32.mxu0 0.0
        %v1733 = vand.u32 %v1083, 4294901760
        %1734 = vmatmul.mubr.f32.gmra.mrb[0].mxu0 %v1733
        %v1735 = vpop.f32.mrb[0].mxu0
        %v1736 = vadd.f32 %v1391, %v1735
        %v1737 = vpop.f32.mrb[0].mxu0
        %1738 = vmatprep.mubr.f32.mxu0 0.0
        %v1739 = vand.u32 %v1086, 4294901760
        %1740 = vmatmul.mubr.f32.gmra.mrb[0].mxu0 %v1739
        %v1741 = vpop.f32.mrb[0].mxu0
        %v1742 = vadd.f32 %v1401, %v1741
        %v1743 = vpop.f32.mrb[0].mxu0
        %1744 = vmatprep.mubr.f32.mxu0 0.0
        %v1745 = vand.u32 %v1089, 4294901760
        %1746 = vmatmul.mubr.f32.gmra.mrb[0].mxu0 %v1745
        %v1747 = vpop.f32.mrb[0].mxu0
        %v1748 = vadd.f32 %v1411, %v1747
        %v1749 = vpop.f32.mrb[0].mxu0
        %1750 = vmatprep.mubr.f32.mxu0 0.0
        %v1751 = vand.u32 %v1092, 4294901760
        %1752 = vmatmul.mubr.f32.gmra.mrb[0].mxu0 %v1751
        %v1753 = vpop.f32.mrb[0].mxu0
        %v1754 = vadd.f32 %v1421, %v1753
        %v1755 = vpop.f32.mrb[0].mxu0
        %1756 = vmatprep.mubr.f32.mxu0 0.0
        %v1757 = vand.u32 %v1095, 4294901760
        %1758 = vmatmul.mubr.f32.gmra.mrb[0].mxu0 %v1757
        %v1759 = vpop.f32.mrb[0].mxu0
        %v1760 = vadd.f32 %v1431, %v1759
        %v1761 = vpop.f32.mrb[0].mxu0
        %1762 = vmatprep.mubr.f32.mxu0 0.0
        %v1763 = vand.u32 %v1098, 4294901760
        %1764 = vmatmul.mubr.f32.gmra.mrb[0].mxu0 %v1763
        %v1765 = vpop.f32.mrb[0].mxu0
        %v1766 = vadd.f32 %v1441, %v1765
        %v1767 = vpop.f32.mrb[0].mxu0
        %1768 = vmatprep.mubr.f32.mxu0 0.0
        %v1769 = vand.u32 %v1101, 4294901760
        %1770 = vmatmul.mubr.f32.gmra.mrb[0].mxu0 %v1769
        %v1771 = vpop.f32.mrb[0].mxu0
        %v1772 = vadd.f32 %v1451, %v1771
        %v1773 = vpop.f32.mrb[0].mxu0
        %1774 = vmatprep.mubr.f32.mxu0 0.0
        %v1775 = vand.u32 %v1104, 4294901760
        %1776 = vmatmul.mubr.f32.gmra.mrb[0].mxu0 %v1775
        %v1777 = vpop.f32.mrb[0].mxu0
        %v1778 = vadd.f32 %v1461, %v1777
        %v1779 = vpop.f32.mrb[0].mxu0
        %1780 = vmatprep.mubr.f32.mxu0 0.0
        %v1781 = vand.u32 %v1107, 4294901760
        %1782 = vmatmul.mubr.f32.gmra.mrb[0].mxu0 %v1781
        %v1783 = vpop.f32.mrb[0].mxu0
        %v1784 = vadd.f32 %v1471, %v1783
        %v1785 = vpop.f32.mrb[0].mxu0
        %1786 = vmatprep.mubr.f32.mxu0 0.0
        %v1787 = vand.u32 %v1110, 4294901760
        %1788 = vmatmul.mubr.f32.gmra.mrb[0].mxu0 %v1787
        %v1789 = vpop.f32.mrb[0].mxu0
        %v1790 = vadd.f32 %v1481, %v1789
        %v1791 = vpop.f32.mrb[0].mxu0
        %1792 = vmatprep.mubr.f32.mxu0 0.0
        %v1793 = vand.u32 %v1113, 4294901760
        %1794 = vmatmul.mubr.f32.gmra.mrb[0].mxu0 %v1793
        %v1795 = vpop.f32.mrb[0].mxu0
        %v1796 = vadd.f32 %v1491, %v1795
        %v1797 = vpop.f32.mrb[0].mxu0
        %1798 = vmatprep.mubr.f32.mxu0 0.0
        %v1799 = vand.u32 %v1116, 4294901760
        %1800 = vmatmul.mubr.f32.gmra.mrb[0].mxu0 %v1799
        %v1801 = vpop.f32.mrb[0].mxu0
        %v1802 = vadd.f32 %v1501, %v1801
        %v1803 = vpop.f32.mrb[0].mxu0
        %1804 = vmatprep.mubr.f32.mxu0 0.0
        %v1805 = vand.u32 %v1119, 4294901760
        %1806 = vmatmul.mubr.f32.gmra.mrb[0].mxu0 %v1805
        %v1807 = vpop.f32.mrb[0].mxu0
        %v1808 = vadd.f32 %v1511, %v1807
        %v1809 = vpop.f32.mrb[0].mxu0
        %1810 = vdwg.mxu0
        %1811 = vmatprep.subr.mxu0 0.0
        %v1812 = vand.u32 %v1016, 4294901760
        %v1813 = vsub.f32 %v1016, %v1812
        %1814 = vmatpush1.msra.mxu0 %v1813
        %1815 = vmatprep.subr.mxu0 0.0
        %v1816 = vand.u32 %v1017, 4294901760
        %v1817 = vsub.f32 %v1017, %v1816
        %1818 = vmatpush1.msra.mxu0 %v1817
        %1819 = vmatprep.subr.mxu0 0.0
        %v1820 = vand.u32 %v1018, 4294901760
        %v1821 = vsub.f32 %v1018, %v1820
        %1822 = vmatpush1.msra.mxu0 %v1821
        %1823 = vmatprep.subr.mxu0 0.0
        %v1824 = vand.u32 %v1019, 4294901760
        %v1825 = vsub.f32 %v1019, %v1824
        %1826 = vmatpush1.msra.mxu0 %v1825
        %1827 = vmatprep.subr.mxu0 0.0
        %v1828 = vand.u32 %v1020, 4294901760
        %v1829 = vsub.f32 %v1020, %v1828
        %1830 = vmatpush1.msra.mxu0 %v1829
        %1831 = vmatprep.subr.mxu0 0.0
        %v1832 = vand.u32 %v1021, 4294901760
        %v1833 = vsub.f32 %v1021, %v1832
        %1834 = vmatpush1.msra.mxu0 %v1833
        %1835 = vmatprep.subr.mxu0 0.0
        %v1836 = vand.u32 %v1022, 4294901760
        %v1837 = vsub.f32 %v1022, %v1836
        %1838 = vmatpush1.msra.mxu0 %v1837
        %1839 = vmatprep.subr.mxu0 0.0
        %v1840 = vand.u32 %v1023, 4294901760
        %v1841 = vsub.f32 %v1023, %v1840
        %1842 = vmatpush1.msra.mxu0 %v1841
        %1843 = vmatprep.subr.mxu0 0.0
        %1844 = vmatpush1.msra.mxu0 0.0
        %1845 = vmatprep.subr.mxu0 0.0
        %1846 = vmatpush1.msra.mxu0 0.0
        %1847 = vmatprep.subr.mxu0 0.0
        %1848 = vmatpush1.msra.mxu0 0.0
        %1849 = vmatprep.subr.mxu0 0.0
        %1850 = vmatpush1.msra.mxu0 0.0
        %1851 = vmatprep.subr.mxu0 0.0
        %1852 = vmatpush1.msra.mxu0 0.0
        %1853 = vmatprep.subr.mxu0 0.0
        %1854 = vmatpush1.msra.mxu0 0.0
        %1855 = vmatprep.subr.mxu0 0.0
        %1856 = vmatpush1.msra.mxu0 0.0
        %1857 = vmatprep.subr.mxu0 0.0
        %1858 = vmatpush1.msra.mxu0 0.0
        %1859 = vmatprep.subr.mxu0 0.0
        %1860 = vmatpush1.msra.mxu0 0.0
        %1861 = vmatprep.subr.mxu0 0.0
        %1862 = vmatpush1.msra.mxu0 0.0
        %1863 = vmatprep.subr.mxu0 0.0
        %1864 = vmatpush1.msra.mxu0 0.0
        %1865 = vmatprep.subr.mxu0 0.0
        %1866 = vmatpush1.msra.mxu0 0.0
        %1867 = vmatprep.subr.mxu0 0.0
        %1868 = vmatpush1.msra.mxu0 0.0
        %1869 = vmatprep.subr.mxu0 0.0
        %1870 = vmatpush1.msra.mxu0 0.0
        %1871 = vmatprep.subr.mxu0 0.0
        %1872 = vmatpush1.msra.mxu0 0.0
        %1873 = vmatprep.subr.mxu0 0.0
        %1874 = vmatpush1.msra.mxu0 0.0
        %1875 = vmatprep.subr.mxu0 0.0
        %1876 = vmatpush1.msra.mxu0 0.0
        %1877 = vmatprep.subr.mxu0 0.0
        %1878 = vmatpush1.msra.mxu0 0.0
        %1879 = vmatprep.subr.mxu0 0.0
        %1880 = vmatpush1.msra.mxu0 0.0
        %1881 = vmatprep.subr.mxu0 0.0
        %1882 = vmatpush1.msra.mxu0 0.0
        %1883 = vmatprep.subr.mxu0 0.0
        %1884 = vmatpush1.msra.mxu0 0.0
        %1885 = vmatprep.subr.mxu0 0.0
        %1886 = vmatpush1.msra.mxu0 0.0
        %1887 = vmatprep.subr.mxu0 0.0
        %1888 = vmatpush1.msra.mxu0 0.0
        %1889 = vmatprep.subr.mxu0 0.0
        %1890 = vmatpush1.msra.mxu0 0.0
        %1891 = vmatprep.mubr.f32.mxu0 0.0
        %v1892 = vand.u32 %v1026, 4294901760
        %v1893 = vsub.f32 %v1026, %v1892
        %1894 = vmatmul.mubr.f32.gmra.mrb[0].mxu0 %v1893
        %v1895 = vpop.f32.mrb[0].mxu0
        %v1896 = vadd.f32 %v1622, %v1895
        %v1897 = vpop.f32.mrb[0].mxu0
        %1898 = vmatprep.mubr.f32.mxu0 0.0
        %v1899 = vand.u32 %v1029, 4294901760
        %v1900 = vsub.f32 %v1029, %v1899
        %1901 = vmatmul.mubr.f32.gmra.mrb[0].mxu0 %v1900
        %v1902 = vpop.f32.mrb[0].mxu0
        %v1903 = vadd.f32 %v1628, %v1902
        %v1904 = vpop.f32.mrb[0].mxu0
        %1905 = vmatprep.mubr.f32.mxu0 0.0
        %v1906 = vand.u32 %v1032, 4294901760
        %v1907 = vsub.f32 %v1032, %v1906
        %1908 = vmatmul.mubr.f32.gmra.mrb[0].mxu0 %v1907
        %v1909 = vpop.f32.mrb[0].mxu0
        %v1910 = vadd.f32 %v1634, %v1909
        %v1911 = vpop.f32.mrb[0].mxu0
        %1912 = vmatprep.mubr.f32.mxu0 0.0
        %v1913 = vand.u32 %v1035, 4294901760
        %v1914 = vsub.f32 %v1035, %v1913
        %1915 = vmatmul.mubr.f32.gmra.mrb[0].mxu0 %v1914
        %v1916 = vpop.f32.mrb[0].mxu0
        %v1917 = vadd.f32 %v1640, %v1916
        %v1918 = vpop.f32.mrb[0].mxu0
        %1919 = vmatprep.mubr.f32.mxu0 0.0
        %v1920 = vand.u32 %v1038, 4294901760
        %v1921 = vsub.f32 %v1038, %v1920
        %1922 = vmatmul.mubr.f32.gmra.mrb[0].mxu0 %v1921
        %v1923 = vpop.f32.mrb[0].mxu0
        %v1924 = vadd.f32 %v1646, %v1923
        %v1925 = vpop.f32.mrb[0].mxu0
        %1926 = vmatprep.mubr.f32.mxu0 0.0
        %v1927 = vand.u32 %v1041, 4294901760
        %v1928 = vsub.f32 %v1041, %v1927
        %1929 = vmatmul.mubr.f32.gmra.mrb[0].mxu0 %v1928
        %v1930 = vpop.f32.mrb[0].mxu0
        %v1931 = vadd.f32 %v1652, %v1930
        %v1932 = vpop.f32.mrb[0].mxu0
        %1933 = vmatprep.mubr.f32.mxu0 0.0
        %v1934 = vand.u32 %v1044, 4294901760
        %v1935 = vsub.f32 %v1044, %v1934
        %1936 = vmatmul.mubr.f32.gmra.mrb[0].mxu0 %v1935
        %v1937 = vpop.f32.mrb[0].mxu0
        %v1938 = vadd.f32 %v1658, %v1937
        %v1939 = vpop.f32.mrb[0].mxu0
        %1940 = vmatprep.mubr.f32.mxu0 0.0
        %v1941 = vand.u32 %v1047, 4294901760
        %v1942 = vsub.f32 %v1047, %v1941
        %1943 = vmatmul.mubr.f32.gmra.mrb[0].mxu0 %v1942
        %v1944 = vpop.f32.mrb[0].mxu0
        %v1945 = vadd.f32 %v1664, %v1944
        %v1946 = vpop.f32.mrb[0].mxu0
        %1947 = vmatprep.mubr.f32.mxu0 0.0
        %v1948 = vand.u32 %v1050, 4294901760
        %v1949 = vsub.f32 %v1050, %v1948
        %1950 = vmatmul.mubr.f32.gmra.mrb[0].mxu0 %v1949
        %v1951 = vpop.f32.mrb[0].mxu0
        %v1952 = vadd.f32 %v1670, %v1951
        %v1953 = vpop.f32.mrb[0].mxu0
        %1954 = vmatprep.mubr.f32.mxu0 0.0
        %v1955 = vand.u32 %v1053, 4294901760
        %v1956 = vsub.f32 %v1053, %v1955
        %1957 = vmatmul.mubr.f32.gmra.mrb[0].mxu0 %v1956
        %v1958 = vpop.f32.mrb[0].mxu0
        %v1959 = vadd.f32 %v1676, %v1958
        %v1960 = vpop.f32.mrb[0].mxu0
        %1961 = vmatprep.mubr.f32.mxu0 0.0
        %v1962 = vand.u32 %v1056, 4294901760
        %v1963 = vsub.f32 %v1056, %v1962
        %1964 = vmatmul.mubr.f32.gmra.mrb[0].mxu0 %v1963
        %v1965 = vpop.f32.mrb[0].mxu0
        %v1966 = vadd.f32 %v1682, %v1965
        %v1967 = vpop.f32.mrb[0].mxu0
        %1968 = vmatprep.mubr.f32.mxu0 0.0
        %v1969 = vand.u32 %v1059, 4294901760
        %v1970 = vsub.f32 %v1059, %v1969
        %1971 = vmatmul.mubr.f32.gmra.mrb[0].mxu0 %v1970
        %v1972 = vpop.f32.mrb[0].mxu0
        %v1973 = vadd.f32 %v1688, %v1972
        %v1974 = vpop.f32.mrb[0].mxu0
        %1975 = vmatprep.mubr.f32.mxu0 0.0
        %v1976 = vand.u32 %v1062, 4294901760
        %v1977 = vsub.f32 %v1062, %v1976
        %1978 = vmatmul.mubr.f32.gmra.mrb[0].mxu0 %v1977
        %v1979 = vpop.f32.mrb[0].mxu0
        %v1980 = vadd.f32 %v1694, %v1979
        %v1981 = vpop.f32.mrb[0].mxu0
        %1982 = vmatprep.mubr.f32.mxu0 0.0
        %v1983 = vand.u32 %v1065, 4294901760
        %v1984 = vsub.f32 %v1065, %v1983
        %1985 = vmatmul.mubr.f32.gmra.mrb[0].mxu0 %v1984
        %v1986 = vpop.f32.mrb[0].mxu0
        %v1987 = vadd.f32 %v1700, %v1986
        %v1988 = vpop.f32.mrb[0].mxu0
        %1989 = vmatprep.mubr.f32.mxu0 0.0
        %v1990 = vand.u32 %v1068, 4294901760
        %v1991 = vsub.f32 %v1068, %v1990
        %1992 = vmatmul.mubr.f32.gmra.mrb[0].mxu0 %v1991
        %v1993 = vpop.f32.mrb[0].mxu0
        %v1994 = vadd.f32 %v1706, %v1993
        %v1995 = vpop.f32.mrb[0].mxu0
        %1996 = vmatprep.mubr.f32.mxu0 0.0
        %v1997 = vand.u32 %v1071, 4294901760
        %v1998 = vsub.f32 %v1071, %v1997
        %1999 = vmatmul.mubr.f32.gmra.mrb[0].mxu0 %v1998
        %v2000 = vpop.f32.mrb[0].mxu0
        %v2001 = vadd.f32 %v1712, %v2000
        %v2002 = vpop.f32.mrb[0].mxu0
        %2003 = vmatprep.mubr.f32.mxu0 0.0
        %v2004 = vand.u32 %v1074, 4294901760
        %v2005 = vsub.f32 %v1074, %v2004
        %2006 = vmatmul.mubr.f32.gmra.mrb[0].mxu0 %v2005
        %v2007 = vpop.f32.mrb[0].mxu0
        %v2008 = vadd.f32 %v1718, %v2007
        %v2009 = vpop.f32.mrb[0].mxu0
        %2010 = vmatprep.mubr.f32.mxu0 0.0
        %v2011 = vand.u32 %v1077, 4294901760
        %v2012 = vsub.f32 %v1077, %v2011
        %2013 = vmatmul.mubr.f32.gmra.mrb[0].mxu0 %v2012
        %v2014 = vpop.f32.mrb[0].mxu0
        %v2015 = vadd.f32 %v1724, %v2014
        %v2016 = vpop.f32.mrb[0].mxu0
        %2017 = vmatprep.mubr.f32.mxu0 0.0
        %v2018 = vand.u32 %v1080, 4294901760
        %v2019 = vsub.f32 %v1080, %v2018
        %2020 = vmatmul.mubr.f32.gmra.mrb[0].mxu0 %v2019
        %v2021 = vpop.f32.mrb[0].mxu0
        %v2022 = vadd.f32 %v1730, %v2021
        %v2023 = vpop.f32.mrb[0].mxu0
        %2024 = vmatprep.mubr.f32.mxu0 0.0
        %v2025 = vand.u32 %v1083, 4294901760
        %v2026 = vsub.f32 %v1083, %v2025
        %2027 = vmatmul.mubr.f32.gmra.mrb[0].mxu0 %v2026
        %v2028 = vpop.f32.mrb[0].mxu0
        %v2029 = vadd.f32 %v1736, %v2028
        %v2030 = vpop.f32.mrb[0].mxu0
        %2031 = vmatprep.mubr.f32.mxu0 0.0
        %v2032 = vand.u32 %v1086, 4294901760
        %v2033 = vsub.f32 %v1086, %v2032
        %2034 = vmatmul.mubr.f32.gmra.mrb[0].mxu0 %v2033
        %v2035 = vpop.f32.mrb[0].mxu0
        %v2036 = vadd.f32 %v1742, %v2035
        %v2037 = vpop.f32.mrb[0].mxu0
        %2038 = vmatprep.mubr.f32.mxu0 0.0
        %v2039 = vand.u32 %v1089, 4294901760
        %v2040 = vsub.f32 %v1089, %v2039
        %2041 = vmatmul.mubr.f32.gmra.mrb[0].mxu0 %v2040
        %v2042 = vpop.f32.mrb[0].mxu0
        %v2043 = vadd.f32 %v1748, %v2042
        %v2044 = vpop.f32.mrb[0].mxu0
        %2045 = vmatprep.mubr.f32.mxu0 0.0
        %v2046 = vand.u32 %v1092, 4294901760
        %v2047 = vsub.f32 %v1092, %v2046
        %2048 = vmatmul.mubr.f32.gmra.mrb[0].mxu0 %v2047
        %v2049 = vpop.f32.mrb[0].mxu0
        %v2050 = vadd.f32 %v1754, %v2049
        %v2051 = vpop.f32.mrb[0].mxu0
        %2052 = vmatprep.mubr.f32.mxu0 0.0
        %v2053 = vand.u32 %v1095, 4294901760
        %v2054 = vsub.f32 %v1095, %v2053
        %2055 = vmatmul.mubr.f32.gmra.mrb[0].mxu0 %v2054
        %v2056 = vpop.f32.mrb[0].mxu0
        %v2057 = vadd.f32 %v1760, %v2056
        %v2058 = vpop.f32.mrb[0].mxu0
        %2059 = vmatprep.mubr.f32.mxu0 0.0
        %v2060 = vand.u32 %v1098, 4294901760
        %v2061 = vsub.f32 %v1098, %v2060
        %2062 = vmatmul.mubr.f32.gmra.mrb[0].mxu0 %v2061
        %v2063 = vpop.f32.mrb[0].mxu0
        %v2064 = vadd.f32 %v1766, %v2063
        %v2065 = vpop.f32.mrb[0].mxu0
        %2066 = vmatprep.mubr.f32.mxu0 0.0
        %v2067 = vand.u32 %v1101, 4294901760
        %v2068 = vsub.f32 %v1101, %v2067
        %2069 = vmatmul.mubr.f32.gmra.mrb[0].mxu0 %v2068
        %v2070 = vpop.f32.mrb[0].mxu0
        %v2071 = vadd.f32 %v1772, %v2070
        %v2072 = vpop.f32.mrb[0].mxu0
        %2073 = vmatprep.mubr.f32.mxu0 0.0
        %v2074 = vand.u32 %v1104, 4294901760
        %v2075 = vsub.f32 %v1104, %v2074
        %2076 = vmatmul.mubr.f32.gmra.mrb[0].mxu0 %v2075
        %v2077 = vpop.f32.mrb[0].mxu0
        %v2078 = vadd.f32 %v1778, %v2077
        %v2079 = vpop.f32.mrb[0].mxu0
        %2080 = vmatprep.mubr.f32.mxu0 0.0
        %v2081 = vand.u32 %v1107, 4294901760
        %v2082 = vsub.f32 %v1107, %v2081
        %2083 = vmatmul.mubr.f32.gmra.mrb[0].mxu0 %v2082
        %v2084 = vpop.f32.mrb[0].mxu0
        %v2085 = vadd.f32 %v1784, %v2084
        %v2086 = vpop.f32.mrb[0].mxu0
        %2087 = vmatprep.mubr.f32.mxu0 0.0
        %v2088 = vand.u32 %v1110, 4294901760
        %v2089 = vsub.f32 %v1110, %v2088
        %2090 = vmatmul.mubr.f32.gmra.mrb[0].mxu0 %v2089
        %v2091 = vpop.f32.mrb[0].mxu0
        %v2092 = vadd.f32 %v1790, %v2091
        %v2093 = vpop.f32.mrb[0].mxu0
        %2094 = vmatprep.mubr.f32.mxu0 0.0
        %v2095 = vand.u32 %v1113, 4294901760
        %v2096 = vsub.f32 %v1113, %v2095
        %2097 = vmatmul.mubr.f32.gmra.mrb[0].mxu0 %v2096
        %v2098 = vpop.f32.mrb[0].mxu0
        %v2099 = vadd.f32 %v1796, %v2098
        %v2100 = vpop.f32.mrb[0].mxu0
        %2101 = vmatprep.mubr.f32.mxu0 0.0
        %v2102 = vand.u32 %v1116, 4294901760
        %v2103 = vsub.f32 %v1116, %v2102
        %2104 = vmatmul.mubr.f32.gmra.mrb[0].mxu0 %v2103
        %v2105 = vpop.f32.mrb[0].mxu0
        %v2106 = vadd.f32 %v1802, %v2105
        %v2107 = vpop.f32.mrb[0].mxu0
        %2108 = vmatprep.mubr.f32.mxu0 0.0
        %v2109 = vand.u32 %v1119, 4294901760
        %v2110 = vsub.f32 %v1119, %v2109
        %2111 = vmatmul.mubr.f32.gmra.mrb[0].mxu0 %v2110
        %v2112 = vpop.f32.mrb[0].mxu0
        %v2113 = vadd.f32 %v1808, %v2112
        %v2114 = vpop.f32.mrb[0].mxu0
        %2115 = vdwg.mxu0
        %2116 = vmatprep.subr.mxu0 0.0
        %v2117 = vand.u32 %v1016, 4294901760
        %2118 = vmatpush1.msra.mxu0 %v2117
        %2119 = vmatprep.subr.mxu0 0.0
        %v2120 = vand.u32 %v1017, 4294901760
        %2121 = vmatpush1.msra.mxu0 %v2120
        %2122 = vmatprep.subr.mxu0 0.0
        %v2123 = vand.u32 %v1018, 4294901760
        %2124 = vmatpush1.msra.mxu0 %v2123
        %2125 = vmatprep.subr.mxu0 0.0
        %v2126 = vand.u32 %v1019, 4294901760
        %2127 = vmatpush1.msra.mxu0 %v2126
        %2128 = vmatprep.subr.mxu0 0.0
        %v2129 = vand.u32 %v1020, 4294901760
        %2130 = vmatpush1.msra.mxu0 %v2129
        %2131 = vmatprep.subr.mxu0 0.0
        %v2132 = vand.u32 %v1021, 4294901760
        %2133 = vmatpush1.msra.mxu0 %v2132
        %2134 = vmatprep.subr.mxu0 0.0
        %v2135 = vand.u32 %v1022, 4294901760
        %2136 = vmatpush1.msra.mxu0 %v2135
        %2137 = vmatprep.subr.mxu0 0.0
        %v2138 = vand.u32 %v1023, 4294901760
        %2139 = vmatpush1.msra.mxu0 %v2138
        %2140 = vmatprep.subr.mxu0 0.0
        %2141 = vmatpush1.msra.mxu0 0.0
        %2142 = vmatprep.subr.mxu0 0.0
        %2143 = vmatpush1.msra.mxu0 0.0
        %2144 = vmatprep.subr.mxu0 0.0
        %2145 = vmatpush1.msra.mxu0 0.0
        %2146 = vmatprep.subr.mxu0 0.0
        %2147 = vmatpush1.msra.mxu0 0.0
        %2148 = vmatprep.subr.mxu0 0.0
        %2149 = vmatpush1.msra.mxu0 0.0
        %2150 = vmatprep.subr.mxu0 0.0
        %2151 = vmatpush1.msra.mxu0 0.0
        %2152 = vmatprep.subr.mxu0 0.0
        %2153 = vmatpush1.msra.mxu0 0.0
        %2154 = vmatprep.subr.mxu0 0.0
        %2155 = vmatpush1.msra.mxu0 0.0
        %2156 = vmatprep.subr.mxu0 0.0
        %2157 = vmatpush1.msra.mxu0 0.0
        %2158 = vmatprep.subr.mxu0 0.0
        %2159 = vmatpush1.msra.mxu0 0.0
        %2160 = vmatprep.subr.mxu0 0.0
        %2161 = vmatpush1.msra.mxu0 0.0
        %2162 = vmatprep.subr.mxu0 0.0
        %2163 = vmatpush1.msra.mxu0 0.0
        %2164 = vmatprep.subr.mxu0 0.0
        %2165 = vmatpush1.msra.mxu0 0.0
        %2166 = vmatprep.subr.mxu0 0.0
        %2167 = vmatpush1.msra.mxu0 0.0
        %2168 = vmatprep.subr.mxu0 0.0
        %2169 = vmatpush1.msra.mxu0 0.0
        %2170 = vmatprep.subr.mxu0 0.0
        %2171 = vmatpush1.msra.mxu0 0.0
        %2172 = vmatprep.subr.mxu0 0.0
        %2173 = vmatpush1.msra.mxu0 0.0
        %2174 = vmatprep.subr.mxu0 0.0
        %2175 = vmatpush1.msra.mxu0 0.0
        %2176 = vmatprep.subr.mxu0 0.0
        %2177 = vmatpush1.msra.mxu0 0.0
        %2178 = vmatprep.subr.mxu0 0.0
        %2179 = vmatpush1.msra.mxu0 0.0
        %2180 = vmatprep.subr.mxu0 0.0
        %2181 = vmatpush1.msra.mxu0 0.0
        %2182 = vmatprep.subr.mxu0 0.0
        %2183 = vmatpush1.msra.mxu0 0.0
        %2184 = vmatprep.subr.mxu0 0.0
        %2185 = vmatpush1.msra.mxu0 0.0
        %2186 = vmatprep.subr.mxu0 0.0
        %2187 = vmatpush1.msra.mxu0 0.0
        %2188 = vmatprep.mubr.f32.mxu0 0.0
        %v2189 = vand.u32 %v1026, 4294901760
        %v2190 = vsub.f32 %v1026, %v2189
        %v2191 = vand.u32 %v2190, 4294901760
        %2192 = vmatmul.mubr.f32.gmra.mrb[0].mxu0 %v2191
        %v2193 = vpop.f32.mrb[0].mxu0
        %v2194 = vadd.f32 %v1896, %v2193
        %v2195 = vpop.f32.mrb[0].mxu0
        %2196 = vmatprep.mubr.f32.mxu0 0.0
        %v2197 = vand.u32 %v1029, 4294901760
        %v2198 = vsub.f32 %v1029, %v2197
        %v2199 = vand.u32 %v2198, 4294901760
        %2200 = vmatmul.mubr.f32.gmra.mrb[0].mxu0 %v2199
        %v2201 = vpop.f32.mrb[0].mxu0
        %v2202 = vadd.f32 %v1903, %v2201
        %v2203 = vpop.f32.mrb[0].mxu0
        %2204 = vmatprep.mubr.f32.mxu0 0.0
        %v2205 = vand.u32 %v1032, 4294901760
        %v2206 = vsub.f32 %v1032, %v2205
        %v2207 = vand.u32 %v2206, 4294901760
        %2208 = vmatmul.mubr.f32.gmra.mrb[0].mxu0 %v2207
        %v2209 = vpop.f32.mrb[0].mxu0
        %v2210 = vadd.f32 %v1910, %v2209
        %v2211 = vpop.f32.mrb[0].mxu0
        %2212 = vmatprep.mubr.f32.mxu0 0.0
        %v2213 = vand.u32 %v1035, 4294901760
        %v2214 = vsub.f32 %v1035, %v2213
        %v2215 = vand.u32 %v2214, 4294901760
        %2216 = vmatmul.mubr.f32.gmra.mrb[0].mxu0 %v2215
        %v2217 = vpop.f32.mrb[0].mxu0
        %v2218 = vadd.f32 %v1917, %v2217
        %v2219 = vpop.f32.mrb[0].mxu0
        %2220 = vmatprep.mubr.f32.mxu0 0.0
        %v2221 = vand.u32 %v1038, 4294901760
        %v2222 = vsub.f32 %v1038, %v2221
        %v2223 = vand.u32 %v2222, 4294901760
        %2224 = vmatmul.mubr.f32.gmra.mrb[0].mxu0 %v2223
        %v2225 = vpop.f32.mrb[0].mxu0
        %v2226 = vadd.f32 %v1924, %v2225
        %v2227 = vpop.f32.mrb[0].mxu0
        %2228 = vmatprep.mubr.f32.mxu0 0.0
        %v2229 = vand.u32 %v1041, 4294901760
        %v2230 = vsub.f32 %v1041, %v2229
        %v2231 = vand.u32 %v2230, 4294901760
        %2232 = vmatmul.mubr.f32.gmra.mrb[0].mxu0 %v2231
        %v2233 = vpop.f32.mrb[0].mxu0
        %v2234 = vadd.f32 %v1931, %v2233
        %v2235 = vpop.f32.mrb[0].mxu0
        %2236 = vmatprep.mubr.f32.mxu0 0.0
        %v2237 = vand.u32 %v1044, 4294901760
        %v2238 = vsub.f32 %v1044, %v2237
        %v2239 = vand.u32 %v2238, 4294901760
        %2240 = vmatmul.mubr.f32.gmra.mrb[0].mxu0 %v2239
        %v2241 = vpop.f32.mrb[0].mxu0
        %v2242 = vadd.f32 %v1938, %v2241
        %v2243 = vpop.f32.mrb[0].mxu0
        %2244 = vmatprep.mubr.f32.mxu0 0.0
        %v2245 = vand.u32 %v1047, 4294901760
        %v2246 = vsub.f32 %v1047, %v2245
        %v2247 = vand.u32 %v2246, 4294901760
        %2248 = vmatmul.mubr.f32.gmra.mrb[0].mxu0 %v2247
        %v2249 = vpop.f32.mrb[0].mxu0
        %v2250 = vadd.f32 %v1945, %v2249
        %v2251 = vpop.f32.mrb[0].mxu0
        %2252 = vmatprep.mubr.f32.mxu0 0.0
        %v2253 = vand.u32 %v1050, 4294901760
        %v2254 = vsub.f32 %v1050, %v2253
        %v2255 = vand.u32 %v2254, 4294901760
        %2256 = vmatmul.mubr.f32.gmra.mrb[0].mxu0 %v2255
        %v2257 = vpop.f32.mrb[0].mxu0
        %v2258 = vadd.f32 %v1952, %v2257
        %v2259 = vpop.f32.mrb[0].mxu0
        %2260 = vmatprep.mubr.f32.mxu0 0.0
        %v2261 = vand.u32 %v1053, 4294901760
        %v2262 = vsub.f32 %v1053, %v2261
        %v2263 = vand.u32 %v2262, 4294901760
        %2264 = vmatmul.mubr.f32.gmra.mrb[0].mxu0 %v2263
        %v2265 = vpop.f32.mrb[0].mxu0
        %v2266 = vadd.f32 %v1959, %v2265
        %v2267 = vpop.f32.mrb[0].mxu0
        %2268 = vmatprep.mubr.f32.mxu0 0.0
        %v2269 = vand.u32 %v1056, 4294901760
        %v2270 = vsub.f32 %v1056, %v2269
        %v2271 = vand.u32 %v2270, 4294901760
        %2272 = vmatmul.mubr.f32.gmra.mrb[0].mxu0 %v2271
        %v2273 = vpop.f32.mrb[0].mxu0
        %v2274 = vadd.f32 %v1966, %v2273
        %v2275 = vpop.f32.mrb[0].mxu0
        %2276 = vmatprep.mubr.f32.mxu0 0.0
        %v2277 = vand.u32 %v1059, 4294901760
        %v2278 = vsub.f32 %v1059, %v2277
        %v2279 = vand.u32 %v2278, 4294901760
        %2280 = vmatmul.mubr.f32.gmra.mrb[0].mxu0 %v2279
        %v2281 = vpop.f32.mrb[0].mxu0
        %v2282 = vadd.f32 %v1973, %v2281
        %v2283 = vpop.f32.mrb[0].mxu0
        %2284 = vmatprep.mubr.f32.mxu0 0.0
        %v2285 = vand.u32 %v1062, 4294901760
        %v2286 = vsub.f32 %v1062, %v2285
        %v2287 = vand.u32 %v2286, 4294901760
        %2288 = vmatmul.mubr.f32.gmra.mrb[0].mxu0 %v2287
        %v2289 = vpop.f32.mrb[0].mxu0
        %v2290 = vadd.f32 %v1980, %v2289
        %v2291 = vpop.f32.mrb[0].mxu0
        %2292 = vmatprep.mubr.f32.mxu0 0.0
        %v2293 = vand.u32 %v1065, 4294901760
        %v2294 = vsub.f32 %v1065, %v2293
        %v2295 = vand.u32 %v2294, 4294901760
        %2296 = vmatmul.mubr.f32.gmra.mrb[0].mxu0 %v2295
        %v2297 = vpop.f32.mrb[0].mxu0
        %v2298 = vadd.f32 %v1987, %v2297
        %v2299 = vpop.f32.mrb[0].mxu0
        %2300 = vmatprep.mubr.f32.mxu0 0.0
        %v2301 = vand.u32 %v1068, 4294901760
        %v2302 = vsub.f32 %v1068, %v2301
        %v2303 = vand.u32 %v2302, 4294901760
        %2304 = vmatmul.mubr.f32.gmra.mrb[0].mxu0 %v2303
        %v2305 = vpop.f32.mrb[0].mxu0
        %v2306 = vadd.f32 %v1994, %v2305
        %v2307 = vpop.f32.mrb[0].mxu0
        %2308 = vmatprep.mubr.f32.mxu0 0.0
        %v2309 = vand.u32 %v1071, 4294901760
        %v2310 = vsub.f32 %v1071, %v2309
        %v2311 = vand.u32 %v2310, 4294901760
        %2312 = vmatmul.mubr.f32.gmra.mrb[0].mxu0 %v2311
        %v2313 = vpop.f32.mrb[0].mxu0
        %v2314 = vadd.f32 %v2001, %v2313
        %v2315 = vpop.f32.mrb[0].mxu0
        %2316 = vmatprep.mubr.f32.mxu0 0.0
        %v2317 = vand.u32 %v1074, 4294901760
        %v2318 = vsub.f32 %v1074, %v2317
        %v2319 = vand.u32 %v2318, 4294901760
        %2320 = vmatmul.mubr.f32.gmra.mrb[0].mxu0 %v2319
        %v2321 = vpop.f32.mrb[0].mxu0
        %v2322 = vadd.f32 %v2008, %v2321
        %v2323 = vpop.f32.mrb[0].mxu0
        %2324 = vmatprep.mubr.f32.mxu0 0.0
        %v2325 = vand.u32 %v1077, 4294901760
        %v2326 = vsub.f32 %v1077, %v2325
        %v2327 = vand.u32 %v2326, 4294901760
        %2328 = vmatmul.mubr.f32.gmra.mrb[0].mxu0 %v2327
        %v2329 = vpop.f32.mrb[0].mxu0
        %v2330 = vadd.f32 %v2015, %v2329
        %v2331 = vpop.f32.mrb[0].mxu0
        %2332 = vmatprep.mubr.f32.mxu0 0.0
        %v2333 = vand.u32 %v1080, 4294901760
        %v2334 = vsub.f32 %v1080, %v2333
        %v2335 = vand.u32 %v2334, 4294901760
        %2336 = vmatmul.mubr.f32.gmra.mrb[0].mxu0 %v2335
        %v2337 = vpop.f32.mrb[0].mxu0
        %v2338 = vadd.f32 %v2022, %v2337
        %v2339 = vpop.f32.mrb[0].mxu0
        %2340 = vmatprep.mubr.f32.mxu0 0.0
        %v2341 = vand.u32 %v1083, 4294901760
        %v2342 = vsub.f32 %v1083, %v2341
        %v2343 = vand.u32 %v2342, 4294901760
        %2344 = vmatmul.mubr.f32.gmra.mrb[0].mxu0 %v2343
        %v2345 = vpop.f32.mrb[0].mxu0
        %v2346 = vadd.f32 %v2029, %v2345
        %v2347 = vpop.f32.mrb[0].mxu0
        %2348 = vmatprep.mubr.f32.mxu0 0.0
        %v2349 = vand.u32 %v1086, 4294901760
        %v2350 = vsub.f32 %v1086, %v2349
        %v2351 = vand.u32 %v2350, 4294901760
        %2352 = vmatmul.mubr.f32.gmra.mrb[0].mxu0 %v2351
        %v2353 = vpop.f32.mrb[0].mxu0
        %v2354 = vadd.f32 %v2036, %v2353
        %v2355 = vpop.f32.mrb[0].mxu0
        %2356 = vmatprep.mubr.f32.mxu0 0.0
        %v2357 = vand.u32 %v1089, 4294901760
        %v2358 = vsub.f32 %v1089, %v2357
        %v2359 = vand.u32 %v2358, 4294901760
        %2360 = vmatmul.mubr.f32.gmra.mrb[0].mxu0 %v2359
        %v2361 = vpop.f32.mrb[0].mxu0
        %v2362 = vadd.f32 %v2043, %v2361
        %v2363 = vpop.f32.mrb[0].mxu0
        %2364 = vmatprep.mubr.f32.mxu0 0.0
        %v2365 = vand.u32 %v1092, 4294901760
        %v2366 = vsub.f32 %v1092, %v2365
        %v2367 = vand.u32 %v2366, 4294901760
        %2368 = vmatmul.mubr.f32.gmra.mrb[0].mxu0 %v2367
        %v2369 = vpop.f32.mrb[0].mxu0
        %v2370 = vadd.f32 %v2050, %v2369
        %v2371 = vpop.f32.mrb[0].mxu0
        %2372 = vmatprep.mubr.f32.mxu0 0.0
        %v2373 = vand.u32 %v1095, 4294901760
        %v2374 = vsub.f32 %v1095, %v2373
        %v2375 = vand.u32 %v2374, 4294901760
        %2376 = vmatmul.mubr.f32.gmra.mrb[0].mxu0 %v2375
        %v2377 = vpop.f32.mrb[0].mxu0
        %v2378 = vadd.f32 %v2057, %v2377
        %v2379 = vpop.f32.mrb[0].mxu0
        %2380 = vmatprep.mubr.f32.mxu0 0.0
        %v2381 = vand.u32 %v1098, 4294901760
        %v2382 = vsub.f32 %v1098, %v2381
        %v2383 = vand.u32 %v2382, 4294901760
        %2384 = vmatmul.mubr.f32.gmra.mrb[0].mxu0 %v2383
        %v2385 = vpop.f32.mrb[0].mxu0
        %v2386 = vadd.f32 %v2064, %v2385
        %v2387 = vpop.f32.mrb[0].mxu0
        %2388 = vmatprep.mubr.f32.mxu0 0.0
        %v2389 = vand.u32 %v1101, 4294901760
        %v2390 = vsub.f32 %v1101, %v2389
        %v2391 = vand.u32 %v2390, 4294901760
        %2392 = vmatmul.mubr.f32.gmra.mrb[0].mxu0 %v2391
        %v2393 = vpop.f32.mrb[0].mxu0
        %v2394 = vadd.f32 %v2071, %v2393
        %v2395 = vpop.f32.mrb[0].mxu0
        %2396 = vmatprep.mubr.f32.mxu0 0.0
        %v2397 = vand.u32 %v1104, 4294901760
        %v2398 = vsub.f32 %v1104, %v2397
        %v2399 = vand.u32 %v2398, 4294901760
        %2400 = vmatmul.mubr.f32.gmra.mrb[0].mxu0 %v2399
        %v2401 = vpop.f32.mrb[0].mxu0
        %v2402 = vadd.f32 %v2078, %v2401
        %v2403 = vpop.f32.mrb[0].mxu0
        %2404 = vmatprep.mubr.f32.mxu0 0.0
        %v2405 = vand.u32 %v1107, 4294901760
        %v2406 = vsub.f32 %v1107, %v2405
        %v2407 = vand.u32 %v2406, 4294901760
        %2408 = vmatmul.mubr.f32.gmra.mrb[0].mxu0 %v2407
        %v2409 = vpop.f32.mrb[0].mxu0
        %v2410 = vadd.f32 %v2085, %v2409
        %v2411 = vpop.f32.mrb[0].mxu0
        %2412 = vmatprep.mubr.f32.mxu0 0.0
        %v2413 = vand.u32 %v1110, 4294901760
        %v2414 = vsub.f32 %v1110, %v2413
        %v2415 = vand.u32 %v2414, 4294901760
        %2416 = vmatmul.mubr.f32.gmra.mrb[0].mxu0 %v2415
        %v2417 = vpop.f32.mrb[0].mxu0
        %v2418 = vadd.f32 %v2092, %v2417
        %v2419 = vpop.f32.mrb[0].mxu0
        %2420 = vmatprep.mubr.f32.mxu0 0.0
        %v2421 = vand.u32 %v1113, 4294901760
        %v2422 = vsub.f32 %v1113, %v2421
        %v2423 = vand.u32 %v2422, 4294901760
        %2424 = vmatmul.mubr.f32.gmra.mrb[0].mxu0 %v2423
        %v2425 = vpop.f32.mrb[0].mxu0
        %v2426 = vadd.f32 %v2099, %v2425
        %v2427 = vpop.f32.mrb[0].mxu0
        %2428 = vmatprep.mubr.f32.mxu0 0.0
        %v2429 = vand.u32 %v1116, 4294901760
        %v2430 = vsub.f32 %v1116, %v2429
        %v2431 = vand.u32 %v2430, 4294901760
        %2432 = vmatmul.mubr.f32.gmra.mrb[0].mxu0 %v2431
        %v2433 = vpop.f32.mrb[0].mxu0
        %v2434 = vadd.f32 %v2106, %v2433
        %v2435 = vpop.f32.mrb[0].mxu0
        %2436 = vmatprep.mubr.f32.mxu0 0.0
        %v2437 = vand.u32 %v1119, 4294901760
        %v2438 = vsub.f32 %v1119, %v2437
        %v2439 = vand.u32 %v2438, 4294901760
        %2440 = vmatmul.mubr.f32.gmra.mrb[0].mxu0 %v2439
        %v2441 = vpop.f32.mrb[0].mxu0
        %v2442 = vadd.f32 %v2113, %v2441
        %v2443 = vpop.f32.mrb[0].mxu0
        %2444 = vdwg.mxu0
        %2445 = vmatprep.subr.mxu0 0.0
        %v2446 = vand.u32 %v1016, 4294901760
        %v2447 = vsub.f32 %v1016, %v2446
        %v2448 = vand.u32 %v2447, 4294901760
        %2449 = vmatpush1.msra.mxu0 %v2448
        %2450 = vmatprep.subr.mxu0 0.0
        %v2451 = vand.u32 %v1017, 4294901760
        %v2452 = vsub.f32 %v1017, %v2451
        %v2453 = vand.u32 %v2452, 4294901760
        %2454 = vmatpush1.msra.mxu0 %v2453
        %2455 = vmatprep.subr.mxu0 0.0
        %v2456 = vand.u32 %v1018, 4294901760
        %v2457 = vsub.f32 %v1018, %v2456
        %v2458 = vand.u32 %v2457, 4294901760
        %2459 = vmatpush1.msra.mxu0 %v2458
        %2460 = vmatprep.subr.mxu0 0.0
        %v2461 = vand.u32 %v1019, 4294901760
        %v2462 = vsub.f32 %v1019, %v2461
        %v2463 = vand.u32 %v2462, 4294901760
        %2464 = vmatpush1.msra.mxu0 %v2463
        %2465 = vmatprep.subr.mxu0 0.0
        %v2466 = vand.u32 %v1020, 4294901760
        %v2467 = vsub.f32 %v1020, %v2466
        %v2468 = vand.u32 %v2467, 4294901760
        %2469 = vmatpush1.msra.mxu0 %v2468
        %2470 = vmatprep.subr.mxu0 0.0
        %v2471 = vand.u32 %v1021, 4294901760
        %v2472 = vsub.f32 %v1021, %v2471
        %v2473 = vand.u32 %v2472, 4294901760
        %2474 = vmatpush1.msra.mxu0 %v2473
        %2475 = vmatprep.subr.mxu0 0.0
        %v2476 = vand.u32 %v1022, 4294901760
        %v2477 = vsub.f32 %v1022, %v2476
        %v2478 = vand.u32 %v2477, 4294901760
        %2479 = vmatpush1.msra.mxu0 %v2478
        %2480 = vmatprep.subr.mxu0 0.0
        %v2481 = vand.u32 %v1023, 4294901760
        %v2482 = vsub.f32 %v1023, %v2481
        %v2483 = vand.u32 %v2482, 4294901760
        %2484 = vmatpush1.msra.mxu0 %v2483
        %2485 = vmatprep.subr.mxu0 0.0
        %2486 = vmatpush1.msra.mxu0 0.0
        %2487 = vmatprep.subr.mxu0 0.0
        %2488 = vmatpush1.msra.mxu0 0.0
        %2489 = vmatprep.subr.mxu0 0.0
        %2490 = vmatpush1.msra.mxu0 0.0
        %2491 = vmatprep.subr.mxu0 0.0
        %2492 = vmatpush1.msra.mxu0 0.0
        %2493 = vmatprep.subr.mxu0 0.0
        %2494 = vmatpush1.msra.mxu0 0.0
        %2495 = vmatprep.subr.mxu0 0.0
        %2496 = vmatpush1.msra.mxu0 0.0
        %2497 = vmatprep.subr.mxu0 0.0
        %2498 = vmatpush1.msra.mxu0 0.0
        %2499 = vmatprep.subr.mxu0 0.0
        %2500 = vmatpush1.msra.mxu0 0.0
        %2501 = vmatprep.subr.mxu0 0.0
        %2502 = vmatpush1.msra.mxu0 0.0
        %2503 = vmatprep.subr.mxu0 0.0
        %2504 = vmatpush1.msra.mxu0 0.0
        %2505 = vmatprep.subr.mxu0 0.0
        %2506 = vmatpush1.msra.mxu0 0.0
        %2507 = vmatprep.subr.mxu0 0.0
        %2508 = vmatpush1.msra.mxu0 0.0
        %2509 = vmatprep.subr.mxu0 0.0
        %2510 = vmatpush1.msra.mxu0 0.0
        %2511 = vmatprep.subr.mxu0 0.0
        %2512 = vmatpush1.msra.mxu0 0.0
        %2513 = vmatprep.subr.mxu0 0.0
        %2514 = vmatpush1.msra.mxu0 0.0
        %2515 = vmatprep.subr.mxu0 0.0
        %2516 = vmatpush1.msra.mxu0 0.0
        %2517 = vmatprep.subr.mxu0 0.0
        %2518 = vmatpush1.msra.mxu0 0.0
        %2519 = vmatprep.subr.mxu0 0.0
        %2520 = vmatpush1.msra.mxu0 0.0
        %2521 = vmatprep.subr.mxu0 0.0
        %2522 = vmatpush1.msra.mxu0 0.0
        %2523 = vmatprep.subr.mxu0 0.0
        %2524 = vmatpush1.msra.mxu0 0.0
        %2525 = vmatprep.subr.mxu0 0.0
        %2526 = vmatpush1.msra.mxu0 0.0
        %2527 = vmatprep.subr.mxu0 0.0
        %2528 = vmatpush1.msra.mxu0 0.0
        %2529 = vmatprep.subr.mxu0 0.0
        %2530 = vmatpush1.msra.mxu0 0.0
        %2531 = vmatprep.subr.mxu0 0.0
        %2532 = vmatpush1.msra.mxu0 0.0
        %2533 = vmatprep.mubr.f32.mxu0 0.0
        %v2534 = vand.u32 %v1026, 4294901760
        %2535 = vmatmul.mubr.f32.gmra.mrb[0].mxu0 %v2534
        %v2536 = vpop.f32.mrb[0].mxu0
        %v2537 = vadd.f32 %v2194, %v2536
        %v2538 = vpop.f32.mrb[0].mxu0
        %2539 = vmatprep.mubr.f32.mxu0 0.0
        %v2540 = vand.u32 %v1029, 4294901760
        %2541 = vmatmul.mubr.f32.gmra.mrb[0].mxu0 %v2540
        %v2542 = vpop.f32.mrb[0].mxu0
        %v2543 = vadd.f32 %v2202, %v2542
        %v2544 = vpop.f32.mrb[0].mxu0
        %2545 = vmatprep.mubr.f32.mxu0 0.0
        %v2546 = vand.u32 %v1032, 4294901760
        %2547 = vmatmul.mubr.f32.gmra.mrb[0].mxu0 %v2546
        %v2548 = vpop.f32.mrb[0].mxu0
        %v2549 = vadd.f32 %v2210, %v2548
        %v2550 = vpop.f32.mrb[0].mxu0
        %2551 = vmatprep.mubr.f32.mxu0 0.0
        %v2552 = vand.u32 %v1035, 4294901760
        %2553 = vmatmul.mubr.f32.gmra.mrb[0].mxu0 %v2552
        %v2554 = vpop.f32.mrb[0].mxu0
        %v2555 = vadd.f32 %v2218, %v2554
        %v2556 = vpop.f32.mrb[0].mxu0
        %2557 = vmatprep.mubr.f32.mxu0 0.0
        %v2558 = vand.u32 %v1038, 4294901760
        %2559 = vmatmul.mubr.f32.gmra.mrb[0].mxu0 %v2558
        %v2560 = vpop.f32.mrb[0].mxu0
        %v2561 = vadd.f32 %v2226, %v2560
        %v2562 = vpop.f32.mrb[0].mxu0
        %2563 = vmatprep.mubr.f32.mxu0 0.0
        %v2564 = vand.u32 %v1041, 4294901760
        %2565 = vmatmul.mubr.f32.gmra.mrb[0].mxu0 %v2564
        %v2566 = vpop.f32.mrb[0].mxu0
        %v2567 = vadd.f32 %v2234, %v2566
        %v2568 = vpop.f32.mrb[0].mxu0
        %2569 = vmatprep.mubr.f32.mxu0 0.0
        %v2570 = vand.u32 %v1044, 4294901760
        %2571 = vmatmul.mubr.f32.gmra.mrb[0].mxu0 %v2570
        %v2572 = vpop.f32.mrb[0].mxu0
        %v2573 = vadd.f32 %v2242, %v2572
        %v2574 = vpop.f32.mrb[0].mxu0
        %2575 = vmatprep.mubr.f32.mxu0 0.0
        %v2576 = vand.u32 %v1047, 4294901760
        %2577 = vmatmul.mubr.f32.gmra.mrb[0].mxu0 %v2576
        %v2578 = vpop.f32.mrb[0].mxu0
        %v2579 = vadd.f32 %v2250, %v2578
        %v2580 = vpop.f32.mrb[0].mxu0
        %2581 = vmatprep.mubr.f32.mxu0 0.0
        %v2582 = vand.u32 %v1050, 4294901760
        %2583 = vmatmul.mubr.f32.gmra.mrb[0].mxu0 %v2582
        %v2584 = vpop.f32.mrb[0].mxu0
        %v2585 = vadd.f32 %v2258, %v2584
        %v2586 = vpop.f32.mrb[0].mxu0
        %2587 = vmatprep.mubr.f32.mxu0 0.0
        %v2588 = vand.u32 %v1053, 4294901760
        %2589 = vmatmul.mubr.f32.gmra.mrb[0].mxu0 %v2588
        %v2590 = vpop.f32.mrb[0].mxu0
        %v2591 = vadd.f32 %v2266, %v2590
        %v2592 = vpop.f32.mrb[0].mxu0
        %2593 = vmatprep.mubr.f32.mxu0 0.0
        %v2594 = vand.u32 %v1056, 4294901760
        %2595 = vmatmul.mubr.f32.gmra.mrb[0].mxu0 %v2594
        %v2596 = vpop.f32.mrb[0].mxu0
        %v2597 = vadd.f32 %v2274, %v2596
        %v2598 = vpop.f32.mrb[0].mxu0
        %2599 = vmatprep.mubr.f32.mxu0 0.0
        %v2600 = vand.u32 %v1059, 4294901760
        %2601 = vmatmul.mubr.f32.gmra.mrb[0].mxu0 %v2600
        %v2602 = vpop.f32.mrb[0].mxu0
        %v2603 = vadd.f32 %v2282, %v2602
        %v2604 = vpop.f32.mrb[0].mxu0
        %2605 = vmatprep.mubr.f32.mxu0 0.0
        %v2606 = vand.u32 %v1062, 4294901760
        %2607 = vmatmul.mubr.f32.gmra.mrb[0].mxu0 %v2606
        %v2608 = vpop.f32.mrb[0].mxu0
        %v2609 = vadd.f32 %v2290, %v2608
        %v2610 = vpop.f32.mrb[0].mxu0
        %2611 = vmatprep.mubr.f32.mxu0 0.0
        %v2612 = vand.u32 %v1065, 4294901760
        %2613 = vmatmul.mubr.f32.gmra.mrb[0].mxu0 %v2612
        %v2614 = vpop.f32.mrb[0].mxu0
        %v2615 = vadd.f32 %v2298, %v2614
        %v2616 = vpop.f32.mrb[0].mxu0
        %2617 = vmatprep.mubr.f32.mxu0 0.0
        %v2618 = vand.u32 %v1068, 4294901760
        %2619 = vmatmul.mubr.f32.gmra.mrb[0].mxu0 %v2618
        %v2620 = vpop.f32.mrb[0].mxu0
        %v2621 = vadd.f32 %v2306, %v2620
        %v2622 = vpop.f32.mrb[0].mxu0
        %2623 = vmatprep.mubr.f32.mxu0 0.0
        %v2624 = vand.u32 %v1071, 4294901760
        %2625 = vmatmul.mubr.f32.gmra.mrb[0].mxu0 %v2624
        %v2626 = vpop.f32.mrb[0].mxu0
        %v2627 = vadd.f32 %v2314, %v2626
        %v2628 = vpop.f32.mrb[0].mxu0
        %2629 = vmatprep.mubr.f32.mxu0 0.0
        %v2630 = vand.u32 %v1074, 4294901760
        %2631 = vmatmul.mubr.f32.gmra.mrb[0].mxu0 %v2630
        %v2632 = vpop.f32.mrb[0].mxu0
        %v2633 = vadd.f32 %v2322, %v2632
        %v2634 = vpop.f32.mrb[0].mxu0
        %2635 = vmatprep.mubr.f32.mxu0 0.0
        %v2636 = vand.u32 %v1077, 4294901760
        %2637 = vmatmul.mubr.f32.gmra.mrb[0].mxu0 %v2636
        %v2638 = vpop.f32.mrb[0].mxu0
        %v2639 = vadd.f32 %v2330, %v2638
        %v2640 = vpop.f32.mrb[0].mxu0
        %2641 = vmatprep.mubr.f32.mxu0 0.0
        %v2642 = vand.u32 %v1080, 4294901760
        %2643 = vmatmul.mubr.f32.gmra.mrb[0].mxu0 %v2642
        %v2644 = vpop.f32.mrb[0].mxu0
        %v2645 = vadd.f32 %v2338, %v2644
        %v2646 = vpop.f32.mrb[0].mxu0
        %2647 = vmatprep.mubr.f32.mxu0 0.0
        %v2648 = vand.u32 %v1083, 4294901760
        %2649 = vmatmul.mubr.f32.gmra.mrb[0].mxu0 %v2648
        %v2650 = vpop.f32.mrb[0].mxu0
        %v2651 = vadd.f32 %v2346, %v2650
        %v2652 = vpop.f32.mrb[0].mxu0
        %2653 = vmatprep.mubr.f32.mxu0 0.0
        %v2654 = vand.u32 %v1086, 4294901760
        %2655 = vmatmul.mubr.f32.gmra.mrb[0].mxu0 %v2654
        %v2656 = vpop.f32.mrb[0].mxu0
        %v2657 = vadd.f32 %v2354, %v2656
        %v2658 = vpop.f32.mrb[0].mxu0
        %2659 = vmatprep.mubr.f32.mxu0 0.0
        %v2660 = vand.u32 %v1089, 4294901760
        %2661 = vmatmul.mubr.f32.gmra.mrb[0].mxu0 %v2660
        %v2662 = vpop.f32.mrb[0].mxu0
        %v2663 = vadd.f32 %v2362, %v2662
        %v2664 = vpop.f32.mrb[0].mxu0
        %2665 = vmatprep.mubr.f32.mxu0 0.0
        %v2666 = vand.u32 %v1092, 4294901760
        %2667 = vmatmul.mubr.f32.gmra.mrb[0].mxu0 %v2666
        %v2668 = vpop.f32.mrb[0].mxu0
        %v2669 = vadd.f32 %v2370, %v2668
        %v2670 = vpop.f32.mrb[0].mxu0
        %2671 = vmatprep.mubr.f32.mxu0 0.0
        %v2672 = vand.u32 %v1095, 4294901760
        %2673 = vmatmul.mubr.f32.gmra.mrb[0].mxu0 %v2672
        %v2674 = vpop.f32.mrb[0].mxu0
        %v2675 = vadd.f32 %v2378, %v2674
        %v2676 = vpop.f32.mrb[0].mxu0
        %2677 = vmatprep.mubr.f32.mxu0 0.0
        %v2678 = vand.u32 %v1098, 4294901760
        %2679 = vmatmul.mubr.f32.gmra.mrb[0].mxu0 %v2678
        %v2680 = vpop.f32.mrb[0].mxu0
        %v2681 = vadd.f32 %v2386, %v2680
        %v2682 = vpop.f32.mrb[0].mxu0
        %2683 = vmatprep.mubr.f32.mxu0 0.0
        %v2684 = vand.u32 %v1101, 4294901760
        %2685 = vmatmul.mubr.f32.gmra.mrb[0].mxu0 %v2684
        %v2686 = vpop.f32.mrb[0].mxu0
        %v2687 = vadd.f32 %v2394, %v2686
        %v2688 = vpop.f32.mrb[0].mxu0
        %2689 = vmatprep.mubr.f32.mxu0 0.0
        %v2690 = vand.u32 %v1104, 4294901760
        %2691 = vmatmul.mubr.f32.gmra.mrb[0].mxu0 %v2690
        %v2692 = vpop.f32.mrb[0].mxu0
        %v2693 = vadd.f32 %v2402, %v2692
        %v2694 = vpop.f32.mrb[0].mxu0
        %2695 = vmatprep.mubr.f32.mxu0 0.0
        %v2696 = vand.u32 %v1107, 4294901760
        %2697 = vmatmul.mubr.f32.gmra.mrb[0].mxu0 %v2696
        %v2698 = vpop.f32.mrb[0].mxu0
        %v2699 = vadd.f32 %v2410, %v2698
        %v2700 = vpop.f32.mrb[0].mxu0
        %2701 = vmatprep.mubr.f32.mxu0 0.0
        %v2702 = vand.u32 %v1110, 4294901760
        %2703 = vmatmul.mubr.f32.gmra.mrb[0].mxu0 %v2702
        %v2704 = vpop.f32.mrb[0].mxu0
        %v2705 = vadd.f32 %v2418, %v2704
        %v2706 = vpop.f32.mrb[0].mxu0
        %2707 = vmatprep.mubr.f32.mxu0 0.0
        %v2708 = vand.u32 %v1113, 4294901760
        %2709 = vmatmul.mubr.f32.gmra.mrb[0].mxu0 %v2708
        %v2710 = vpop.f32.mrb[0].mxu0
        %v2711 = vadd.f32 %v2426, %v2710
        %v2712 = vpop.f32.mrb[0].mxu0
        %2713 = vmatprep.mubr.f32.mxu0 0.0
        %v2714 = vand.u32 %v1116, 4294901760
        %2715 = vmatmul.mubr.f32.gmra.mrb[0].mxu0 %v2714
        %v2716 = vpop.f32.mrb[0].mxu0
        %v2717 = vadd.f32 %v2434, %v2716
        %v2718 = vpop.f32.mrb[0].mxu0
        %2719 = vmatprep.mubr.f32.mxu0 0.0
        %v2720 = vand.u32 %v1119, 4294901760
        %2721 = vmatmul.mubr.f32.gmra.mrb[0].mxu0 %v2720
        %v2722 = vpop.f32.mrb[0].mxu0
        %v2723 = vadd.f32 %v2442, %v2722
        %v2724 = vpop.f32.mrb[0].mxu0
        %2725 = vdwg.mxu0
        %2726 = vmatprep.subr.mxu0 0.0
        %v2727 = vand.u32 %v1016, 4294901760
        %2728 = vmatpush1.msra.mxu0 %v2727
        %2729 = vmatprep.subr.mxu0 0.0
        %v2730 = vand.u32 %v1017, 4294901760
        %2731 = vmatpush1.msra.mxu0 %v2730
        %2732 = vmatprep.subr.mxu0 0.0
        %v2733 = vand.u32 %v1018, 4294901760
        %2734 = vmatpush1.msra.mxu0 %v2733
        %2735 = vmatprep.subr.mxu0 0.0
        %v2736 = vand.u32 %v1019, 4294901760
        %2737 = vmatpush1.msra.mxu0 %v2736
        %2738 = vmatprep.subr.mxu0 0.0
        %v2739 = vand.u32 %v1020, 4294901760
        %2740 = vmatpush1.msra.mxu0 %v2739
        %2741 = vmatprep.subr.mxu0 0.0
        %v2742 = vand.u32 %v1021, 4294901760
        %2743 = vmatpush1.msra.mxu0 %v2742
        %2744 = vmatprep.subr.mxu0 0.0
        %v2745 = vand.u32 %v1022, 4294901760
        %2746 = vmatpush1.msra.mxu0 %v2745
        %2747 = vmatprep.subr.mxu0 0.0
        %v2748 = vand.u32 %v1023, 4294901760
        %2749 = vmatpush1.msra.mxu0 %v2748
        %2750 = vmatprep.subr.mxu0 0.0
        %2751 = vmatpush1.msra.mxu0 0.0
        %2752 = vmatprep.subr.mxu0 0.0
        %2753 = vmatpush1.msra.mxu0 0.0
        %2754 = vmatprep.subr.mxu0 0.0
        %2755 = vmatpush1.msra.mxu0 0.0
        %2756 = vmatprep.subr.mxu0 0.0
        %2757 = vmatpush1.msra.mxu0 0.0
        %2758 = vmatprep.subr.mxu0 0.0
        %2759 = vmatpush1.msra.mxu0 0.0
        %2760 = vmatprep.subr.mxu0 0.0
        %2761 = vmatpush1.msra.mxu0 0.0
        %2762 = vmatprep.subr.mxu0 0.0
        %2763 = vmatpush1.msra.mxu0 0.0
        %2764 = vmatprep.subr.mxu0 0.0
        %2765 = vmatpush1.msra.mxu0 0.0
        %2766 = vmatprep.subr.mxu0 0.0
        %2767 = vmatpush1.msra.mxu0 0.0
        %2768 = vmatprep.subr.mxu0 0.0
        %2769 = vmatpush1.msra.mxu0 0.0
        %2770 = vmatprep.subr.mxu0 0.0
        %2771 = vmatpush1.msra.mxu0 0.0
        %2772 = vmatprep.subr.mxu0 0.0
        %2773 = vmatpush1.msra.mxu0 0.0
        %2774 = vmatprep.subr.mxu0 0.0
        %2775 = vmatpush1.msra.mxu0 0.0
        %2776 = vmatprep.subr.mxu0 0.0
        %2777 = vmatpush1.msra.mxu0 0.0
        %2778 = vmatprep.subr.mxu0 0.0
        %2779 = vmatpush1.msra.mxu0 0.0
        %2780 = vmatprep.subr.mxu0 0.0
        %2781 = vmatpush1.msra.mxu0 0.0
        %2782 = vmatprep.subr.mxu0 0.0
        %2783 = vmatpush1.msra.mxu0 0.0
        %2784 = vmatprep.subr.mxu0 0.0
        %2785 = vmatpush1.msra.mxu0 0.0
        %2786 = vmatprep.subr.mxu0 0.0
        %2787 = vmatpush1.msra.mxu0 0.0
        %2788 = vmatprep.subr.mxu0 0.0
        %2789 = vmatpush1.msra.mxu0 0.0
        %2790 = vmatprep.subr.mxu0 0.0
        %2791 = vmatpush1.msra.mxu0 0.0
        %2792 = vmatprep.subr.mxu0 0.0
        %2793 = vmatpush1.msra.mxu0 0.0
        %2794 = vmatprep.subr.mxu0 0.0
        %2795 = vmatpush1.msra.mxu0 0.0
        %2796 = vmatprep.subr.mxu0 0.0
        %2797 = vmatpush1.msra.mxu0 0.0
        %2798 = vmatprep.mubr.f32.mxu0 0.0
        %v2799 = vand.u32 %v1026, 4294901760
        %2800 = vmatmul.mubr.f32.gmra.mrb[0].mxu0 %v2799
        %v2801 = vpop.f32.mrb[0].mxu0
        %v2802 = vadd.f32 %v2537, %v2801
        %v2803 = vpop.f32.mrb[0].mxu0
        %2804 = vmatprep.mubr.f32.mxu0 0.0
        %v2805 = vand.u32 %v1029, 4294901760
        %2806 = vmatmul.mubr.f32.gmra.mrb[0].mxu0 %v2805
        %v2807 = vpop.f32.mrb[0].mxu0
        %v2808 = vadd.f32 %v2543, %v2807
        %v2809 = vpop.f32.mrb[0].mxu0
        %2810 = vmatprep.mubr.f32.mxu0 0.0
        %v2811 = vand.u32 %v1032, 4294901760
        %2812 = vmatmul.mubr.f32.gmra.mrb[0].mxu0 %v2811
        %v2813 = vpop.f32.mrb[0].mxu0
        %v2814 = vadd.f32 %v2549, %v2813
        %v2815 = vpop.f32.mrb[0].mxu0
        %2816 = vmatprep.mubr.f32.mxu0 0.0
        %v2817 = vand.u32 %v1035, 4294901760
        %2818 = vmatmul.mubr.f32.gmra.mrb[0].mxu0 %v2817
        %v2819 = vpop.f32.mrb[0].mxu0
        %v2820 = vadd.f32 %v2555, %v2819
        %v2821 = vpop.f32.mrb[0].mxu0
        %2822 = vmatprep.mubr.f32.mxu0 0.0
        %v2823 = vand.u32 %v1038, 4294901760
        %2824 = vmatmul.mubr.f32.gmra.mrb[0].mxu0 %v2823
        %v2825 = vpop.f32.mrb[0].mxu0
        %v2826 = vadd.f32 %v2561, %v2825
        %v2827 = vpop.f32.mrb[0].mxu0
        %2828 = vmatprep.mubr.f32.mxu0 0.0
        %v2829 = vand.u32 %v1041, 4294901760
        %2830 = vmatmul.mubr.f32.gmra.mrb[0].mxu0 %v2829
        %v2831 = vpop.f32.mrb[0].mxu0
        %v2832 = vadd.f32 %v2567, %v2831
        %v2833 = vpop.f32.mrb[0].mxu0
        %2834 = vmatprep.mubr.f32.mxu0 0.0
        %v2835 = vand.u32 %v1044, 4294901760
        %2836 = vmatmul.mubr.f32.gmra.mrb[0].mxu0 %v2835
        %v2837 = vpop.f32.mrb[0].mxu0
        %v2838 = vadd.f32 %v2573, %v2837
        %v2839 = vpop.f32.mrb[0].mxu0
        %2840 = vmatprep.mubr.f32.mxu0 0.0
        %v2841 = vand.u32 %v1047, 4294901760
        %2842 = vmatmul.mubr.f32.gmra.mrb[0].mxu0 %v2841
        %v2843 = vpop.f32.mrb[0].mxu0
        %v2844 = vadd.f32 %v2579, %v2843
        %v2845 = vpop.f32.mrb[0].mxu0
        %2846 = vmatprep.mubr.f32.mxu0 0.0
        %v2847 = vand.u32 %v1050, 4294901760
        %2848 = vmatmul.mubr.f32.gmra.mrb[0].mxu0 %v2847
        %v2849 = vpop.f32.mrb[0].mxu0
        %v2850 = vadd.f32 %v2585, %v2849
        %v2851 = vpop.f32.mrb[0].mxu0
        %2852 = vmatprep.mubr.f32.mxu0 0.0
        %v2853 = vand.u32 %v1053, 4294901760
        %2854 = vmatmul.mubr.f32.gmra.mrb[0].mxu0 %v2853
        %v2855 = vpop.f32.mrb[0].mxu0
        %v2856 = vadd.f32 %v2591, %v2855
        %v2857 = vpop.f32.mrb[0].mxu0
        %2858 = vmatprep.mubr.f32.mxu0 0.0
        %v2859 = vand.u32 %v1056, 4294901760
        %2860 = vmatmul.mubr.f32.gmra.mrb[0].mxu0 %v2859
        %v2861 = vpop.f32.mrb[0].mxu0
        %v2862 = vadd.f32 %v2597, %v2861
        %v2863 = vpop.f32.mrb[0].mxu0
        %2864 = vmatprep.mubr.f32.mxu0 0.0
        %v2865 = vand.u32 %v1059, 4294901760
        %2866 = vmatmul.mubr.f32.gmra.mrb[0].mxu0 %v2865
        %v2867 = vpop.f32.mrb[0].mxu0
        %v2868 = vadd.f32 %v2603, %v2867
        %v2869 = vpop.f32.mrb[0].mxu0
        %2870 = vmatprep.mubr.f32.mxu0 0.0
        %v2871 = vand.u32 %v1062, 4294901760
        %2872 = vmatmul.mubr.f32.gmra.mrb[0].mxu0 %v2871
        %v2873 = vpop.f32.mrb[0].mxu0
        %v2874 = vadd.f32 %v2609, %v2873
        %v2875 = vpop.f32.mrb[0].mxu0
        %2876 = vmatprep.mubr.f32.mxu0 0.0
        %v2877 = vand.u32 %v1065, 4294901760
        %2878 = vmatmul.mubr.f32.gmra.mrb[0].mxu0 %v2877
        %v2879 = vpop.f32.mrb[0].mxu0
        %v2880 = vadd.f32 %v2615, %v2879
        %v2881 = vpop.f32.mrb[0].mxu0
        %2882 = vmatprep.mubr.f32.mxu0 0.0
        %v2883 = vand.u32 %v1068, 4294901760
        %2884 = vmatmul.mubr.f32.gmra.mrb[0].mxu0 %v2883
        %v2885 = vpop.f32.mrb[0].mxu0
        %v2886 = vadd.f32 %v2621, %v2885
        %v2887 = vpop.f32.mrb[0].mxu0
        %2888 = vmatprep.mubr.f32.mxu0 0.0
        %v2889 = vand.u32 %v1071, 4294901760
        %2890 = vmatmul.mubr.f32.gmra.mrb[0].mxu0 %v2889
        %v2891 = vpop.f32.mrb[0].mxu0
        %v2892 = vadd.f32 %v2627, %v2891
        %v2893 = vpop.f32.mrb[0].mxu0
        %2894 = vmatprep.mubr.f32.mxu0 0.0
        %v2895 = vand.u32 %v1074, 4294901760
        %2896 = vmatmul.mubr.f32.gmra.mrb[0].mxu0 %v2895
        %v2897 = vpop.f32.mrb[0].mxu0
        %v2898 = vadd.f32 %v2633, %v2897
        %v2899 = vpop.f32.mrb[0].mxu0
        %2900 = vmatprep.mubr.f32.mxu0 0.0
        %v2901 = vand.u32 %v1077, 4294901760
        %2902 = vmatmul.mubr.f32.gmra.mrb[0].mxu0 %v2901
        %v2903 = vpop.f32.mrb[0].mxu0
        %v2904 = vadd.f32 %v2639, %v2903
        %v2905 = vpop.f32.mrb[0].mxu0
        %2906 = vmatprep.mubr.f32.mxu0 0.0
        %v2907 = vand.u32 %v1080, 4294901760
        %2908 = vmatmul.mubr.f32.gmra.mrb[0].mxu0 %v2907
        %v2909 = vpop.f32.mrb[0].mxu0
        %v2910 = vadd.f32 %v2645, %v2909
        %v2911 = vpop.f32.mrb[0].mxu0
        %2912 = vmatprep.mubr.f32.mxu0 0.0
        %v2913 = vand.u32 %v1083, 4294901760
        %2914 = vmatmul.mubr.f32.gmra.mrb[0].mxu0 %v2913
        %v2915 = vpop.f32.mrb[0].mxu0
        %v2916 = vadd.f32 %v2651, %v2915
        %v2917 = vpop.f32.mrb[0].mxu0
        %2918 = vmatprep.mubr.f32.mxu0 0.0
        %v2919 = vand.u32 %v1086, 4294901760
        %2920 = vmatmul.mubr.f32.gmra.mrb[0].mxu0 %v2919
        %v2921 = vpop.f32.mrb[0].mxu0
        %v2922 = vadd.f32 %v2657, %v2921
        %v2923 = vpop.f32.mrb[0].mxu0
        %2924 = vmatprep.mubr.f32.mxu0 0.0
        %v2925 = vand.u32 %v1089, 4294901760
        %2926 = vmatmul.mubr.f32.gmra.mrb[0].mxu0 %v2925
        %v2927 = vpop.f32.mrb[0].mxu0
        %v2928 = vadd.f32 %v2663, %v2927
        %v2929 = vpop.f32.mrb[0].mxu0
        %2930 = vmatprep.mubr.f32.mxu0 0.0
        %v2931 = vand.u32 %v1092, 4294901760
        %2932 = vmatmul.mubr.f32.gmra.mrb[0].mxu0 %v2931
        %v2933 = vpop.f32.mrb[0].mxu0
        %v2934 = vadd.f32 %v2669, %v2933
        %v2935 = vpop.f32.mrb[0].mxu0
        %2936 = vmatprep.mubr.f32.mxu0 0.0
        %v2937 = vand.u32 %v1095, 4294901760
        %2938 = vmatmul.mubr.f32.gmra.mrb[0].mxu0 %v2937
        %v2939 = vpop.f32.mrb[0].mxu0
        %v2940 = vadd.f32 %v2675, %v2939
        %v2941 = vpop.f32.mrb[0].mxu0
        %2942 = vmatprep.mubr.f32.mxu0 0.0
        %v2943 = vand.u32 %v1098, 4294901760
        %2944 = vmatmul.mubr.f32.gmra.mrb[0].mxu0 %v2943
        %v2945 = vpop.f32.mrb[0].mxu0
        %v2946 = vadd.f32 %v2681, %v2945
        %v2947 = vpop.f32.mrb[0].mxu0
        %2948 = vmatprep.mubr.f32.mxu0 0.0
        %v2949 = vand.u32 %v1101, 4294901760
        %2950 = vmatmul.mubr.f32.gmra.mrb[0].mxu0 %v2949
        %v2951 = vpop.f32.mrb[0].mxu0
        %v2952 = vadd.f32 %v2687, %v2951
        %v2953 = vpop.f32.mrb[0].mxu0
        %2954 = vmatprep.mubr.f32.mxu0 0.0
        %v2955 = vand.u32 %v1104, 4294901760
        %2956 = vmatmul.mubr.f32.gmra.mrb[0].mxu0 %v2955
        %v2957 = vpop.f32.mrb[0].mxu0
        %v2958 = vadd.f32 %v2693, %v2957
        %v2959 = vpop.f32.mrb[0].mxu0
        %2960 = vmatprep.mubr.f32.mxu0 0.0
        %v2961 = vand.u32 %v1107, 4294901760
        %2962 = vmatmul.mubr.f32.gmra.mrb[0].mxu0 %v2961
        %v2963 = vpop.f32.mrb[0].mxu0
        %v2964 = vadd.f32 %v2699, %v2963
        %v2965 = vpop.f32.mrb[0].mxu0
        %2966 = vmatprep.mubr.f32.mxu0 0.0
        %v2967 = vand.u32 %v1110, 4294901760
        %2968 = vmatmul.mubr.f32.gmra.mrb[0].mxu0 %v2967
        %v2969 = vpop.f32.mrb[0].mxu0
        %v2970 = vadd.f32 %v2705, %v2969
        %v2971 = vpop.f32.mrb[0].mxu0
        %2972 = vmatprep.mubr.f32.mxu0 0.0
        %v2973 = vand.u32 %v1113, 4294901760
        %2974 = vmatmul.mubr.f32.gmra.mrb[0].mxu0 %v2973
        %v2975 = vpop.f32.mrb[0].mxu0
        %v2976 = vadd.f32 %v2711, %v2975
        %v2977 = vpop.f32.mrb[0].mxu0
        %2978 = vmatprep.mubr.f32.mxu0 0.0
        %v2979 = vand.u32 %v1116, 4294901760
        %2980 = vmatmul.mubr.f32.gmra.mrb[0].mxu0 %v2979
        %v2981 = vpop.f32.mrb[0].mxu0
        %v2982 = vadd.f32 %v2717, %v2981
        %v2983 = vpop.f32.mrb[0].mxu0
        %2984 = vmatprep.mubr.f32.mxu0 0.0
        %v2985 = vand.u32 %v1119, 4294901760
        %2986 = vmatmul.mubr.f32.gmra.mrb[0].mxu0 %v2985
        %v2987 = vpop.f32.mrb[0].mxu0
        %v2988 = vadd.f32 %v2723, %v2987
        %v2989 = vpop.f32.mrb[0].mxu0
        %2990 = vdwg.mxu0
        %v2991 = vld [vmem:[%s3] sm:$0xff]
        %v2992 = vld [vmem:[%s3 + $0x8] sm:$0xff]
        %v2993 = vld [vmem:[%s3 + $0x10] sm:$0xff]
        %v2994 = vld [vmem:[%s3 + $0x18] sm:$0xff]
        %v2995 = vld [vmem:[%s3 + $0x20] sm:$0xff]
        %v2996 = vld [vmem:[%s3 + $0x28] sm:$0xff]
        %v2997 = vld [vmem:[%s3 + $0x30] sm:$0xff]
        %v2998 = vld [vmem:[%s3 + $0x38] sm:$0xff]
        %v2999 = vld [vmem:[%s3 + $0x40] sm:$0xff]
        %v3000 = vld [vmem:[%s3 + $0x48] sm:$0xff]
        %v3001 = vld [vmem:[%s3 + $0x50] sm:$0xff]
        %v3002 = vld [vmem:[%s3 + $0x58] sm:$0xff]
        %v3003 = vld [vmem:[%s3 + $0x60] sm:$0xff]
        %v3004 = vld [vmem:[%s3 + $0x68] sm:$0xff]
        %v3005 = vld [vmem:[%s3 + $0x70] sm:$0xff]
        %v3006 = vld [vmem:[%s3 + $0x78] sm:$0xff]
        %v3007 = vld [vmem:[%s3 + $0x80] sm:$0xff]
        %v3008 = vld [vmem:[%s3 + $0x88] sm:$0xff]
        %v3009 = vld [vmem:[%s3 + $0x90] sm:$0xff]
        %v3010 = vld [vmem:[%s3 + $0x98] sm:$0xff]
        %v3011 = vld [vmem:[%s3 + $0xa0] sm:$0xff]
        %v3012 = vld [vmem:[%s3 + $0xa8] sm:$0xff]
        %v3013 = vld [vmem:[%s3 + $0xb0] sm:$0xff]
        %v3014 = vld [vmem:[%s3 + $0xb8] sm:$0xff]
        %v3015 = vld [vmem:[%s3 + $0xc0] sm:$0xff]
        %v3016 = vld [vmem:[%s3 + $0xc8] sm:$0xff]
        %v3017 = vld [vmem:[%s3 + $0xd0] sm:$0xff]
        %v3018 = vld [vmem:[%s3 + $0xd8] sm:$0xff]
        %v3019 = vld [vmem:[%s3 + $0xe0] sm:$0xff]
        %v3020 = vld [vmem:[%s3 + $0xe8] sm:$0xff]
        %v3021 = vld [vmem:[%s3 + $0xf0] sm:$0xff]
        %v3022 = vld [vmem:[%s3 + $0xf8] sm:$0xff]
        %v3023 = vld [vmem:[%s3 + $0x100] sm:$0xff]
        %v3024 = vld [vmem:[%s3 + $0x108] sm:$0xff]
        %v3025 = vld [vmem:[%s3 + $0x110] sm:$0xff]
        %v3026 = vld [vmem:[%s3 + $0x118] sm:$0xff]
        %v3027 = vld [vmem:[%s3 + $0x120] sm:$0xff]
        %v3028 = vld [vmem:[%s3 + $0x128] sm:$0xff]
        %v3029 = vld [vmem:[%s3 + $0x130] sm:$0xff]
        %v3030 = vld [vmem:[%s3 + $0x138] sm:$0xff]
        %v3031 = vld [vmem:[%s3 + $0x140] sm:$0xff]
        %v3032 = vld [vmem:[%s3 + $0x148] sm:$0xff]
        %v3033 = vld [vmem:[%s3 + $0x150] sm:$0xff]
        %v3034 = vld [vmem:[%s3 + $0x158] sm:$0xff]
        %v3035 = vld [vmem:[%s3 + $0x160] sm:$0xff]
        %v3036 = vld [vmem:[%s3 + $0x168] sm:$0xff]
        %v3037 = vld [vmem:[%s3 + $0x170] sm:$0xff]
        %v3038 = vld [vmem:[%s3 + $0x178] sm:$0xff]
        %v3039 = vld [vmem:[%s3 + $0x180] sm:$0xff]
        %v3040 = vld [vmem:[%s3 + $0x188] sm:$0xff]
        %v3041 = vld [vmem:[%s3 + $0x190] sm:$0xff]
        %v3042 = vld [vmem:[%s3 + $0x198] sm:$0xff]
        %v3043 = vld [vmem:[%s3 + $0x1a0] sm:$0xff]
        %v3044 = vld [vmem:[%s3 + $0x1a8] sm:$0xff]
        %v3045 = vld [vmem:[%s3 + $0x1b0] sm:$0xff]
        %v3046 = vld [vmem:[%s3 + $0x1b8] sm:$0xff]
        %v3047 = vld [vmem:[%s3 + $0x1c0] sm:$0xff]
        %v3048 = vld [vmem:[%s3 + $0x1c8] sm:$0xff]
        %v3049 = vld [vmem:[%s3 + $0x1d0] sm:$0xff]
        %v3050 = vld [vmem:[%s3 + $0x1d8] sm:$0xff]
        %v3051 = vld [vmem:[%s3 + $0x1e0] sm:$0xff]
        %v3052 = vld [vmem:[%s3 + $0x1e8] sm:$0xff]
        %v3053 = vld [vmem:[%s3 + $0x1f0] sm:$0xff]
        %v3054 = vld [vmem:[%s3 + $0x1f8] sm:$0xff]
        %3055 = vmatprep.subr.mxu0 0.0
        %v3056 = vand.u32 %v2991, 4294901760
        %3057 = vmatpush1.msra.mxu0 %v3056
        %3058 = vmatprep.subr.mxu0 0.0
        %v3059 = vand.u32 %v2992, 4294901760
        %3060 = vmatpush1.msra.mxu0 %v3059
        %3061 = vmatprep.subr.mxu0 0.0
        %v3062 = vand.u32 %v2993, 4294901760
        %3063 = vmatpush1.msra.mxu0 %v3062
        %3064 = vmatprep.subr.mxu0 0.0
        %v3065 = vand.u32 %v2994, 4294901760
        %3066 = vmatpush1.msra.mxu0 %v3065
        %3067 = vmatprep.subr.mxu0 0.0
        %v3068 = vand.u32 %v2995, 4294901760
        %3069 = vmatpush1.msra.mxu0 %v3068
        %3070 = vmatprep.subr.mxu0 0.0
        %v3071 = vand.u32 %v2996, 4294901760
        %3072 = vmatpush1.msra.mxu0 %v3071
        %3073 = vmatprep.subr.mxu0 0.0
        %v3074 = vand.u32 %v2997, 4294901760
        %3075 = vmatpush1.msra.mxu0 %v3074
        %3076 = vmatprep.subr.mxu0 0.0
        %v3077 = vand.u32 %v2998, 4294901760
        %3078 = vmatpush1.msra.mxu0 %v3077
        %3079 = vmatprep.subr.mxu0 0.0
        %v3080 = vand.u32 %v2999, 4294901760
        %3081 = vmatpush1.msra.mxu0 %v3080
        %3082 = vmatprep.subr.mxu0 0.0
        %v3083 = vand.u32 %v3000, 4294901760
        %3084 = vmatpush1.msra.mxu0 %v3083
        %3085 = vmatprep.subr.mxu0 0.0
        %v3086 = vand.u32 %v3001, 4294901760
        %3087 = vmatpush1.msra.mxu0 %v3086
        %3088 = vmatprep.subr.mxu0 0.0
        %v3089 = vand.u32 %v3002, 4294901760
        %3090 = vmatpush1.msra.mxu0 %v3089
        %3091 = vmatprep.subr.mxu0 0.0
        %v3092 = vand.u32 %v3003, 4294901760
        %3093 = vmatpush1.msra.mxu0 %v3092
        %3094 = vmatprep.subr.mxu0 0.0
        %v3095 = vand.u32 %v3004, 4294901760
        %3096 = vmatpush1.msra.mxu0 %v3095
        %3097 = vmatprep.subr.mxu0 0.0
        %v3098 = vand.u32 %v3005, 4294901760
        %3099 = vmatpush1.msra.mxu0 %v3098
        %3100 = vmatprep.subr.mxu0 0.0
        %v3101 = vand.u32 %v3006, 4294901760
        %3102 = vmatpush1.msra.mxu0 %v3101
        %3103 = vmatprep.subr.mxu0 0.0
        %v3104 = vand.u32 %v3007, 4294901760
        %3105 = vmatpush1.msra.mxu0 %v3104
        %3106 = vmatprep.subr.mxu0 0.0
        %v3107 = vand.u32 %v3008, 4294901760
        %3108 = vmatpush1.msra.mxu0 %v3107
        %3109 = vmatprep.subr.mxu0 0.0
        %v3110 = vand.u32 %v3009, 4294901760
        %3111 = vmatpush1.msra.mxu0 %v3110
        %3112 = vmatprep.subr.mxu0 0.0
        %v3113 = vand.u32 %v3010, 4294901760
        %3114 = vmatpush1.msra.mxu0 %v3113
        %3115 = vmatprep.subr.mxu0 0.0
        %v3116 = vand.u32 %v3011, 4294901760
        %3117 = vmatpush1.msra.mxu0 %v3116
        %3118 = vmatprep.subr.mxu0 0.0
        %v3119 = vand.u32 %v3012, 4294901760
        %3120 = vmatpush1.msra.mxu0 %v3119
        %3121 = vmatprep.subr.mxu0 0.0
        %v3122 = vand.u32 %v3013, 4294901760
        %3123 = vmatpush1.msra.mxu0 %v3122
        %3124 = vmatprep.subr.mxu0 0.0
        %v3125 = vand.u32 %v3014, 4294901760
        %3126 = vmatpush1.msra.mxu0 %v3125
        %3127 = vmatprep.subr.mxu0 0.0
        %v3128 = vand.u32 %v3015, 4294901760
        %3129 = vmatpush1.msra.mxu0 %v3128
        %3130 = vmatprep.subr.mxu0 0.0
        %v3131 = vand.u32 %v3016, 4294901760
        %3132 = vmatpush1.msra.mxu0 %v3131
        %3133 = vmatprep.subr.mxu0 0.0
        %v3134 = vand.u32 %v3017, 4294901760
        %3135 = vmatpush1.msra.mxu0 %v3134
        %3136 = vmatprep.subr.mxu0 0.0
        %v3137 = vand.u32 %v3018, 4294901760
        %3138 = vmatpush1.msra.mxu0 %v3137
        %3139 = vmatprep.subr.mxu0 0.0
        %v3140 = vand.u32 %v3019, 4294901760
        %3141 = vmatpush1.msra.mxu0 %v3140
        %3142 = vmatprep.subr.mxu0 0.0
        %v3143 = vand.u32 %v3020, 4294901760
        %3144 = vmatpush1.msra.mxu0 %v3143
        %3145 = vmatprep.subr.mxu0 0.0
        %v3146 = vand.u32 %v3021, 4294901760
        %3147 = vmatpush1.msra.mxu0 %v3146
        %3148 = vmatprep.subr.mxu0 0.0
        %v3149 = vand.u32 %v3022, 4294901760
        %3150 = vmatpush1.msra.mxu0 %v3149
        %v3151 = vand.u32 %v889, 4294901760
        %v3152 = vsub.f32 %v889, %v3151
        %v3153 = vand.u32 %v3152, 4294901760
        %v3154 = vsub.f32 %v3152, %v3153
        %v3155 = vand.u32 %v3154, 4294901760
        %3156 = vmatprep.mubr.f32.mxu0 %v3155
        %v3157 = vand.u32 %v888, 4294901760
        %v3158 = vsub.f32 %v888, %v3157
        %v3159 = vand.u32 %v3158, 4294901760
        %v3160 = vsub.f32 %v3158, %v3159
        %v3161 = vand.u32 %v3160, 4294901760
        %3162 = vmatmul.mubr.f32.gmra.mrb[0].mxu0 %v3161
        %v3163 = vpop.f32.mrb[0].mxu0
        %v3164 = vadd.f32 0.0, %v3163
        %v3165 = vpop.f32.mrb[0].mxu0
        %v3166 = vand.u32 %v893, 4294901760
        %v3167 = vsub.f32 %v893, %v3166
        %v3168 = vand.u32 %v3167, 4294901760
        %v3169 = vsub.f32 %v3167, %v3168
        %v3170 = vand.u32 %v3169, 4294901760
        %3171 = vmatprep.mubr.f32.mxu0 %v3170
        %v3172 = vand.u32 %v892, 4294901760
        %v3173 = vsub.f32 %v892, %v3172
        %v3174 = vand.u32 %v3173, 4294901760
        %v3175 = vsub.f32 %v3173, %v3174
        %v3176 = vand.u32 %v3175, 4294901760
        %3177 = vmatmul.mubr.f32.gmra.mrb[0].mxu0 %v3176
        %v3178 = vpop.f32.mrb[0].mxu0
        %v3179 = vadd.f32 0.0, %v3178
        %v3180 = vpop.f32.mrb[0].mxu0
        %v3181 = vand.u32 %v897, 4294901760
        %v3182 = vsub.f32 %v897, %v3181
        %v3183 = vand.u32 %v3182, 4294901760
        %v3184 = vsub.f32 %v3182, %v3183
        %v3185 = vand.u32 %v3184, 4294901760
        %3186 = vmatprep.mubr.f32.mxu0 %v3185
        %v3187 = vand.u32 %v896, 4294901760
        %v3188 = vsub.f32 %v896, %v3187
        %v3189 = vand.u32 %v3188, 4294901760
        %v3190 = vsub.f32 %v3188, %v3189
        %v3191 = vand.u32 %v3190, 4294901760
        %3192 = vmatmul.mubr.f32.gmra.mrb[0].mxu0 %v3191
        %v3193 = vpop.f32.mrb[0].mxu0
        %v3194 = vadd.f32 0.0, %v3193
        %v3195 = vpop.f32.mrb[0].mxu0
        %v3196 = vand.u32 %v901, 4294901760
        %v3197 = vsub.f32 %v901, %v3196
        %v3198 = vand.u32 %v3197, 4294901760
        %v3199 = vsub.f32 %v3197, %v3198
        %v3200 = vand.u32 %v3199, 4294901760
        %3201 = vmatprep.mubr.f32.mxu0 %v3200
        %v3202 = vand.u32 %v900, 4294901760
        %v3203 = vsub.f32 %v900, %v3202
        %v3204 = vand.u32 %v3203, 4294901760
        %v3205 = vsub.f32 %v3203, %v3204
        %v3206 = vand.u32 %v3205, 4294901760
        %3207 = vmatmul.mubr.f32.gmra.mrb[0].mxu0 %v3206
        %v3208 = vpop.f32.mrb[0].mxu0
        %v3209 = vadd.f32 0.0, %v3208
        %v3210 = vpop.f32.mrb[0].mxu0
        %v3211 = vand.u32 %v905, 4294901760
        %v3212 = vsub.f32 %v905, %v3211
        %v3213 = vand.u32 %v3212, 4294901760
        %v3214 = vsub.f32 %v3212, %v3213
        %v3215 = vand.u32 %v3214, 4294901760
        %3216 = vmatprep.mubr.f32.mxu0 %v3215
        %v3217 = vand.u32 %v904, 4294901760
        %v3218 = vsub.f32 %v904, %v3217
        %v3219 = vand.u32 %v3218, 4294901760
        %v3220 = vsub.f32 %v3218, %v3219
        %v3221 = vand.u32 %v3220, 4294901760
        %3222 = vmatmul.mubr.f32.gmra.mrb[0].mxu0 %v3221
        %v3223 = vpop.f32.mrb[0].mxu0
        %v3224 = vadd.f32 0.0, %v3223
        %v3225 = vpop.f32.mrb[0].mxu0
        %v3226 = vand.u32 %v909, 4294901760
        %v3227 = vsub.f32 %v909, %v3226
        %v3228 = vand.u32 %v3227, 4294901760
        %v3229 = vsub.f32 %v3227, %v3228
        %v3230 = vand.u32 %v3229, 4294901760
        %3231 = vmatprep.mubr.f32.mxu0 %v3230
        %v3232 = vand.u32 %v908, 4294901760
        %v3233 = vsub.f32 %v908, %v3232
        %v3234 = vand.u32 %v3233, 4294901760
        %v3235 = vsub.f32 %v3233, %v3234
        %v3236 = vand.u32 %v3235, 4294901760
        %3237 = vmatmul.mubr.f32.gmra.mrb[0].mxu0 %v3236
        %v3238 = vpop.f32.mrb[0].mxu0
        %v3239 = vadd.f32 0.0, %v3238
        %v3240 = vpop.f32.mrb[0].mxu0
        %v3241 = vand.u32 %v913, 4294901760
        %v3242 = vsub.f32 %v913, %v3241
        %v3243 = vand.u32 %v3242, 4294901760
        %v3244 = vsub.f32 %v3242, %v3243
        %v3245 = vand.u32 %v3244, 4294901760
        %3246 = vmatprep.mubr.f32.mxu0 %v3245
        %v3247 = vand.u32 %v912, 4294901760
        %v3248 = vsub.f32 %v912, %v3247
        %v3249 = vand.u32 %v3248, 4294901760
        %v3250 = vsub.f32 %v3248, %v3249
        %v3251 = vand.u32 %v3250, 4294901760
        %3252 = vmatmul.mubr.f32.gmra.mrb[0].mxu0 %v3251
        %v3253 = vpop.f32.mrb[0].mxu0
        %v3254 = vadd.f32 0.0, %v3253
        %v3255 = vpop.f32.mrb[0].mxu0
        %v3256 = vand.u32 %v917, 4294901760
        %v3257 = vsub.f32 %v917, %v3256
        %v3258 = vand.u32 %v3257, 4294901760
        %v3259 = vsub.f32 %v3257, %v3258
        %v3260 = vand.u32 %v3259, 4294901760
        %3261 = vmatprep.mubr.f32.mxu0 %v3260
        %v3262 = vand.u32 %v916, 4294901760
        %v3263 = vsub.f32 %v916, %v3262
        %v3264 = vand.u32 %v3263, 4294901760
        %v3265 = vsub.f32 %v3263, %v3264
        %v3266 = vand.u32 %v3265, 4294901760
        %3267 = vmatmul.mubr.f32.gmra.mrb[0].mxu0 %v3266
        %v3268 = vpop.f32.mrb[0].mxu0
        %v3269 = vadd.f32 0.0, %v3268
        %v3270 = vpop.f32.mrb[0].mxu0
        %v3271 = vand.u32 %v921, 4294901760
        %v3272 = vsub.f32 %v921, %v3271
        %v3273 = vand.u32 %v3272, 4294901760
        %v3274 = vsub.f32 %v3272, %v3273
        %v3275 = vand.u32 %v3274, 4294901760
        %3276 = vmatprep.mubr.f32.mxu0 %v3275
        %v3277 = vand.u32 %v920, 4294901760
        %v3278 = vsub.f32 %v920, %v3277
        %v3279 = vand.u32 %v3278, 4294901760
        %v3280 = vsub.f32 %v3278, %v3279
        %v3281 = vand.u32 %v3280, 4294901760
        %3282 = vmatmul.mubr.f32.gmra.mrb[0].mxu0 %v3281
        %v3283 = vpop.f32.mrb[0].mxu0
        %v3284 = vadd.f32 0.0, %v3283
        %v3285 = vpop.f32.mrb[0].mxu0
        %v3286 = vand.u32 %v925, 4294901760
        %v3287 = vsub.f32 %v925, %v3286
        %v3288 = vand.u32 %v3287, 4294901760
        %v3289 = vsub.f32 %v3287, %v3288
        %v3290 = vand.u32 %v3289, 4294901760
        %3291 = vmatprep.mubr.f32.mxu0 %v3290
        %v3292 = vand.u32 %v924, 4294901760
        %v3293 = vsub.f32 %v924, %v3292
        %v3294 = vand.u32 %v3293, 4294901760
        %v3295 = vsub.f32 %v3293, %v3294
        %v3296 = vand.u32 %v3295, 4294901760
        %3297 = vmatmul.mubr.f32.gmra.mrb[0].mxu0 %v3296
        %v3298 = vpop.f32.mrb[0].mxu0
        %v3299 = vadd.f32 0.0, %v3298
        %v3300 = vpop.f32.mrb[0].mxu0
        %v3301 = vand.u32 %v929, 4294901760
        %v3302 = vsub.f32 %v929, %v3301
        %v3303 = vand.u32 %v3302, 4294901760
        %v3304 = vsub.f32 %v3302, %v3303
        %v3305 = vand.u32 %v3304, 4294901760
        %3306 = vmatprep.mubr.f32.mxu0 %v3305
        %v3307 = vand.u32 %v928, 4294901760
        %v3308 = vsub.f32 %v928, %v3307
        %v3309 = vand.u32 %v3308, 4294901760
        %v3310 = vsub.f32 %v3308, %v3309
        %v3311 = vand.u32 %v3310, 4294901760
        %3312 = vmatmul.mubr.f32.gmra.mrb[0].mxu0 %v3311
        %v3313 = vpop.f32.mrb[0].mxu0
        %v3314 = vadd.f32 0.0, %v3313
        %v3315 = vpop.f32.mrb[0].mxu0
        %v3316 = vand.u32 %v933, 4294901760
        %v3317 = vsub.f32 %v933, %v3316
        %v3318 = vand.u32 %v3317, 4294901760
        %v3319 = vsub.f32 %v3317, %v3318
        %v3320 = vand.u32 %v3319, 4294901760
        %3321 = vmatprep.mubr.f32.mxu0 %v3320
        %v3322 = vand.u32 %v932, 4294901760
        %v3323 = vsub.f32 %v932, %v3322
        %v3324 = vand.u32 %v3323, 4294901760
        %v3325 = vsub.f32 %v3323, %v3324
        %v3326 = vand.u32 %v3325, 4294901760
        %3327 = vmatmul.mubr.f32.gmra.mrb[0].mxu0 %v3326
        %v3328 = vpop.f32.mrb[0].mxu0
        %v3329 = vadd.f32 0.0, %v3328
        %v3330 = vpop.f32.mrb[0].mxu0
        %v3331 = vand.u32 %v937, 4294901760
        %v3332 = vsub.f32 %v937, %v3331
        %v3333 = vand.u32 %v3332, 4294901760
        %v3334 = vsub.f32 %v3332, %v3333
        %v3335 = vand.u32 %v3334, 4294901760
        %3336 = vmatprep.mubr.f32.mxu0 %v3335
        %v3337 = vand.u32 %v936, 4294901760
        %v3338 = vsub.f32 %v936, %v3337
        %v3339 = vand.u32 %v3338, 4294901760
        %v3340 = vsub.f32 %v3338, %v3339
        %v3341 = vand.u32 %v3340, 4294901760
        %3342 = vmatmul.mubr.f32.gmra.mrb[0].mxu0 %v3341
        %v3343 = vpop.f32.mrb[0].mxu0
        %v3344 = vadd.f32 0.0, %v3343
        %v3345 = vpop.f32.mrb[0].mxu0
        %v3346 = vand.u32 %v941, 4294901760
        %v3347 = vsub.f32 %v941, %v3346
        %v3348 = vand.u32 %v3347, 4294901760
        %v3349 = vsub.f32 %v3347, %v3348
        %v3350 = vand.u32 %v3349, 4294901760
        %3351 = vmatprep.mubr.f32.mxu0 %v3350
        %v3352 = vand.u32 %v940, 4294901760
        %v3353 = vsub.f32 %v940, %v3352
        %v3354 = vand.u32 %v3353, 4294901760
        %v3355 = vsub.f32 %v3353, %v3354
        %v3356 = vand.u32 %v3355, 4294901760
        %3357 = vmatmul.mubr.f32.gmra.mrb[0].mxu0 %v3356
        %v3358 = vpop.f32.mrb[0].mxu0
        %v3359 = vadd.f32 0.0, %v3358
        %v3360 = vpop.f32.mrb[0].mxu0
        %v3361 = vand.u32 %v945, 4294901760
        %v3362 = vsub.f32 %v945, %v3361
        %v3363 = vand.u32 %v3362, 4294901760
        %v3364 = vsub.f32 %v3362, %v3363
        %v3365 = vand.u32 %v3364, 4294901760
        %3366 = vmatprep.mubr.f32.mxu0 %v3365
        %v3367 = vand.u32 %v944, 4294901760
        %v3368 = vsub.f32 %v944, %v3367
        %v3369 = vand.u32 %v3368, 4294901760
        %v3370 = vsub.f32 %v3368, %v3369
        %v3371 = vand.u32 %v3370, 4294901760
        %3372 = vmatmul.mubr.f32.gmra.mrb[0].mxu0 %v3371
        %v3373 = vpop.f32.mrb[0].mxu0
        %v3374 = vadd.f32 0.0, %v3373
        %v3375 = vpop.f32.mrb[0].mxu0
        %v3376 = vand.u32 %v949, 4294901760
        %v3377 = vsub.f32 %v949, %v3376
        %v3378 = vand.u32 %v3377, 4294901760
        %v3379 = vsub.f32 %v3377, %v3378
        %v3380 = vand.u32 %v3379, 4294901760
        %3381 = vmatprep.mubr.f32.mxu0 %v3380
        %v3382 = vand.u32 %v948, 4294901760
        %v3383 = vsub.f32 %v948, %v3382
        %v3384 = vand.u32 %v3383, 4294901760
        %v3385 = vsub.f32 %v3383, %v3384
        %v3386 = vand.u32 %v3385, 4294901760
        %3387 = vmatmul.mubr.f32.gmra.mrb[0].mxu0 %v3386
        %v3388 = vpop.f32.mrb[0].mxu0
        %v3389 = vadd.f32 0.0, %v3388
        %v3390 = vpop.f32.mrb[0].mxu0
        %v3391 = vand.u32 %v953, 4294901760
        %v3392 = vsub.f32 %v953, %v3391
        %v3393 = vand.u32 %v3392, 4294901760
        %v3394 = vsub.f32 %v3392, %v3393
        %v3395 = vand.u32 %v3394, 4294901760
        %3396 = vmatprep.mubr.f32.mxu0 %v3395
        %v3397 = vand.u32 %v952, 4294901760
        %v3398 = vsub.f32 %v952, %v3397
        %v3399 = vand.u32 %v3398, 4294901760
        %v3400 = vsub.f32 %v3398, %v3399
        %v3401 = vand.u32 %v3400, 4294901760
        %3402 = vmatmul.mubr.f32.gmra.mrb[0].mxu0 %v3401
        %v3403 = vpop.f32.mrb[0].mxu0
        %v3404 = vadd.f32 0.0, %v3403
        %v3405 = vpop.f32.mrb[0].mxu0
        %v3406 = vand.u32 %v957, 4294901760
        %v3407 = vsub.f32 %v957, %v3406
        %v3408 = vand.u32 %v3407, 4294901760
        %v3409 = vsub.f32 %v3407, %v3408
        %v3410 = vand.u32 %v3409, 4294901760
        %3411 = vmatprep.mubr.f32.mxu0 %v3410
        %v3412 = vand.u32 %v956, 4294901760
        %v3413 = vsub.f32 %v956, %v3412
        %v3414 = vand.u32 %v3413, 4294901760
        %v3415 = vsub.f32 %v3413, %v3414
        %v3416 = vand.u32 %v3415, 4294901760
        %3417 = vmatmul.mubr.f32.gmra.mrb[0].mxu0 %v3416
        %v3418 = vpop.f32.mrb[0].mxu0
        %v3419 = vadd.f32 0.0, %v3418
        %v3420 = vpop.f32.mrb[0].mxu0
        %v3421 = vand.u32 %v961, 4294901760
        %v3422 = vsub.f32 %v961, %v3421
        %v3423 = vand.u32 %v3422, 4294901760
        %v3424 = vsub.f32 %v3422, %v3423
        %v3425 = vand.u32 %v3424, 4294901760
        %3426 = vmatprep.mubr.f32.mxu0 %v3425
        %v3427 = vand.u32 %v960, 4294901760
        %v3428 = vsub.f32 %v960, %v3427
        %v3429 = vand.u32 %v3428, 4294901760
        %v3430 = vsub.f32 %v3428, %v3429
        %v3431 = vand.u32 %v3430, 4294901760
        %3432 = vmatmul.mubr.f32.gmra.mrb[0].mxu0 %v3431
        %v3433 = vpop.f32.mrb[0].mxu0
        %v3434 = vadd.f32 0.0, %v3433
        %v3435 = vpop.f32.mrb[0].mxu0
        %v3436 = vand.u32 %v965, 4294901760
        %v3437 = vsub.f32 %v965, %v3436
        %v3438 = vand.u32 %v3437, 4294901760
        %v3439 = vsub.f32 %v3437, %v3438
        %v3440 = vand.u32 %v3439, 4294901760
        %3441 = vmatprep.mubr.f32.mxu0 %v3440
        %v3442 = vand.u32 %v964, 4294901760
        %v3443 = vsub.f32 %v964, %v3442
        %v3444 = vand.u32 %v3443, 4294901760
        %v3445 = vsub.f32 %v3443, %v3444
        %v3446 = vand.u32 %v3445, 4294901760
        %3447 = vmatmul.mubr.f32.gmra.mrb[0].mxu0 %v3446
        %v3448 = vpop.f32.mrb[0].mxu0
        %v3449 = vadd.f32 0.0, %v3448
        %v3450 = vpop.f32.mrb[0].mxu0
        %v3451 = vand.u32 %v969, 4294901760
        %v3452 = vsub.f32 %v969, %v3451
        %v3453 = vand.u32 %v3452, 4294901760
        %v3454 = vsub.f32 %v3452, %v3453
        %v3455 = vand.u32 %v3454, 4294901760
        %3456 = vmatprep.mubr.f32.mxu0 %v3455
        %v3457 = vand.u32 %v968, 4294901760
        %v3458 = vsub.f32 %v968, %v3457
        %v3459 = vand.u32 %v3458, 4294901760
        %v3460 = vsub.f32 %v3458, %v3459
        %v3461 = vand.u32 %v3460, 4294901760
        %3462 = vmatmul.mubr.f32.gmra.mrb[0].mxu0 %v3461
        %v3463 = vpop.f32.mrb[0].mxu0
        %v3464 = vadd.f32 0.0, %v3463
        %v3465 = vpop.f32.mrb[0].mxu0
        %v3466 = vand.u32 %v973, 4294901760
        %v3467 = vsub.f32 %v973, %v3466
        %v3468 = vand.u32 %v3467, 4294901760
        %v3469 = vsub.f32 %v3467, %v3468
        %v3470 = vand.u32 %v3469, 4294901760
        %3471 = vmatprep.mubr.f32.mxu0 %v3470
        %v3472 = vand.u32 %v972, 4294901760
        %v3473 = vsub.f32 %v972, %v3472
        %v3474 = vand.u32 %v3473, 4294901760
        %v3475 = vsub.f32 %v3473, %v3474
        %v3476 = vand.u32 %v3475, 4294901760
        %3477 = vmatmul.mubr.f32.gmra.mrb[0].mxu0 %v3476
        %v3478 = vpop.f32.mrb[0].mxu0
        %v3479 = vadd.f32 0.0, %v3478
        %v3480 = vpop.f32.mrb[0].mxu0
        %v3481 = vand.u32 %v977, 4294901760
        %v3482 = vsub.f32 %v977, %v3481
        %v3483 = vand.u32 %v3482, 4294901760
        %v3484 = vsub.f32 %v3482, %v3483
        %v3485 = vand.u32 %v3484, 4294901760
        %3486 = vmatprep.mubr.f32.mxu0 %v3485
        %v3487 = vand.u32 %v976, 4294901760
        %v3488 = vsub.f32 %v976, %v3487
        %v3489 = vand.u32 %v3488, 4294901760
        %v3490 = vsub.f32 %v3488, %v3489
        %v3491 = vand.u32 %v3490, 4294901760
        %3492 = vmatmul.mubr.f32.gmra.mrb[0].mxu0 %v3491
        %v3493 = vpop.f32.mrb[0].mxu0
        %v3494 = vadd.f32 0.0, %v3493
        %v3495 = vpop.f32.mrb[0].mxu0
        %v3496 = vand.u32 %v981, 4294901760
        %v3497 = vsub.f32 %v981, %v3496
        %v3498 = vand.u32 %v3497, 4294901760
        %v3499 = vsub.f32 %v3497, %v3498
        %v3500 = vand.u32 %v3499, 4294901760
        %3501 = vmatprep.mubr.f32.mxu0 %v3500
        %v3502 = vand.u32 %v980, 4294901760
        %v3503 = vsub.f32 %v980, %v3502
        %v3504 = vand.u32 %v3503, 4294901760
        %v3505 = vsub.f32 %v3503, %v3504
        %v3506 = vand.u32 %v3505, 4294901760
        %3507 = vmatmul.mubr.f32.gmra.mrb[0].mxu0 %v3506
        %v3508 = vpop.f32.mrb[0].mxu0
        %v3509 = vadd.f32 0.0, %v3508
        %v3510 = vpop.f32.mrb[0].mxu0
        %v3511 = vand.u32 %v985, 4294901760
        %v3512 = vsub.f32 %v985, %v3511
        %v3513 = vand.u32 %v3512, 4294901760
        %v3514 = vsub.f32 %v3512, %v3513
        %v3515 = vand.u32 %v3514, 4294901760
        %3516 = vmatprep.mubr.f32.mxu0 %v3515
        %v3517 = vand.u32 %v984, 4294901760
        %v3518 = vsub.f32 %v984, %v3517
        %v3519 = vand.u32 %v3518, 4294901760
        %v3520 = vsub.f32 %v3518, %v3519
        %v3521 = vand.u32 %v3520, 4294901760
        %3522 = vmatmul.mubr.f32.gmra.mrb[0].mxu0 %v3521
        %v3523 = vpop.f32.mrb[0].mxu0
        %v3524 = vadd.f32 0.0, %v3523
        %v3525 = vpop.f32.mrb[0].mxu0
        %v3526 = vand.u32 %v989, 4294901760
        %v3527 = vsub.f32 %v989, %v3526
        %v3528 = vand.u32 %v3527, 4294901760
        %v3529 = vsub.f32 %v3527, %v3528
        %v3530 = vand.u32 %v3529, 4294901760
        %3531 = vmatprep.mubr.f32.mxu0 %v3530
        %v3532 = vand.u32 %v988, 4294901760
        %v3533 = vsub.f32 %v988, %v3532
        %v3534 = vand.u32 %v3533, 4294901760
        %v3535 = vsub.f32 %v3533, %v3534
        %v3536 = vand.u32 %v3535, 4294901760
        %3537 = vmatmul.mubr.f32.gmra.mrb[0].mxu0 %v3536
        %v3538 = vpop.f32.mrb[0].mxu0
        %v3539 = vadd.f32 0.0, %v3538
        %v3540 = vpop.f32.mrb[0].mxu0
        %v3541 = vand.u32 %v993, 4294901760
        %v3542 = vsub.f32 %v993, %v3541
        %v3543 = vand.u32 %v3542, 4294901760
        %v3544 = vsub.f32 %v3542, %v3543
        %v3545 = vand.u32 %v3544, 4294901760
        %3546 = vmatprep.mubr.f32.mxu0 %v3545
        %v3547 = vand.u32 %v992, 4294901760
        %v3548 = vsub.f32 %v992, %v3547
        %v3549 = vand.u32 %v3548, 4294901760
        %v3550 = vsub.f32 %v3548, %v3549
        %v3551 = vand.u32 %v3550, 4294901760
        %3552 = vmatmul.mubr.f32.gmra.mrb[0].mxu0 %v3551
        %v3553 = vpop.f32.mrb[0].mxu0
        %v3554 = vadd.f32 0.0, %v3553
        %v3555 = vpop.f32.mrb[0].mxu0
        %v3556 = vand.u32 %v997, 4294901760
        %v3557 = vsub.f32 %v997, %v3556
        %v3558 = vand.u32 %v3557, 4294901760
        %v3559 = vsub.f32 %v3557, %v3558
        %v3560 = vand.u32 %v3559, 4294901760
        %3561 = vmatprep.mubr.f32.mxu0 %v3560
        %v3562 = vand.u32 %v996, 4294901760
        %v3563 = vsub.f32 %v996, %v3562
        %v3564 = vand.u32 %v3563, 4294901760
        %v3565 = vsub.f32 %v3563, %v3564
        %v3566 = vand.u32 %v3565, 4294901760
        %3567 = vmatmul.mubr.f32.gmra.mrb[0].mxu0 %v3566
        %v3568 = vpop.f32.mrb[0].mxu0
        %v3569 = vadd.f32 0.0, %v3568
        %v3570 = vpop.f32.mrb[0].mxu0
        %v3571 = vand.u32 %v1001, 4294901760
        %v3572 = vsub.f32 %v1001, %v3571
        %v3573 = vand.u32 %v3572, 4294901760
        %v3574 = vsub.f32 %v3572, %v3573
        %v3575 = vand.u32 %v3574, 4294901760
        %3576 = vmatprep.mubr.f32.mxu0 %v3575
        %v3577 = vand.u32 %v1000, 4294901760
        %v3578 = vsub.f32 %v1000, %v3577
        %v3579 = vand.u32 %v3578, 4294901760
        %v3580 = vsub.f32 %v3578, %v3579
        %v3581 = vand.u32 %v3580, 4294901760
        %3582 = vmatmul.mubr.f32.gmra.mrb[0].mxu0 %v3581
        %v3583 = vpop.f32.mrb[0].mxu0
        %v3584 = vadd.f32 0.0, %v3583
        %v3585 = vpop.f32.mrb[0].mxu0
        %v3586 = vand.u32 %v1005, 4294901760
        %v3587 = vsub.f32 %v1005, %v3586
        %v3588 = vand.u32 %v3587, 4294901760
        %v3589 = vsub.f32 %v3587, %v3588
        %v3590 = vand.u32 %v3589, 4294901760
        %3591 = vmatprep.mubr.f32.mxu0 %v3590
        %v3592 = vand.u32 %v1004, 4294901760
        %v3593 = vsub.f32 %v1004, %v3592
        %v3594 = vand.u32 %v3593, 4294901760
        %v3595 = vsub.f32 %v3593, %v3594
        %v3596 = vand.u32 %v3595, 4294901760
        %3597 = vmatmul.mubr.f32.gmra.mrb[0].mxu0 %v3596
        %v3598 = vpop.f32.mrb[0].mxu0
        %v3599 = vadd.f32 0.0, %v3598
        %v3600 = vpop.f32.mrb[0].mxu0
        %v3601 = vand.u32 %v1009, 4294901760
        %v3602 = vsub.f32 %v1009, %v3601
        %v3603 = vand.u32 %v3602, 4294901760
        %v3604 = vsub.f32 %v3602, %v3603
        %v3605 = vand.u32 %v3604, 4294901760
        %3606 = vmatprep.mubr.f32.mxu0 %v3605
        %v3607 = vand.u32 %v1008, 4294901760
        %v3608 = vsub.f32 %v1008, %v3607
        %v3609 = vand.u32 %v3608, 4294901760
        %v3610 = vsub.f32 %v3608, %v3609
        %v3611 = vand.u32 %v3610, 4294901760
        %3612 = vmatmul.mubr.f32.gmra.mrb[0].mxu0 %v3611
        %v3613 = vpop.f32.mrb[0].mxu0
        %v3614 = vadd.f32 0.0, %v3613
        %v3615 = vpop.f32.mrb[0].mxu0
        %v3616 = vand.u32 %v1013, 4294901760
        %v3617 = vsub.f32 %v1013, %v3616
        %v3618 = vand.u32 %v3617, 4294901760
        %v3619 = vsub.f32 %v3617, %v3618
        %v3620 = vand.u32 %v3619, 4294901760
        %3621 = vmatprep.mubr.f32.mxu0 %v3620
        %v3622 = vand.u32 %v1012, 4294901760
        %v3623 = vsub.f32 %v1012, %v3622
        %v3624 = vand.u32 %v3623, 4294901760
        %v3625 = vsub.f32 %v3623, %v3624
        %v3626 = vand.u32 %v3625, 4294901760
        %3627 = vmatmul.mubr.f32.gmra.mrb[0].mxu0 %v3626
        %v3628 = vpop.f32.mrb[0].mxu0
        %v3629 = vadd.f32 0.0, %v3628
        %v3630 = vpop.f32.mrb[0].mxu0
        %3631 = vdwg.mxu0
        %3632 = vmatprep.subr.mxu0 0.0
        %v3633 = vand.u32 %v2991, 4294901760
        %v3634 = vsub.f32 %v2991, %v3633
        %v3635 = vand.u32 %v3634, 4294901760
        %v3636 = vsub.f32 %v3634, %v3635
        %v3637 = vand.u32 %v3636, 4294901760
        %3638 = vmatpush1.msra.mxu0 %v3637
        %3639 = vmatprep.subr.mxu0 0.0
        %v3640 = vand.u32 %v2992, 4294901760
        %v3641 = vsub.f32 %v2992, %v3640
        %v3642 = vand.u32 %v3641, 4294901760
        %v3643 = vsub.f32 %v3641, %v3642
        %v3644 = vand.u32 %v3643, 4294901760
        %3645 = vmatpush1.msra.mxu0 %v3644
        %3646 = vmatprep.subr.mxu0 0.0
        %v3647 = vand.u32 %v2993, 4294901760
        %v3648 = vsub.f32 %v2993, %v3647
        %v3649 = vand.u32 %v3648, 4294901760
        %v3650 = vsub.f32 %v3648, %v3649
        %v3651 = vand.u32 %v3650, 4294901760
        %3652 = vmatpush1.msra.mxu0 %v3651
        %3653 = vmatprep.subr.mxu0 0.0
        %v3654 = vand.u32 %v2994, 4294901760
        %v3655 = vsub.f32 %v2994, %v3654
        %v3656 = vand.u32 %v3655, 4294901760
        %v3657 = vsub.f32 %v3655, %v3656
        %v3658 = vand.u32 %v3657, 4294901760
        %3659 = vmatpush1.msra.mxu0 %v3658
        %3660 = vmatprep.subr.mxu0 0.0
        %v3661 = vand.u32 %v2995, 4294901760
        %v3662 = vsub.f32 %v2995, %v3661
        %v3663 = vand.u32 %v3662, 4294901760
        %v3664 = vsub.f32 %v3662, %v3663
        %v3665 = vand.u32 %v3664, 4294901760
        %3666 = vmatpush1.msra.mxu0 %v3665
        %3667 = vmatprep.subr.mxu0 0.0
        %v3668 = vand.u32 %v2996, 4294901760
        %v3669 = vsub.f32 %v2996, %v3668
        %v3670 = vand.u32 %v3669, 4294901760
        %v3671 = vsub.f32 %v3669, %v3670
        %v3672 = vand.u32 %v3671, 4294901760
        %3673 = vmatpush1.msra.mxu0 %v3672
        %3674 = vmatprep.subr.mxu0 0.0
        %v3675 = vand.u32 %v2997, 4294901760
        %v3676 = vsub.f32 %v2997, %v3675
        %v3677 = vand.u32 %v3676, 4294901760
        %v3678 = vsub.f32 %v3676, %v3677
        %v3679 = vand.u32 %v3678, 4294901760
        %3680 = vmatpush1.msra.mxu0 %v3679
        %3681 = vmatprep.subr.mxu0 0.0
        %v3682 = vand.u32 %v2998, 4294901760
        %v3683 = vsub.f32 %v2998, %v3682
        %v3684 = vand.u32 %v3683, 4294901760
        %v3685 = vsub.f32 %v3683, %v3684
        %v3686 = vand.u32 %v3685, 4294901760
        %3687 = vmatpush1.msra.mxu0 %v3686
        %3688 = vmatprep.subr.mxu0 0.0
        %v3689 = vand.u32 %v2999, 4294901760
        %v3690 = vsub.f32 %v2999, %v3689
        %v3691 = vand.u32 %v3690, 4294901760
        %v3692 = vsub.f32 %v3690, %v3691
        %v3693 = vand.u32 %v3692, 4294901760
        %3694 = vmatpush1.msra.mxu0 %v3693
        %3695 = vmatprep.subr.mxu0 0.0
        %v3696 = vand.u32 %v3000, 4294901760
        %v3697 = vsub.f32 %v3000, %v3696
        %v3698 = vand.u32 %v3697, 4294901760
        %v3699 = vsub.f32 %v3697, %v3698
        %v3700 = vand.u32 %v3699, 4294901760
        %3701 = vmatpush1.msra.mxu0 %v3700
        %3702 = vmatprep.subr.mxu0 0.0
        %v3703 = vand.u32 %v3001, 4294901760
        %v3704 = vsub.f32 %v3001, %v3703
        %v3705 = vand.u32 %v3704, 4294901760
        %v3706 = vsub.f32 %v3704, %v3705
        %v3707 = vand.u32 %v3706, 4294901760
        %3708 = vmatpush1.msra.mxu0 %v3707
        %3709 = vmatprep.subr.mxu0 0.0
        %v3710 = vand.u32 %v3002, 4294901760
        %v3711 = vsub.f32 %v3002, %v3710
        %v3712 = vand.u32 %v3711, 4294901760
        %v3713 = vsub.f32 %v3711, %v3712
        %v3714 = vand.u32 %v3713, 4294901760
        %3715 = vmatpush1.msra.mxu0 %v3714
        %3716 = vmatprep.subr.mxu0 0.0
        %v3717 = vand.u32 %v3003, 4294901760
        %v3718 = vsub.f32 %v3003, %v3717
        %v3719 = vand.u32 %v3718, 4294901760
        %v3720 = vsub.f32 %v3718, %v3719
        %v3721 = vand.u32 %v3720, 4294901760
        %3722 = vmatpush1.msra.mxu0 %v3721
        %3723 = vmatprep.subr.mxu0 0.0
        %v3724 = vand.u32 %v3004, 4294901760
        %v3725 = vsub.f32 %v3004, %v3724
        %v3726 = vand.u32 %v3725, 4294901760
        %v3727 = vsub.f32 %v3725, %v3726
        %v3728 = vand.u32 %v3727, 4294901760
        %3729 = vmatpush1.msra.mxu0 %v3728
        %3730 = vmatprep.subr.mxu0 0.0
        %v3731 = vand.u32 %v3005, 4294901760
        %v3732 = vsub.f32 %v3005, %v3731
        %v3733 = vand.u32 %v3732, 4294901760
        %v3734 = vsub.f32 %v3732, %v3733
        %v3735 = vand.u32 %v3734, 4294901760
        %3736 = vmatpush1.msra.mxu0 %v3735
        %3737 = vmatprep.subr.mxu0 0.0
        %v3738 = vand.u32 %v3006, 4294901760
        %v3739 = vsub.f32 %v3006, %v3738
        %v3740 = vand.u32 %v3739, 4294901760
        %v3741 = vsub.f32 %v3739, %v3740
        %v3742 = vand.u32 %v3741, 4294901760
        %3743 = vmatpush1.msra.mxu0 %v3742
        %3744 = vmatprep.subr.mxu0 0.0
        %v3745 = vand.u32 %v3007, 4294901760
        %v3746 = vsub.f32 %v3007, %v3745
        %v3747 = vand.u32 %v3746, 4294901760
        %v3748 = vsub.f32 %v3746, %v3747
        %v3749 = vand.u32 %v3748, 4294901760
        %3750 = vmatpush1.msra.mxu0 %v3749
        %3751 = vmatprep.subr.mxu0 0.0
        %v3752 = vand.u32 %v3008, 4294901760
        %v3753 = vsub.f32 %v3008, %v3752
        %v3754 = vand.u32 %v3753, 4294901760
        %v3755 = vsub.f32 %v3753, %v3754
        %v3756 = vand.u32 %v3755, 4294901760
        %3757 = vmatpush1.msra.mxu0 %v3756
        %3758 = vmatprep.subr.mxu0 0.0
        %v3759 = vand.u32 %v3009, 4294901760
        %v3760 = vsub.f32 %v3009, %v3759
        %v3761 = vand.u32 %v3760, 4294901760
        %v3762 = vsub.f32 %v3760, %v3761
        %v3763 = vand.u32 %v3762, 4294901760
        %3764 = vmatpush1.msra.mxu0 %v3763
        %3765 = vmatprep.subr.mxu0 0.0
        %v3766 = vand.u32 %v3010, 4294901760
        %v3767 = vsub.f32 %v3010, %v3766
        %v3768 = vand.u32 %v3767, 4294901760
        %v3769 = vsub.f32 %v3767, %v3768
        %v3770 = vand.u32 %v3769, 4294901760
        %3771 = vmatpush1.msra.mxu0 %v3770
        %3772 = vmatprep.subr.mxu0 0.0
        %v3773 = vand.u32 %v3011, 4294901760
        %v3774 = vsub.f32 %v3011, %v3773
        %v3775 = vand.u32 %v3774, 4294901760
        %v3776 = vsub.f32 %v3774, %v3775
        %v3777 = vand.u32 %v3776, 4294901760
        %3778 = vmatpush1.msra.mxu0 %v3777
        %3779 = vmatprep.subr.mxu0 0.0
        %v3780 = vand.u32 %v3012, 4294901760
        %v3781 = vsub.f32 %v3012, %v3780
        %v3782 = vand.u32 %v3781, 4294901760
        %v3783 = vsub.f32 %v3781, %v3782
        %v3784 = vand.u32 %v3783, 4294901760
        %3785 = vmatpush1.msra.mxu0 %v3784
        %3786 = vmatprep.subr.mxu0 0.0
        %v3787 = vand.u32 %v3013, 4294901760
        %v3788 = vsub.f32 %v3013, %v3787
        %v3789 = vand.u32 %v3788, 4294901760
        %v3790 = vsub.f32 %v3788, %v3789
        %v3791 = vand.u32 %v3790, 4294901760
        %3792 = vmatpush1.msra.mxu0 %v3791
        %3793 = vmatprep.subr.mxu0 0.0
        %v3794 = vand.u32 %v3014, 4294901760
        %v3795 = vsub.f32 %v3014, %v3794
        %v3796 = vand.u32 %v3795, 4294901760
        %v3797 = vsub.f32 %v3795, %v3796
        %v3798 = vand.u32 %v3797, 4294901760
        %3799 = vmatpush1.msra.mxu0 %v3798
        %3800 = vmatprep.subr.mxu0 0.0
        %v3801 = vand.u32 %v3015, 4294901760
        %v3802 = vsub.f32 %v3015, %v3801
        %v3803 = vand.u32 %v3802, 4294901760
        %v3804 = vsub.f32 %v3802, %v3803
        %v3805 = vand.u32 %v3804, 4294901760
        %3806 = vmatpush1.msra.mxu0 %v3805
        %3807 = vmatprep.subr.mxu0 0.0
        %v3808 = vand.u32 %v3016, 4294901760
        %v3809 = vsub.f32 %v3016, %v3808
        %v3810 = vand.u32 %v3809, 4294901760
        %v3811 = vsub.f32 %v3809, %v3810
        %v3812 = vand.u32 %v3811, 4294901760
        %3813 = vmatpush1.msra.mxu0 %v3812
        %3814 = vmatprep.subr.mxu0 0.0
        %v3815 = vand.u32 %v3017, 4294901760
        %v3816 = vsub.f32 %v3017, %v3815
        %v3817 = vand.u32 %v3816, 4294901760
        %v3818 = vsub.f32 %v3816, %v3817
        %v3819 = vand.u32 %v3818, 4294901760
        %3820 = vmatpush1.msra.mxu0 %v3819
        %3821 = vmatprep.subr.mxu0 0.0
        %v3822 = vand.u32 %v3018, 4294901760
        %v3823 = vsub.f32 %v3018, %v3822
        %v3824 = vand.u32 %v3823, 4294901760
        %v3825 = vsub.f32 %v3823, %v3824
        %v3826 = vand.u32 %v3825, 4294901760
        %3827 = vmatpush1.msra.mxu0 %v3826
        %3828 = vmatprep.subr.mxu0 0.0
        %v3829 = vand.u32 %v3019, 4294901760
        %v3830 = vsub.f32 %v3019, %v3829
        %v3831 = vand.u32 %v3830, 4294901760
        %v3832 = vsub.f32 %v3830, %v3831
        %v3833 = vand.u32 %v3832, 4294901760
        %3834 = vmatpush1.msra.mxu0 %v3833
        %3835 = vmatprep.subr.mxu0 0.0
        %v3836 = vand.u32 %v3020, 4294901760
        %v3837 = vsub.f32 %v3020, %v3836
        %v3838 = vand.u32 %v3837, 4294901760
        %v3839 = vsub.f32 %v3837, %v3838
        %v3840 = vand.u32 %v3839, 4294901760
        %3841 = vmatpush1.msra.mxu0 %v3840
        %3842 = vmatprep.subr.mxu0 0.0
        %v3843 = vand.u32 %v3021, 4294901760
        %v3844 = vsub.f32 %v3021, %v3843
        %v3845 = vand.u32 %v3844, 4294901760
        %v3846 = vsub.f32 %v3844, %v3845
        %v3847 = vand.u32 %v3846, 4294901760
        %3848 = vmatpush1.msra.mxu0 %v3847
        %3849 = vmatprep.subr.mxu0 0.0
        %v3850 = vand.u32 %v3022, 4294901760
        %v3851 = vsub.f32 %v3022, %v3850
        %v3852 = vand.u32 %v3851, 4294901760
        %v3853 = vsub.f32 %v3851, %v3852
        %v3854 = vand.u32 %v3853, 4294901760
        %3855 = vmatpush1.msra.mxu0 %v3854
        %v3856 = vand.u32 %v889, 4294901760
        %3857 = vmatprep.mubr.f32.mxu0 %v3856
        %v3858 = vand.u32 %v888, 4294901760
        %3859 = vmatmul.mubr.f32.gmra.mrb[0].mxu0 %v3858
        %v3860 = vpop.f32.mrb[0].mxu0
        %v3861 = vadd.f32 %v3164, %v3860
        %v3862 = vpop.f32.mrb[0].mxu0
        %v3863 = vand.u32 %v893, 4294901760
        %3864 = vmatprep.mubr.f32.mxu0 %v3863
        %v3865 = vand.u32 %v892, 4294901760
        %3866 = vmatmul.mubr.f32.gmra.mrb[0].mxu0 %v3865
        %v3867 = vpop.f32.mrb[0].mxu0
        %v3868 = vadd.f32 %v3179, %v3867
        %v3869 = vpop.f32.mrb[0].mxu0
        %v3870 = vand.u32 %v897, 4294901760
        %3871 = vmatprep.mubr.f32.mxu0 %v3870
        %v3872 = vand.u32 %v896, 4294901760
        %3873 = vmatmul.mubr.f32.gmra.mrb[0].mxu0 %v3872
        %v3874 = vpop.f32.mrb[0].mxu0
        %v3875 = vadd.f32 %v3194, %v3874
        %v3876 = vpop.f32.mrb[0].mxu0
        %v3877 = vand.u32 %v901, 4294901760
        %3878 = vmatprep.mubr.f32.mxu0 %v3877
        %v3879 = vand.u32 %v900, 4294901760
        %3880 = vmatmul.mubr.f32.gmra.mrb[0].mxu0 %v3879
        %v3881 = vpop.f32.mrb[0].mxu0
        %v3882 = vadd.f32 %v3209, %v3881
        %v3883 = vpop.f32.mrb[0].mxu0
        %v3884 = vand.u32 %v905, 4294901760
        %3885 = vmatprep.mubr.f32.mxu0 %v3884
        %v3886 = vand.u32 %v904, 4294901760
        %3887 = vmatmul.mubr.f32.gmra.mrb[0].mxu0 %v3886
        %v3888 = vpop.f32.mrb[0].mxu0
        %v3889 = vadd.f32 %v3224, %v3888
        %v3890 = vpop.f32.mrb[0].mxu0
        %v3891 = vand.u32 %v909, 4294901760
        %3892 = vmatprep.mubr.f32.mxu0 %v3891
        %v3893 = vand.u32 %v908, 4294901760
        %3894 = vmatmul.mubr.f32.gmra.mrb[0].mxu0 %v3893
        %v3895 = vpop.f32.mrb[0].mxu0
        %v3896 = vadd.f32 %v3239, %v3895
        %v3897 = vpop.f32.mrb[0].mxu0
        %v3898 = vand.u32 %v913, 4294901760
        %3899 = vmatprep.mubr.f32.mxu0 %v3898
        %v3900 = vand.u32 %v912, 4294901760
        %3901 = vmatmul.mubr.f32.gmra.mrb[0].mxu0 %v3900
        %v3902 = vpop.f32.mrb[0].mxu0
        %v3903 = vadd.f32 %v3254, %v3902
        %v3904 = vpop.f32.mrb[0].mxu0
        %v3905 = vand.u32 %v917, 4294901760
        %3906 = vmatprep.mubr.f32.mxu0 %v3905
        %v3907 = vand.u32 %v916, 4294901760
        %3908 = vmatmul.mubr.f32.gmra.mrb[0].mxu0 %v3907
        %v3909 = vpop.f32.mrb[0].mxu0
        %v3910 = vadd.f32 %v3269, %v3909
        %v3911 = vpop.f32.mrb[0].mxu0
        %v3912 = vand.u32 %v921, 4294901760
        %3913 = vmatprep.mubr.f32.mxu0 %v3912
        %v3914 = vand.u32 %v920, 4294901760
        %3915 = vmatmul.mubr.f32.gmra.mrb[0].mxu0 %v3914
        %v3916 = vpop.f32.mrb[0].mxu0
        %v3917 = vadd.f32 %v3284, %v3916
        %v3918 = vpop.f32.mrb[0].mxu0
        %v3919 = vand.u32 %v925, 4294901760
        %3920 = vmatprep.mubr.f32.mxu0 %v3919
        %v3921 = vand.u32 %v924, 4294901760
        %3922 = vmatmul.mubr.f32.gmra.mrb[0].mxu0 %v3921
        %v3923 = vpop.f32.mrb[0].mxu0
        %v3924 = vadd.f32 %v3299, %v3923
        %v3925 = vpop.f32.mrb[0].mxu0
        %v3926 = vand.u32 %v929, 4294901760
        %3927 = vmatprep.mubr.f32.mxu0 %v3926
        %v3928 = vand.u32 %v928, 4294901760
        %3929 = vmatmul.mubr.f32.gmra.mrb[0].mxu0 %v3928
        %v3930 = vpop.f32.mrb[0].mxu0
        %v3931 = vadd.f32 %v3314, %v3930
        %v3932 = vpop.f32.mrb[0].mxu0
        %v3933 = vand.u32 %v933, 4294901760
        %3934 = vmatprep.mubr.f32.mxu0 %v3933
        %v3935 = vand.u32 %v932, 4294901760
        %3936 = vmatmul.mubr.f32.gmra.mrb[0].mxu0 %v3935
        %v3937 = vpop.f32.mrb[0].mxu0
        %v3938 = vadd.f32 %v3329, %v3937
        %v3939 = vpop.f32.mrb[0].mxu0
        %v3940 = vand.u32 %v937, 4294901760
        %3941 = vmatprep.mubr.f32.mxu0 %v3940
        %v3942 = vand.u32 %v936, 4294901760
        %3943 = vmatmul.mubr.f32.gmra.mrb[0].mxu0 %v3942
        %v3944 = vpop.f32.mrb[0].mxu0
        %v3945 = vadd.f32 %v3344, %v3944
        %v3946 = vpop.f32.mrb[0].mxu0
        %v3947 = vand.u32 %v941, 4294901760
        %3948 = vmatprep.mubr.f32.mxu0 %v3947
        %v3949 = vand.u32 %v940, 4294901760
        %3950 = vmatmul.mubr.f32.gmra.mrb[0].mxu0 %v3949
        %v3951 = vpop.f32.mrb[0].mxu0
        %v3952 = vadd.f32 %v3359, %v3951
        %v3953 = vpop.f32.mrb[0].mxu0
        %v3954 = vand.u32 %v945, 4294901760
        %3955 = vmatprep.mubr.f32.mxu0 %v3954
        %v3956 = vand.u32 %v944, 4294901760
        %3957 = vmatmul.mubr.f32.gmra.mrb[0].mxu0 %v3956
        %v3958 = vpop.f32.mrb[0].mxu0
        %v3959 = vadd.f32 %v3374, %v3958
        %v3960 = vpop.f32.mrb[0].mxu0
        %v3961 = vand.u32 %v949, 4294901760
        %3962 = vmatprep.mubr.f32.mxu0 %v3961
        %v3963 = vand.u32 %v948, 4294901760
        %3964 = vmatmul.mubr.f32.gmra.mrb[0].mxu0 %v3963
        %v3965 = vpop.f32.mrb[0].mxu0
        %v3966 = vadd.f32 %v3389, %v3965
        %v3967 = vpop.f32.mrb[0].mxu0
        %v3968 = vand.u32 %v953, 4294901760
        %3969 = vmatprep.mubr.f32.mxu0 %v3968
        %v3970 = vand.u32 %v952, 4294901760
        %3971 = vmatmul.mubr.f32.gmra.mrb[0].mxu0 %v3970
        %v3972 = vpop.f32.mrb[0].mxu0
        %v3973 = vadd.f32 %v3404, %v3972
        %v3974 = vpop.f32.mrb[0].mxu0
        %v3975 = vand.u32 %v957, 4294901760
        %3976 = vmatprep.mubr.f32.mxu0 %v3975
        %v3977 = vand.u32 %v956, 4294901760
        %3978 = vmatmul.mubr.f32.gmra.mrb[0].mxu0 %v3977
        %v3979 = vpop.f32.mrb[0].mxu0
        %v3980 = vadd.f32 %v3419, %v3979
        %v3981 = vpop.f32.mrb[0].mxu0
        %v3982 = vand.u32 %v961, 4294901760
        %3983 = vmatprep.mubr.f32.mxu0 %v3982
        %v3984 = vand.u32 %v960, 4294901760
        %3985 = vmatmul.mubr.f32.gmra.mrb[0].mxu0 %v3984
        %v3986 = vpop.f32.mrb[0].mxu0
        %v3987 = vadd.f32 %v3434, %v3986
        %v3988 = vpop.f32.mrb[0].mxu0
        %v3989 = vand.u32 %v965, 4294901760
        %3990 = vmatprep.mubr.f32.mxu0 %v3989
        %v3991 = vand.u32 %v964, 4294901760
        %3992 = vmatmul.mubr.f32.gmra.mrb[0].mxu0 %v3991
        %v3993 = vpop.f32.mrb[0].mxu0
        %v3994 = vadd.f32 %v3449, %v3993
        %v3995 = vpop.f32.mrb[0].mxu0
        %v3996 = vand.u32 %v969, 4294901760
        %3997 = vmatprep.mubr.f32.mxu0 %v3996
        %v3998 = vand.u32 %v968, 4294901760
        %3999 = vmatmul.mubr.f32.gmra.mrb[0].mxu0 %v3998
        %v4000 = vpop.f32.mrb[0].mxu0
        %v4001 = vadd.f32 %v3464, %v4000
        %v4002 = vpop.f32.mrb[0].mxu0
        %v4003 = vand.u32 %v973, 4294901760
        %4004 = vmatprep.mubr.f32.mxu0 %v4003
        %v4005 = vand.u32 %v972, 4294901760
        %4006 = vmatmul.mubr.f32.gmra.mrb[0].mxu0 %v4005
        %v4007 = vpop.f32.mrb[0].mxu0
        %v4008 = vadd.f32 %v3479, %v4007
        %v4009 = vpop.f32.mrb[0].mxu0
        %v4010 = vand.u32 %v977, 4294901760
        %4011 = vmatprep.mubr.f32.mxu0 %v4010
        %v4012 = vand.u32 %v976, 4294901760
        %4013 = vmatmul.mubr.f32.gmra.mrb[0].mxu0 %v4012
        %v4014 = vpop.f32.mrb[0].mxu0
        %v4015 = vadd.f32 %v3494, %v4014
        %v4016 = vpop.f32.mrb[0].mxu0
        %v4017 = vand.u32 %v981, 4294901760
        %4018 = vmatprep.mubr.f32.mxu0 %v4017
        %v4019 = vand.u32 %v980, 4294901760
        %4020 = vmatmul.mubr.f32.gmra.mrb[0].mxu0 %v4019
        %v4021 = vpop.f32.mrb[0].mxu0
        %v4022 = vadd.f32 %v3509, %v4021
        %v4023 = vpop.f32.mrb[0].mxu0
        %v4024 = vand.u32 %v985, 4294901760
        %4025 = vmatprep.mubr.f32.mxu0 %v4024
        %v4026 = vand.u32 %v984, 4294901760
        %4027 = vmatmul.mubr.f32.gmra.mrb[0].mxu0 %v4026
        %v4028 = vpop.f32.mrb[0].mxu0
        %v4029 = vadd.f32 %v3524, %v4028
        %v4030 = vpop.f32.mrb[0].mxu0
        %v4031 = vand.u32 %v989, 4294901760
        %4032 = vmatprep.mubr.f32.mxu0 %v4031
        %v4033 = vand.u32 %v988, 4294901760
        %4034 = vmatmul.mubr.f32.gmra.mrb[0].mxu0 %v4033
        %v4035 = vpop.f32.mrb[0].mxu0
        %v4036 = vadd.f32 %v3539, %v4035
        %v4037 = vpop.f32.mrb[0].mxu0
        %v4038 = vand.u32 %v993, 4294901760
        %4039 = vmatprep.mubr.f32.mxu0 %v4038
        %v4040 = vand.u32 %v992, 4294901760
        %4041 = vmatmul.mubr.f32.gmra.mrb[0].mxu0 %v4040
        %v4042 = vpop.f32.mrb[0].mxu0
        %v4043 = vadd.f32 %v3554, %v4042
        %v4044 = vpop.f32.mrb[0].mxu0
        %v4045 = vand.u32 %v997, 4294901760
        %4046 = vmatprep.mubr.f32.mxu0 %v4045
        %v4047 = vand.u32 %v996, 4294901760
        %4048 = vmatmul.mubr.f32.gmra.mrb[0].mxu0 %v4047
        %v4049 = vpop.f32.mrb[0].mxu0
        %v4050 = vadd.f32 %v3569, %v4049
        %v4051 = vpop.f32.mrb[0].mxu0
        %v4052 = vand.u32 %v1001, 4294901760
        %4053 = vmatprep.mubr.f32.mxu0 %v4052
        %v4054 = vand.u32 %v1000, 4294901760
        %4055 = vmatmul.mubr.f32.gmra.mrb[0].mxu0 %v4054
        %v4056 = vpop.f32.mrb[0].mxu0
        %v4057 = vadd.f32 %v3584, %v4056
        %v4058 = vpop.f32.mrb[0].mxu0
        %v4059 = vand.u32 %v1005, 4294901760
        %4060 = vmatprep.mubr.f32.mxu0 %v4059
        %v4061 = vand.u32 %v1004, 4294901760
        %4062 = vmatmul.mubr.f32.gmra.mrb[0].mxu0 %v4061
        %v4063 = vpop.f32.mrb[0].mxu0
        %v4064 = vadd.f32 %v3599, %v4063
        %v4065 = vpop.f32.mrb[0].mxu0
        %v4066 = vand.u32 %v1009, 4294901760
        %4067 = vmatprep.mubr.f32.mxu0 %v4066
        %v4068 = vand.u32 %v1008, 4294901760
        %4069 = vmatmul.mubr.f32.gmra.mrb[0].mxu0 %v4068
        %v4070 = vpop.f32.mrb[0].mxu0
        %v4071 = vadd.f32 %v3614, %v4070
        %v4072 = vpop.f32.mrb[0].mxu0
        %v4073 = vand.u32 %v1013, 4294901760
        %4074 = vmatprep.mubr.f32.mxu0 %v4073
        %v4075 = vand.u32 %v1012, 4294901760
        %4076 = vmatmul.mubr.f32.gmra.mrb[0].mxu0 %v4075
        %v4077 = vpop.f32.mrb[0].mxu0
        %v4078 = vadd.f32 %v3629, %v4077
        %v4079 = vpop.f32.mrb[0].mxu0
        %4080 = vdwg.mxu0
        %4081 = vmatprep.subr.mxu0 0.0
        %v4082 = vand.u32 %v2991, 4294901760
        %v4083 = vsub.f32 %v2991, %v4082
        %4084 = vmatpush1.msra.mxu0 %v4083
        %4085 = vmatprep.subr.mxu0 0.0
        %v4086 = vand.u32 %v2992, 4294901760
        %v4087 = vsub.f32 %v2992, %v4086
        %4088 = vmatpush1.msra.mxu0 %v4087
        %4089 = vmatprep.subr.mxu0 0.0
        %v4090 = vand.u32 %v2993, 4294901760
        %v4091 = vsub.f32 %v2993, %v4090
        %4092 = vmatpush1.msra.mxu0 %v4091
        %4093 = vmatprep.subr.mxu0 0.0
        %v4094 = vand.u32 %v2994, 4294901760
        %v4095 = vsub.f32 %v2994, %v4094
        %4096 = vmatpush1.msra.mxu0 %v4095
        %4097 = vmatprep.subr.mxu0 0.0
        %v4098 = vand.u32 %v2995, 4294901760
        %v4099 = vsub.f32 %v2995, %v4098
        %4100 = vmatpush1.msra.mxu0 %v4099
        %4101 = vmatprep.subr.mxu0 0.0
        %v4102 = vand.u32 %v2996, 4294901760
        %v4103 = vsub.f32 %v2996, %v4102
        %4104 = vmatpush1.msra.mxu0 %v4103
        %4105 = vmatprep.subr.mxu0 0.0
        %v4106 = vand.u32 %v2997, 4294901760
        %v4107 = vsub.f32 %v2997, %v4106
        %4108 = vmatpush1.msra.mxu0 %v4107
        %4109 = vmatprep.subr.mxu0 0.0
        %v4110 = vand.u32 %v2998, 4294901760
        %v4111 = vsub.f32 %v2998, %v4110
        %4112 = vmatpush1.msra.mxu0 %v4111
        %4113 = vmatprep.subr.mxu0 0.0
        %v4114 = vand.u32 %v2999, 4294901760
        %v4115 = vsub.f32 %v2999, %v4114
        %4116 = vmatpush1.msra.mxu0 %v4115
        %4117 = vmatprep.subr.mxu0 0.0
        %v4118 = vand.u32 %v3000, 4294901760
        %v4119 = vsub.f32 %v3000, %v4118
        %4120 = vmatpush1.msra.mxu0 %v4119
        %4121 = vmatprep.subr.mxu0 0.0
        %v4122 = vand.u32 %v3001, 4294901760
        %v4123 = vsub.f32 %v3001, %v4122
        %4124 = vmatpush1.msra.mxu0 %v4123
        %4125 = vmatprep.subr.mxu0 0.0
        %v4126 = vand.u32 %v3002, 4294901760
        %v4127 = vsub.f32 %v3002, %v4126
        %4128 = vmatpush1.msra.mxu0 %v4127
        %4129 = vmatprep.subr.mxu0 0.0
        %v4130 = vand.u32 %v3003, 4294901760
        %v4131 = vsub.f32 %v3003, %v4130
        %4132 = vmatpush1.msra.mxu0 %v4131
        %4133 = vmatprep.subr.mxu0 0.0
        %v4134 = vand.u32 %v3004, 4294901760
        %v4135 = vsub.f32 %v3004, %v4134
        %4136 = vmatpush1.msra.mxu0 %v4135
        %4137 = vmatprep.subr.mxu0 0.0
        %v4138 = vand.u32 %v3005, 4294901760
        %v4139 = vsub.f32 %v3005, %v4138
        %4140 = vmatpush1.msra.mxu0 %v4139
        %4141 = vmatprep.subr.mxu0 0.0
        %v4142 = vand.u32 %v3006, 4294901760
        %v4143 = vsub.f32 %v3006, %v4142
        %4144 = vmatpush1.msra.mxu0 %v4143
        %4145 = vmatprep.subr.mxu0 0.0
        %v4146 = vand.u32 %v3007, 4294901760
        %v4147 = vsub.f32 %v3007, %v4146
        %4148 = vmatpush1.msra.mxu0 %v4147
        %4149 = vmatprep.subr.mxu0 0.0
        %v4150 = vand.u32 %v3008, 4294901760
        %v4151 = vsub.f32 %v3008, %v4150
        %4152 = vmatpush1.msra.mxu0 %v4151
        %4153 = vmatprep.subr.mxu0 0.0
        %v4154 = vand.u32 %v3009, 4294901760
        %v4155 = vsub.f32 %v3009, %v4154
        %4156 = vmatpush1.msra.mxu0 %v4155
        %4157 = vmatprep.subr.mxu0 0.0
        %v4158 = vand.u32 %v3010, 4294901760
        %v4159 = vsub.f32 %v3010, %v4158
        %4160 = vmatpush1.msra.mxu0 %v4159
        %4161 = vmatprep.subr.mxu0 0.0
        %v4162 = vand.u32 %v3011, 4294901760
        %v4163 = vsub.f32 %v3011, %v4162
        %4164 = vmatpush1.msra.mxu0 %v4163
        %4165 = vmatprep.subr.mxu0 0.0
        %v4166 = vand.u32 %v3012, 4294901760
        %v4167 = vsub.f32 %v3012, %v4166
        %4168 = vmatpush1.msra.mxu0 %v4167
        %4169 = vmatprep.subr.mxu0 0.0
        %v4170 = vand.u32 %v3013, 4294901760
        %v4171 = vsub.f32 %v3013, %v4170
        %4172 = vmatpush1.msra.mxu0 %v4171
        %4173 = vmatprep.subr.mxu0 0.0
        %v4174 = vand.u32 %v3014, 4294901760
        %v4175 = vsub.f32 %v3014, %v4174
        %4176 = vmatpush1.msra.mxu0 %v4175
        %4177 = vmatprep.subr.mxu0 0.0
        %v4178 = vand.u32 %v3015, 4294901760
        %v4179 = vsub.f32 %v3015, %v4178
        %4180 = vmatpush1.msra.mxu0 %v4179
        %4181 = vmatprep.subr.mxu0 0.0
        %v4182 = vand.u32 %v3016, 4294901760
        %v4183 = vsub.f32 %v3016, %v4182
        %4184 = vmatpush1.msra.mxu0 %v4183
        %4185 = vmatprep.subr.mxu0 0.0
        %v4186 = vand.u32 %v3017, 4294901760
        %v4187 = vsub.f32 %v3017, %v4186
        %4188 = vmatpush1.msra.mxu0 %v4187
        %4189 = vmatprep.subr.mxu0 0.0
        %v4190 = vand.u32 %v3018, 4294901760
        %v4191 = vsub.f32 %v3018, %v4190
        %4192 = vmatpush1.msra.mxu0 %v4191
        %4193 = vmatprep.subr.mxu0 0.0
        %v4194 = vand.u32 %v3019, 4294901760
        %v4195 = vsub.f32 %v3019, %v4194
        %4196 = vmatpush1.msra.mxu0 %v4195
        %4197 = vmatprep.subr.mxu0 0.0
        %v4198 = vand.u32 %v3020, 4294901760
        %v4199 = vsub.f32 %v3020, %v4198
        %4200 = vmatpush1.msra.mxu0 %v4199
        %4201 = vmatprep.subr.mxu0 0.0
        %v4202 = vand.u32 %v3021, 4294901760
        %v4203 = vsub.f32 %v3021, %v4202
        %4204 = vmatpush1.msra.mxu0 %v4203
        %4205 = vmatprep.subr.mxu0 0.0
        %v4206 = vand.u32 %v3022, 4294901760
        %v4207 = vsub.f32 %v3022, %v4206
        %4208 = vmatpush1.msra.mxu0 %v4207
        %v4209 = vand.u32 %v889, 4294901760
        %v4210 = vsub.f32 %v889, %v4209
        %4211 = vmatprep.mubr.f32.mxu0 %v4210
        %v4212 = vand.u32 %v888, 4294901760
        %v4213 = vsub.f32 %v888, %v4212
        %4214 = vmatmul.mubr.f32.gmra.mrb[0].mxu0 %v4213
        %v4215 = vpop.f32.mrb[0].mxu0
        %v4216 = vadd.f32 %v3861, %v4215
        %v4217 = vpop.f32.mrb[0].mxu0
        %v4218 = vand.u32 %v893, 4294901760
        %v4219 = vsub.f32 %v893, %v4218
        %4220 = vmatprep.mubr.f32.mxu0 %v4219
        %v4221 = vand.u32 %v892, 4294901760
        %v4222 = vsub.f32 %v892, %v4221
        %4223 = vmatmul.mubr.f32.gmra.mrb[0].mxu0 %v4222
        %v4224 = vpop.f32.mrb[0].mxu0
        %v4225 = vadd.f32 %v3868, %v4224
        %v4226 = vpop.f32.mrb[0].mxu0
        %v4227 = vand.u32 %v897, 4294901760
        %v4228 = vsub.f32 %v897, %v4227
        %4229 = vmatprep.mubr.f32.mxu0 %v4228
        %v4230 = vand.u32 %v896, 4294901760
        %v4231 = vsub.f32 %v896, %v4230
        %4232 = vmatmul.mubr.f32.gmra.mrb[0].mxu0 %v4231
        %v4233 = vpop.f32.mrb[0].mxu0
        %v4234 = vadd.f32 %v3875, %v4233
        %v4235 = vpop.f32.mrb[0].mxu0
        %v4236 = vand.u32 %v901, 4294901760
        %v4237 = vsub.f32 %v901, %v4236
        %4238 = vmatprep.mubr.f32.mxu0 %v4237
        %v4239 = vand.u32 %v900, 4294901760
        %v4240 = vsub.f32 %v900, %v4239
        %4241 = vmatmul.mubr.f32.gmra.mrb[0].mxu0 %v4240
        %v4242 = vpop.f32.mrb[0].mxu0
        %v4243 = vadd.f32 %v3882, %v4242
        %v4244 = vpop.f32.mrb[0].mxu0
        %v4245 = vand.u32 %v905, 4294901760
        %v4246 = vsub.f32 %v905, %v4245
        %4247 = vmatprep.mubr.f32.mxu0 %v4246
        %v4248 = vand.u32 %v904, 4294901760
        %v4249 = vsub.f32 %v904, %v4248
        %4250 = vmatmul.mubr.f32.gmra.mrb[0].mxu0 %v4249
        %v4251 = vpop.f32.mrb[0].mxu0
        %v4252 = vadd.f32 %v3889, %v4251
        %v4253 = vpop.f32.mrb[0].mxu0
        %v4254 = vand.u32 %v909, 4294901760
        %v4255 = vsub.f32 %v909, %v4254
        %4256 = vmatprep.mubr.f32.mxu0 %v4255
        %v4257 = vand.u32 %v908, 4294901760
        %v4258 = vsub.f32 %v908, %v4257
        %4259 = vmatmul.mubr.f32.gmra.mrb[0].mxu0 %v4258
        %v4260 = vpop.f32.mrb[0].mxu0
        %v4261 = vadd.f32 %v3896, %v4260
        %v4262 = vpop.f32.mrb[0].mxu0
        %v4263 = vand.u32 %v913, 4294901760
        %v4264 = vsub.f32 %v913, %v4263
        %4265 = vmatprep.mubr.f32.mxu0 %v4264
        %v4266 = vand.u32 %v912, 4294901760
        %v4267 = vsub.f32 %v912, %v4266
        %4268 = vmatmul.mubr.f32.gmra.mrb[0].mxu0 %v4267
        %v4269 = vpop.f32.mrb[0].mxu0
        %v4270 = vadd.f32 %v3903, %v4269
        %v4271 = vpop.f32.mrb[0].mxu0
        %v4272 = vand.u32 %v917, 4294901760
        %v4273 = vsub.f32 %v917, %v4272
        %4274 = vmatprep.mubr.f32.mxu0 %v4273
        %v4275 = vand.u32 %v916, 4294901760
        %v4276 = vsub.f32 %v916, %v4275
        %4277 = vmatmul.mubr.f32.gmra.mrb[0].mxu0 %v4276
        %v4278 = vpop.f32.mrb[0].mxu0
        %v4279 = vadd.f32 %v3910, %v4278
        %v4280 = vpop.f32.mrb[0].mxu0
        %v4281 = vand.u32 %v921, 4294901760
        %v4282 = vsub.f32 %v921, %v4281
        %4283 = vmatprep.mubr.f32.mxu0 %v4282
        %v4284 = vand.u32 %v920, 4294901760
        %v4285 = vsub.f32 %v920, %v4284
        %4286 = vmatmul.mubr.f32.gmra.mrb[0].mxu0 %v4285
        %v4287 = vpop.f32.mrb[0].mxu0
        %v4288 = vadd.f32 %v3917, %v4287
        %v4289 = vpop.f32.mrb[0].mxu0
        %v4290 = vand.u32 %v925, 4294901760
        %v4291 = vsub.f32 %v925, %v4290
        %4292 = vmatprep.mubr.f32.mxu0 %v4291
        %v4293 = vand.u32 %v924, 4294901760
        %v4294 = vsub.f32 %v924, %v4293
        %4295 = vmatmul.mubr.f32.gmra.mrb[0].mxu0 %v4294
        %v4296 = vpop.f32.mrb[0].mxu0
        %v4297 = vadd.f32 %v3924, %v4296
        %v4298 = vpop.f32.mrb[0].mxu0
        %v4299 = vand.u32 %v929, 4294901760
        %v4300 = vsub.f32 %v929, %v4299
        %4301 = vmatprep.mubr.f32.mxu0 %v4300
        %v4302 = vand.u32 %v928, 4294901760
        %v4303 = vsub.f32 %v928, %v4302
        %4304 = vmatmul.mubr.f32.gmra.mrb[0].mxu0 %v4303
        %v4305 = vpop.f32.mrb[0].mxu0
        %v4306 = vadd.f32 %v3931, %v4305
        %v4307 = vpop.f32.mrb[0].mxu0
        %v4308 = vand.u32 %v933, 4294901760
        %v4309 = vsub.f32 %v933, %v4308
        %4310 = vmatprep.mubr.f32.mxu0 %v4309
        %v4311 = vand.u32 %v932, 4294901760
        %v4312 = vsub.f32 %v932, %v4311
        %4313 = vmatmul.mubr.f32.gmra.mrb[0].mxu0 %v4312
        %v4314 = vpop.f32.mrb[0].mxu0
        %v4315 = vadd.f32 %v3938, %v4314
        %v4316 = vpop.f32.mrb[0].mxu0
        %v4317 = vand.u32 %v937, 4294901760
        %v4318 = vsub.f32 %v937, %v4317
        %4319 = vmatprep.mubr.f32.mxu0 %v4318
        %v4320 = vand.u32 %v936, 4294901760
        %v4321 = vsub.f32 %v936, %v4320
        %4322 = vmatmul.mubr.f32.gmra.mrb[0].mxu0 %v4321
        %v4323 = vpop.f32.mrb[0].mxu0
        %v4324 = vadd.f32 %v3945, %v4323
        %v4325 = vpop.f32.mrb[0].mxu0
        %v4326 = vand.u32 %v941, 4294901760
        %v4327 = vsub.f32 %v941, %v4326
        %4328 = vmatprep.mubr.f32.mxu0 %v4327
        %v4329 = vand.u32 %v940, 4294901760
        %v4330 = vsub.f32 %v940, %v4329
        %4331 = vmatmul.mubr.f32.gmra.mrb[0].mxu0 %v4330
        %v4332 = vpop.f32.mrb[0].mxu0
        %v4333 = vadd.f32 %v3952, %v4332
        %v4334 = vpop.f32.mrb[0].mxu0
        %v4335 = vand.u32 %v945, 4294901760
        %v4336 = vsub.f32 %v945, %v4335
        %4337 = vmatprep.mubr.f32.mxu0 %v4336
        %v4338 = vand.u32 %v944, 4294901760
        %v4339 = vsub.f32 %v944, %v4338
        %4340 = vmatmul.mubr.f32.gmra.mrb[0].mxu0 %v4339
        %v4341 = vpop.f32.mrb[0].mxu0
        %v4342 = vadd.f32 %v3959, %v4341
        %v4343 = vpop.f32.mrb[0].mxu0
        %v4344 = vand.u32 %v949, 4294901760
        %v4345 = vsub.f32 %v949, %v4344
        %4346 = vmatprep.mubr.f32.mxu0 %v4345
        %v4347 = vand.u32 %v948, 4294901760
        %v4348 = vsub.f32 %v948, %v4347
        %4349 = vmatmul.mubr.f32.gmra.mrb[0].mxu0 %v4348
        %v4350 = vpop.f32.mrb[0].mxu0
        %v4351 = vadd.f32 %v3966, %v4350
        %v4352 = vpop.f32.mrb[0].mxu0
        %v4353 = vand.u32 %v953, 4294901760
        %v4354 = vsub.f32 %v953, %v4353
        %4355 = vmatprep.mubr.f32.mxu0 %v4354
        %v4356 = vand.u32 %v952, 4294901760
        %v4357 = vsub.f32 %v952, %v4356
        %4358 = vmatmul.mubr.f32.gmra.mrb[0].mxu0 %v4357
        %v4359 = vpop.f32.mrb[0].mxu0
        %v4360 = vadd.f32 %v3973, %v4359
        %v4361 = vpop.f32.mrb[0].mxu0
        %v4362 = vand.u32 %v957, 4294901760
        %v4363 = vsub.f32 %v957, %v4362
        %4364 = vmatprep.mubr.f32.mxu0 %v4363
        %v4365 = vand.u32 %v956, 4294901760
        %v4366 = vsub.f32 %v956, %v4365
        %4367 = vmatmul.mubr.f32.gmra.mrb[0].mxu0 %v4366
        %v4368 = vpop.f32.mrb[0].mxu0
        %v4369 = vadd.f32 %v3980, %v4368
        %v4370 = vpop.f32.mrb[0].mxu0
        %v4371 = vand.u32 %v961, 4294901760
        %v4372 = vsub.f32 %v961, %v4371
        %4373 = vmatprep.mubr.f32.mxu0 %v4372
        %v4374 = vand.u32 %v960, 4294901760
        %v4375 = vsub.f32 %v960, %v4374
        %4376 = vmatmul.mubr.f32.gmra.mrb[0].mxu0 %v4375
        %v4377 = vpop.f32.mrb[0].mxu0
        %v4378 = vadd.f32 %v3987, %v4377
        %v4379 = vpop.f32.mrb[0].mxu0
        %v4380 = vand.u32 %v965, 4294901760
        %v4381 = vsub.f32 %v965, %v4380
        %4382 = vmatprep.mubr.f32.mxu0 %v4381
        %v4383 = vand.u32 %v964, 4294901760
        %v4384 = vsub.f32 %v964, %v4383
        %4385 = vmatmul.mubr.f32.gmra.mrb[0].mxu0 %v4384
        %v4386 = vpop.f32.mrb[0].mxu0
        %v4387 = vadd.f32 %v3994, %v4386
        %v4388 = vpop.f32.mrb[0].mxu0
        %v4389 = vand.u32 %v969, 4294901760
        %v4390 = vsub.f32 %v969, %v4389
        %4391 = vmatprep.mubr.f32.mxu0 %v4390
        %v4392 = vand.u32 %v968, 4294901760
        %v4393 = vsub.f32 %v968, %v4392
        %4394 = vmatmul.mubr.f32.gmra.mrb[0].mxu0 %v4393
        %v4395 = vpop.f32.mrb[0].mxu0
        %v4396 = vadd.f32 %v4001, %v4395
        %v4397 = vpop.f32.mrb[0].mxu0
        %v4398 = vand.u32 %v973, 4294901760
        %v4399 = vsub.f32 %v973, %v4398
        %4400 = vmatprep.mubr.f32.mxu0 %v4399
        %v4401 = vand.u32 %v972, 4294901760
        %v4402 = vsub.f32 %v972, %v4401
        %4403 = vmatmul.mubr.f32.gmra.mrb[0].mxu0 %v4402
        %v4404 = vpop.f32.mrb[0].mxu0
        %v4405 = vadd.f32 %v4008, %v4404
        %v4406 = vpop.f32.mrb[0].mxu0
        %v4407 = vand.u32 %v977, 4294901760
        %v4408 = vsub.f32 %v977, %v4407
        %4409 = vmatprep.mubr.f32.mxu0 %v4408
        %v4410 = vand.u32 %v976, 4294901760
        %v4411 = vsub.f32 %v976, %v4410
        %4412 = vmatmul.mubr.f32.gmra.mrb[0].mxu0 %v4411
        %v4413 = vpop.f32.mrb[0].mxu0
        %v4414 = vadd.f32 %v4015, %v4413
        %v4415 = vpop.f32.mrb[0].mxu0
        %v4416 = vand.u32 %v981, 4294901760
        %v4417 = vsub.f32 %v981, %v4416
        %4418 = vmatprep.mubr.f32.mxu0 %v4417
        %v4419 = vand.u32 %v980, 4294901760
        %v4420 = vsub.f32 %v980, %v4419
        %4421 = vmatmul.mubr.f32.gmra.mrb[0].mxu0 %v4420
        %v4422 = vpop.f32.mrb[0].mxu0
        %v4423 = vadd.f32 %v4022, %v4422
        %v4424 = vpop.f32.mrb[0].mxu0
        %v4425 = vand.u32 %v985, 4294901760
        %v4426 = vsub.f32 %v985, %v4425
        %4427 = vmatprep.mubr.f32.mxu0 %v4426
        %v4428 = vand.u32 %v984, 4294901760
        %v4429 = vsub.f32 %v984, %v4428
        %4430 = vmatmul.mubr.f32.gmra.mrb[0].mxu0 %v4429
        %v4431 = vpop.f32.mrb[0].mxu0
        %v4432 = vadd.f32 %v4029, %v4431
        %v4433 = vpop.f32.mrb[0].mxu0
        %v4434 = vand.u32 %v989, 4294901760
        %v4435 = vsub.f32 %v989, %v4434
        %4436 = vmatprep.mubr.f32.mxu0 %v4435
        %v4437 = vand.u32 %v988, 4294901760
        %v4438 = vsub.f32 %v988, %v4437
        %4439 = vmatmul.mubr.f32.gmra.mrb[0].mxu0 %v4438
        %v4440 = vpop.f32.mrb[0].mxu0
        %v4441 = vadd.f32 %v4036, %v4440
        %v4442 = vpop.f32.mrb[0].mxu0
        %v4443 = vand.u32 %v993, 4294901760
        %v4444 = vsub.f32 %v993, %v4443
        %4445 = vmatprep.mubr.f32.mxu0 %v4444
        %v4446 = vand.u32 %v992, 4294901760
        %v4447 = vsub.f32 %v992, %v4446
        %4448 = vmatmul.mubr.f32.gmra.mrb[0].mxu0 %v4447
        %v4449 = vpop.f32.mrb[0].mxu0
        %v4450 = vadd.f32 %v4043, %v4449
        %v4451 = vpop.f32.mrb[0].mxu0
        %v4452 = vand.u32 %v997, 4294901760
        %v4453 = vsub.f32 %v997, %v4452
        %4454 = vmatprep.mubr.f32.mxu0 %v4453
        %v4455 = vand.u32 %v996, 4294901760
        %v4456 = vsub.f32 %v996, %v4455
        %4457 = vmatmul.mubr.f32.gmra.mrb[0].mxu0 %v4456
        %v4458 = vpop.f32.mrb[0].mxu0
        %v4459 = vadd.f32 %v4050, %v4458
        %v4460 = vpop.f32.mrb[0].mxu0
        %v4461 = vand.u32 %v1001, 4294901760
        %v4462 = vsub.f32 %v1001, %v4461
        %4463 = vmatprep.mubr.f32.mxu0 %v4462
        %v4464 = vand.u32 %v1000, 4294901760
        %v4465 = vsub.f32 %v1000, %v4464
        %4466 = vmatmul.mubr.f32.gmra.mrb[0].mxu0 %v4465
        %v4467 = vpop.f32.mrb[0].mxu0
        %v4468 = vadd.f32 %v4057, %v4467
        %v4469 = vpop.f32.mrb[0].mxu0
        %v4470 = vand.u32 %v1005, 4294901760
        %v4471 = vsub.f32 %v1005, %v4470
        %4472 = vmatprep.mubr.f32.mxu0 %v4471
        %v4473 = vand.u32 %v1004, 4294901760
        %v4474 = vsub.f32 %v1004, %v4473
        %4475 = vmatmul.mubr.f32.gmra.mrb[0].mxu0 %v4474
        %v4476 = vpop.f32.mrb[0].mxu0
        %v4477 = vadd.f32 %v4064, %v4476
        %v4478 = vpop.f32.mrb[0].mxu0
        %v4479 = vand.u32 %v1009, 4294901760
        %v4480 = vsub.f32 %v1009, %v4479
        %4481 = vmatprep.mubr.f32.mxu0 %v4480
        %v4482 = vand.u32 %v1008, 4294901760
        %v4483 = vsub.f32 %v1008, %v4482
        %4484 = vmatmul.mubr.f32.gmra.mrb[0].mxu0 %v4483
        %v4485 = vpop.f32.mrb[0].mxu0
        %v4486 = vadd.f32 %v4071, %v4485
        %v4487 = vpop.f32.mrb[0].mxu0
        %v4488 = vand.u32 %v1013, 4294901760
        %v4489 = vsub.f32 %v1013, %v4488
        %4490 = vmatprep.mubr.f32.mxu0 %v4489
        %v4491 = vand.u32 %v1012, 4294901760
        %v4492 = vsub.f32 %v1012, %v4491
        %4493 = vmatmul.mubr.f32.gmra.mrb[0].mxu0 %v4492
        %v4494 = vpop.f32.mrb[0].mxu0
        %v4495 = vadd.f32 %v4078, %v4494
        %v4496 = vpop.f32.mrb[0].mxu0
        %4497 = vdwg.mxu0
        %4498 = vmatprep.subr.mxu0 0.0
        %v4499 = vand.u32 %v2991, 4294901760
        %4500 = vmatpush1.msra.mxu0 %v4499
        %4501 = vmatprep.subr.mxu0 0.0
        %v4502 = vand.u32 %v2992, 4294901760
        %4503 = vmatpush1.msra.mxu0 %v4502
        %4504 = vmatprep.subr.mxu0 0.0
        %v4505 = vand.u32 %v2993, 4294901760
        %4506 = vmatpush1.msra.mxu0 %v4505
        %4507 = vmatprep.subr.mxu0 0.0
        %v4508 = vand.u32 %v2994, 4294901760
        %4509 = vmatpush1.msra.mxu0 %v4508
        %4510 = vmatprep.subr.mxu0 0.0
        %v4511 = vand.u32 %v2995, 4294901760
        %4512 = vmatpush1.msra.mxu0 %v4511
        %4513 = vmatprep.subr.mxu0 0.0
        %v4514 = vand.u32 %v2996, 4294901760
        %4515 = vmatpush1.msra.mxu0 %v4514
        %4516 = vmatprep.subr.mxu0 0.0
        %v4517 = vand.u32 %v2997, 4294901760
        %4518 = vmatpush1.msra.mxu0 %v4517
        %4519 = vmatprep.subr.mxu0 0.0
        %v4520 = vand.u32 %v2998, 4294901760
        %4521 = vmatpush1.msra.mxu0 %v4520
        %4522 = vmatprep.subr.mxu0 0.0
        %v4523 = vand.u32 %v2999, 4294901760
        %4524 = vmatpush1.msra.mxu0 %v4523
        %4525 = vmatprep.subr.mxu0 0.0
        %v4526 = vand.u32 %v3000, 4294901760
        %4527 = vmatpush1.msra.mxu0 %v4526
        %4528 = vmatprep.subr.mxu0 0.0
        %v4529 = vand.u32 %v3001, 4294901760
        %4530 = vmatpush1.msra.mxu0 %v4529
        %4531 = vmatprep.subr.mxu0 0.0
        %v4532 = vand.u32 %v3002, 4294901760
        %4533 = vmatpush1.msra.mxu0 %v4532
        %4534 = vmatprep.subr.mxu0 0.0
        %v4535 = vand.u32 %v3003, 4294901760
        %4536 = vmatpush1.msra.mxu0 %v4535
        %4537 = vmatprep.subr.mxu0 0.0
        %v4538 = vand.u32 %v3004, 4294901760
        %4539 = vmatpush1.msra.mxu0 %v4538
        %4540 = vmatprep.subr.mxu0 0.0
        %v4541 = vand.u32 %v3005, 4294901760
        %4542 = vmatpush1.msra.mxu0 %v4541
        %4543 = vmatprep.subr.mxu0 0.0
        %v4544 = vand.u32 %v3006, 4294901760
        %4545 = vmatpush1.msra.mxu0 %v4544
        %4546 = vmatprep.subr.mxu0 0.0
        %v4547 = vand.u32 %v3007, 4294901760
        %4548 = vmatpush1.msra.mxu0 %v4547
        %4549 = vmatprep.subr.mxu0 0.0
        %v4550 = vand.u32 %v3008, 4294901760
        %4551 = vmatpush1.msra.mxu0 %v4550
        %4552 = vmatprep.subr.mxu0 0.0
        %v4553 = vand.u32 %v3009, 4294901760
        %4554 = vmatpush1.msra.mxu0 %v4553
        %4555 = vmatprep.subr.mxu0 0.0
        %v4556 = vand.u32 %v3010, 4294901760
        %4557 = vmatpush1.msra.mxu0 %v4556
        %4558 = vmatprep.subr.mxu0 0.0
        %v4559 = vand.u32 %v3011, 4294901760
        %4560 = vmatpush1.msra.mxu0 %v4559
        %4561 = vmatprep.subr.mxu0 0.0
        %v4562 = vand.u32 %v3012, 4294901760
        %4563 = vmatpush1.msra.mxu0 %v4562
        %4564 = vmatprep.subr.mxu0 0.0
        %v4565 = vand.u32 %v3013, 4294901760
        %4566 = vmatpush1.msra.mxu0 %v4565
        %4567 = vmatprep.subr.mxu0 0.0
        %v4568 = vand.u32 %v3014, 4294901760
        %4569 = vmatpush1.msra.mxu0 %v4568
        %4570 = vmatprep.subr.mxu0 0.0
        %v4571 = vand.u32 %v3015, 4294901760
        %4572 = vmatpush1.msra.mxu0 %v4571
        %4573 = vmatprep.subr.mxu0 0.0
        %v4574 = vand.u32 %v3016, 4294901760
        %4575 = vmatpush1.msra.mxu0 %v4574
        %4576 = vmatprep.subr.mxu0 0.0
        %v4577 = vand.u32 %v3017, 4294901760
        %4578 = vmatpush1.msra.mxu0 %v4577
        %4579 = vmatprep.subr.mxu0 0.0
        %v4580 = vand.u32 %v3018, 4294901760
        %4581 = vmatpush1.msra.mxu0 %v4580
        %4582 = vmatprep.subr.mxu0 0.0
        %v4583 = vand.u32 %v3019, 4294901760
        %4584 = vmatpush1.msra.mxu0 %v4583
        %4585 = vmatprep.subr.mxu0 0.0
        %v4586 = vand.u32 %v3020, 4294901760
        %4587 = vmatpush1.msra.mxu0 %v4586
        %4588 = vmatprep.subr.mxu0 0.0
        %v4589 = vand.u32 %v3021, 4294901760
        %4590 = vmatpush1.msra.mxu0 %v4589
        %4591 = vmatprep.subr.mxu0 0.0
        %v4592 = vand.u32 %v3022, 4294901760
        %4593 = vmatpush1.msra.mxu0 %v4592
        %v4594 = vand.u32 %v889, 4294901760
        %v4595 = vsub.f32 %v889, %v4594
        %v4596 = vand.u32 %v4595, 4294901760
        %4597 = vmatprep.mubr.f32.mxu0 %v4596
        %v4598 = vand.u32 %v888, 4294901760
        %v4599 = vsub.f32 %v888, %v4598
        %v4600 = vand.u32 %v4599, 4294901760
        %4601 = vmatmul.mubr.f32.gmra.mrb[0].mxu0 %v4600
        %v4602 = vpop.f32.mrb[0].mxu0
        %v4603 = vadd.f32 %v4216, %v4602
        %v4604 = vpop.f32.mrb[0].mxu0
        %v4605 = vand.u32 %v893, 4294901760
        %v4606 = vsub.f32 %v893, %v4605
        %v4607 = vand.u32 %v4606, 4294901760
        %4608 = vmatprep.mubr.f32.mxu0 %v4607
        %v4609 = vand.u32 %v892, 4294901760
        %v4610 = vsub.f32 %v892, %v4609
        %v4611 = vand.u32 %v4610, 4294901760
        %4612 = vmatmul.mubr.f32.gmra.mrb[0].mxu0 %v4611
        %v4613 = vpop.f32.mrb[0].mxu0
        %v4614 = vadd.f32 %v4225, %v4613
        %v4615 = vpop.f32.mrb[0].mxu0
        %v4616 = vand.u32 %v897, 4294901760
        %v4617 = vsub.f32 %v897, %v4616
        %v4618 = vand.u32 %v4617, 4294901760
        %4619 = vmatprep.mubr.f32.mxu0 %v4618
        %v4620 = vand.u32 %v896, 4294901760
        %v4621 = vsub.f32 %v896, %v4620
        %v4622 = vand.u32 %v4621, 4294901760
        %4623 = vmatmul.mubr.f32.gmra.mrb[0].mxu0 %v4622
        %v4624 = vpop.f32.mrb[0].mxu0
        %v4625 = vadd.f32 %v4234, %v4624
        %v4626 = vpop.f32.mrb[0].mxu0
        %v4627 = vand.u32 %v901, 4294901760
        %v4628 = vsub.f32 %v901, %v4627
        %v4629 = vand.u32 %v4628, 4294901760
        %4630 = vmatprep.mubr.f32.mxu0 %v4629
        %v4631 = vand.u32 %v900, 4294901760
        %v4632 = vsub.f32 %v900, %v4631
        %v4633 = vand.u32 %v4632, 4294901760
        %4634 = vmatmul.mubr.f32.gmra.mrb[0].mxu0 %v4633
        %v4635 = vpop.f32.mrb[0].mxu0
        %v4636 = vadd.f32 %v4243, %v4635
        %v4637 = vpop.f32.mrb[0].mxu0
        %v4638 = vand.u32 %v905, 4294901760
        %v4639 = vsub.f32 %v905, %v4638
        %v4640 = vand.u32 %v4639, 4294901760
        %4641 = vmatprep.mubr.f32.mxu0 %v4640
        %v4642 = vand.u32 %v904, 4294901760
        %v4643 = vsub.f32 %v904, %v4642
        %v4644 = vand.u32 %v4643, 4294901760
        %4645 = vmatmul.mubr.f32.gmra.mrb[0].mxu0 %v4644
        %v4646 = vpop.f32.mrb[0].mxu0
        %v4647 = vadd.f32 %v4252, %v4646
        %v4648 = vpop.f32.mrb[0].mxu0
        %v4649 = vand.u32 %v909, 4294901760
        %v4650 = vsub.f32 %v909, %v4649
        %v4651 = vand.u32 %v4650, 4294901760
        %4652 = vmatprep.mubr.f32.mxu0 %v4651
        %v4653 = vand.u32 %v908, 4294901760
        %v4654 = vsub.f32 %v908, %v4653
        %v4655 = vand.u32 %v4654, 4294901760
        %4656 = vmatmul.mubr.f32.gmra.mrb[0].mxu0 %v4655
        %v4657 = vpop.f32.mrb[0].mxu0
        %v4658 = vadd.f32 %v4261, %v4657
        %v4659 = vpop.f32.mrb[0].mxu0
        %v4660 = vand.u32 %v913, 4294901760
        %v4661 = vsub.f32 %v913, %v4660
        %v4662 = vand.u32 %v4661, 4294901760
        %4663 = vmatprep.mubr.f32.mxu0 %v4662
        %v4664 = vand.u32 %v912, 4294901760
        %v4665 = vsub.f32 %v912, %v4664
        %v4666 = vand.u32 %v4665, 4294901760
        %4667 = vmatmul.mubr.f32.gmra.mrb[0].mxu0 %v4666
        %v4668 = vpop.f32.mrb[0].mxu0
        %v4669 = vadd.f32 %v4270, %v4668
        %v4670 = vpop.f32.mrb[0].mxu0
        %v4671 = vand.u32 %v917, 4294901760
        %v4672 = vsub.f32 %v917, %v4671
        %v4673 = vand.u32 %v4672, 4294901760
        %4674 = vmatprep.mubr.f32.mxu0 %v4673
        %v4675 = vand.u32 %v916, 4294901760
        %v4676 = vsub.f32 %v916, %v4675
        %v4677 = vand.u32 %v4676, 4294901760
        %4678 = vmatmul.mubr.f32.gmra.mrb[0].mxu0 %v4677
        %v4679 = vpop.f32.mrb[0].mxu0
        %v4680 = vadd.f32 %v4279, %v4679
        %v4681 = vpop.f32.mrb[0].mxu0
        %v4682 = vand.u32 %v921, 4294901760
        %v4683 = vsub.f32 %v921, %v4682
        %v4684 = vand.u32 %v4683, 4294901760
        %4685 = vmatprep.mubr.f32.mxu0 %v4684
        %v4686 = vand.u32 %v920, 4294901760
        %v4687 = vsub.f32 %v920, %v4686
        %v4688 = vand.u32 %v4687, 4294901760
        %4689 = vmatmul.mubr.f32.gmra.mrb[0].mxu0 %v4688
        %v4690 = vpop.f32.mrb[0].mxu0
        %v4691 = vadd.f32 %v4288, %v4690
        %v4692 = vpop.f32.mrb[0].mxu0
        %v4693 = vand.u32 %v925, 4294901760
        %v4694 = vsub.f32 %v925, %v4693
        %v4695 = vand.u32 %v4694, 4294901760
        %4696 = vmatprep.mubr.f32.mxu0 %v4695
        %v4697 = vand.u32 %v924, 4294901760
        %v4698 = vsub.f32 %v924, %v4697
        %v4699 = vand.u32 %v4698, 4294901760
        %4700 = vmatmul.mubr.f32.gmra.mrb[0].mxu0 %v4699
        %v4701 = vpop.f32.mrb[0].mxu0
        %v4702 = vadd.f32 %v4297, %v4701
        %v4703 = vpop.f32.mrb[0].mxu0
        %v4704 = vand.u32 %v929, 4294901760
        %v4705 = vsub.f32 %v929, %v4704
        %v4706 = vand.u32 %v4705, 4294901760
        %4707 = vmatprep.mubr.f32.mxu0 %v4706
        %v4708 = vand.u32 %v928, 4294901760
        %v4709 = vsub.f32 %v928, %v4708
        %v4710 = vand.u32 %v4709, 4294901760
        %4711 = vmatmul.mubr.f32.gmra.mrb[0].mxu0 %v4710
        %v4712 = vpop.f32.mrb[0].mxu0
        %v4713 = vadd.f32 %v4306, %v4712
        %v4714 = vpop.f32.mrb[0].mxu0
        %v4715 = vand.u32 %v933, 4294901760
        %v4716 = vsub.f32 %v933, %v4715
        %v4717 = vand.u32 %v4716, 4294901760
        %4718 = vmatprep.mubr.f32.mxu0 %v4717
        %v4719 = vand.u32 %v932, 4294901760
        %v4720 = vsub.f32 %v932, %v4719
        %v4721 = vand.u32 %v4720, 4294901760
        %4722 = vmatmul.mubr.f32.gmra.mrb[0].mxu0 %v4721
        %v4723 = vpop.f32.mrb[0].mxu0
        %v4724 = vadd.f32 %v4315, %v4723
        %v4725 = vpop.f32.mrb[0].mxu0
        %v4726 = vand.u32 %v937, 4294901760
        %v4727 = vsub.f32 %v937, %v4726
        %v4728 = vand.u32 %v4727, 4294901760
        %4729 = vmatprep.mubr.f32.mxu0 %v4728
        %v4730 = vand.u32 %v936, 4294901760
        %v4731 = vsub.f32 %v936, %v4730
        %v4732 = vand.u32 %v4731, 4294901760
        %4733 = vmatmul.mubr.f32.gmra.mrb[0].mxu0 %v4732
        %v4734 = vpop.f32.mrb[0].mxu0
        %v4735 = vadd.f32 %v4324, %v4734
        %v4736 = vpop.f32.mrb[0].mxu0
        %v4737 = vand.u32 %v941, 4294901760
        %v4738 = vsub.f32 %v941, %v4737
        %v4739 = vand.u32 %v4738, 4294901760
        %4740 = vmatprep.mubr.f32.mxu0 %v4739
        %v4741 = vand.u32 %v940, 4294901760
        %v4742 = vsub.f32 %v940, %v4741
        %v4743 = vand.u32 %v4742, 4294901760
        %4744 = vmatmul.mubr.f32.gmra.mrb[0].mxu0 %v4743
        %v4745 = vpop.f32.mrb[0].mxu0
        %v4746 = vadd.f32 %v4333, %v4745
        %v4747 = vpop.f32.mrb[0].mxu0
        %v4748 = vand.u32 %v945, 4294901760
        %v4749 = vsub.f32 %v945, %v4748
        %v4750 = vand.u32 %v4749, 4294901760
        %4751 = vmatprep.mubr.f32.mxu0 %v4750
        %v4752 = vand.u32 %v944, 4294901760
        %v4753 = vsub.f32 %v944, %v4752
        %v4754 = vand.u32 %v4753, 4294901760
        %4755 = vmatmul.mubr.f32.gmra.mrb[0].mxu0 %v4754
        %v4756 = vpop.f32.mrb[0].mxu0
        %v4757 = vadd.f32 %v4342, %v4756
        %v4758 = vpop.f32.mrb[0].mxu0
        %v4759 = vand.u32 %v949, 4294901760
        %v4760 = vsub.f32 %v949, %v4759
        %v4761 = vand.u32 %v4760, 4294901760
        %4762 = vmatprep.mubr.f32.mxu0 %v4761
        %v4763 = vand.u32 %v948, 4294901760
        %v4764 = vsub.f32 %v948, %v4763
        %v4765 = vand.u32 %v4764, 4294901760
        %4766 = vmatmul.mubr.f32.gmra.mrb[0].mxu0 %v4765
        %v4767 = vpop.f32.mrb[0].mxu0
        %v4768 = vadd.f32 %v4351, %v4767
        %v4769 = vpop.f32.mrb[0].mxu0
        %v4770 = vand.u32 %v953, 4294901760
        %v4771 = vsub.f32 %v953, %v4770
        %v4772 = vand.u32 %v4771, 4294901760
        %4773 = vmatprep.mubr.f32.mxu0 %v4772
        %v4774 = vand.u32 %v952, 4294901760
        %v4775 = vsub.f32 %v952, %v4774
        %v4776 = vand.u32 %v4775, 4294901760
        %4777 = vmatmul.mubr.f32.gmra.mrb[0].mxu0 %v4776
        %v4778 = vpop.f32.mrb[0].mxu0
        %v4779 = vadd.f32 %v4360, %v4778
        %v4780 = vpop.f32.mrb[0].mxu0
        %v4781 = vand.u32 %v957, 4294901760
        %v4782 = vsub.f32 %v957, %v4781
        %v4783 = vand.u32 %v4782, 4294901760
        %4784 = vmatprep.mubr.f32.mxu0 %v4783
        %v4785 = vand.u32 %v956, 4294901760
        %v4786 = vsub.f32 %v956, %v4785
        %v4787 = vand.u32 %v4786, 4294901760
        %4788 = vmatmul.mubr.f32.gmra.mrb[0].mxu0 %v4787
        %v4789 = vpop.f32.mrb[0].mxu0
        %v4790 = vadd.f32 %v4369, %v4789
        %v4791 = vpop.f32.mrb[0].mxu0
        %v4792 = vand.u32 %v961, 4294901760
        %v4793 = vsub.f32 %v961, %v4792
        %v4794 = vand.u32 %v4793, 4294901760
        %4795 = vmatprep.mubr.f32.mxu0 %v4794
        %v4796 = vand.u32 %v960, 4294901760
        %v4797 = vsub.f32 %v960, %v4796
        %v4798 = vand.u32 %v4797, 4294901760
        %4799 = vmatmul.mubr.f32.gmra.mrb[0].mxu0 %v4798
        %v4800 = vpop.f32.mrb[0].mxu0
        %v4801 = vadd.f32 %v4378, %v4800
        %v4802 = vpop.f32.mrb[0].mxu0
        %v4803 = vand.u32 %v965, 4294901760
        %v4804 = vsub.f32 %v965, %v4803
        %v4805 = vand.u32 %v4804, 4294901760
        %4806 = vmatprep.mubr.f32.mxu0 %v4805
        %v4807 = vand.u32 %v964, 4294901760
        %v4808 = vsub.f32 %v964, %v4807
        %v4809 = vand.u32 %v4808, 4294901760
        %4810 = vmatmul.mubr.f32.gmra.mrb[0].mxu0 %v4809
        %v4811 = vpop.f32.mrb[0].mxu0
        %v4812 = vadd.f32 %v4387, %v4811
        %v4813 = vpop.f32.mrb[0].mxu0
        %v4814 = vand.u32 %v969, 4294901760
        %v4815 = vsub.f32 %v969, %v4814
        %v4816 = vand.u32 %v4815, 4294901760
        %4817 = vmatprep.mubr.f32.mxu0 %v4816
        %v4818 = vand.u32 %v968, 4294901760
        %v4819 = vsub.f32 %v968, %v4818
        %v4820 = vand.u32 %v4819, 4294901760
        %4821 = vmatmul.mubr.f32.gmra.mrb[0].mxu0 %v4820
        %v4822 = vpop.f32.mrb[0].mxu0
        %v4823 = vadd.f32 %v4396, %v4822
        %v4824 = vpop.f32.mrb[0].mxu0
        %v4825 = vand.u32 %v973, 4294901760
        %v4826 = vsub.f32 %v973, %v4825
        %v4827 = vand.u32 %v4826, 4294901760
        %4828 = vmatprep.mubr.f32.mxu0 %v4827
        %v4829 = vand.u32 %v972, 4294901760
        %v4830 = vsub.f32 %v972, %v4829
        %v4831 = vand.u32 %v4830, 4294901760
        %4832 = vmatmul.mubr.f32.gmra.mrb[0].mxu0 %v4831
        %v4833 = vpop.f32.mrb[0].mxu0
        %v4834 = vadd.f32 %v4405, %v4833
        %v4835 = vpop.f32.mrb[0].mxu0
        %v4836 = vand.u32 %v977, 4294901760
        %v4837 = vsub.f32 %v977, %v4836
        %v4838 = vand.u32 %v4837, 4294901760
        %4839 = vmatprep.mubr.f32.mxu0 %v4838
        %v4840 = vand.u32 %v976, 4294901760
        %v4841 = vsub.f32 %v976, %v4840
        %v4842 = vand.u32 %v4841, 4294901760
        %4843 = vmatmul.mubr.f32.gmra.mrb[0].mxu0 %v4842
        %v4844 = vpop.f32.mrb[0].mxu0
        %v4845 = vadd.f32 %v4414, %v4844
        %v4846 = vpop.f32.mrb[0].mxu0
        %v4847 = vand.u32 %v981, 4294901760
        %v4848 = vsub.f32 %v981, %v4847
        %v4849 = vand.u32 %v4848, 4294901760
        %4850 = vmatprep.mubr.f32.mxu0 %v4849
        %v4851 = vand.u32 %v980, 4294901760
        %v4852 = vsub.f32 %v980, %v4851
        %v4853 = vand.u32 %v4852, 4294901760
        %4854 = vmatmul.mubr.f32.gmra.mrb[0].mxu0 %v4853
        %v4855 = vpop.f32.mrb[0].mxu0
        %v4856 = vadd.f32 %v4423, %v4855
        %v4857 = vpop.f32.mrb[0].mxu0
        %v4858 = vand.u32 %v985, 4294901760
        %v4859 = vsub.f32 %v985, %v4858
        %v4860 = vand.u32 %v4859, 4294901760
        %4861 = vmatprep.mubr.f32.mxu0 %v4860
        %v4862 = vand.u32 %v984, 4294901760
        %v4863 = vsub.f32 %v984, %v4862
        %v4864 = vand.u32 %v4863, 4294901760
        %4865 = vmatmul.mubr.f32.gmra.mrb[0].mxu0 %v4864
        %v4866 = vpop.f32.mrb[0].mxu0
        %v4867 = vadd.f32 %v4432, %v4866
        %v4868 = vpop.f32.mrb[0].mxu0
        %v4869 = vand.u32 %v989, 4294901760
        %v4870 = vsub.f32 %v989, %v4869
        %v4871 = vand.u32 %v4870, 4294901760
        %4872 = vmatprep.mubr.f32.mxu0 %v4871
        %v4873 = vand.u32 %v988, 4294901760
        %v4874 = vsub.f32 %v988, %v4873
        %v4875 = vand.u32 %v4874, 4294901760
        %4876 = vmatmul.mubr.f32.gmra.mrb[0].mxu0 %v4875
        %v4877 = vpop.f32.mrb[0].mxu0
        %v4878 = vadd.f32 %v4441, %v4877
        %v4879 = vpop.f32.mrb[0].mxu0
        %v4880 = vand.u32 %v993, 4294901760
        %v4881 = vsub.f32 %v993, %v4880
        %v4882 = vand.u32 %v4881, 4294901760
        %4883 = vmatprep.mubr.f32.mxu0 %v4882
        %v4884 = vand.u32 %v992, 4294901760
        %v4885 = vsub.f32 %v992, %v4884
        %v4886 = vand.u32 %v4885, 4294901760
        %4887 = vmatmul.mubr.f32.gmra.mrb[0].mxu0 %v4886
        %v4888 = vpop.f32.mrb[0].mxu0
        %v4889 = vadd.f32 %v4450, %v4888
        %v4890 = vpop.f32.mrb[0].mxu0
        %v4891 = vand.u32 %v997, 4294901760
        %v4892 = vsub.f32 %v997, %v4891
        %v4893 = vand.u32 %v4892, 4294901760
        %4894 = vmatprep.mubr.f32.mxu0 %v4893
        %v4895 = vand.u32 %v996, 4294901760
        %v4896 = vsub.f32 %v996, %v4895
        %v4897 = vand.u32 %v4896, 4294901760
        %4898 = vmatmul.mubr.f32.gmra.mrb[0].mxu0 %v4897
        %v4899 = vpop.f32.mrb[0].mxu0
        %v4900 = vadd.f32 %v4459, %v4899
        %v4901 = vpop.f32.mrb[0].mxu0
        %v4902 = vand.u32 %v1001, 4294901760
        %v4903 = vsub.f32 %v1001, %v4902
        %v4904 = vand.u32 %v4903, 4294901760
        %4905 = vmatprep.mubr.f32.mxu0 %v4904
        %v4906 = vand.u32 %v1000, 4294901760
        %v4907 = vsub.f32 %v1000, %v4906
        %v4908 = vand.u32 %v4907, 4294901760
        %4909 = vmatmul.mubr.f32.gmra.mrb[0].mxu0 %v4908
        %v4910 = vpop.f32.mrb[0].mxu0
        %v4911 = vadd.f32 %v4468, %v4910
        %v4912 = vpop.f32.mrb[0].mxu0
        %v4913 = vand.u32 %v1005, 4294901760
        %v4914 = vsub.f32 %v1005, %v4913
        %v4915 = vand.u32 %v4914, 4294901760
        %4916 = vmatprep.mubr.f32.mxu0 %v4915
        %v4917 = vand.u32 %v1004, 4294901760
        %v4918 = vsub.f32 %v1004, %v4917
        %v4919 = vand.u32 %v4918, 4294901760
        %4920 = vmatmul.mubr.f32.gmra.mrb[0].mxu0 %v4919
        %v4921 = vpop.f32.mrb[0].mxu0
        %v4922 = vadd.f32 %v4477, %v4921
        %v4923 = vpop.f32.mrb[0].mxu0
        %v4924 = vand.u32 %v1009, 4294901760
        %v4925 = vsub.f32 %v1009, %v4924
        %v4926 = vand.u32 %v4925, 4294901760
        %4927 = vmatprep.mubr.f32.mxu0 %v4926
        %v4928 = vand.u32 %v1008, 4294901760
        %v4929 = vsub.f32 %v1008, %v4928
        %v4930 = vand.u32 %v4929, 4294901760
        %4931 = vmatmul.mubr.f32.gmra.mrb[0].mxu0 %v4930
        %v4932 = vpop.f32.mrb[0].mxu0
        %v4933 = vadd.f32 %v4486, %v4932
        %v4934 = vpop.f32.mrb[0].mxu0
        %v4935 = vand.u32 %v1013, 4294901760
        %v4936 = vsub.f32 %v1013, %v4935
        %v4937 = vand.u32 %v4936, 4294901760
        %4938 = vmatprep.mubr.f32.mxu0 %v4937
        %v4939 = vand.u32 %v1012, 4294901760
        %v4940 = vsub.f32 %v1012, %v4939
        %v4941 = vand.u32 %v4940, 4294901760
        %4942 = vmatmul.mubr.f32.gmra.mrb[0].mxu0 %v4941
        %v4943 = vpop.f32.mrb[0].mxu0
        %v4944 = vadd.f32 %v4495, %v4943
        %v4945 = vpop.f32.mrb[0].mxu0
        %4946 = vdwg.mxu0
        %4947 = vmatprep.subr.mxu0 0.0
        %v4948 = vand.u32 %v2991, 4294901760
        %v4949 = vsub.f32 %v2991, %v4948
        %v4950 = vand.u32 %v4949, 4294901760
        %4951 = vmatpush1.msra.mxu0 %v4950
        %4952 = vmatprep.subr.mxu0 0.0
        %v4953 = vand.u32 %v2992, 4294901760
        %v4954 = vsub.f32 %v2992, %v4953
        %v4955 = vand.u32 %v4954, 4294901760
        %4956 = vmatpush1.msra.mxu0 %v4955
        %4957 = vmatprep.subr.mxu0 0.0
        %v4958 = vand.u32 %v2993, 4294901760
        %v4959 = vsub.f32 %v2993, %v4958
        %v4960 = vand.u32 %v4959, 4294901760
        %4961 = vmatpush1.msra.mxu0 %v4960
        %4962 = vmatprep.subr.mxu0 0.0
        %v4963 = vand.u32 %v2994, 4294901760
        %v4964 = vsub.f32 %v2994, %v4963
        %v4965 = vand.u32 %v4964, 4294901760
        %4966 = vmatpush1.msra.mxu0 %v4965
        %4967 = vmatprep.subr.mxu0 0.0
        %v4968 = vand.u32 %v2995, 4294901760
        %v4969 = vsub.f32 %v2995, %v4968
        %v4970 = vand.u32 %v4969, 4294901760
        %4971 = vmatpush1.msra.mxu0 %v4970
        %4972 = vmatprep.subr.mxu0 0.0
        %v4973 = vand.u32 %v2996, 4294901760
        %v4974 = vsub.f32 %v2996, %v4973
        %v4975 = vand.u32 %v4974, 4294901760
        %4976 = vmatpush1.msra.mxu0 %v4975
        %4977 = vmatprep.subr.mxu0 0.0
        %v4978 = vand.u32 %v2997, 4294901760
        %v4979 = vsub.f32 %v2997, %v4978
        %v4980 = vand.u32 %v4979, 4294901760
        %4981 = vmatpush1.msra.mxu0 %v4980
        %4982 = vmatprep.subr.mxu0 0.0
        %v4983 = vand.u32 %v2998, 4294901760
        %v4984 = vsub.f32 %v2998, %v4983
        %v4985 = vand.u32 %v4984, 4294901760
        %4986 = vmatpush1.msra.mxu0 %v4985
        %4987 = vmatprep.subr.mxu0 0.0
        %v4988 = vand.u32 %v2999, 4294901760
        %v4989 = vsub.f32 %v2999, %v4988
        %v4990 = vand.u32 %v4989, 4294901760
        %4991 = vmatpush1.msra.mxu0 %v4990
        %4992 = vmatprep.subr.mxu0 0.0
        %v4993 = vand.u32 %v3000, 4294901760
        %v4994 = vsub.f32 %v3000, %v4993
        %v4995 = vand.u32 %v4994, 4294901760
        %4996 = vmatpush1.msra.mxu0 %v4995
        %4997 = vmatprep.subr.mxu0 0.0
        %v4998 = vand.u32 %v3001, 4294901760
        %v4999 = vsub.f32 %v3001, %v4998
        %v5000 = vand.u32 %v4999, 4294901760
        %5001 = vmatpush1.msra.mxu0 %v5000
        %5002 = vmatprep.subr.mxu0 0.0
        %v5003 = vand.u32 %v3002, 4294901760
        %v5004 = vsub.f32 %v3002, %v5003
        %v5005 = vand.u32 %v5004, 4294901760
        %5006 = vmatpush1.msra.mxu0 %v5005
        %5007 = vmatprep.subr.mxu0 0.0
        %v5008 = vand.u32 %v3003, 4294901760
        %v5009 = vsub.f32 %v3003, %v5008
        %v5010 = vand.u32 %v5009, 4294901760
        %5011 = vmatpush1.msra.mxu0 %v5010
        %5012 = vmatprep.subr.mxu0 0.0
        %v5013 = vand.u32 %v3004, 4294901760
        %v5014 = vsub.f32 %v3004, %v5013
        %v5015 = vand.u32 %v5014, 4294901760
        %5016 = vmatpush1.msra.mxu0 %v5015
        %5017 = vmatprep.subr.mxu0 0.0
        %v5018 = vand.u32 %v3005, 4294901760
        %v5019 = vsub.f32 %v3005, %v5018
        %v5020 = vand.u32 %v5019, 4294901760
        %5021 = vmatpush1.msra.mxu0 %v5020
        %5022 = vmatprep.subr.mxu0 0.0
        %v5023 = vand.u32 %v3006, 4294901760
        %v5024 = vsub.f32 %v3006, %v5023
        %v5025 = vand.u32 %v5024, 4294901760
        %5026 = vmatpush1.msra.mxu0 %v5025
        %5027 = vmatprep.subr.mxu0 0.0
        %v5028 = vand.u32 %v3007, 4294901760
        %v5029 = vsub.f32 %v3007, %v5028
        %v5030 = vand.u32 %v5029, 4294901760
        %5031 = vmatpush1.msra.mxu0 %v5030
        %5032 = vmatprep.subr.mxu0 0.0
        %v5033 = vand.u32 %v3008, 4294901760
        %v5034 = vsub.f32 %v3008, %v5033
        %v5035 = vand.u32 %v5034, 4294901760
        %5036 = vmatpush1.msra.mxu0 %v5035
        %5037 = vmatprep.subr.mxu0 0.0
        %v5038 = vand.u32 %v3009, 4294901760
        %v5039 = vsub.f32 %v3009, %v5038
        %v5040 = vand.u32 %v5039, 4294901760
        %5041 = vmatpush1.msra.mxu0 %v5040
        %5042 = vmatprep.subr.mxu0 0.0
        %v5043 = vand.u32 %v3010, 4294901760
        %v5044 = vsub.f32 %v3010, %v5043
        %v5045 = vand.u32 %v5044, 4294901760
        %5046 = vmatpush1.msra.mxu0 %v5045
        %5047 = vmatprep.subr.mxu0 0.0
        %v5048 = vand.u32 %v3011, 4294901760
        %v5049 = vsub.f32 %v3011, %v5048
        %v5050 = vand.u32 %v5049, 4294901760
        %5051 = vmatpush1.msra.mxu0 %v5050
        %5052 = vmatprep.subr.mxu0 0.0
        %v5053 = vand.u32 %v3012, 4294901760
        %v5054 = vsub.f32 %v3012, %v5053
        %v5055 = vand.u32 %v5054, 4294901760
        %5056 = vmatpush1.msra.mxu0 %v5055
        %5057 = vmatprep.subr.mxu0 0.0
        %v5058 = vand.u32 %v3013, 4294901760
        %v5059 = vsub.f32 %v3013, %v5058
        %v5060 = vand.u32 %v5059, 4294901760
        %5061 = vmatpush1.msra.mxu0 %v5060
        %5062 = vmatprep.subr.mxu0 0.0
        %v5063 = vand.u32 %v3014, 4294901760
        %v5064 = vsub.f32 %v3014, %v5063
        %v5065 = vand.u32 %v5064, 4294901760
        %5066 = vmatpush1.msra.mxu0 %v5065
        %5067 = vmatprep.subr.mxu0 0.0
        %v5068 = vand.u32 %v3015, 4294901760
        %v5069 = vsub.f32 %v3015, %v5068
        %v5070 = vand.u32 %v5069, 4294901760
        %5071 = vmatpush1.msra.mxu0 %v5070
        %5072 = vmatprep.subr.mxu0 0.0
        %v5073 = vand.u32 %v3016, 4294901760
        %v5074 = vsub.f32 %v3016, %v5073
        %v5075 = vand.u32 %v5074, 4294901760
        %5076 = vmatpush1.msra.mxu0 %v5075
        %5077 = vmatprep.subr.mxu0 0.0
        %v5078 = vand.u32 %v3017, 4294901760
        %v5079 = vsub.f32 %v3017, %v5078
        %v5080 = vand.u32 %v5079, 4294901760
        %5081 = vmatpush1.msra.mxu0 %v5080
        %5082 = vmatprep.subr.mxu0 0.0
        %v5083 = vand.u32 %v3018, 4294901760
        %v5084 = vsub.f32 %v3018, %v5083
        %v5085 = vand.u32 %v5084, 4294901760
        %5086 = vmatpush1.msra.mxu0 %v5085
        %5087 = vmatprep.subr.mxu0 0.0
        %v5088 = vand.u32 %v3019, 4294901760
        %v5089 = vsub.f32 %v3019, %v5088
        %v5090 = vand.u32 %v5089, 4294901760
        %5091 = vmatpush1.msra.mxu0 %v5090
        %5092 = vmatprep.subr.mxu0 0.0
        %v5093 = vand.u32 %v3020, 4294901760
        %v5094 = vsub.f32 %v3020, %v5093
        %v5095 = vand.u32 %v5094, 4294901760
        %5096 = vmatpush1.msra.mxu0 %v5095
        %5097 = vmatprep.subr.mxu0 0.0
        %v5098 = vand.u32 %v3021, 4294901760
        %v5099 = vsub.f32 %v3021, %v5098
        %v5100 = vand.u32 %v5099, 4294901760
        %5101 = vmatpush1.msra.mxu0 %v5100
        %5102 = vmatprep.subr.mxu0 0.0
        %v5103 = vand.u32 %v3022, 4294901760
        %v5104 = vsub.f32 %v3022, %v5103
        %v5105 = vand.u32 %v5104, 4294901760
        %5106 = vmatpush1.msra.mxu0 %v5105
        %v5107 = vand.u32 %v889, 4294901760
        %5108 = vmatprep.mubr.f32.mxu0 %v5107
        %v5109 = vand.u32 %v888, 4294901760
        %5110 = vmatmul.mubr.f32.gmra.mrb[0].mxu0 %v5109
        %v5111 = vpop.f32.mrb[0].mxu0
        %v5112 = vadd.f32 %v4603, %v5111
        %v5113 = vpop.f32.mrb[0].mxu0
        %v5114 = vand.u32 %v893, 4294901760
        %5115 = vmatprep.mubr.f32.mxu0 %v5114
        %v5116 = vand.u32 %v892, 4294901760
        %5117 = vmatmul.mubr.f32.gmra.mrb[0].mxu0 %v5116
        %v5118 = vpop.f32.mrb[0].mxu0
        %v5119 = vadd.f32 %v4614, %v5118
        %v5120 = vpop.f32.mrb[0].mxu0
        %v5121 = vand.u32 %v897, 4294901760
        %5122 = vmatprep.mubr.f32.mxu0 %v5121
        %v5123 = vand.u32 %v896, 4294901760
        %5124 = vmatmul.mubr.f32.gmra.mrb[0].mxu0 %v5123
        %v5125 = vpop.f32.mrb[0].mxu0
        %v5126 = vadd.f32 %v4625, %v5125
        %v5127 = vpop.f32.mrb[0].mxu0
        %v5128 = vand.u32 %v901, 4294901760
        %5129 = vmatprep.mubr.f32.mxu0 %v5128
        %v5130 = vand.u32 %v900, 4294901760
        %5131 = vmatmul.mubr.f32.gmra.mrb[0].mxu0 %v5130
        %v5132 = vpop.f32.mrb[0].mxu0
        %v5133 = vadd.f32 %v4636, %v5132
        %v5134 = vpop.f32.mrb[0].mxu0
        %v5135 = vand.u32 %v905, 4294901760
        %5136 = vmatprep.mubr.f32.mxu0 %v5135
        %v5137 = vand.u32 %v904, 4294901760
        %5138 = vmatmul.mubr.f32.gmra.mrb[0].mxu0 %v5137
        %v5139 = vpop.f32.mrb[0].mxu0
        %v5140 = vadd.f32 %v4647, %v5139
        %v5141 = vpop.f32.mrb[0].mxu0
        %v5142 = vand.u32 %v909, 4294901760
        %5143 = vmatprep.mubr.f32.mxu0 %v5142
        %v5144 = vand.u32 %v908, 4294901760
        %5145 = vmatmul.mubr.f32.gmra.mrb[0].mxu0 %v5144
        %v5146 = vpop.f32.mrb[0].mxu0
        %v5147 = vadd.f32 %v4658, %v5146
        %v5148 = vpop.f32.mrb[0].mxu0
        %v5149 = vand.u32 %v913, 4294901760
        %5150 = vmatprep.mubr.f32.mxu0 %v5149
        %v5151 = vand.u32 %v912, 4294901760
        %5152 = vmatmul.mubr.f32.gmra.mrb[0].mxu0 %v5151
        %v5153 = vpop.f32.mrb[0].mxu0
        %v5154 = vadd.f32 %v4669, %v5153
        %v5155 = vpop.f32.mrb[0].mxu0
        %v5156 = vand.u32 %v917, 4294901760
        %5157 = vmatprep.mubr.f32.mxu0 %v5156
        %v5158 = vand.u32 %v916, 4294901760
        %5159 = vmatmul.mubr.f32.gmra.mrb[0].mxu0 %v5158
        %v5160 = vpop.f32.mrb[0].mxu0
        %v5161 = vadd.f32 %v4680, %v5160
        %v5162 = vpop.f32.mrb[0].mxu0
        %v5163 = vand.u32 %v921, 4294901760
        %5164 = vmatprep.mubr.f32.mxu0 %v5163
        %v5165 = vand.u32 %v920, 4294901760
        %5166 = vmatmul.mubr.f32.gmra.mrb[0].mxu0 %v5165
        %v5167 = vpop.f32.mrb[0].mxu0
        %v5168 = vadd.f32 %v4691, %v5167
        %v5169 = vpop.f32.mrb[0].mxu0
        %v5170 = vand.u32 %v925, 4294901760
        %5171 = vmatprep.mubr.f32.mxu0 %v5170
        %v5172 = vand.u32 %v924, 4294901760
        %5173 = vmatmul.mubr.f32.gmra.mrb[0].mxu0 %v5172
        %v5174 = vpop.f32.mrb[0].mxu0
        %v5175 = vadd.f32 %v4702, %v5174
        %v5176 = vpop.f32.mrb[0].mxu0
        %v5177 = vand.u32 %v929, 4294901760
        %5178 = vmatprep.mubr.f32.mxu0 %v5177
        %v5179 = vand.u32 %v928, 4294901760
        %5180 = vmatmul.mubr.f32.gmra.mrb[0].mxu0 %v5179
        %v5181 = vpop.f32.mrb[0].mxu0
        %v5182 = vadd.f32 %v4713, %v5181
        %v5183 = vpop.f32.mrb[0].mxu0
        %v5184 = vand.u32 %v933, 4294901760
        %5185 = vmatprep.mubr.f32.mxu0 %v5184
        %v5186 = vand.u32 %v932, 4294901760
        %5187 = vmatmul.mubr.f32.gmra.mrb[0].mxu0 %v5186
        %v5188 = vpop.f32.mrb[0].mxu0
        %v5189 = vadd.f32 %v4724, %v5188
        %v5190 = vpop.f32.mrb[0].mxu0
        %v5191 = vand.u32 %v937, 4294901760
        %5192 = vmatprep.mubr.f32.mxu0 %v5191
        %v5193 = vand.u32 %v936, 4294901760
        %5194 = vmatmul.mubr.f32.gmra.mrb[0].mxu0 %v5193
        %v5195 = vpop.f32.mrb[0].mxu0
        %v5196 = vadd.f32 %v4735, %v5195
        %v5197 = vpop.f32.mrb[0].mxu0
        %v5198 = vand.u32 %v941, 4294901760
        %5199 = vmatprep.mubr.f32.mxu0 %v5198
        %v5200 = vand.u32 %v940, 4294901760
        %5201 = vmatmul.mubr.f32.gmra.mrb[0].mxu0 %v5200
        %v5202 = vpop.f32.mrb[0].mxu0
        %v5203 = vadd.f32 %v4746, %v5202
        %v5204 = vpop.f32.mrb[0].mxu0
        %v5205 = vand.u32 %v945, 4294901760
        %5206 = vmatprep.mubr.f32.mxu0 %v5205
        %v5207 = vand.u32 %v944, 4294901760
        %5208 = vmatmul.mubr.f32.gmra.mrb[0].mxu0 %v5207
        %v5209 = vpop.f32.mrb[0].mxu0
        %v5210 = vadd.f32 %v4757, %v5209
        %v5211 = vpop.f32.mrb[0].mxu0
        %v5212 = vand.u32 %v949, 4294901760
        %5213 = vmatprep.mubr.f32.mxu0 %v5212
        %v5214 = vand.u32 %v948, 4294901760
        %5215 = vmatmul.mubr.f32.gmra.mrb[0].mxu0 %v5214
        %v5216 = vpop.f32.mrb[0].mxu0
        %v5217 = vadd.f32 %v4768, %v5216
        %v5218 = vpop.f32.mrb[0].mxu0
        %v5219 = vand.u32 %v953, 4294901760
        %5220 = vmatprep.mubr.f32.mxu0 %v5219
        %v5221 = vand.u32 %v952, 4294901760
        %5222 = vmatmul.mubr.f32.gmra.mrb[0].mxu0 %v5221
        %v5223 = vpop.f32.mrb[0].mxu0
        %v5224 = vadd.f32 %v4779, %v5223
        %v5225 = vpop.f32.mrb[0].mxu0
        %v5226 = vand.u32 %v957, 4294901760
        %5227 = vmatprep.mubr.f32.mxu0 %v5226
        %v5228 = vand.u32 %v956, 4294901760
        %5229 = vmatmul.mubr.f32.gmra.mrb[0].mxu0 %v5228
        %v5230 = vpop.f32.mrb[0].mxu0
        %v5231 = vadd.f32 %v4790, %v5230
        %v5232 = vpop.f32.mrb[0].mxu0
        %v5233 = vand.u32 %v961, 4294901760
        %5234 = vmatprep.mubr.f32.mxu0 %v5233
        %v5235 = vand.u32 %v960, 4294901760
        %5236 = vmatmul.mubr.f32.gmra.mrb[0].mxu0 %v5235
        %v5237 = vpop.f32.mrb[0].mxu0
        %v5238 = vadd.f32 %v4801, %v5237
        %v5239 = vpop.f32.mrb[0].mxu0
        %v5240 = vand.u32 %v965, 4294901760
        %5241 = vmatprep.mubr.f32.mxu0 %v5240
        %v5242 = vand.u32 %v964, 4294901760
        %5243 = vmatmul.mubr.f32.gmra.mrb[0].mxu0 %v5242
        %v5244 = vpop.f32.mrb[0].mxu0
        %v5245 = vadd.f32 %v4812, %v5244
        %v5246 = vpop.f32.mrb[0].mxu0
        %v5247 = vand.u32 %v969, 4294901760
        %5248 = vmatprep.mubr.f32.mxu0 %v5247
        %v5249 = vand.u32 %v968, 4294901760
        %5250 = vmatmul.mubr.f32.gmra.mrb[0].mxu0 %v5249
        %v5251 = vpop.f32.mrb[0].mxu0
        %v5252 = vadd.f32 %v4823, %v5251
        %v5253 = vpop.f32.mrb[0].mxu0
        %v5254 = vand.u32 %v973, 4294901760
        %5255 = vmatprep.mubr.f32.mxu0 %v5254
        %v5256 = vand.u32 %v972, 4294901760
        %5257 = vmatmul.mubr.f32.gmra.mrb[0].mxu0 %v5256
        %v5258 = vpop.f32.mrb[0].mxu0
        %v5259 = vadd.f32 %v4834, %v5258
        %v5260 = vpop.f32.mrb[0].mxu0
        %v5261 = vand.u32 %v977, 4294901760
        %5262 = vmatprep.mubr.f32.mxu0 %v5261
        %v5263 = vand.u32 %v976, 4294901760
        %5264 = vmatmul.mubr.f32.gmra.mrb[0].mxu0 %v5263
        %v5265 = vpop.f32.mrb[0].mxu0
        %v5266 = vadd.f32 %v4845, %v5265
        %v5267 = vpop.f32.mrb[0].mxu0
        %v5268 = vand.u32 %v981, 4294901760
        %5269 = vmatprep.mubr.f32.mxu0 %v5268
        %v5270 = vand.u32 %v980, 4294901760
        %5271 = vmatmul.mubr.f32.gmra.mrb[0].mxu0 %v5270
        %v5272 = vpop.f32.mrb[0].mxu0
        %v5273 = vadd.f32 %v4856, %v5272
        %v5274 = vpop.f32.mrb[0].mxu0
        %v5275 = vand.u32 %v985, 4294901760
        %5276 = vmatprep.mubr.f32.mxu0 %v5275
        %v5277 = vand.u32 %v984, 4294901760
        %5278 = vmatmul.mubr.f32.gmra.mrb[0].mxu0 %v5277
        %v5279 = vpop.f32.mrb[0].mxu0
        %v5280 = vadd.f32 %v4867, %v5279
        %v5281 = vpop.f32.mrb[0].mxu0
        %v5282 = vand.u32 %v989, 4294901760
        %5283 = vmatprep.mubr.f32.mxu0 %v5282
        %v5284 = vand.u32 %v988, 4294901760
        %5285 = vmatmul.mubr.f32.gmra.mrb[0].mxu0 %v5284
        %v5286 = vpop.f32.mrb[0].mxu0
        %v5287 = vadd.f32 %v4878, %v5286
        %v5288 = vpop.f32.mrb[0].mxu0
        %v5289 = vand.u32 %v993, 4294901760
        %5290 = vmatprep.mubr.f32.mxu0 %v5289
        %v5291 = vand.u32 %v992, 4294901760
        %5292 = vmatmul.mubr.f32.gmra.mrb[0].mxu0 %v5291
        %v5293 = vpop.f32.mrb[0].mxu0
        %v5294 = vadd.f32 %v4889, %v5293
        %v5295 = vpop.f32.mrb[0].mxu0
        %v5296 = vand.u32 %v997, 4294901760
        %5297 = vmatprep.mubr.f32.mxu0 %v5296
        %v5298 = vand.u32 %v996, 4294901760
        %5299 = vmatmul.mubr.f32.gmra.mrb[0].mxu0 %v5298
        %v5300 = vpop.f32.mrb[0].mxu0
        %v5301 = vadd.f32 %v4900, %v5300
        %v5302 = vpop.f32.mrb[0].mxu0
        %v5303 = vand.u32 %v1001, 4294901760
        %5304 = vmatprep.mubr.f32.mxu0 %v5303
        %v5305 = vand.u32 %v1000, 4294901760
        %5306 = vmatmul.mubr.f32.gmra.mrb[0].mxu0 %v5305
        %v5307 = vpop.f32.mrb[0].mxu0
        %v5308 = vadd.f32 %v4911, %v5307
        %v5309 = vpop.f32.mrb[0].mxu0
        %v5310 = vand.u32 %v1005, 4294901760
        %5311 = vmatprep.mubr.f32.mxu0 %v5310
        %v5312 = vand.u32 %v1004, 4294901760
        %5313 = vmatmul.mubr.f32.gmra.mrb[0].mxu0 %v5312
        %v5314 = vpop.f32.mrb[0].mxu0
        %v5315 = vadd.f32 %v4922, %v5314
        %v5316 = vpop.f32.mrb[0].mxu0
        %v5317 = vand.u32 %v1009, 4294901760
        %5318 = vmatprep.mubr.f32.mxu0 %v5317
        %v5319 = vand.u32 %v1008, 4294901760
        %5320 = vmatmul.mubr.f32.gmra.mrb[0].mxu0 %v5319
        %v5321 = vpop.f32.mrb[0].mxu0
        %v5322 = vadd.f32 %v4933, %v5321
        %v5323 = vpop.f32.mrb[0].mxu0
        %v5324 = vand.u32 %v1013, 4294901760
        %5325 = vmatprep.mubr.f32.mxu0 %v5324
        %v5326 = vand.u32 %v1012, 4294901760
        %5327 = vmatmul.mubr.f32.gmra.mrb[0].mxu0 %v5326
        %v5328 = vpop.f32.mrb[0].mxu0
        %v5329 = vadd.f32 %v4944, %v5328
        %v5330 = vpop.f32.mrb[0].mxu0
        %5331 = vdwg.mxu0
        %5332 = vmatprep.subr.mxu0 0.0
        %v5333 = vand.u32 %v2991, 4294901760
        %5334 = vmatpush1.msra.mxu0 %v5333
        %5335 = vmatprep.subr.mxu0 0.0
        %v5336 = vand.u32 %v2992, 4294901760
        %5337 = vmatpush1.msra.mxu0 %v5336
        %5338 = vmatprep.subr.mxu0 0.0
        %v5339 = vand.u32 %v2993, 4294901760
        %5340 = vmatpush1.msra.mxu0 %v5339
        %5341 = vmatprep.subr.mxu0 0.0
        %v5342 = vand.u32 %v2994, 4294901760
        %5343 = vmatpush1.msra.mxu0 %v5342
        %5344 = vmatprep.subr.mxu0 0.0
        %v5345 = vand.u32 %v2995, 4294901760
        %5346 = vmatpush1.msra.mxu0 %v5345
        %5347 = vmatprep.subr.mxu0 0.0
        %v5348 = vand.u32 %v2996, 4294901760
        %5349 = vmatpush1.msra.mxu0 %v5348
        %5350 = vmatprep.subr.mxu0 0.0
        %v5351 = vand.u32 %v2997, 4294901760
        %5352 = vmatpush1.msra.mxu0 %v5351
        %5353 = vmatprep.subr.mxu0 0.0
        %v5354 = vand.u32 %v2998, 4294901760
        %5355 = vmatpush1.msra.mxu0 %v5354
        %5356 = vmatprep.subr.mxu0 0.0
        %v5357 = vand.u32 %v2999, 4294901760
        %5358 = vmatpush1.msra.mxu0 %v5357
        %5359 = vmatprep.subr.mxu0 0.0
        %v5360 = vand.u32 %v3000, 4294901760
        %5361 = vmatpush1.msra.mxu0 %v5360
        %5362 = vmatprep.subr.mxu0 0.0
        %v5363 = vand.u32 %v3001, 4294901760
        %5364 = vmatpush1.msra.mxu0 %v5363
        %5365 = vmatprep.subr.mxu0 0.0
        %v5366 = vand.u32 %v3002, 4294901760
        %5367 = vmatpush1.msra.mxu0 %v5366
        %5368 = vmatprep.subr.mxu0 0.0
        %v5369 = vand.u32 %v3003, 4294901760
        %5370 = vmatpush1.msra.mxu0 %v5369
        %5371 = vmatprep.subr.mxu0 0.0
        %v5372 = vand.u32 %v3004, 4294901760
        %5373 = vmatpush1.msra.mxu0 %v5372
        %5374 = vmatprep.subr.mxu0 0.0
        %v5375 = vand.u32 %v3005, 4294901760
        %5376 = vmatpush1.msra.mxu0 %v5375
        %5377 = vmatprep.subr.mxu0 0.0
        %v5378 = vand.u32 %v3006, 4294901760
        %5379 = vmatpush1.msra.mxu0 %v5378
        %5380 = vmatprep.subr.mxu0 0.0
        %v5381 = vand.u32 %v3007, 4294901760
        %5382 = vmatpush1.msra.mxu0 %v5381
        %5383 = vmatprep.subr.mxu0 0.0
        %v5384 = vand.u32 %v3008, 4294901760
        %5385 = vmatpush1.msra.mxu0 %v5384
        %5386 = vmatprep.subr.mxu0 0.0
        %v5387 = vand.u32 %v3009, 4294901760
        %5388 = vmatpush1.msra.mxu0 %v5387
        %5389 = vmatprep.subr.mxu0 0.0
        %v5390 = vand.u32 %v3010, 4294901760
        %5391 = vmatpush1.msra.mxu0 %v5390
        %5392 = vmatprep.subr.mxu0 0.0
        %v5393 = vand.u32 %v3011, 4294901760
        %5394 = vmatpush1.msra.mxu0 %v5393
        %5395 = vmatprep.subr.mxu0 0.0
        %v5396 = vand.u32 %v3012, 4294901760
        %5397 = vmatpush1.msra.mxu0 %v5396
        %5398 = vmatprep.subr.mxu0 0.0
        %v5399 = vand.u32 %v3013, 4294901760
        %5400 = vmatpush1.msra.mxu0 %v5399
        %5401 = vmatprep.subr.mxu0 0.0
        %v5402 = vand.u32 %v3014, 4294901760
        %5403 = vmatpush1.msra.mxu0 %v5402
        %5404 = vmatprep.subr.mxu0 0.0
        %v5405 = vand.u32 %v3015, 4294901760
        %5406 = vmatpush1.msra.mxu0 %v5405
        %5407 = vmatprep.subr.mxu0 0.0
        %v5408 = vand.u32 %v3016, 4294901760
        %5409 = vmatpush1.msra.mxu0 %v5408
        %5410 = vmatprep.subr.mxu0 0.0
        %v5411 = vand.u32 %v3017, 4294901760
        %5412 = vmatpush1.msra.mxu0 %v5411
        %5413 = vmatprep.subr.mxu0 0.0
        %v5414 = vand.u32 %v3018, 4294901760
        %5415 = vmatpush1.msra.mxu0 %v5414
        %5416 = vmatprep.subr.mxu0 0.0
        %v5417 = vand.u32 %v3019, 4294901760
        %5418 = vmatpush1.msra.mxu0 %v5417
        %5419 = vmatprep.subr.mxu0 0.0
        %v5420 = vand.u32 %v3020, 4294901760
        %5421 = vmatpush1.msra.mxu0 %v5420
        %5422 = vmatprep.subr.mxu0 0.0
        %v5423 = vand.u32 %v3021, 4294901760
        %5424 = vmatpush1.msra.mxu0 %v5423
        %5425 = vmatprep.subr.mxu0 0.0
        %v5426 = vand.u32 %v3022, 4294901760
        %5427 = vmatpush1.msra.mxu0 %v5426
        %v5428 = vand.u32 %v889, 4294901760
        %5429 = vmatprep.mubr.f32.mxu0 %v5428
        %v5430 = vand.u32 %v888, 4294901760
        %5431 = vmatmul.mubr.f32.gmra.mrb[0].mxu0 %v5430
        %v5432 = vpop.f32.mrb[0].mxu0
        %v5433 = vadd.f32 %v5112, %v5432
        %v5434 = vpop.f32.mrb[0].mxu0
        %v5435 = vand.u32 %v893, 4294901760
        %5436 = vmatprep.mubr.f32.mxu0 %v5435
        %v5437 = vand.u32 %v892, 4294901760
        %5438 = vmatmul.mubr.f32.gmra.mrb[0].mxu0 %v5437
        %v5439 = vpop.f32.mrb[0].mxu0
        %v5440 = vadd.f32 %v5119, %v5439
        %v5441 = vpop.f32.mrb[0].mxu0
        %v5442 = vand.u32 %v897, 4294901760
        %5443 = vmatprep.mubr.f32.mxu0 %v5442
        %v5444 = vand.u32 %v896, 4294901760
        %5445 = vmatmul.mubr.f32.gmra.mrb[0].mxu0 %v5444
        %v5446 = vpop.f32.mrb[0].mxu0
        %v5447 = vadd.f32 %v5126, %v5446
        %v5448 = vpop.f32.mrb[0].mxu0
        %v5449 = vand.u32 %v901, 4294901760
        %5450 = vmatprep.mubr.f32.mxu0 %v5449
        %v5451 = vand.u32 %v900, 4294901760
        %5452 = vmatmul.mubr.f32.gmra.mrb[0].mxu0 %v5451
        %v5453 = vpop.f32.mrb[0].mxu0
        %v5454 = vadd.f32 %v5133, %v5453
        %v5455 = vpop.f32.mrb[0].mxu0
        %v5456 = vand.u32 %v905, 4294901760
        %5457 = vmatprep.mubr.f32.mxu0 %v5456
        %v5458 = vand.u32 %v904, 4294901760
        %5459 = vmatmul.mubr.f32.gmra.mrb[0].mxu0 %v5458
        %v5460 = vpop.f32.mrb[0].mxu0
        %v5461 = vadd.f32 %v5140, %v5460
        %v5462 = vpop.f32.mrb[0].mxu0
        %v5463 = vand.u32 %v909, 4294901760
        %5464 = vmatprep.mubr.f32.mxu0 %v5463
        %v5465 = vand.u32 %v908, 4294901760
        %5466 = vmatmul.mubr.f32.gmra.mrb[0].mxu0 %v5465
        %v5467 = vpop.f32.mrb[0].mxu0
        %v5468 = vadd.f32 %v5147, %v5467
        %v5469 = vpop.f32.mrb[0].mxu0
        %v5470 = vand.u32 %v913, 4294901760
        %5471 = vmatprep.mubr.f32.mxu0 %v5470
        %v5472 = vand.u32 %v912, 4294901760
        %5473 = vmatmul.mubr.f32.gmra.mrb[0].mxu0 %v5472
        %v5474 = vpop.f32.mrb[0].mxu0
        %v5475 = vadd.f32 %v5154, %v5474
        %v5476 = vpop.f32.mrb[0].mxu0
        %v5477 = vand.u32 %v917, 4294901760
        %5478 = vmatprep.mubr.f32.mxu0 %v5477
        %v5479 = vand.u32 %v916, 4294901760
        %5480 = vmatmul.mubr.f32.gmra.mrb[0].mxu0 %v5479
        %v5481 = vpop.f32.mrb[0].mxu0
        %v5482 = vadd.f32 %v5161, %v5481
        %v5483 = vpop.f32.mrb[0].mxu0
        %v5484 = vand.u32 %v921, 4294901760
        %5485 = vmatprep.mubr.f32.mxu0 %v5484
        %v5486 = vand.u32 %v920, 4294901760
        %5487 = vmatmul.mubr.f32.gmra.mrb[0].mxu0 %v5486
        %v5488 = vpop.f32.mrb[0].mxu0
        %v5489 = vadd.f32 %v5168, %v5488
        %v5490 = vpop.f32.mrb[0].mxu0
        %v5491 = vand.u32 %v925, 4294901760
        %5492 = vmatprep.mubr.f32.mxu0 %v5491
        %v5493 = vand.u32 %v924, 4294901760
        %5494 = vmatmul.mubr.f32.gmra.mrb[0].mxu0 %v5493
        %v5495 = vpop.f32.mrb[0].mxu0
        %v5496 = vadd.f32 %v5175, %v5495
        %v5497 = vpop.f32.mrb[0].mxu0
        %v5498 = vand.u32 %v929, 4294901760
        %5499 = vmatprep.mubr.f32.mxu0 %v5498
        %v5500 = vand.u32 %v928, 4294901760
        %5501 = vmatmul.mubr.f32.gmra.mrb[0].mxu0 %v5500
        %v5502 = vpop.f32.mrb[0].mxu0
        %v5503 = vadd.f32 %v5182, %v5502
        %v5504 = vpop.f32.mrb[0].mxu0
        %v5505 = vand.u32 %v933, 4294901760
        %5506 = vmatprep.mubr.f32.mxu0 %v5505
        %v5507 = vand.u32 %v932, 4294901760
        %5508 = vmatmul.mubr.f32.gmra.mrb[0].mxu0 %v5507
        %v5509 = vpop.f32.mrb[0].mxu0
        %v5510 = vadd.f32 %v5189, %v5509
        %v5511 = vpop.f32.mrb[0].mxu0
        %v5512 = vand.u32 %v937, 4294901760
        %5513 = vmatprep.mubr.f32.mxu0 %v5512
        %v5514 = vand.u32 %v936, 4294901760
        %5515 = vmatmul.mubr.f32.gmra.mrb[0].mxu0 %v5514
        %v5516 = vpop.f32.mrb[0].mxu0
        %v5517 = vadd.f32 %v5196, %v5516
        %v5518 = vpop.f32.mrb[0].mxu0
        %v5519 = vand.u32 %v941, 4294901760
        %5520 = vmatprep.mubr.f32.mxu0 %v5519
        %v5521 = vand.u32 %v940, 4294901760
        %5522 = vmatmul.mubr.f32.gmra.mrb[0].mxu0 %v5521
        %v5523 = vpop.f32.mrb[0].mxu0
        %v5524 = vadd.f32 %v5203, %v5523
        %v5525 = vpop.f32.mrb[0].mxu0
        %v5526 = vand.u32 %v945, 4294901760
        %5527 = vmatprep.mubr.f32.mxu0 %v5526
        %v5528 = vand.u32 %v944, 4294901760
        %5529 = vmatmul.mubr.f32.gmra.mrb[0].mxu0 %v5528
        %v5530 = vpop.f32.mrb[0].mxu0
        %v5531 = vadd.f32 %v5210, %v5530
        %v5532 = vpop.f32.mrb[0].mxu0
        %v5533 = vand.u32 %v949, 4294901760
        %5534 = vmatprep.mubr.f32.mxu0 %v5533
        %v5535 = vand.u32 %v948, 4294901760
        %5536 = vmatmul.mubr.f32.gmra.mrb[0].mxu0 %v5535
        %v5537 = vpop.f32.mrb[0].mxu0
        %v5538 = vadd.f32 %v5217, %v5537
        %v5539 = vpop.f32.mrb[0].mxu0
        %v5540 = vand.u32 %v953, 4294901760
        %5541 = vmatprep.mubr.f32.mxu0 %v5540
        %v5542 = vand.u32 %v952, 4294901760
        %5543 = vmatmul.mubr.f32.gmra.mrb[0].mxu0 %v5542
        %v5544 = vpop.f32.mrb[0].mxu0
        %v5545 = vadd.f32 %v5224, %v5544
        %v5546 = vpop.f32.mrb[0].mxu0
        %v5547 = vand.u32 %v957, 4294901760
        %5548 = vmatprep.mubr.f32.mxu0 %v5547
        %v5549 = vand.u32 %v956, 4294901760
        %5550 = vmatmul.mubr.f32.gmra.mrb[0].mxu0 %v5549
        %v5551 = vpop.f32.mrb[0].mxu0
        %v5552 = vadd.f32 %v5231, %v5551
        %v5553 = vpop.f32.mrb[0].mxu0
        %v5554 = vand.u32 %v961, 4294901760
        %5555 = vmatprep.mubr.f32.mxu0 %v5554
        %v5556 = vand.u32 %v960, 4294901760
        %5557 = vmatmul.mubr.f32.gmra.mrb[0].mxu0 %v5556
        %v5558 = vpop.f32.mrb[0].mxu0
        %v5559 = vadd.f32 %v5238, %v5558
        %v5560 = vpop.f32.mrb[0].mxu0
        %v5561 = vand.u32 %v965, 4294901760
        %5562 = vmatprep.mubr.f32.mxu0 %v5561
        %v5563 = vand.u32 %v964, 4294901760
        %5564 = vmatmul.mubr.f32.gmra.mrb[0].mxu0 %v5563
        %v5565 = vpop.f32.mrb[0].mxu0
        %v5566 = vadd.f32 %v5245, %v5565
        %v5567 = vpop.f32.mrb[0].mxu0
        %v5568 = vand.u32 %v969, 4294901760
        %5569 = vmatprep.mubr.f32.mxu0 %v5568
        %v5570 = vand.u32 %v968, 4294901760
        %5571 = vmatmul.mubr.f32.gmra.mrb[0].mxu0 %v5570
        %v5572 = vpop.f32.mrb[0].mxu0
        %v5573 = vadd.f32 %v5252, %v5572
        %v5574 = vpop.f32.mrb[0].mxu0
        %v5575 = vand.u32 %v973, 4294901760
        %5576 = vmatprep.mubr.f32.mxu0 %v5575
        %v5577 = vand.u32 %v972, 4294901760
        %5578 = vmatmul.mubr.f32.gmra.mrb[0].mxu0 %v5577
        %v5579 = vpop.f32.mrb[0].mxu0
        %v5580 = vadd.f32 %v5259, %v5579
        %v5581 = vpop.f32.mrb[0].mxu0
        %v5582 = vand.u32 %v977, 4294901760
        %5583 = vmatprep.mubr.f32.mxu0 %v5582
        %v5584 = vand.u32 %v976, 4294901760
        %5585 = vmatmul.mubr.f32.gmra.mrb[0].mxu0 %v5584
        %v5586 = vpop.f32.mrb[0].mxu0
        %v5587 = vadd.f32 %v5266, %v5586
        %v5588 = vpop.f32.mrb[0].mxu0
        %v5589 = vand.u32 %v981, 4294901760
        %5590 = vmatprep.mubr.f32.mxu0 %v5589
        %v5591 = vand.u32 %v980, 4294901760
        %5592 = vmatmul.mubr.f32.gmra.mrb[0].mxu0 %v5591
        %v5593 = vpop.f32.mrb[0].mxu0
        %v5594 = vadd.f32 %v5273, %v5593
        %v5595 = vpop.f32.mrb[0].mxu0
        %v5596 = vand.u32 %v985, 4294901760
        %5597 = vmatprep.mubr.f32.mxu0 %v5596
        %v5598 = vand.u32 %v984, 4294901760
        %5599 = vmatmul.mubr.f32.gmra.mrb[0].mxu0 %v5598
        %v5600 = vpop.f32.mrb[0].mxu0
        %v5601 = vadd.f32 %v5280, %v5600
        %v5602 = vpop.f32.mrb[0].mxu0
        %v5603 = vand.u32 %v989, 4294901760
        %5604 = vmatprep.mubr.f32.mxu0 %v5603
        %v5605 = vand.u32 %v988, 4294901760
        %5606 = vmatmul.mubr.f32.gmra.mrb[0].mxu0 %v5605
        %v5607 = vpop.f32.mrb[0].mxu0
        %v5608 = vadd.f32 %v5287, %v5607
        %v5609 = vpop.f32.mrb[0].mxu0
        %v5610 = vand.u32 %v993, 4294901760
        %5611 = vmatprep.mubr.f32.mxu0 %v5610
        %v5612 = vand.u32 %v992, 4294901760
        %5613 = vmatmul.mubr.f32.gmra.mrb[0].mxu0 %v5612
        %v5614 = vpop.f32.mrb[0].mxu0
        %v5615 = vadd.f32 %v5294, %v5614
        %v5616 = vpop.f32.mrb[0].mxu0
        %v5617 = vand.u32 %v997, 4294901760
        %5618 = vmatprep.mubr.f32.mxu0 %v5617
        %v5619 = vand.u32 %v996, 4294901760
        %5620 = vmatmul.mubr.f32.gmra.mrb[0].mxu0 %v5619
        %v5621 = vpop.f32.mrb[0].mxu0
        %v5622 = vadd.f32 %v5301, %v5621
        %v5623 = vpop.f32.mrb[0].mxu0
        %v5624 = vand.u32 %v1001, 4294901760
        %5625 = vmatprep.mubr.f32.mxu0 %v5624
        %v5626 = vand.u32 %v1000, 4294901760
        %5627 = vmatmul.mubr.f32.gmra.mrb[0].mxu0 %v5626
        %v5628 = vpop.f32.mrb[0].mxu0
        %v5629 = vadd.f32 %v5308, %v5628
        %v5630 = vpop.f32.mrb[0].mxu0
        %v5631 = vand.u32 %v1005, 4294901760
        %5632 = vmatprep.mubr.f32.mxu0 %v5631
        %v5633 = vand.u32 %v1004, 4294901760
        %5634 = vmatmul.mubr.f32.gmra.mrb[0].mxu0 %v5633
        %v5635 = vpop.f32.mrb[0].mxu0
        %v5636 = vadd.f32 %v5315, %v5635
        %v5637 = vpop.f32.mrb[0].mxu0
        %v5638 = vand.u32 %v1009, 4294901760
        %5639 = vmatprep.mubr.f32.mxu0 %v5638
        %v5640 = vand.u32 %v1008, 4294901760
        %5641 = vmatmul.mubr.f32.gmra.mrb[0].mxu0 %v5640
        %v5642 = vpop.f32.mrb[0].mxu0
        %v5643 = vadd.f32 %v5322, %v5642
        %v5644 = vpop.f32.mrb[0].mxu0
        %v5645 = vand.u32 %v1013, 4294901760
        %5646 = vmatprep.mubr.f32.mxu0 %v5645
        %v5647 = vand.u32 %v1012, 4294901760
        %5648 = vmatmul.mubr.f32.gmra.mrb[0].mxu0 %v5647
        %v5649 = vpop.f32.mrb[0].mxu0
        %v5650 = vadd.f32 %v5329, %v5649
        %v5651 = vpop.f32.mrb[0].mxu0
        %5652 = vdwg.mxu0
        %5653 = vmatprep.subr.mxu0 0.0
        %v5654 = vand.u32 %v3023, 4294901760
        %5655 = vmatpush1.msra.mxu0 %v5654
        %5656 = vmatprep.subr.mxu0 0.0
        %v5657 = vand.u32 %v3024, 4294901760
        %5658 = vmatpush1.msra.mxu0 %v5657
        %5659 = vmatprep.subr.mxu0 0.0
        %v5660 = vand.u32 %v3025, 4294901760
        %5661 = vmatpush1.msra.mxu0 %v5660
        %5662 = vmatprep.subr.mxu0 0.0
        %v5663 = vand.u32 %v3026, 4294901760
        %5664 = vmatpush1.msra.mxu0 %v5663
        %5665 = vmatprep.subr.mxu0 0.0
        %v5666 = vand.u32 %v3027, 4294901760
        %5667 = vmatpush1.msra.mxu0 %v5666
        %5668 = vmatprep.subr.mxu0 0.0
        %v5669 = vand.u32 %v3028, 4294901760
        %5670 = vmatpush1.msra.mxu0 %v5669
        %5671 = vmatprep.subr.mxu0 0.0
        %v5672 = vand.u32 %v3029, 4294901760
        %5673 = vmatpush1.msra.mxu0 %v5672
        %5674 = vmatprep.subr.mxu0 0.0
        %v5675 = vand.u32 %v3030, 4294901760
        %5676 = vmatpush1.msra.mxu0 %v5675
        %5677 = vmatprep.subr.mxu0 0.0
        %v5678 = vand.u32 %v3031, 4294901760
        %5679 = vmatpush1.msra.mxu0 %v5678
        %5680 = vmatprep.subr.mxu0 0.0
        %v5681 = vand.u32 %v3032, 4294901760
        %5682 = vmatpush1.msra.mxu0 %v5681
        %5683 = vmatprep.subr.mxu0 0.0
        %v5684 = vand.u32 %v3033, 4294901760
        %5685 = vmatpush1.msra.mxu0 %v5684
        %5686 = vmatprep.subr.mxu0 0.0
        %v5687 = vand.u32 %v3034, 4294901760
        %5688 = vmatpush1.msra.mxu0 %v5687
        %5689 = vmatprep.subr.mxu0 0.0
        %v5690 = vand.u32 %v3035, 4294901760
        %5691 = vmatpush1.msra.mxu0 %v5690
        %5692 = vmatprep.subr.mxu0 0.0
        %v5693 = vand.u32 %v3036, 4294901760
        %5694 = vmatpush1.msra.mxu0 %v5693
        %5695 = vmatprep.subr.mxu0 0.0
        %v5696 = vand.u32 %v3037, 4294901760
        %5697 = vmatpush1.msra.mxu0 %v5696
        %5698 = vmatprep.subr.mxu0 0.0
        %v5699 = vand.u32 %v3038, 4294901760
        %5700 = vmatpush1.msra.mxu0 %v5699
        %5701 = vmatprep.subr.mxu0 0.0
        %v5702 = vand.u32 %v3039, 4294901760
        %5703 = vmatpush1.msra.mxu0 %v5702
        %5704 = vmatprep.subr.mxu0 0.0
        %v5705 = vand.u32 %v3040, 4294901760
        %5706 = vmatpush1.msra.mxu0 %v5705
        %5707 = vmatprep.subr.mxu0 0.0
        %v5708 = vand.u32 %v3041, 4294901760
        %5709 = vmatpush1.msra.mxu0 %v5708
        %5710 = vmatprep.subr.mxu0 0.0
        %v5711 = vand.u32 %v3042, 4294901760
        %5712 = vmatpush1.msra.mxu0 %v5711
        %5713 = vmatprep.subr.mxu0 0.0
        %v5714 = vand.u32 %v3043, 4294901760
        %5715 = vmatpush1.msra.mxu0 %v5714
        %5716 = vmatprep.subr.mxu0 0.0
        %v5717 = vand.u32 %v3044, 4294901760
        %5718 = vmatpush1.msra.mxu0 %v5717
        %5719 = vmatprep.subr.mxu0 0.0
        %v5720 = vand.u32 %v3045, 4294901760
        %5721 = vmatpush1.msra.mxu0 %v5720
        %5722 = vmatprep.subr.mxu0 0.0
        %v5723 = vand.u32 %v3046, 4294901760
        %5724 = vmatpush1.msra.mxu0 %v5723
        %5725 = vmatprep.subr.mxu0 0.0
        %v5726 = vand.u32 %v3047, 4294901760
        %5727 = vmatpush1.msra.mxu0 %v5726
        %5728 = vmatprep.subr.mxu0 0.0
        %v5729 = vand.u32 %v3048, 4294901760
        %5730 = vmatpush1.msra.mxu0 %v5729
        %5731 = vmatprep.subr.mxu0 0.0
        %v5732 = vand.u32 %v3049, 4294901760
        %5733 = vmatpush1.msra.mxu0 %v5732
        %5734 = vmatprep.subr.mxu0 0.0
        %v5735 = vand.u32 %v3050, 4294901760
        %5736 = vmatpush1.msra.mxu0 %v5735
        %5737 = vmatprep.subr.mxu0 0.0
        %v5738 = vand.u32 %v3051, 4294901760
        %5739 = vmatpush1.msra.mxu0 %v5738
        %5740 = vmatprep.subr.mxu0 0.0
        %v5741 = vand.u32 %v3052, 4294901760
        %5742 = vmatpush1.msra.mxu0 %v5741
        %5743 = vmatprep.subr.mxu0 0.0
        %v5744 = vand.u32 %v3053, 4294901760
        %5745 = vmatpush1.msra.mxu0 %v5744
        %5746 = vmatprep.subr.mxu0 0.0
        %v5747 = vand.u32 %v3054, 4294901760
        %5748 = vmatpush1.msra.mxu0 %v5747
        %v5749 = vand.u32 %v891, 4294901760
        %v5750 = vsub.f32 %v891, %v5749
        %v5751 = vand.u32 %v5750, 4294901760
        %v5752 = vsub.f32 %v5750, %v5751
        %v5753 = vand.u32 %v5752, 4294901760
        %5754 = vmatprep.mubr.f32.mxu0 %v5753
        %v5755 = vand.u32 %v890, 4294901760
        %v5756 = vsub.f32 %v890, %v5755
        %v5757 = vand.u32 %v5756, 4294901760
        %v5758 = vsub.f32 %v5756, %v5757
        %v5759 = vand.u32 %v5758, 4294901760
        %5760 = vmatmul.mubr.f32.gmra.mrb[0].mxu0 %v5759
        %v5761 = vpop.f32.mrb[0].mxu0
        %v5762 = vadd.f32 %v5433, %v5761
        %v5763 = vpop.f32.mrb[0].mxu0
        %v5764 = vand.u32 %v895, 4294901760
        %v5765 = vsub.f32 %v895, %v5764
        %v5766 = vand.u32 %v5765, 4294901760
        %v5767 = vsub.f32 %v5765, %v5766
        %v5768 = vand.u32 %v5767, 4294901760
        %5769 = vmatprep.mubr.f32.mxu0 %v5768
        %v5770 = vand.u32 %v894, 4294901760
        %v5771 = vsub.f32 %v894, %v5770
        %v5772 = vand.u32 %v5771, 4294901760
        %v5773 = vsub.f32 %v5771, %v5772
        %v5774 = vand.u32 %v5773, 4294901760
        %5775 = vmatmul.mubr.f32.gmra.mrb[0].mxu0 %v5774
        %v5776 = vpop.f32.mrb[0].mxu0
        %v5777 = vadd.f32 %v5440, %v5776
        %v5778 = vpop.f32.mrb[0].mxu0
        %v5779 = vand.u32 %v899, 4294901760
        %v5780 = vsub.f32 %v899, %v5779
        %v5781 = vand.u32 %v5780, 4294901760
        %v5782 = vsub.f32 %v5780, %v5781
        %v5783 = vand.u32 %v5782, 4294901760
        %5784 = vmatprep.mubr.f32.mxu0 %v5783
        %v5785 = vand.u32 %v898, 4294901760
        %v5786 = vsub.f32 %v898, %v5785
        %v5787 = vand.u32 %v5786, 4294901760
        %v5788 = vsub.f32 %v5786, %v5787
        %v5789 = vand.u32 %v5788, 4294901760
        %5790 = vmatmul.mubr.f32.gmra.mrb[0].mxu0 %v5789
        %v5791 = vpop.f32.mrb[0].mxu0
        %v5792 = vadd.f32 %v5447, %v5791
        %v5793 = vpop.f32.mrb[0].mxu0
        %v5794 = vand.u32 %v903, 4294901760
        %v5795 = vsub.f32 %v903, %v5794
        %v5796 = vand.u32 %v5795, 4294901760
        %v5797 = vsub.f32 %v5795, %v5796
        %v5798 = vand.u32 %v5797, 4294901760
        %5799 = vmatprep.mubr.f32.mxu0 %v5798
        %v5800 = vand.u32 %v902, 4294901760
        %v5801 = vsub.f32 %v902, %v5800
        %v5802 = vand.u32 %v5801, 4294901760
        %v5803 = vsub.f32 %v5801, %v5802
        %v5804 = vand.u32 %v5803, 4294901760
        %5805 = vmatmul.mubr.f32.gmra.mrb[0].mxu0 %v5804
        %v5806 = vpop.f32.mrb[0].mxu0
        %v5807 = vadd.f32 %v5454, %v5806
        %v5808 = vpop.f32.mrb[0].mxu0
        %v5809 = vand.u32 %v907, 4294901760
        %v5810 = vsub.f32 %v907, %v5809
        %v5811 = vand.u32 %v5810, 4294901760
        %v5812 = vsub.f32 %v5810, %v5811
        %v5813 = vand.u32 %v5812, 4294901760
        %5814 = vmatprep.mubr.f32.mxu0 %v5813
        %v5815 = vand.u32 %v906, 4294901760
        %v5816 = vsub.f32 %v906, %v5815
        %v5817 = vand.u32 %v5816, 4294901760
        %v5818 = vsub.f32 %v5816, %v5817
        %v5819 = vand.u32 %v5818, 4294901760
        %5820 = vmatmul.mubr.f32.gmra.mrb[0].mxu0 %v5819
        %v5821 = vpop.f32.mrb[0].mxu0
        %v5822 = vadd.f32 %v5461, %v5821
        %v5823 = vpop.f32.mrb[0].mxu0
        %v5824 = vand.u32 %v911, 4294901760
        %v5825 = vsub.f32 %v911, %v5824
        %v5826 = vand.u32 %v5825, 4294901760
        %v5827 = vsub.f32 %v5825, %v5826
        %v5828 = vand.u32 %v5827, 4294901760
        %5829 = vmatprep.mubr.f32.mxu0 %v5828
        %v5830 = vand.u32 %v910, 4294901760
        %v5831 = vsub.f32 %v910, %v5830
        %v5832 = vand.u32 %v5831, 4294901760
        %v5833 = vsub.f32 %v5831, %v5832
        %v5834 = vand.u32 %v5833, 4294901760
        %5835 = vmatmul.mubr.f32.gmra.mrb[0].mxu0 %v5834
        %v5836 = vpop.f32.mrb[0].mxu0
        %v5837 = vadd.f32 %v5468, %v5836
        %v5838 = vpop.f32.mrb[0].mxu0
        %v5839 = vand.u32 %v915, 4294901760
        %v5840 = vsub.f32 %v915, %v5839
        %v5841 = vand.u32 %v5840, 4294901760
        %v5842 = vsub.f32 %v5840, %v5841
        %v5843 = vand.u32 %v5842, 4294901760
        %5844 = vmatprep.mubr.f32.mxu0 %v5843
        %v5845 = vand.u32 %v914, 4294901760
        %v5846 = vsub.f32 %v914, %v5845
        %v5847 = vand.u32 %v5846, 4294901760
        %v5848 = vsub.f32 %v5846, %v5847
        %v5849 = vand.u32 %v5848, 4294901760
        %5850 = vmatmul.mubr.f32.gmra.mrb[0].mxu0 %v5849
        %v5851 = vpop.f32.mrb[0].mxu0
        %v5852 = vadd.f32 %v5475, %v5851
        %v5853 = vpop.f32.mrb[0].mxu0
        %v5854 = vand.u32 %v919, 4294901760
        %v5855 = vsub.f32 %v919, %v5854
        %v5856 = vand.u32 %v5855, 4294901760
        %v5857 = vsub.f32 %v5855, %v5856
        %v5858 = vand.u32 %v5857, 4294901760
        %5859 = vmatprep.mubr.f32.mxu0 %v5858
        %v5860 = vand.u32 %v918, 4294901760
        %v5861 = vsub.f32 %v918, %v5860
        %v5862 = vand.u32 %v5861, 4294901760
        %v5863 = vsub.f32 %v5861, %v5862
        %v5864 = vand.u32 %v5863, 4294901760
        %5865 = vmatmul.mubr.f32.gmra.mrb[0].mxu0 %v5864
        %v5866 = vpop.f32.mrb[0].mxu0
        %v5867 = vadd.f32 %v5482, %v5866
        %v5868 = vpop.f32.mrb[0].mxu0
        %v5869 = vand.u32 %v923, 4294901760
        %v5870 = vsub.f32 %v923, %v5869
        %v5871 = vand.u32 %v5870, 4294901760
        %v5872 = vsub.f32 %v5870, %v5871
        %v5873 = vand.u32 %v5872, 4294901760
        %5874 = vmatprep.mubr.f32.mxu0 %v5873
        %v5875 = vand.u32 %v922, 4294901760
        %v5876 = vsub.f32 %v922, %v5875
        %v5877 = vand.u32 %v5876, 4294901760
        %v5878 = vsub.f32 %v5876, %v5877
        %v5879 = vand.u32 %v5878, 4294901760
        %5880 = vmatmul.mubr.f32.gmra.mrb[0].mxu0 %v5879
        %v5881 = vpop.f32.mrb[0].mxu0
        %v5882 = vadd.f32 %v5489, %v5881
        %v5883 = vpop.f32.mrb[0].mxu0
        %v5884 = vand.u32 %v927, 4294901760
        %v5885 = vsub.f32 %v927, %v5884
        %v5886 = vand.u32 %v5885, 4294901760
        %v5887 = vsub.f32 %v5885, %v5886
        %v5888 = vand.u32 %v5887, 4294901760
        %5889 = vmatprep.mubr.f32.mxu0 %v5888
        %v5890 = vand.u32 %v926, 4294901760
        %v5891 = vsub.f32 %v926, %v5890
        %v5892 = vand.u32 %v5891, 4294901760
        %v5893 = vsub.f32 %v5891, %v5892
        %v5894 = vand.u32 %v5893, 4294901760
        %5895 = vmatmul.mubr.f32.gmra.mrb[0].mxu0 %v5894
        %v5896 = vpop.f32.mrb[0].mxu0
        %v5897 = vadd.f32 %v5496, %v5896
        %v5898 = vpop.f32.mrb[0].mxu0
        %v5899 = vand.u32 %v931, 4294901760
        %v5900 = vsub.f32 %v931, %v5899
        %v5901 = vand.u32 %v5900, 4294901760
        %v5902 = vsub.f32 %v5900, %v5901
        %v5903 = vand.u32 %v5902, 4294901760
        %5904 = vmatprep.mubr.f32.mxu0 %v5903
        %v5905 = vand.u32 %v930, 4294901760
        %v5906 = vsub.f32 %v930, %v5905
        %v5907 = vand.u32 %v5906, 4294901760
        %v5908 = vsub.f32 %v5906, %v5907
        %v5909 = vand.u32 %v5908, 4294901760
        %5910 = vmatmul.mubr.f32.gmra.mrb[0].mxu0 %v5909
        %v5911 = vpop.f32.mrb[0].mxu0
        %v5912 = vadd.f32 %v5503, %v5911
        %v5913 = vpop.f32.mrb[0].mxu0
        %v5914 = vand.u32 %v935, 4294901760
        %v5915 = vsub.f32 %v935, %v5914
        %v5916 = vand.u32 %v5915, 4294901760
        %v5917 = vsub.f32 %v5915, %v5916
        %v5918 = vand.u32 %v5917, 4294901760
        %5919 = vmatprep.mubr.f32.mxu0 %v5918
        %v5920 = vand.u32 %v934, 4294901760
        %v5921 = vsub.f32 %v934, %v5920
        %v5922 = vand.u32 %v5921, 4294901760
        %v5923 = vsub.f32 %v5921, %v5922
        %v5924 = vand.u32 %v5923, 4294901760
        %5925 = vmatmul.mubr.f32.gmra.mrb[0].mxu0 %v5924
        %v5926 = vpop.f32.mrb[0].mxu0
        %v5927 = vadd.f32 %v5510, %v5926
        %v5928 = vpop.f32.mrb[0].mxu0
        %v5929 = vand.u32 %v939, 4294901760
        %v5930 = vsub.f32 %v939, %v5929
        %v5931 = vand.u32 %v5930, 4294901760
        %v5932 = vsub.f32 %v5930, %v5931
        %v5933 = vand.u32 %v5932, 4294901760
        %5934 = vmatprep.mubr.f32.mxu0 %v5933
        %v5935 = vand.u32 %v938, 4294901760
        %v5936 = vsub.f32 %v938, %v5935
        %v5937 = vand.u32 %v5936, 4294901760
        %v5938 = vsub.f32 %v5936, %v5937
        %v5939 = vand.u32 %v5938, 4294901760
        %5940 = vmatmul.mubr.f32.gmra.mrb[0].mxu0 %v5939
        %v5941 = vpop.f32.mrb[0].mxu0
        %v5942 = vadd.f32 %v5517, %v5941
        %v5943 = vpop.f32.mrb[0].mxu0
        %v5944 = vand.u32 %v943, 4294901760
        %v5945 = vsub.f32 %v943, %v5944
        %v5946 = vand.u32 %v5945, 4294901760
        %v5947 = vsub.f32 %v5945, %v5946
        %v5948 = vand.u32 %v5947, 4294901760
        %5949 = vmatprep.mubr.f32.mxu0 %v5948
        %v5950 = vand.u32 %v942, 4294901760
        %v5951 = vsub.f32 %v942, %v5950
        %v5952 = vand.u32 %v5951, 4294901760
        %v5953 = vsub.f32 %v5951, %v5952
        %v5954 = vand.u32 %v5953, 4294901760
        %5955 = vmatmul.mubr.f32.gmra.mrb[0].mxu0 %v5954
        %v5956 = vpop.f32.mrb[0].mxu0
        %v5957 = vadd.f32 %v5524, %v5956
        %v5958 = vpop.f32.mrb[0].mxu0
        %v5959 = vand.u32 %v947, 4294901760
        %v5960 = vsub.f32 %v947, %v5959
        %v5961 = vand.u32 %v5960, 4294901760
        %v5962 = vsub.f32 %v5960, %v5961
        %v5963 = vand.u32 %v5962, 4294901760
        %5964 = vmatprep.mubr.f32.mxu0 %v5963
        %v5965 = vand.u32 %v946, 4294901760
        %v5966 = vsub.f32 %v946, %v5965
        %v5967 = vand.u32 %v5966, 4294901760
        %v5968 = vsub.f32 %v5966, %v5967
        %v5969 = vand.u32 %v5968, 4294901760
        %5970 = vmatmul.mubr.f32.gmra.mrb[0].mxu0 %v5969
        %v5971 = vpop.f32.mrb[0].mxu0
        %v5972 = vadd.f32 %v5531, %v5971
        %v5973 = vpop.f32.mrb[0].mxu0
        %v5974 = vand.u32 %v951, 4294901760
        %v5975 = vsub.f32 %v951, %v5974
        %v5976 = vand.u32 %v5975, 4294901760
        %v5977 = vsub.f32 %v5975, %v5976
        %v5978 = vand.u32 %v5977, 4294901760
        %5979 = vmatprep.mubr.f32.mxu0 %v5978
        %v5980 = vand.u32 %v950, 4294901760
        %v5981 = vsub.f32 %v950, %v5980
        %v5982 = vand.u32 %v5981, 4294901760
        %v5983 = vsub.f32 %v5981, %v5982
        %v5984 = vand.u32 %v5983, 4294901760
        %5985 = vmatmul.mubr.f32.gmra.mrb[0].mxu0 %v5984
        %v5986 = vpop.f32.mrb[0].mxu0
        %v5987 = vadd.f32 %v5538, %v5986
        %v5988 = vpop.f32.mrb[0].mxu0
        %v5989 = vand.u32 %v955, 4294901760
        %v5990 = vsub.f32 %v955, %v5989
        %v5991 = vand.u32 %v5990, 4294901760
        %v5992 = vsub.f32 %v5990, %v5991
        %v5993 = vand.u32 %v5992, 4294901760
        %5994 = vmatprep.mubr.f32.mxu0 %v5993
        %v5995 = vand.u32 %v954, 4294901760
        %v5996 = vsub.f32 %v954, %v5995
        %v5997 = vand.u32 %v5996, 4294901760
        %v5998 = vsub.f32 %v5996, %v5997
        %v5999 = vand.u32 %v5998, 4294901760
        %6000 = vmatmul.mubr.f32.gmra.mrb[0].mxu0 %v5999
        %v6001 = vpop.f32.mrb[0].mxu0
        %v6002 = vadd.f32 %v5545, %v6001
        %v6003 = vpop.f32.mrb[0].mxu0
        %v6004 = vand.u32 %v959, 4294901760
        %v6005 = vsub.f32 %v959, %v6004
        %v6006 = vand.u32 %v6005, 4294901760
        %v6007 = vsub.f32 %v6005, %v6006
        %v6008 = vand.u32 %v6007, 4294901760
        %6009 = vmatprep.mubr.f32.mxu0 %v6008
        %v6010 = vand.u32 %v958, 4294901760
        %v6011 = vsub.f32 %v958, %v6010
        %v6012 = vand.u32 %v6011, 4294901760
        %v6013 = vsub.f32 %v6011, %v6012
        %v6014 = vand.u32 %v6013, 4294901760
        %6015 = vmatmul.mubr.f32.gmra.mrb[0].mxu0 %v6014
        %v6016 = vpop.f32.mrb[0].mxu0
        %v6017 = vadd.f32 %v5552, %v6016
        %v6018 = vpop.f32.mrb[0].mxu0
        %v6019 = vand.u32 %v963, 4294901760
        %v6020 = vsub.f32 %v963, %v6019
        %v6021 = vand.u32 %v6020, 4294901760
        %v6022 = vsub.f32 %v6020, %v6021
        %v6023 = vand.u32 %v6022, 4294901760
        %6024 = vmatprep.mubr.f32.mxu0 %v6023
        %v6025 = vand.u32 %v962, 4294901760
        %v6026 = vsub.f32 %v962, %v6025
        %v6027 = vand.u32 %v6026, 4294901760
        %v6028 = vsub.f32 %v6026, %v6027
        %v6029 = vand.u32 %v6028, 4294901760
        %6030 = vmatmul.mubr.f32.gmra.mrb[0].mxu0 %v6029
        %v6031 = vpop.f32.mrb[0].mxu0
        %v6032 = vadd.f32 %v5559, %v6031
        %v6033 = vpop.f32.mrb[0].mxu0
        %v6034 = vand.u32 %v967, 4294901760
        %v6035 = vsub.f32 %v967, %v6034
        %v6036 = vand.u32 %v6035, 4294901760
        %v6037 = vsub.f32 %v6035, %v6036
        %v6038 = vand.u32 %v6037, 4294901760
        %6039 = vmatprep.mubr.f32.mxu0 %v6038
        %v6040 = vand.u32 %v966, 4294901760
        %v6041 = vsub.f32 %v966, %v6040
        %v6042 = vand.u32 %v6041, 4294901760
        %v6043 = vsub.f32 %v6041, %v6042
        %v6044 = vand.u32 %v6043, 4294901760
        %6045 = vmatmul.mubr.f32.gmra.mrb[0].mxu0 %v6044
        %v6046 = vpop.f32.mrb[0].mxu0
        %v6047 = vadd.f32 %v5566, %v6046
        %v6048 = vpop.f32.mrb[0].mxu0
        %v6049 = vand.u32 %v971, 4294901760
        %v6050 = vsub.f32 %v971, %v6049
        %v6051 = vand.u32 %v6050, 4294901760
        %v6052 = vsub.f32 %v6050, %v6051
        %v6053 = vand.u32 %v6052, 4294901760
        %6054 = vmatprep.mubr.f32.mxu0 %v6053
        %v6055 = vand.u32 %v970, 4294901760
        %v6056 = vsub.f32 %v970, %v6055
        %v6057 = vand.u32 %v6056, 4294901760
        %v6058 = vsub.f32 %v6056, %v6057
        %v6059 = vand.u32 %v6058, 4294901760
        %6060 = vmatmul.mubr.f32.gmra.mrb[0].mxu0 %v6059
        %v6061 = vpop.f32.mrb[0].mxu0
        %v6062 = vadd.f32 %v5573, %v6061
        %v6063 = vpop.f32.mrb[0].mxu0
        %v6064 = vand.u32 %v975, 4294901760
        %v6065 = vsub.f32 %v975, %v6064
        %v6066 = vand.u32 %v6065, 4294901760
        %v6067 = vsub.f32 %v6065, %v6066
        %v6068 = vand.u32 %v6067, 4294901760
        %6069 = vmatprep.mubr.f32.mxu0 %v6068
        %v6070 = vand.u32 %v974, 4294901760
        %v6071 = vsub.f32 %v974, %v6070
        %v6072 = vand.u32 %v6071, 4294901760
        %v6073 = vsub.f32 %v6071, %v6072
        %v6074 = vand.u32 %v6073, 4294901760
        %6075 = vmatmul.mubr.f32.gmra.mrb[0].mxu0 %v6074
        %v6076 = vpop.f32.mrb[0].mxu0
        %v6077 = vadd.f32 %v5580, %v6076
        %v6078 = vpop.f32.mrb[0].mxu0
        %v6079 = vand.u32 %v979, 4294901760
        %v6080 = vsub.f32 %v979, %v6079
        %v6081 = vand.u32 %v6080, 4294901760
        %v6082 = vsub.f32 %v6080, %v6081
        %v6083 = vand.u32 %v6082, 4294901760
        %6084 = vmatprep.mubr.f32.mxu0 %v6083
        %v6085 = vand.u32 %v978, 4294901760
        %v6086 = vsub.f32 %v978, %v6085
        %v6087 = vand.u32 %v6086, 4294901760
        %v6088 = vsub.f32 %v6086, %v6087
        %v6089 = vand.u32 %v6088, 4294901760
        %6090 = vmatmul.mubr.f32.gmra.mrb[0].mxu0 %v6089
        %v6091 = vpop.f32.mrb[0].mxu0
        %v6092 = vadd.f32 %v5587, %v6091
        %v6093 = vpop.f32.mrb[0].mxu0
        %v6094 = vand.u32 %v983, 4294901760
        %v6095 = vsub.f32 %v983, %v6094
        %v6096 = vand.u32 %v6095, 4294901760
        %v6097 = vsub.f32 %v6095, %v6096
        %v6098 = vand.u32 %v6097, 4294901760
        %6099 = vmatprep.mubr.f32.mxu0 %v6098
        %v6100 = vand.u32 %v982, 4294901760
        %v6101 = vsub.f32 %v982, %v6100
        %v6102 = vand.u32 %v6101, 4294901760
        %v6103 = vsub.f32 %v6101, %v6102
        %v6104 = vand.u32 %v6103, 4294901760
        %6105 = vmatmul.mubr.f32.gmra.mrb[0].mxu0 %v6104
        %v6106 = vpop.f32.mrb[0].mxu0
        %v6107 = vadd.f32 %v5594, %v6106
        %v6108 = vpop.f32.mrb[0].mxu0
        %v6109 = vand.u32 %v987, 4294901760
        %v6110 = vsub.f32 %v987, %v6109
        %v6111 = vand.u32 %v6110, 4294901760
        %v6112 = vsub.f32 %v6110, %v6111
        %v6113 = vand.u32 %v6112, 4294901760
        %6114 = vmatprep.mubr.f32.mxu0 %v6113
        %v6115 = vand.u32 %v986, 4294901760
        %v6116 = vsub.f32 %v986, %v6115
        %v6117 = vand.u32 %v6116, 4294901760
        %v6118 = vsub.f32 %v6116, %v6117
        %v6119 = vand.u32 %v6118, 4294901760
        %6120 = vmatmul.mubr.f32.gmra.mrb[0].mxu0 %v6119
        %v6121 = vpop.f32.mrb[0].mxu0
        %v6122 = vadd.f32 %v5601, %v6121
        %v6123 = vpop.f32.mrb[0].mxu0
        %v6124 = vand.u32 %v991, 4294901760
        %v6125 = vsub.f32 %v991, %v6124
        %v6126 = vand.u32 %v6125, 4294901760
        %v6127 = vsub.f32 %v6125, %v6126
        %v6128 = vand.u32 %v6127, 4294901760
        %6129 = vmatprep.mubr.f32.mxu0 %v6128
        %v6130 = vand.u32 %v990, 4294901760
        %v6131 = vsub.f32 %v990, %v6130
        %v6132 = vand.u32 %v6131, 4294901760
        %v6133 = vsub.f32 %v6131, %v6132
        %v6134 = vand.u32 %v6133, 4294901760
        %6135 = vmatmul.mubr.f32.gmra.mrb[0].mxu0 %v6134
        %v6136 = vpop.f32.mrb[0].mxu0
        %v6137 = vadd.f32 %v5608, %v6136
        %v6138 = vpop.f32.mrb[0].mxu0
        %v6139 = vand.u32 %v995, 4294901760
        %v6140 = vsub.f32 %v995, %v6139
        %v6141 = vand.u32 %v6140, 4294901760
        %v6142 = vsub.f32 %v6140, %v6141
        %v6143 = vand.u32 %v6142, 4294901760
        %6144 = vmatprep.mubr.f32.mxu0 %v6143
        %v6145 = vand.u32 %v994, 4294901760
        %v6146 = vsub.f32 %v994, %v6145
        %v6147 = vand.u32 %v6146, 4294901760
        %v6148 = vsub.f32 %v6146, %v6147
        %v6149 = vand.u32 %v6148, 4294901760
        %6150 = vmatmul.mubr.f32.gmra.mrb[0].mxu0 %v6149
        %v6151 = vpop.f32.mrb[0].mxu0
        %v6152 = vadd.f32 %v5615, %v6151
        %v6153 = vpop.f32.mrb[0].mxu0
        %v6154 = vand.u32 %v999, 4294901760
        %v6155 = vsub.f32 %v999, %v6154
        %v6156 = vand.u32 %v6155, 4294901760
        %v6157 = vsub.f32 %v6155, %v6156
        %v6158 = vand.u32 %v6157, 4294901760
        %6159 = vmatprep.mubr.f32.mxu0 %v6158
        %v6160 = vand.u32 %v998, 4294901760
        %v6161 = vsub.f32 %v998, %v6160
        %v6162 = vand.u32 %v6161, 4294901760
        %v6163 = vsub.f32 %v6161, %v6162
        %v6164 = vand.u32 %v6163, 4294901760
        %6165 = vmatmul.mubr.f32.gmra.mrb[0].mxu0 %v6164
        %v6166 = vpop.f32.mrb[0].mxu0
        %v6167 = vadd.f32 %v5622, %v6166
        %v6168 = vpop.f32.mrb[0].mxu0
        %v6169 = vand.u32 %v1003, 4294901760
        %v6170 = vsub.f32 %v1003, %v6169
        %v6171 = vand.u32 %v6170, 4294901760
        %v6172 = vsub.f32 %v6170, %v6171
        %v6173 = vand.u32 %v6172, 4294901760
        %6174 = vmatprep.mubr.f32.mxu0 %v6173
        %v6175 = vand.u32 %v1002, 4294901760
        %v6176 = vsub.f32 %v1002, %v6175
        %v6177 = vand.u32 %v6176, 4294901760
        %v6178 = vsub.f32 %v6176, %v6177
        %v6179 = vand.u32 %v6178, 4294901760
        %6180 = vmatmul.mubr.f32.gmra.mrb[0].mxu0 %v6179
        %v6181 = vpop.f32.mrb[0].mxu0
        %v6182 = vadd.f32 %v5629, %v6181
        %v6183 = vpop.f32.mrb[0].mxu0
        %v6184 = vand.u32 %v1007, 4294901760
        %v6185 = vsub.f32 %v1007, %v6184
        %v6186 = vand.u32 %v6185, 4294901760
        %v6187 = vsub.f32 %v6185, %v6186
        %v6188 = vand.u32 %v6187, 4294901760
        %6189 = vmatprep.mubr.f32.mxu0 %v6188
        %v6190 = vand.u32 %v1006, 4294901760
        %v6191 = vsub.f32 %v1006, %v6190
        %v6192 = vand.u32 %v6191, 4294901760
        %v6193 = vsub.f32 %v6191, %v6192
        %v6194 = vand.u32 %v6193, 4294901760
        %6195 = vmatmul.mubr.f32.gmra.mrb[0].mxu0 %v6194
        %v6196 = vpop.f32.mrb[0].mxu0
        %v6197 = vadd.f32 %v5636, %v6196
        %v6198 = vpop.f32.mrb[0].mxu0
        %v6199 = vand.u32 %v1011, 4294901760
        %v6200 = vsub.f32 %v1011, %v6199
        %v6201 = vand.u32 %v6200, 4294901760
        %v6202 = vsub.f32 %v6200, %v6201
        %v6203 = vand.u32 %v6202, 4294901760
        %6204 = vmatprep.mubr.f32.mxu0 %v6203
        %v6205 = vand.u32 %v1010, 4294901760
        %v6206 = vsub.f32 %v1010, %v6205
        %v6207 = vand.u32 %v6206, 4294901760
        %v6208 = vsub.f32 %v6206, %v6207
        %v6209 = vand.u32 %v6208, 4294901760
        %6210 = vmatmul.mubr.f32.gmra.mrb[0].mxu0 %v6209
        %v6211 = vpop.f32.mrb[0].mxu0
        %v6212 = vadd.f32 %v5643, %v6211
        %v6213 = vpop.f32.mrb[0].mxu0
        %v6214 = vand.u32 %v1015, 4294901760
        %v6215 = vsub.f32 %v1015, %v6214
        %v6216 = vand.u32 %v6215, 4294901760
        %v6217 = vsub.f32 %v6215, %v6216
        %v6218 = vand.u32 %v6217, 4294901760
        %6219 = vmatprep.mubr.f32.mxu0 %v6218
        %v6220 = vand.u32 %v1014, 4294901760
        %v6221 = vsub.f32 %v1014, %v6220
        %v6222 = vand.u32 %v6221, 4294901760
        %v6223 = vsub.f32 %v6221, %v6222
        %v6224 = vand.u32 %v6223, 4294901760
        %6225 = vmatmul.mubr.f32.gmra.mrb[0].mxu0 %v6224
        %v6226 = vpop.f32.mrb[0].mxu0
        %v6227 = vadd.f32 %v5650, %v6226
        %v6228 = vpop.f32.mrb[0].mxu0
        %6229 = vdwg.mxu0
        %6230 = vmatprep.subr.mxu0 0.0
        %v6231 = vand.u32 %v3023, 4294901760
        %v6232 = vsub.f32 %v3023, %v6231
        %v6233 = vand.u32 %v6232, 4294901760
        %v6234 = vsub.f32 %v6232, %v6233
        %v6235 = vand.u32 %v6234, 4294901760
        %6236 = vmatpush1.msra.mxu0 %v6235
        %6237 = vmatprep.subr.mxu0 0.0
        %v6238 = vand.u32 %v3024, 4294901760
        %v6239 = vsub.f32 %v3024, %v6238
        %v6240 = vand.u32 %v6239, 4294901760
        %v6241 = vsub.f32 %v6239, %v6240
        %v6242 = vand.u32 %v6241, 4294901760
        %6243 = vmatpush1.msra.mxu0 %v6242
        %6244 = vmatprep.subr.mxu0 0.0
        %v6245 = vand.u32 %v3025, 4294901760
        %v6246 = vsub.f32 %v3025, %v6245
        %v6247 = vand.u32 %v6246, 4294901760
        %v6248 = vsub.f32 %v6246, %v6247
        %v6249 = vand.u32 %v6248, 4294901760
        %6250 = vmatpush1.msra.mxu0 %v6249
        %6251 = vmatprep.subr.mxu0 0.0
        %v6252 = vand.u32 %v3026, 4294901760
        %v6253 = vsub.f32 %v3026, %v6252
        %v6254 = vand.u32 %v6253, 4294901760
        %v6255 = vsub.f32 %v6253, %v6254
        %v6256 = vand.u32 %v6255, 4294901760
        %6257 = vmatpush1.msra.mxu0 %v6256
        %6258 = vmatprep.subr.mxu0 0.0
        %v6259 = vand.u32 %v3027, 4294901760
        %v6260 = vsub.f32 %v3027, %v6259
        %v6261 = vand.u32 %v6260, 4294901760
        %v6262 = vsub.f32 %v6260, %v6261
        %v6263 = vand.u32 %v6262, 4294901760
        %6264 = vmatpush1.msra.mxu0 %v6263
        %6265 = vmatprep.subr.mxu0 0.0
        %v6266 = vand.u32 %v3028, 4294901760
        %v6267 = vsub.f32 %v3028, %v6266
        %v6268 = vand.u32 %v6267, 4294901760
        %v6269 = vsub.f32 %v6267, %v6268
        %v6270 = vand.u32 %v6269, 4294901760
        %6271 = vmatpush1.msra.mxu0 %v6270
        %6272 = vmatprep.subr.mxu0 0.0
        %v6273 = vand.u32 %v3029, 4294901760
        %v6274 = vsub.f32 %v3029, %v6273
        %v6275 = vand.u32 %v6274, 4294901760
        %v6276 = vsub.f32 %v6274, %v6275
        %v6277 = vand.u32 %v6276, 4294901760
        %6278 = vmatpush1.msra.mxu0 %v6277
        %6279 = vmatprep.subr.mxu0 0.0
        %v6280 = vand.u32 %v3030, 4294901760
        %v6281 = vsub.f32 %v3030, %v6280
        %v6282 = vand.u32 %v6281, 4294901760
        %v6283 = vsub.f32 %v6281, %v6282
        %v6284 = vand.u32 %v6283, 4294901760
        %6285 = vmatpush1.msra.mxu0 %v6284
        %6286 = vmatprep.subr.mxu0 0.0
        %v6287 = vand.u32 %v3031, 4294901760
        %v6288 = vsub.f32 %v3031, %v6287
        %v6289 = vand.u32 %v6288, 4294901760
        %v6290 = vsub.f32 %v6288, %v6289
        %v6291 = vand.u32 %v6290, 4294901760
        %6292 = vmatpush1.msra.mxu0 %v6291
        %6293 = vmatprep.subr.mxu0 0.0
        %v6294 = vand.u32 %v3032, 4294901760
        %v6295 = vsub.f32 %v3032, %v6294
        %v6296 = vand.u32 %v6295, 4294901760
        %v6297 = vsub.f32 %v6295, %v6296
        %v6298 = vand.u32 %v6297, 4294901760
        %6299 = vmatpush1.msra.mxu0 %v6298
        %6300 = vmatprep.subr.mxu0 0.0
        %v6301 = vand.u32 %v3033, 4294901760
        %v6302 = vsub.f32 %v3033, %v6301
        %v6303 = vand.u32 %v6302, 4294901760
        %v6304 = vsub.f32 %v6302, %v6303
        %v6305 = vand.u32 %v6304, 4294901760
        %6306 = vmatpush1.msra.mxu0 %v6305
        %6307 = vmatprep.subr.mxu0 0.0
        %v6308 = vand.u32 %v3034, 4294901760
        %v6309 = vsub.f32 %v3034, %v6308
        %v6310 = vand.u32 %v6309, 4294901760
        %v6311 = vsub.f32 %v6309, %v6310
        %v6312 = vand.u32 %v6311, 4294901760
        %6313 = vmatpush1.msra.mxu0 %v6312
        %6314 = vmatprep.subr.mxu0 0.0
        %v6315 = vand.u32 %v3035, 4294901760
        %v6316 = vsub.f32 %v3035, %v6315
        %v6317 = vand.u32 %v6316, 4294901760
        %v6318 = vsub.f32 %v6316, %v6317
        %v6319 = vand.u32 %v6318, 4294901760
        %6320 = vmatpush1.msra.mxu0 %v6319
        %6321 = vmatprep.subr.mxu0 0.0
        %v6322 = vand.u32 %v3036, 4294901760
        %v6323 = vsub.f32 %v3036, %v6322
        %v6324 = vand.u32 %v6323, 4294901760
        %v6325 = vsub.f32 %v6323, %v6324
        %v6326 = vand.u32 %v6325, 4294901760
        %6327 = vmatpush1.msra.mxu0 %v6326
        %6328 = vmatprep.subr.mxu0 0.0
        %v6329 = vand.u32 %v3037, 4294901760
        %v6330 = vsub.f32 %v3037, %v6329
        %v6331 = vand.u32 %v6330, 4294901760
        %v6332 = vsub.f32 %v6330, %v6331
        %v6333 = vand.u32 %v6332, 4294901760
        %6334 = vmatpush1.msra.mxu0 %v6333
        %6335 = vmatprep.subr.mxu0 0.0
        %v6336 = vand.u32 %v3038, 4294901760
        %v6337 = vsub.f32 %v3038, %v6336
        %v6338 = vand.u32 %v6337, 4294901760
        %v6339 = vsub.f32 %v6337, %v6338
        %v6340 = vand.u32 %v6339, 4294901760
        %6341 = vmatpush1.msra.mxu0 %v6340
        %6342 = vmatprep.subr.mxu0 0.0
        %v6343 = vand.u32 %v3039, 4294901760
        %v6344 = vsub.f32 %v3039, %v6343
        %v6345 = vand.u32 %v6344, 4294901760
        %v6346 = vsub.f32 %v6344, %v6345
        %v6347 = vand.u32 %v6346, 4294901760
        %6348 = vmatpush1.msra.mxu0 %v6347
        %6349 = vmatprep.subr.mxu0 0.0
        %v6350 = vand.u32 %v3040, 4294901760
        %v6351 = vsub.f32 %v3040, %v6350
        %v6352 = vand.u32 %v6351, 4294901760
        %v6353 = vsub.f32 %v6351, %v6352
        %v6354 = vand.u32 %v6353, 4294901760
        %6355 = vmatpush1.msra.mxu0 %v6354
        %6356 = vmatprep.subr.mxu0 0.0
        %v6357 = vand.u32 %v3041, 4294901760
        %v6358 = vsub.f32 %v3041, %v6357
        %v6359 = vand.u32 %v6358, 4294901760
        %v6360 = vsub.f32 %v6358, %v6359
        %v6361 = vand.u32 %v6360, 4294901760
        %6362 = vmatpush1.msra.mxu0 %v6361
        %6363 = vmatprep.subr.mxu0 0.0
        %v6364 = vand.u32 %v3042, 4294901760
        %v6365 = vsub.f32 %v3042, %v6364
        %v6366 = vand.u32 %v6365, 4294901760
        %v6367 = vsub.f32 %v6365, %v6366
        %v6368 = vand.u32 %v6367, 4294901760
        %6369 = vmatpush1.msra.mxu0 %v6368
        %6370 = vmatprep.subr.mxu0 0.0
        %v6371 = vand.u32 %v3043, 4294901760
        %v6372 = vsub.f32 %v3043, %v6371
        %v6373 = vand.u32 %v6372, 4294901760
        %v6374 = vsub.f32 %v6372, %v6373
        %v6375 = vand.u32 %v6374, 4294901760
        %6376 = vmatpush1.msra.mxu0 %v6375
        %6377 = vmatprep.subr.mxu0 0.0
        %v6378 = vand.u32 %v3044, 4294901760
        %v6379 = vsub.f32 %v3044, %v6378
        %v6380 = vand.u32 %v6379, 4294901760
        %v6381 = vsub.f32 %v6379, %v6380
        %v6382 = vand.u32 %v6381, 4294901760
        %6383 = vmatpush1.msra.mxu0 %v6382
        %6384 = vmatprep.subr.mxu0 0.0
        %v6385 = vand.u32 %v3045, 4294901760
        %v6386 = vsub.f32 %v3045, %v6385
        %v6387 = vand.u32 %v6386, 4294901760
        %v6388 = vsub.f32 %v6386, %v6387
        %v6389 = vand.u32 %v6388, 4294901760
        %6390 = vmatpush1.msra.mxu0 %v6389
        %6391 = vmatprep.subr.mxu0 0.0
        %v6392 = vand.u32 %v3046, 4294901760
        %v6393 = vsub.f32 %v3046, %v6392
        %v6394 = vand.u32 %v6393, 4294901760
        %v6395 = vsub.f32 %v6393, %v6394
        %v6396 = vand.u32 %v6395, 4294901760
        %6397 = vmatpush1.msra.mxu0 %v6396
        %6398 = vmatprep.subr.mxu0 0.0
        %v6399 = vand.u32 %v3047, 4294901760
        %v6400 = vsub.f32 %v3047, %v6399
        %v6401 = vand.u32 %v6400, 4294901760
        %v6402 = vsub.f32 %v6400, %v6401
        %v6403 = vand.u32 %v6402, 4294901760
        %6404 = vmatpush1.msra.mxu0 %v6403
        %6405 = vmatprep.subr.mxu0 0.0
        %v6406 = vand.u32 %v3048, 4294901760
        %v6407 = vsub.f32 %v3048, %v6406
        %v6408 = vand.u32 %v6407, 4294901760
        %v6409 = vsub.f32 %v6407, %v6408
        %v6410 = vand.u32 %v6409, 4294901760
        %6411 = vmatpush1.msra.mxu0 %v6410
        %6412 = vmatprep.subr.mxu0 0.0
        %v6413 = vand.u32 %v3049, 4294901760
        %v6414 = vsub.f32 %v3049, %v6413
        %v6415 = vand.u32 %v6414, 4294901760
        %v6416 = vsub.f32 %v6414, %v6415
        %v6417 = vand.u32 %v6416, 4294901760
        %6418 = vmatpush1.msra.mxu0 %v6417
        %6419 = vmatprep.subr.mxu0 0.0
        %v6420 = vand.u32 %v3050, 4294901760
        %v6421 = vsub.f32 %v3050, %v6420
        %v6422 = vand.u32 %v6421, 4294901760
        %v6423 = vsub.f32 %v6421, %v6422
        %v6424 = vand.u32 %v6423, 4294901760
        %6425 = vmatpush1.msra.mxu0 %v6424
        %6426 = vmatprep.subr.mxu0 0.0
        %v6427 = vand.u32 %v3051, 4294901760
        %v6428 = vsub.f32 %v3051, %v6427
        %v6429 = vand.u32 %v6428, 4294901760
        %v6430 = vsub.f32 %v6428, %v6429
        %v6431 = vand.u32 %v6430, 4294901760
        %6432 = vmatpush1.msra.mxu0 %v6431
        %6433 = vmatprep.subr.mxu0 0.0
        %v6434 = vand.u32 %v3052, 4294901760
        %v6435 = vsub.f32 %v3052, %v6434
        %v6436 = vand.u32 %v6435, 4294901760
        %v6437 = vsub.f32 %v6435, %v6436
        %v6438 = vand.u32 %v6437, 4294901760
        %6439 = vmatpush1.msra.mxu0 %v6438
        %6440 = vmatprep.subr.mxu0 0.0
        %v6441 = vand.u32 %v3053, 4294901760
        %v6442 = vsub.f32 %v3053, %v6441
        %v6443 = vand.u32 %v6442, 4294901760
        %v6444 = vsub.f32 %v6442, %v6443
        %v6445 = vand.u32 %v6444, 4294901760
        %6446 = vmatpush1.msra.mxu0 %v6445
        %6447 = vmatprep.subr.mxu0 0.0
        %v6448 = vand.u32 %v3054, 4294901760
        %v6449 = vsub.f32 %v3054, %v6448
        %v6450 = vand.u32 %v6449, 4294901760
        %v6451 = vsub.f32 %v6449, %v6450
        %v6452 = vand.u32 %v6451, 4294901760
        %6453 = vmatpush1.msra.mxu0 %v6452
        %v6454 = vand.u32 %v891, 4294901760
        %6455 = vmatprep.mubr.f32.mxu0 %v6454
        %v6456 = vand.u32 %v890, 4294901760
        %6457 = vmatmul.mubr.f32.gmra.mrb[0].mxu0 %v6456
        %v6458 = vpop.f32.mrb[0].mxu0
        %v6459 = vadd.f32 %v5762, %v6458
        %v6460 = vpop.f32.mrb[0].mxu0
        %v6461 = vand.u32 %v895, 4294901760
        %6462 = vmatprep.mubr.f32.mxu0 %v6461
        %v6463 = vand.u32 %v894, 4294901760
        %6464 = vmatmul.mubr.f32.gmra.mrb[0].mxu0 %v6463
        %v6465 = vpop.f32.mrb[0].mxu0
        %v6466 = vadd.f32 %v5777, %v6465
        %v6467 = vpop.f32.mrb[0].mxu0
        %v6468 = vand.u32 %v899, 4294901760
        %6469 = vmatprep.mubr.f32.mxu0 %v6468
        %v6470 = vand.u32 %v898, 4294901760
        %6471 = vmatmul.mubr.f32.gmra.mrb[0].mxu0 %v6470
        %v6472 = vpop.f32.mrb[0].mxu0
        %v6473 = vadd.f32 %v5792, %v6472
        %v6474 = vpop.f32.mrb[0].mxu0
        %v6475 = vand.u32 %v903, 4294901760
        %6476 = vmatprep.mubr.f32.mxu0 %v6475
        %v6477 = vand.u32 %v902, 4294901760
        %6478 = vmatmul.mubr.f32.gmra.mrb[0].mxu0 %v6477
        %v6479 = vpop.f32.mrb[0].mxu0
        %v6480 = vadd.f32 %v5807, %v6479
        %v6481 = vpop.f32.mrb[0].mxu0
        %v6482 = vand.u32 %v907, 4294901760
        %6483 = vmatprep.mubr.f32.mxu0 %v6482
        %v6484 = vand.u32 %v906, 4294901760
        %6485 = vmatmul.mubr.f32.gmra.mrb[0].mxu0 %v6484
        %v6486 = vpop.f32.mrb[0].mxu0
        %v6487 = vadd.f32 %v5822, %v6486
        %v6488 = vpop.f32.mrb[0].mxu0
        %v6489 = vand.u32 %v911, 4294901760
        %6490 = vmatprep.mubr.f32.mxu0 %v6489
        %v6491 = vand.u32 %v910, 4294901760
        %6492 = vmatmul.mubr.f32.gmra.mrb[0].mxu0 %v6491
        %v6493 = vpop.f32.mrb[0].mxu0
        %v6494 = vadd.f32 %v5837, %v6493
        %v6495 = vpop.f32.mrb[0].mxu0
        %v6496 = vand.u32 %v915, 4294901760
        %6497 = vmatprep.mubr.f32.mxu0 %v6496
        %v6498 = vand.u32 %v914, 4294901760
        %6499 = vmatmul.mubr.f32.gmra.mrb[0].mxu0 %v6498
        %v6500 = vpop.f32.mrb[0].mxu0
        %v6501 = vadd.f32 %v5852, %v6500
        %v6502 = vpop.f32.mrb[0].mxu0
        %v6503 = vand.u32 %v919, 4294901760
        %6504 = vmatprep.mubr.f32.mxu0 %v6503
        %v6505 = vand.u32 %v918, 4294901760
        %6506 = vmatmul.mubr.f32.gmra.mrb[0].mxu0 %v6505
        %v6507 = vpop.f32.mrb[0].mxu0
        %v6508 = vadd.f32 %v5867, %v6507
        %v6509 = vpop.f32.mrb[0].mxu0
        %v6510 = vand.u32 %v923, 4294901760
        %6511 = vmatprep.mubr.f32.mxu0 %v6510
        %v6512 = vand.u32 %v922, 4294901760
        %6513 = vmatmul.mubr.f32.gmra.mrb[0].mxu0 %v6512
        %v6514 = vpop.f32.mrb[0].mxu0
        %v6515 = vadd.f32 %v5882, %v6514
        %v6516 = vpop.f32.mrb[0].mxu0
        %v6517 = vand.u32 %v927, 4294901760
        %6518 = vmatprep.mubr.f32.mxu0 %v6517
        %v6519 = vand.u32 %v926, 4294901760
        %6520 = vmatmul.mubr.f32.gmra.mrb[0].mxu0 %v6519
        %v6521 = vpop.f32.mrb[0].mxu0
        %v6522 = vadd.f32 %v5897, %v6521
        %v6523 = vpop.f32.mrb[0].mxu0
        %v6524 = vand.u32 %v931, 4294901760
        %6525 = vmatprep.mubr.f32.mxu0 %v6524
        %v6526 = vand.u32 %v930, 4294901760
        %6527 = vmatmul.mubr.f32.gmra.mrb[0].mxu0 %v6526
        %v6528 = vpop.f32.mrb[0].mxu0
        %v6529 = vadd.f32 %v5912, %v6528
        %v6530 = vpop.f32.mrb[0].mxu0
        %v6531 = vand.u32 %v935, 4294901760
        %6532 = vmatprep.mubr.f32.mxu0 %v6531
        %v6533 = vand.u32 %v934, 4294901760
        %6534 = vmatmul.mubr.f32.gmra.mrb[0].mxu0 %v6533
        %v6535 = vpop.f32.mrb[0].mxu0
        %v6536 = vadd.f32 %v5927, %v6535
        %v6537 = vpop.f32.mrb[0].mxu0
        %v6538 = vand.u32 %v939, 4294901760
        %6539 = vmatprep.mubr.f32.mxu0 %v6538
        %v6540 = vand.u32 %v938, 4294901760
        %6541 = vmatmul.mubr.f32.gmra.mrb[0].mxu0 %v6540
        %v6542 = vpop.f32.mrb[0].mxu0
        %v6543 = vadd.f32 %v5942, %v6542
        %v6544 = vpop.f32.mrb[0].mxu0
        %v6545 = vand.u32 %v943, 4294901760
        %6546 = vmatprep.mubr.f32.mxu0 %v6545
        %v6547 = vand.u32 %v942, 4294901760
        %6548 = vmatmul.mubr.f32.gmra.mrb[0].mxu0 %v6547
        %v6549 = vpop.f32.mrb[0].mxu0
        %v6550 = vadd.f32 %v5957, %v6549
        %v6551 = vpop.f32.mrb[0].mxu0
        %v6552 = vand.u32 %v947, 4294901760
        %6553 = vmatprep.mubr.f32.mxu0 %v6552
        %v6554 = vand.u32 %v946, 4294901760
        %6555 = vmatmul.mubr.f32.gmra.mrb[0].mxu0 %v6554
        %v6556 = vpop.f32.mrb[0].mxu0
        %v6557 = vadd.f32 %v5972, %v6556
        %v6558 = vpop.f32.mrb[0].mxu0
        %v6559 = vand.u32 %v951, 4294901760
        %6560 = vmatprep.mubr.f32.mxu0 %v6559
        %v6561 = vand.u32 %v950, 4294901760
        %6562 = vmatmul.mubr.f32.gmra.mrb[0].mxu0 %v6561
        %v6563 = vpop.f32.mrb[0].mxu0
        %v6564 = vadd.f32 %v5987, %v6563
        %v6565 = vpop.f32.mrb[0].mxu0
        %v6566 = vand.u32 %v955, 4294901760
        %6567 = vmatprep.mubr.f32.mxu0 %v6566
        %v6568 = vand.u32 %v954, 4294901760
        %6569 = vmatmul.mubr.f32.gmra.mrb[0].mxu0 %v6568
        %v6570 = vpop.f32.mrb[0].mxu0
        %v6571 = vadd.f32 %v6002, %v6570
        %v6572 = vpop.f32.mrb[0].mxu0
        %v6573 = vand.u32 %v959, 4294901760
        %6574 = vmatprep.mubr.f32.mxu0 %v6573
        %v6575 = vand.u32 %v958, 4294901760
        %6576 = vmatmul.mubr.f32.gmra.mrb[0].mxu0 %v6575
        %v6577 = vpop.f32.mrb[0].mxu0
        %v6578 = vadd.f32 %v6017, %v6577
        %v6579 = vpop.f32.mrb[0].mxu0
        %v6580 = vand.u32 %v963, 4294901760
        %6581 = vmatprep.mubr.f32.mxu0 %v6580
        %v6582 = vand.u32 %v962, 4294901760
        %6583 = vmatmul.mubr.f32.gmra.mrb[0].mxu0 %v6582
        %v6584 = vpop.f32.mrb[0].mxu0
        %v6585 = vadd.f32 %v6032, %v6584
        %v6586 = vpop.f32.mrb[0].mxu0
        %v6587 = vand.u32 %v967, 4294901760
        %6588 = vmatprep.mubr.f32.mxu0 %v6587
        %v6589 = vand.u32 %v966, 4294901760
        %6590 = vmatmul.mubr.f32.gmra.mrb[0].mxu0 %v6589
        %v6591 = vpop.f32.mrb[0].mxu0
        %v6592 = vadd.f32 %v6047, %v6591
        %v6593 = vpop.f32.mrb[0].mxu0
        %v6594 = vand.u32 %v971, 4294901760
        %6595 = vmatprep.mubr.f32.mxu0 %v6594
        %v6596 = vand.u32 %v970, 4294901760
        %6597 = vmatmul.mubr.f32.gmra.mrb[0].mxu0 %v6596
        %v6598 = vpop.f32.mrb[0].mxu0
        %v6599 = vadd.f32 %v6062, %v6598
        %v6600 = vpop.f32.mrb[0].mxu0
        %v6601 = vand.u32 %v975, 4294901760
        %6602 = vmatprep.mubr.f32.mxu0 %v6601
        %v6603 = vand.u32 %v974, 4294901760
        %6604 = vmatmul.mubr.f32.gmra.mrb[0].mxu0 %v6603
        %v6605 = vpop.f32.mrb[0].mxu0
        %v6606 = vadd.f32 %v6077, %v6605
        %v6607 = vpop.f32.mrb[0].mxu0
        %v6608 = vand.u32 %v979, 4294901760
        %6609 = vmatprep.mubr.f32.mxu0 %v6608
        %v6610 = vand.u32 %v978, 4294901760
        %6611 = vmatmul.mubr.f32.gmra.mrb[0].mxu0 %v6610
        %v6612 = vpop.f32.mrb[0].mxu0
        %v6613 = vadd.f32 %v6092, %v6612
        %v6614 = vpop.f32.mrb[0].mxu0
        %v6615 = vand.u32 %v983, 4294901760
        %6616 = vmatprep.mubr.f32.mxu0 %v6615
        %v6617 = vand.u32 %v982, 4294901760
        %6618 = vmatmul.mubr.f32.gmra.mrb[0].mxu0 %v6617
        %v6619 = vpop.f32.mrb[0].mxu0
        %v6620 = vadd.f32 %v6107, %v6619
        %v6621 = vpop.f32.mrb[0].mxu0
        %v6622 = vand.u32 %v987, 4294901760
        %6623 = vmatprep.mubr.f32.mxu0 %v6622
        %v6624 = vand.u32 %v986, 4294901760
        %6625 = vmatmul.mubr.f32.gmra.mrb[0].mxu0 %v6624
        %v6626 = vpop.f32.mrb[0].mxu0
        %v6627 = vadd.f32 %v6122, %v6626
        %v6628 = vpop.f32.mrb[0].mxu0
        %v6629 = vand.u32 %v991, 4294901760
        %6630 = vmatprep.mubr.f32.mxu0 %v6629
        %v6631 = vand.u32 %v990, 4294901760
        %6632 = vmatmul.mubr.f32.gmra.mrb[0].mxu0 %v6631
        %v6633 = vpop.f32.mrb[0].mxu0
        %v6634 = vadd.f32 %v6137, %v6633
        %v6635 = vpop.f32.mrb[0].mxu0
        %v6636 = vand.u32 %v995, 4294901760
        %6637 = vmatprep.mubr.f32.mxu0 %v6636
        %v6638 = vand.u32 %v994, 4294901760
        %6639 = vmatmul.mubr.f32.gmra.mrb[0].mxu0 %v6638
        %v6640 = vpop.f32.mrb[0].mxu0
        %v6641 = vadd.f32 %v6152, %v6640
        %v6642 = vpop.f32.mrb[0].mxu0
        %v6643 = vand.u32 %v999, 4294901760
        %6644 = vmatprep.mubr.f32.mxu0 %v6643
        %v6645 = vand.u32 %v998, 4294901760
        %6646 = vmatmul.mubr.f32.gmra.mrb[0].mxu0 %v6645
        %v6647 = vpop.f32.mrb[0].mxu0
        %v6648 = vadd.f32 %v6167, %v6647
        %v6649 = vpop.f32.mrb[0].mxu0
        %v6650 = vand.u32 %v1003, 4294901760
        %6651 = vmatprep.mubr.f32.mxu0 %v6650
        %v6652 = vand.u32 %v1002, 4294901760
        %6653 = vmatmul.mubr.f32.gmra.mrb[0].mxu0 %v6652
        %v6654 = vpop.f32.mrb[0].mxu0
        %v6655 = vadd.f32 %v6182, %v6654
        %v6656 = vpop.f32.mrb[0].mxu0
        %v6657 = vand.u32 %v1007, 4294901760
        %6658 = vmatprep.mubr.f32.mxu0 %v6657
        %v6659 = vand.u32 %v1006, 4294901760
        %6660 = vmatmul.mubr.f32.gmra.mrb[0].mxu0 %v6659
        %v6661 = vpop.f32.mrb[0].mxu0
        %v6662 = vadd.f32 %v6197, %v6661
        %v6663 = vpop.f32.mrb[0].mxu0
        %v6664 = vand.u32 %v1011, 4294901760
        %6665 = vmatprep.mubr.f32.mxu0 %v6664
        %v6666 = vand.u32 %v1010, 4294901760
        %6667 = vmatmul.mubr.f32.gmra.mrb[0].mxu0 %v6666
        %v6668 = vpop.f32.mrb[0].mxu0
        %v6669 = vadd.f32 %v6212, %v6668
        %v6670 = vpop.f32.mrb[0].mxu0
        %v6671 = vand.u32 %v1015, 4294901760
        %6672 = vmatprep.mubr.f32.mxu0 %v6671
        %v6673 = vand.u32 %v1014, 4294901760
        %6674 = vmatmul.mubr.f32.gmra.mrb[0].mxu0 %v6673
        %v6675 = vpop.f32.mrb[0].mxu0
        %v6676 = vadd.f32 %v6227, %v6675
        %v6677 = vpop.f32.mrb[0].mxu0
        %6678 = vdwg.mxu0
        %6679 = vmatprep.subr.mxu0 0.0
        %v6680 = vand.u32 %v3023, 4294901760
        %v6681 = vsub.f32 %v3023, %v6680
        %6682 = vmatpush1.msra.mxu0 %v6681
        %6683 = vmatprep.subr.mxu0 0.0
        %v6684 = vand.u32 %v3024, 4294901760
        %v6685 = vsub.f32 %v3024, %v6684
        %6686 = vmatpush1.msra.mxu0 %v6685
        %6687 = vmatprep.subr.mxu0 0.0
        %v6688 = vand.u32 %v3025, 4294901760
        %v6689 = vsub.f32 %v3025, %v6688
        %6690 = vmatpush1.msra.mxu0 %v6689
        %6691 = vmatprep.subr.mxu0 0.0
        %v6692 = vand.u32 %v3026, 4294901760
        %v6693 = vsub.f32 %v3026, %v6692
        %6694 = vmatpush1.msra.mxu0 %v6693
        %6695 = vmatprep.subr.mxu0 0.0
        %v6696 = vand.u32 %v3027, 4294901760
        %v6697 = vsub.f32 %v3027, %v6696
        %6698 = vmatpush1.msra.mxu0 %v6697
        %6699 = vmatprep.subr.mxu0 0.0
        %v6700 = vand.u32 %v3028, 4294901760
        %v6701 = vsub.f32 %v3028, %v6700
        %6702 = vmatpush1.msra.mxu0 %v6701
        %6703 = vmatprep.subr.mxu0 0.0
        %v6704 = vand.u32 %v3029, 4294901760
        %v6705 = vsub.f32 %v3029, %v6704
        %6706 = vmatpush1.msra.mxu0 %v6705
        %6707 = vmatprep.subr.mxu0 0.0
        %v6708 = vand.u32 %v3030, 4294901760
        %v6709 = vsub.f32 %v3030, %v6708
        %6710 = vmatpush1.msra.mxu0 %v6709
        %6711 = vmatprep.subr.mxu0 0.0
        %v6712 = vand.u32 %v3031, 4294901760
        %v6713 = vsub.f32 %v3031, %v6712
        %6714 = vmatpush1.msra.mxu0 %v6713
        %6715 = vmatprep.subr.mxu0 0.0
        %v6716 = vand.u32 %v3032, 4294901760
        %v6717 = vsub.f32 %v3032, %v6716
        %6718 = vmatpush1.msra.mxu0 %v6717
        %6719 = vmatprep.subr.mxu0 0.0
        %v6720 = vand.u32 %v3033, 4294901760
        %v6721 = vsub.f32 %v3033, %v6720
        %6722 = vmatpush1.msra.mxu0 %v6721
        %6723 = vmatprep.subr.mxu0 0.0
        %v6724 = vand.u32 %v3034, 4294901760
        %v6725 = vsub.f32 %v3034, %v6724
        %6726 = vmatpush1.msra.mxu0 %v6725
        %6727 = vmatprep.subr.mxu0 0.0
        %v6728 = vand.u32 %v3035, 4294901760
        %v6729 = vsub.f32 %v3035, %v6728
        %6730 = vmatpush1.msra.mxu0 %v6729
        %6731 = vmatprep.subr.mxu0 0.0
        %v6732 = vand.u32 %v3036, 4294901760
        %v6733 = vsub.f32 %v3036, %v6732
        %6734 = vmatpush1.msra.mxu0 %v6733
        %6735 = vmatprep.subr.mxu0 0.0
        %v6736 = vand.u32 %v3037, 4294901760
        %v6737 = vsub.f32 %v3037, %v6736
        %6738 = vmatpush1.msra.mxu0 %v6737
        %6739 = vmatprep.subr.mxu0 0.0
        %v6740 = vand.u32 %v3038, 4294901760
        %v6741 = vsub.f32 %v3038, %v6740
        %6742 = vmatpush1.msra.mxu0 %v6741
        %6743 = vmatprep.subr.mxu0 0.0
        %v6744 = vand.u32 %v3039, 4294901760
        %v6745 = vsub.f32 %v3039, %v6744
        %6746 = vmatpush1.msra.mxu0 %v6745
        %6747 = vmatprep.subr.mxu0 0.0
        %v6748 = vand.u32 %v3040, 4294901760
        %v6749 = vsub.f32 %v3040, %v6748
        %6750 = vmatpush1.msra.mxu0 %v6749
        %6751 = vmatprep.subr.mxu0 0.0
        %v6752 = vand.u32 %v3041, 4294901760
        %v6753 = vsub.f32 %v3041, %v6752
        %6754 = vmatpush1.msra.mxu0 %v6753
        %6755 = vmatprep.subr.mxu0 0.0
        %v6756 = vand.u32 %v3042, 4294901760
        %v6757 = vsub.f32 %v3042, %v6756
        %6758 = vmatpush1.msra.mxu0 %v6757
        %6759 = vmatprep.subr.mxu0 0.0
        %v6760 = vand.u32 %v3043, 4294901760
        %v6761 = vsub.f32 %v3043, %v6760
        %6762 = vmatpush1.msra.mxu0 %v6761
        %6763 = vmatprep.subr.mxu0 0.0
        %v6764 = vand.u32 %v3044, 4294901760
        %v6765 = vsub.f32 %v3044, %v6764
        %6766 = vmatpush1.msra.mxu0 %v6765
        %6767 = vmatprep.subr.mxu0 0.0
        %v6768 = vand.u32 %v3045, 4294901760
        %v6769 = vsub.f32 %v3045, %v6768
        %6770 = vmatpush1.msra.mxu0 %v6769
        %6771 = vmatprep.subr.mxu0 0.0
        %v6772 = vand.u32 %v3046, 4294901760
        %v6773 = vsub.f32 %v3046, %v6772
        %6774 = vmatpush1.msra.mxu0 %v6773
        %6775 = vmatprep.subr.mxu0 0.0
        %v6776 = vand.u32 %v3047, 4294901760
        %v6777 = vsub.f32 %v3047, %v6776
        %6778 = vmatpush1.msra.mxu0 %v6777
        %6779 = vmatprep.subr.mxu0 0.0
        %v6780 = vand.u32 %v3048, 4294901760
        %v6781 = vsub.f32 %v3048, %v6780
        %6782 = vmatpush1.msra.mxu0 %v6781
        %6783 = vmatprep.subr.mxu0 0.0
        %v6784 = vand.u32 %v3049, 4294901760
        %v6785 = vsub.f32 %v3049, %v6784
        %6786 = vmatpush1.msra.mxu0 %v6785
        %6787 = vmatprep.subr.mxu0 0.0
        %v6788 = vand.u32 %v3050, 4294901760
        %v6789 = vsub.f32 %v3050, %v6788
        %6790 = vmatpush1.msra.mxu0 %v6789
        %6791 = vmatprep.subr.mxu0 0.0
        %v6792 = vand.u32 %v3051, 4294901760
        %v6793 = vsub.f32 %v3051, %v6792
        %6794 = vmatpush1.msra.mxu0 %v6793
        %6795 = vmatprep.subr.mxu0 0.0
        %v6796 = vand.u32 %v3052, 4294901760
        %v6797 = vsub.f32 %v3052, %v6796
        %6798 = vmatpush1.msra.mxu0 %v6797
        %6799 = vmatprep.subr.mxu0 0.0
        %v6800 = vand.u32 %v3053, 4294901760
        %v6801 = vsub.f32 %v3053, %v6800
        %6802 = vmatpush1.msra.mxu0 %v6801
        %6803 = vmatprep.subr.mxu0 0.0
        %v6804 = vand.u32 %v3054, 4294901760
        %v6805 = vsub.f32 %v3054, %v6804
        %6806 = vmatpush1.msra.mxu0 %v6805
        %v6807 = vand.u32 %v891, 4294901760
        %v6808 = vsub.f32 %v891, %v6807
        %6809 = vmatprep.mubr.f32.mxu0 %v6808
        %v6810 = vand.u32 %v890, 4294901760
        %v6811 = vsub.f32 %v890, %v6810
        %6812 = vmatmul.mubr.f32.gmra.mrb[0].mxu0 %v6811
        %v6813 = vpop.f32.mrb[0].mxu0
        %v6814 = vadd.f32 %v6459, %v6813
        %v6815 = vpop.f32.mrb[0].mxu0
        %v6816 = vand.u32 %v895, 4294901760
        %v6817 = vsub.f32 %v895, %v6816
        %6818 = vmatprep.mubr.f32.mxu0 %v6817
        %v6819 = vand.u32 %v894, 4294901760
        %v6820 = vsub.f32 %v894, %v6819
        %6821 = vmatmul.mubr.f32.gmra.mrb[0].mxu0 %v6820
        %v6822 = vpop.f32.mrb[0].mxu0
        %v6823 = vadd.f32 %v6466, %v6822
        %v6824 = vpop.f32.mrb[0].mxu0
        %v6825 = vand.u32 %v899, 4294901760
        %v6826 = vsub.f32 %v899, %v6825
        %6827 = vmatprep.mubr.f32.mxu0 %v6826
        %v6828 = vand.u32 %v898, 4294901760
        %v6829 = vsub.f32 %v898, %v6828
        %6830 = vmatmul.mubr.f32.gmra.mrb[0].mxu0 %v6829
        %v6831 = vpop.f32.mrb[0].mxu0
        %v6832 = vadd.f32 %v6473, %v6831
        %v6833 = vpop.f32.mrb[0].mxu0
        %v6834 = vand.u32 %v903, 4294901760
        %v6835 = vsub.f32 %v903, %v6834
        %6836 = vmatprep.mubr.f32.mxu0 %v6835
        %v6837 = vand.u32 %v902, 4294901760
        %v6838 = vsub.f32 %v902, %v6837
        %6839 = vmatmul.mubr.f32.gmra.mrb[0].mxu0 %v6838
        %v6840 = vpop.f32.mrb[0].mxu0
        %v6841 = vadd.f32 %v6480, %v6840
        %v6842 = vpop.f32.mrb[0].mxu0
        %v6843 = vand.u32 %v907, 4294901760
        %v6844 = vsub.f32 %v907, %v6843
        %6845 = vmatprep.mubr.f32.mxu0 %v6844
        %v6846 = vand.u32 %v906, 4294901760
        %v6847 = vsub.f32 %v906, %v6846
        %6848 = vmatmul.mubr.f32.gmra.mrb[0].mxu0 %v6847
        %v6849 = vpop.f32.mrb[0].mxu0
        %v6850 = vadd.f32 %v6487, %v6849
        %v6851 = vpop.f32.mrb[0].mxu0
        %v6852 = vand.u32 %v911, 4294901760
        %v6853 = vsub.f32 %v911, %v6852
        %6854 = vmatprep.mubr.f32.mxu0 %v6853
        %v6855 = vand.u32 %v910, 4294901760
        %v6856 = vsub.f32 %v910, %v6855
        %6857 = vmatmul.mubr.f32.gmra.mrb[0].mxu0 %v6856
        %v6858 = vpop.f32.mrb[0].mxu0
        %v6859 = vadd.f32 %v6494, %v6858
        %v6860 = vpop.f32.mrb[0].mxu0
        %v6861 = vand.u32 %v915, 4294901760
        %v6862 = vsub.f32 %v915, %v6861
        %6863 = vmatprep.mubr.f32.mxu0 %v6862
        %v6864 = vand.u32 %v914, 4294901760
        %v6865 = vsub.f32 %v914, %v6864
        %6866 = vmatmul.mubr.f32.gmra.mrb[0].mxu0 %v6865
        %v6867 = vpop.f32.mrb[0].mxu0
        %v6868 = vadd.f32 %v6501, %v6867
        %v6869 = vpop.f32.mrb[0].mxu0
        %v6870 = vand.u32 %v919, 4294901760
        %v6871 = vsub.f32 %v919, %v6870
        %6872 = vmatprep.mubr.f32.mxu0 %v6871
        %v6873 = vand.u32 %v918, 4294901760
        %v6874 = vsub.f32 %v918, %v6873
        %6875 = vmatmul.mubr.f32.gmra.mrb[0].mxu0 %v6874
        %v6876 = vpop.f32.mrb[0].mxu0
        %v6877 = vadd.f32 %v6508, %v6876
        %v6878 = vpop.f32.mrb[0].mxu0
        %v6879 = vand.u32 %v923, 4294901760
        %v6880 = vsub.f32 %v923, %v6879
        %6881 = vmatprep.mubr.f32.mxu0 %v6880
        %v6882 = vand.u32 %v922, 4294901760
        %v6883 = vsub.f32 %v922, %v6882
        %6884 = vmatmul.mubr.f32.gmra.mrb[0].mxu0 %v6883
        %v6885 = vpop.f32.mrb[0].mxu0
        %v6886 = vadd.f32 %v6515, %v6885
        %v6887 = vpop.f32.mrb[0].mxu0
        %v6888 = vand.u32 %v927, 4294901760
        %v6889 = vsub.f32 %v927, %v6888
        %6890 = vmatprep.mubr.f32.mxu0 %v6889
        %v6891 = vand.u32 %v926, 4294901760
        %v6892 = vsub.f32 %v926, %v6891
        %6893 = vmatmul.mubr.f32.gmra.mrb[0].mxu0 %v6892
        %v6894 = vpop.f32.mrb[0].mxu0
        %v6895 = vadd.f32 %v6522, %v6894
        %v6896 = vpop.f32.mrb[0].mxu0
        %v6897 = vand.u32 %v931, 4294901760
        %v6898 = vsub.f32 %v931, %v6897
        %6899 = vmatprep.mubr.f32.mxu0 %v6898
        %v6900 = vand.u32 %v930, 4294901760
        %v6901 = vsub.f32 %v930, %v6900
        %6902 = vmatmul.mubr.f32.gmra.mrb[0].mxu0 %v6901
        %v6903 = vpop.f32.mrb[0].mxu0
        %v6904 = vadd.f32 %v6529, %v6903
        %v6905 = vpop.f32.mrb[0].mxu0
        %v6906 = vand.u32 %v935, 4294901760
        %v6907 = vsub.f32 %v935, %v6906
        %6908 = vmatprep.mubr.f32.mxu0 %v6907
        %v6909 = vand.u32 %v934, 4294901760
        %v6910 = vsub.f32 %v934, %v6909
        %6911 = vmatmul.mubr.f32.gmra.mrb[0].mxu0 %v6910
        %v6912 = vpop.f32.mrb[0].mxu0
        %v6913 = vadd.f32 %v6536, %v6912
        %v6914 = vpop.f32.mrb[0].mxu0
        %v6915 = vand.u32 %v939, 4294901760
        %v6916 = vsub.f32 %v939, %v6915
        %6917 = vmatprep.mubr.f32.mxu0 %v6916
        %v6918 = vand.u32 %v938, 4294901760
        %v6919 = vsub.f32 %v938, %v6918
        %6920 = vmatmul.mubr.f32.gmra.mrb[0].mxu0 %v6919
        %v6921 = vpop.f32.mrb[0].mxu0
        %v6922 = vadd.f32 %v6543, %v6921
        %v6923 = vpop.f32.mrb[0].mxu0
        %v6924 = vand.u32 %v943, 4294901760
        %v6925 = vsub.f32 %v943, %v6924
        %6926 = vmatprep.mubr.f32.mxu0 %v6925
        %v6927 = vand.u32 %v942, 4294901760
        %v6928 = vsub.f32 %v942, %v6927
        %6929 = vmatmul.mubr.f32.gmra.mrb[0].mxu0 %v6928
        %v6930 = vpop.f32.mrb[0].mxu0
        %v6931 = vadd.f32 %v6550, %v6930
        %v6932 = vpop.f32.mrb[0].mxu0
        %v6933 = vand.u32 %v947, 4294901760
        %v6934 = vsub.f32 %v947, %v6933
        %6935 = vmatprep.mubr.f32.mxu0 %v6934
        %v6936 = vand.u32 %v946, 4294901760
        %v6937 = vsub.f32 %v946, %v6936
        %6938 = vmatmul.mubr.f32.gmra.mrb[0].mxu0 %v6937
        %v6939 = vpop.f32.mrb[0].mxu0
        %v6940 = vadd.f32 %v6557, %v6939
        %v6941 = vpop.f32.mrb[0].mxu0
        %v6942 = vand.u32 %v951, 4294901760
        %v6943 = vsub.f32 %v951, %v6942
        %6944 = vmatprep.mubr.f32.mxu0 %v6943
        %v6945 = vand.u32 %v950, 4294901760
        %v6946 = vsub.f32 %v950, %v6945
        %6947 = vmatmul.mubr.f32.gmra.mrb[0].mxu0 %v6946
        %v6948 = vpop.f32.mrb[0].mxu0
        %v6949 = vadd.f32 %v6564, %v6948
        %v6950 = vpop.f32.mrb[0].mxu0
        %v6951 = vand.u32 %v955, 4294901760
        %v6952 = vsub.f32 %v955, %v6951
        %6953 = vmatprep.mubr.f32.mxu0 %v6952
        %v6954 = vand.u32 %v954, 4294901760
        %v6955 = vsub.f32 %v954, %v6954
        %6956 = vmatmul.mubr.f32.gmra.mrb[0].mxu0 %v6955
        %v6957 = vpop.f32.mrb[0].mxu0
        %v6958 = vadd.f32 %v6571, %v6957
        %v6959 = vpop.f32.mrb[0].mxu0
        %v6960 = vand.u32 %v959, 4294901760
        %v6961 = vsub.f32 %v959, %v6960
        %6962 = vmatprep.mubr.f32.mxu0 %v6961
        %v6963 = vand.u32 %v958, 4294901760
        %v6964 = vsub.f32 %v958, %v6963
        %6965 = vmatmul.mubr.f32.gmra.mrb[0].mxu0 %v6964
        %v6966 = vpop.f32.mrb[0].mxu0
        %v6967 = vadd.f32 %v6578, %v6966
        %v6968 = vpop.f32.mrb[0].mxu0
        %v6969 = vand.u32 %v963, 4294901760
        %v6970 = vsub.f32 %v963, %v6969
        %6971 = vmatprep.mubr.f32.mxu0 %v6970
        %v6972 = vand.u32 %v962, 4294901760
        %v6973 = vsub.f32 %v962, %v6972
        %6974 = vmatmul.mubr.f32.gmra.mrb[0].mxu0 %v6973
        %v6975 = vpop.f32.mrb[0].mxu0
        %v6976 = vadd.f32 %v6585, %v6975
        %v6977 = vpop.f32.mrb[0].mxu0
        %v6978 = vand.u32 %v967, 4294901760
        %v6979 = vsub.f32 %v967, %v6978
        %6980 = vmatprep.mubr.f32.mxu0 %v6979
        %v6981 = vand.u32 %v966, 4294901760
        %v6982 = vsub.f32 %v966, %v6981
        %6983 = vmatmul.mubr.f32.gmra.mrb[0].mxu0 %v6982
        %v6984 = vpop.f32.mrb[0].mxu0
        %v6985 = vadd.f32 %v6592, %v6984
        %v6986 = vpop.f32.mrb[0].mxu0
        %v6987 = vand.u32 %v971, 4294901760
        %v6988 = vsub.f32 %v971, %v6987
        %6989 = vmatprep.mubr.f32.mxu0 %v6988
        %v6990 = vand.u32 %v970, 4294901760
        %v6991 = vsub.f32 %v970, %v6990
        %6992 = vmatmul.mubr.f32.gmra.mrb[0].mxu0 %v6991
        %v6993 = vpop.f32.mrb[0].mxu0
        %v6994 = vadd.f32 %v6599, %v6993
        %v6995 = vpop.f32.mrb[0].mxu0
        %v6996 = vand.u32 %v975, 4294901760
        %v6997 = vsub.f32 %v975, %v6996
        %6998 = vmatprep.mubr.f32.mxu0 %v6997
        %v6999 = vand.u32 %v974, 4294901760
        %v7000 = vsub.f32 %v974, %v6999
        %7001 = vmatmul.mubr.f32.gmra.mrb[0].mxu0 %v7000
        %v7002 = vpop.f32.mrb[0].mxu0
        %v7003 = vadd.f32 %v6606, %v7002
        %v7004 = vpop.f32.mrb[0].mxu0
        %v7005 = vand.u32 %v979, 4294901760
        %v7006 = vsub.f32 %v979, %v7005
        %7007 = vmatprep.mubr.f32.mxu0 %v7006
        %v7008 = vand.u32 %v978, 4294901760
        %v7009 = vsub.f32 %v978, %v7008
        %7010 = vmatmul.mubr.f32.gmra.mrb[0].mxu0 %v7009
        %v7011 = vpop.f32.mrb[0].mxu0
        %v7012 = vadd.f32 %v6613, %v7011
        %v7013 = vpop.f32.mrb[0].mxu0
        %v7014 = vand.u32 %v983, 4294901760
        %v7015 = vsub.f32 %v983, %v7014
        %7016 = vmatprep.mubr.f32.mxu0 %v7015
        %v7017 = vand.u32 %v982, 4294901760
        %v7018 = vsub.f32 %v982, %v7017
        %7019 = vmatmul.mubr.f32.gmra.mrb[0].mxu0 %v7018
        %v7020 = vpop.f32.mrb[0].mxu0
        %v7021 = vadd.f32 %v6620, %v7020
        %v7022 = vpop.f32.mrb[0].mxu0
        %v7023 = vand.u32 %v987, 4294901760
        %v7024 = vsub.f32 %v987, %v7023
        %7025 = vmatprep.mubr.f32.mxu0 %v7024
        %v7026 = vand.u32 %v986, 4294901760
        %v7027 = vsub.f32 %v986, %v7026
        %7028 = vmatmul.mubr.f32.gmra.mrb[0].mxu0 %v7027
        %v7029 = vpop.f32.mrb[0].mxu0
        %v7030 = vadd.f32 %v6627, %v7029
        %v7031 = vpop.f32.mrb[0].mxu0
        %v7032 = vand.u32 %v991, 4294901760
        %v7033 = vsub.f32 %v991, %v7032
        %7034 = vmatprep.mubr.f32.mxu0 %v7033
        %v7035 = vand.u32 %v990, 4294901760
        %v7036 = vsub.f32 %v990, %v7035
        %7037 = vmatmul.mubr.f32.gmra.mrb[0].mxu0 %v7036
        %v7038 = vpop.f32.mrb[0].mxu0
        %v7039 = vadd.f32 %v6634, %v7038
        %v7040 = vpop.f32.mrb[0].mxu0
        %v7041 = vand.u32 %v995, 4294901760
        %v7042 = vsub.f32 %v995, %v7041
        %7043 = vmatprep.mubr.f32.mxu0 %v7042
        %v7044 = vand.u32 %v994, 4294901760
        %v7045 = vsub.f32 %v994, %v7044
        %7046 = vmatmul.mubr.f32.gmra.mrb[0].mxu0 %v7045
        %v7047 = vpop.f32.mrb[0].mxu0
        %v7048 = vadd.f32 %v6641, %v7047
        %v7049 = vpop.f32.mrb[0].mxu0
        %v7050 = vand.u32 %v999, 4294901760
        %v7051 = vsub.f32 %v999, %v7050
        %7052 = vmatprep.mubr.f32.mxu0 %v7051
        %v7053 = vand.u32 %v998, 4294901760
        %v7054 = vsub.f32 %v998, %v7053
        %7055 = vmatmul.mubr.f32.gmra.mrb[0].mxu0 %v7054
        %v7056 = vpop.f32.mrb[0].mxu0
        %v7057 = vadd.f32 %v6648, %v7056
        %v7058 = vpop.f32.mrb[0].mxu0
        %v7059 = vand.u32 %v1003, 4294901760
        %v7060 = vsub.f32 %v1003, %v7059
        %7061 = vmatprep.mubr.f32.mxu0 %v7060
        %v7062 = vand.u32 %v1002, 4294901760
        %v7063 = vsub.f32 %v1002, %v7062
        %7064 = vmatmul.mubr.f32.gmra.mrb[0].mxu0 %v7063
        %v7065 = vpop.f32.mrb[0].mxu0
        %v7066 = vadd.f32 %v6655, %v7065
        %v7067 = vpop.f32.mrb[0].mxu0
        %v7068 = vand.u32 %v1007, 4294901760
        %v7069 = vsub.f32 %v1007, %v7068
        %7070 = vmatprep.mubr.f32.mxu0 %v7069
        %v7071 = vand.u32 %v1006, 4294901760
        %v7072 = vsub.f32 %v1006, %v7071
        %7073 = vmatmul.mubr.f32.gmra.mrb[0].mxu0 %v7072
        %v7074 = vpop.f32.mrb[0].mxu0
        %v7075 = vadd.f32 %v6662, %v7074
        %v7076 = vpop.f32.mrb[0].mxu0
        %v7077 = vand.u32 %v1011, 4294901760
        %v7078 = vsub.f32 %v1011, %v7077
        %7079 = vmatprep.mubr.f32.mxu0 %v7078
        %v7080 = vand.u32 %v1010, 4294901760
        %v7081 = vsub.f32 %v1010, %v7080
        %7082 = vmatmul.mubr.f32.gmra.mrb[0].mxu0 %v7081
        %v7083 = vpop.f32.mrb[0].mxu0
        %v7084 = vadd.f32 %v6669, %v7083
        %v7085 = vpop.f32.mrb[0].mxu0
        %v7086 = vand.u32 %v1015, 4294901760
        %v7087 = vsub.f32 %v1015, %v7086
        %7088 = vmatprep.mubr.f32.mxu0 %v7087
        %v7089 = vand.u32 %v1014, 4294901760
        %v7090 = vsub.f32 %v1014, %v7089
        %7091 = vmatmul.mubr.f32.gmra.mrb[0].mxu0 %v7090
        %v7092 = vpop.f32.mrb[0].mxu0
        %v7093 = vadd.f32 %v6676, %v7092
        %v7094 = vpop.f32.mrb[0].mxu0
        %7095 = vdwg.mxu0
        %7096 = vmatprep.subr.mxu0 0.0
        %v7097 = vand.u32 %v3023, 4294901760
        %7098 = vmatpush1.msra.mxu0 %v7097
        %7099 = vmatprep.subr.mxu0 0.0
        %v7100 = vand.u32 %v3024, 4294901760
        %7101 = vmatpush1.msra.mxu0 %v7100
        %7102 = vmatprep.subr.mxu0 0.0
        %v7103 = vand.u32 %v3025, 4294901760
        %7104 = vmatpush1.msra.mxu0 %v7103
        %7105 = vmatprep.subr.mxu0 0.0
        %v7106 = vand.u32 %v3026, 4294901760
        %7107 = vmatpush1.msra.mxu0 %v7106
        %7108 = vmatprep.subr.mxu0 0.0
        %v7109 = vand.u32 %v3027, 4294901760
        %7110 = vmatpush1.msra.mxu0 %v7109
        %7111 = vmatprep.subr.mxu0 0.0
        %v7112 = vand.u32 %v3028, 4294901760
        %7113 = vmatpush1.msra.mxu0 %v7112
        %7114 = vmatprep.subr.mxu0 0.0
        %v7115 = vand.u32 %v3029, 4294901760
        %7116 = vmatpush1.msra.mxu0 %v7115
        %7117 = vmatprep.subr.mxu0 0.0
        %v7118 = vand.u32 %v3030, 4294901760
        %7119 = vmatpush1.msra.mxu0 %v7118
        %7120 = vmatprep.subr.mxu0 0.0
        %v7121 = vand.u32 %v3031, 4294901760
        %7122 = vmatpush1.msra.mxu0 %v7121
        %7123 = vmatprep.subr.mxu0 0.0
        %v7124 = vand.u32 %v3032, 4294901760
        %7125 = vmatpush1.msra.mxu0 %v7124
        %7126 = vmatprep.subr.mxu0 0.0
        %v7127 = vand.u32 %v3033, 4294901760
        %7128 = vmatpush1.msra.mxu0 %v7127
        %7129 = vmatprep.subr.mxu0 0.0
        %v7130 = vand.u32 %v3034, 4294901760
        %7131 = vmatpush1.msra.mxu0 %v7130
        %7132 = vmatprep.subr.mxu0 0.0
        %v7133 = vand.u32 %v3035, 4294901760
        %7134 = vmatpush1.msra.mxu0 %v7133
        %7135 = vmatprep.subr.mxu0 0.0
        %v7136 = vand.u32 %v3036, 4294901760
        %7137 = vmatpush1.msra.mxu0 %v7136
        %7138 = vmatprep.subr.mxu0 0.0
        %v7139 = vand.u32 %v3037, 4294901760
        %7140 = vmatpush1.msra.mxu0 %v7139
        %7141 = vmatprep.subr.mxu0 0.0
        %v7142 = vand.u32 %v3038, 4294901760
        %7143 = vmatpush1.msra.mxu0 %v7142
        %7144 = vmatprep.subr.mxu0 0.0
        %v7145 = vand.u32 %v3039, 4294901760
        %7146 = vmatpush1.msra.mxu0 %v7145
        %7147 = vmatprep.subr.mxu0 0.0
        %v7148 = vand.u32 %v3040, 4294901760
        %7149 = vmatpush1.msra.mxu0 %v7148
        %7150 = vmatprep.subr.mxu0 0.0
        %v7151 = vand.u32 %v3041, 4294901760
        %7152 = vmatpush1.msra.mxu0 %v7151
        %7153 = vmatprep.subr.mxu0 0.0
        %v7154 = vand.u32 %v3042, 4294901760
        %7155 = vmatpush1.msra.mxu0 %v7154
        %7156 = vmatprep.subr.mxu0 0.0
        %v7157 = vand.u32 %v3043, 4294901760
        %7158 = vmatpush1.msra.mxu0 %v7157
        %7159 = vmatprep.subr.mxu0 0.0
        %v7160 = vand.u32 %v3044, 4294901760
        %7161 = vmatpush1.msra.mxu0 %v7160
        %7162 = vmatprep.subr.mxu0 0.0
        %v7163 = vand.u32 %v3045, 4294901760
        %7164 = vmatpush1.msra.mxu0 %v7163
        %7165 = vmatprep.subr.mxu0 0.0
        %v7166 = vand.u32 %v3046, 4294901760
        %7167 = vmatpush1.msra.mxu0 %v7166
        %7168 = vmatprep.subr.mxu0 0.0
        %v7169 = vand.u32 %v3047, 4294901760
        %7170 = vmatpush1.msra.mxu0 %v7169
        %7171 = vmatprep.subr.mxu0 0.0
        %v7172 = vand.u32 %v3048, 4294901760
        %7173 = vmatpush1.msra.mxu0 %v7172
        %7174 = vmatprep.subr.mxu0 0.0
        %v7175 = vand.u32 %v3049, 4294901760
        %7176 = vmatpush1.msra.mxu0 %v7175
        %7177 = vmatprep.subr.mxu0 0.0
        %v7178 = vand.u32 %v3050, 4294901760
        %7179 = vmatpush1.msra.mxu0 %v7178
        %7180 = vmatprep.subr.mxu0 0.0
        %v7181 = vand.u32 %v3051, 4294901760
        %7182 = vmatpush1.msra.mxu0 %v7181
        %7183 = vmatprep.subr.mxu0 0.0
        %v7184 = vand.u32 %v3052, 4294901760
        %7185 = vmatpush1.msra.mxu0 %v7184
        %7186 = vmatprep.subr.mxu0 0.0
        %v7187 = vand.u32 %v3053, 4294901760
        %7188 = vmatpush1.msra.mxu0 %v7187
        %7189 = vmatprep.subr.mxu0 0.0
        %v7190 = vand.u32 %v3054, 4294901760
        %7191 = vmatpush1.msra.mxu0 %v7190
        %v7192 = vand.u32 %v891, 4294901760
        %v7193 = vsub.f32 %v891, %v7192
        %v7194 = vand.u32 %v7193, 4294901760
        %7195 = vmatprep.mubr.f32.mxu0 %v7194
        %v7196 = vand.u32 %v890, 4294901760
        %v7197 = vsub.f32 %v890, %v7196
        %v7198 = vand.u32 %v7197, 4294901760
        %7199 = vmatmul.mubr.f32.gmra.mrb[0].mxu0 %v7198
        %v7200 = vpop.f32.mrb[0].mxu0
        %v7201 = vadd.f32 %v6814, %v7200
        %v7202 = vpop.f32.mrb[0].mxu0
        %v7203 = vand.u32 %v895, 4294901760
        %v7204 = vsub.f32 %v895, %v7203
        %v7205 = vand.u32 %v7204, 4294901760
        %7206 = vmatprep.mubr.f32.mxu0 %v7205
        %v7207 = vand.u32 %v894, 4294901760
        %v7208 = vsub.f32 %v894, %v7207
        %v7209 = vand.u32 %v7208, 4294901760
        %7210 = vmatmul.mubr.f32.gmra.mrb[0].mxu0 %v7209
        %v7211 = vpop.f32.mrb[0].mxu0
        %v7212 = vadd.f32 %v6823, %v7211
        %v7213 = vpop.f32.mrb[0].mxu0
        %v7214 = vand.u32 %v899, 4294901760
        %v7215 = vsub.f32 %v899, %v7214
        %v7216 = vand.u32 %v7215, 4294901760
        %7217 = vmatprep.mubr.f32.mxu0 %v7216
        %v7218 = vand.u32 %v898, 4294901760
        %v7219 = vsub.f32 %v898, %v7218
        %v7220 = vand.u32 %v7219, 4294901760
        %7221 = vmatmul.mubr.f32.gmra.mrb[0].mxu0 %v7220
        %v7222 = vpop.f32.mrb[0].mxu0
        %v7223 = vadd.f32 %v6832, %v7222
        %v7224 = vpop.f32.mrb[0].mxu0
        %v7225 = vand.u32 %v903, 4294901760
        %v7226 = vsub.f32 %v903, %v7225
        %v7227 = vand.u32 %v7226, 4294901760
        %7228 = vmatprep.mubr.f32.mxu0 %v7227
        %v7229 = vand.u32 %v902, 4294901760
        %v7230 = vsub.f32 %v902, %v7229
        %v7231 = vand.u32 %v7230, 4294901760
        %7232 = vmatmul.mubr.f32.gmra.mrb[0].mxu0 %v7231
        %v7233 = vpop.f32.mrb[0].mxu0
        %v7234 = vadd.f32 %v6841, %v7233
        %v7235 = vpop.f32.mrb[0].mxu0
        %v7236 = vand.u32 %v907, 4294901760
        %v7237 = vsub.f32 %v907, %v7236
        %v7238 = vand.u32 %v7237, 4294901760
        %7239 = vmatprep.mubr.f32.mxu0 %v7238
        %v7240 = vand.u32 %v906, 4294901760
        %v7241 = vsub.f32 %v906, %v7240
        %v7242 = vand.u32 %v7241, 4294901760
        %7243 = vmatmul.mubr.f32.gmra.mrb[0].mxu0 %v7242
        %v7244 = vpop.f32.mrb[0].mxu0
        %v7245 = vadd.f32 %v6850, %v7244
        %v7246 = vpop.f32.mrb[0].mxu0
        %v7247 = vand.u32 %v911, 4294901760
        %v7248 = vsub.f32 %v911, %v7247
        %v7249 = vand.u32 %v7248, 4294901760
        %7250 = vmatprep.mubr.f32.mxu0 %v7249
        %v7251 = vand.u32 %v910, 4294901760
        %v7252 = vsub.f32 %v910, %v7251
        %v7253 = vand.u32 %v7252, 4294901760
        %7254 = vmatmul.mubr.f32.gmra.mrb[0].mxu0 %v7253
        %v7255 = vpop.f32.mrb[0].mxu0
        %v7256 = vadd.f32 %v6859, %v7255
        %v7257 = vpop.f32.mrb[0].mxu0
        %v7258 = vand.u32 %v915, 4294901760
        %v7259 = vsub.f32 %v915, %v7258
        %v7260 = vand.u32 %v7259, 4294901760
        %7261 = vmatprep.mubr.f32.mxu0 %v7260
        %v7262 = vand.u32 %v914, 4294901760
        %v7263 = vsub.f32 %v914, %v7262
        %v7264 = vand.u32 %v7263, 4294901760
        %7265 = vmatmul.mubr.f32.gmra.mrb[0].mxu0 %v7264
        %v7266 = vpop.f32.mrb[0].mxu0
        %v7267 = vadd.f32 %v6868, %v7266
        %v7268 = vpop.f32.mrb[0].mxu0
        %v7269 = vand.u32 %v919, 4294901760
        %v7270 = vsub.f32 %v919, %v7269
        %v7271 = vand.u32 %v7270, 4294901760
        %7272 = vmatprep.mubr.f32.mxu0 %v7271
        %v7273 = vand.u32 %v918, 4294901760
        %v7274 = vsub.f32 %v918, %v7273
        %v7275 = vand.u32 %v7274, 4294901760
        %7276 = vmatmul.mubr.f32.gmra.mrb[0].mxu0 %v7275
        %v7277 = vpop.f32.mrb[0].mxu0
        %v7278 = vadd.f32 %v6877, %v7277
        %v7279 = vpop.f32.mrb[0].mxu0
        %v7280 = vand.u32 %v923, 4294901760
        %v7281 = vsub.f32 %v923, %v7280
        %v7282 = vand.u32 %v7281, 4294901760
        %7283 = vmatprep.mubr.f32.mxu0 %v7282
        %v7284 = vand.u32 %v922, 4294901760
        %v7285 = vsub.f32 %v922, %v7284
        %v7286 = vand.u32 %v7285, 4294901760
        %7287 = vmatmul.mubr.f32.gmra.mrb[0].mxu0 %v7286
        %v7288 = vpop.f32.mrb[0].mxu0
        %v7289 = vadd.f32 %v6886, %v7288
        %v7290 = vpop.f32.mrb[0].mxu0
        %v7291 = vand.u32 %v927, 4294901760
        %v7292 = vsub.f32 %v927, %v7291
        %v7293 = vand.u32 %v7292, 4294901760
        %7294 = vmatprep.mubr.f32.mxu0 %v7293
        %v7295 = vand.u32 %v926, 4294901760
        %v7296 = vsub.f32 %v926, %v7295
        %v7297 = vand.u32 %v7296, 4294901760
        %7298 = vmatmul.mubr.f32.gmra.mrb[0].mxu0 %v7297
        %v7299 = vpop.f32.mrb[0].mxu0
        %v7300 = vadd.f32 %v6895, %v7299
        %v7301 = vpop.f32.mrb[0].mxu0
        %v7302 = vand.u32 %v931, 4294901760
        %v7303 = vsub.f32 %v931, %v7302
        %v7304 = vand.u32 %v7303, 4294901760
        %7305 = vmatprep.mubr.f32.mxu0 %v7304
        %v7306 = vand.u32 %v930, 4294901760
        %v7307 = vsub.f32 %v930, %v7306
        %v7308 = vand.u32 %v7307, 4294901760
        %7309 = vmatmul.mubr.f32.gmra.mrb[0].mxu0 %v7308
        %v7310 = vpop.f32.mrb[0].mxu0
        %v7311 = vadd.f32 %v6904, %v7310
        %v7312 = vpop.f32.mrb[0].mxu0
        %v7313 = vand.u32 %v935, 4294901760
        %v7314 = vsub.f32 %v935, %v7313
        %v7315 = vand.u32 %v7314, 4294901760
        %7316 = vmatprep.mubr.f32.mxu0 %v7315
        %v7317 = vand.u32 %v934, 4294901760
        %v7318 = vsub.f32 %v934, %v7317
        %v7319 = vand.u32 %v7318, 4294901760
        %7320 = vmatmul.mubr.f32.gmra.mrb[0].mxu0 %v7319
        %v7321 = vpop.f32.mrb[0].mxu0
        %v7322 = vadd.f32 %v6913, %v7321
        %v7323 = vpop.f32.mrb[0].mxu0
        %v7324 = vand.u32 %v939, 4294901760
        %v7325 = vsub.f32 %v939, %v7324
        %v7326 = vand.u32 %v7325, 4294901760
        %7327 = vmatprep.mubr.f32.mxu0 %v7326
        %v7328 = vand.u32 %v938, 4294901760
        %v7329 = vsub.f32 %v938, %v7328
        %v7330 = vand.u32 %v7329, 4294901760
        %7331 = vmatmul.mubr.f32.gmra.mrb[0].mxu0 %v7330
        %v7332 = vpop.f32.mrb[0].mxu0
        %v7333 = vadd.f32 %v6922, %v7332
        %v7334 = vpop.f32.mrb[0].mxu0
        %v7335 = vand.u32 %v943, 4294901760
        %v7336 = vsub.f32 %v943, %v7335
        %v7337 = vand.u32 %v7336, 4294901760
        %7338 = vmatprep.mubr.f32.mxu0 %v7337
        %v7339 = vand.u32 %v942, 4294901760
        %v7340 = vsub.f32 %v942, %v7339
        %v7341 = vand.u32 %v7340, 4294901760
        %7342 = vmatmul.mubr.f32.gmra.mrb[0].mxu0 %v7341
        %v7343 = vpop.f32.mrb[0].mxu0
        %v7344 = vadd.f32 %v6931, %v7343
        %v7345 = vpop.f32.mrb[0].mxu0
        %v7346 = vand.u32 %v947, 4294901760
        %v7347 = vsub.f32 %v947, %v7346
        %v7348 = vand.u32 %v7347, 4294901760
        %7349 = vmatprep.mubr.f32.mxu0 %v7348
        %v7350 = vand.u32 %v946, 4294901760
        %v7351 = vsub.f32 %v946, %v7350
        %v7352 = vand.u32 %v7351, 4294901760
        %7353 = vmatmul.mubr.f32.gmra.mrb[0].mxu0 %v7352
        %v7354 = vpop.f32.mrb[0].mxu0
        %v7355 = vadd.f32 %v6940, %v7354
        %v7356 = vpop.f32.mrb[0].mxu0
        %v7357 = vand.u32 %v951, 4294901760
        %v7358 = vsub.f32 %v951, %v7357
        %v7359 = vand.u32 %v7358, 4294901760
        %7360 = vmatprep.mubr.f32.mxu0 %v7359
        %v7361 = vand.u32 %v950, 4294901760
        %v7362 = vsub.f32 %v950, %v7361
        %v7363 = vand.u32 %v7362, 4294901760
        %7364 = vmatmul.mubr.f32.gmra.mrb[0].mxu0 %v7363
        %v7365 = vpop.f32.mrb[0].mxu0
        %v7366 = vadd.f32 %v6949, %v7365
        %v7367 = vpop.f32.mrb[0].mxu0
        %v7368 = vand.u32 %v955, 4294901760
        %v7369 = vsub.f32 %v955, %v7368
        %v7370 = vand.u32 %v7369, 4294901760
        %7371 = vmatprep.mubr.f32.mxu0 %v7370
        %v7372 = vand.u32 %v954, 4294901760
        %v7373 = vsub.f32 %v954, %v7372
        %v7374 = vand.u32 %v7373, 4294901760
        %7375 = vmatmul.mubr.f32.gmra.mrb[0].mxu0 %v7374
        %v7376 = vpop.f32.mrb[0].mxu0
        %v7377 = vadd.f32 %v6958, %v7376
        %v7378 = vpop.f32.mrb[0].mxu0
        %v7379 = vand.u32 %v959, 4294901760
        %v7380 = vsub.f32 %v959, %v7379
        %v7381 = vand.u32 %v7380, 4294901760
        %7382 = vmatprep.mubr.f32.mxu0 %v7381
        %v7383 = vand.u32 %v958, 4294901760
        %v7384 = vsub.f32 %v958, %v7383
        %v7385 = vand.u32 %v7384, 4294901760
        %7386 = vmatmul.mubr.f32.gmra.mrb[0].mxu0 %v7385
        %v7387 = vpop.f32.mrb[0].mxu0
        %v7388 = vadd.f32 %v6967, %v7387
        %v7389 = vpop.f32.mrb[0].mxu0
        %v7390 = vand.u32 %v963, 4294901760
        %v7391 = vsub.f32 %v963, %v7390
        %v7392 = vand.u32 %v7391, 4294901760
        %7393 = vmatprep.mubr.f32.mxu0 %v7392
        %v7394 = vand.u32 %v962, 4294901760
        %v7395 = vsub.f32 %v962, %v7394
        %v7396 = vand.u32 %v7395, 4294901760
        %7397 = vmatmul.mubr.f32.gmra.mrb[0].mxu0 %v7396
        %v7398 = vpop.f32.mrb[0].mxu0
        %v7399 = vadd.f32 %v6976, %v7398
        %v7400 = vpop.f32.mrb[0].mxu0
        %v7401 = vand.u32 %v967, 4294901760
        %v7402 = vsub.f32 %v967, %v7401
        %v7403 = vand.u32 %v7402, 4294901760
        %7404 = vmatprep.mubr.f32.mxu0 %v7403
        %v7405 = vand.u32 %v966, 4294901760
        %v7406 = vsub.f32 %v966, %v7405
        %v7407 = vand.u32 %v7406, 4294901760
        %7408 = vmatmul.mubr.f32.gmra.mrb[0].mxu0 %v7407
        %v7409 = vpop.f32.mrb[0].mxu0
        %v7410 = vadd.f32 %v6985, %v7409
        %v7411 = vpop.f32.mrb[0].mxu0
        %v7412 = vand.u32 %v971, 4294901760
        %v7413 = vsub.f32 %v971, %v7412
        %v7414 = vand.u32 %v7413, 4294901760
        %7415 = vmatprep.mubr.f32.mxu0 %v7414
        %v7416 = vand.u32 %v970, 4294901760
        %v7417 = vsub.f32 %v970, %v7416
        %v7418 = vand.u32 %v7417, 4294901760
        %7419 = vmatmul.mubr.f32.gmra.mrb[0].mxu0 %v7418
        %v7420 = vpop.f32.mrb[0].mxu0
        %v7421 = vadd.f32 %v6994, %v7420
        %v7422 = vpop.f32.mrb[0].mxu0
        %v7423 = vand.u32 %v975, 4294901760
        %v7424 = vsub.f32 %v975, %v7423
        %v7425 = vand.u32 %v7424, 4294901760
        %7426 = vmatprep.mubr.f32.mxu0 %v7425
        %v7427 = vand.u32 %v974, 4294901760
        %v7428 = vsub.f32 %v974, %v7427
        %v7429 = vand.u32 %v7428, 4294901760
        %7430 = vmatmul.mubr.f32.gmra.mrb[0].mxu0 %v7429
        %v7431 = vpop.f32.mrb[0].mxu0
        %v7432 = vadd.f32 %v7003, %v7431
        %v7433 = vpop.f32.mrb[0].mxu0
        %v7434 = vand.u32 %v979, 4294901760
        %v7435 = vsub.f32 %v979, %v7434
        %v7436 = vand.u32 %v7435, 4294901760
        %7437 = vmatprep.mubr.f32.mxu0 %v7436
        %v7438 = vand.u32 %v978, 4294901760
        %v7439 = vsub.f32 %v978, %v7438
        %v7440 = vand.u32 %v7439, 4294901760
        %7441 = vmatmul.mubr.f32.gmra.mrb[0].mxu0 %v7440
        %v7442 = vpop.f32.mrb[0].mxu0
        %v7443 = vadd.f32 %v7012, %v7442
        %v7444 = vpop.f32.mrb[0].mxu0
        %v7445 = vand.u32 %v983, 4294901760
        %v7446 = vsub.f32 %v983, %v7445
        %v7447 = vand.u32 %v7446, 4294901760
        %7448 = vmatprep.mubr.f32.mxu0 %v7447
        %v7449 = vand.u32 %v982, 4294901760
        %v7450 = vsub.f32 %v982, %v7449
        %v7451 = vand.u32 %v7450, 4294901760
        %7452 = vmatmul.mubr.f32.gmra.mrb[0].mxu0 %v7451
        %v7453 = vpop.f32.mrb[0].mxu0
        %v7454 = vadd.f32 %v7021, %v7453
        %v7455 = vpop.f32.mrb[0].mxu0
        %v7456 = vand.u32 %v987, 4294901760
        %v7457 = vsub.f32 %v987, %v7456
        %v7458 = vand.u32 %v7457, 4294901760
        %7459 = vmatprep.mubr.f32.mxu0 %v7458
        %v7460 = vand.u32 %v986, 4294901760
        %v7461 = vsub.f32 %v986, %v7460
        %v7462 = vand.u32 %v7461, 4294901760
        %7463 = vmatmul.mubr.f32.gmra.mrb[0].mxu0 %v7462
        %v7464 = vpop.f32.mrb[0].mxu0
        %v7465 = vadd.f32 %v7030, %v7464
        %v7466 = vpop.f32.mrb[0].mxu0
        %v7467 = vand.u32 %v991, 4294901760
        %v7468 = vsub.f32 %v991, %v7467
        %v7469 = vand.u32 %v7468, 4294901760
        %7470 = vmatprep.mubr.f32.mxu0 %v7469
        %v7471 = vand.u32 %v990, 4294901760
        %v7472 = vsub.f32 %v990, %v7471
        %v7473 = vand.u32 %v7472, 4294901760
        %7474 = vmatmul.mubr.f32.gmra.mrb[0].mxu0 %v7473
        %v7475 = vpop.f32.mrb[0].mxu0
        %v7476 = vadd.f32 %v7039, %v7475
        %v7477 = vpop.f32.mrb[0].mxu0
        %v7478 = vand.u32 %v995, 4294901760
        %v7479 = vsub.f32 %v995, %v7478
        %v7480 = vand.u32 %v7479, 4294901760
        %7481 = vmatprep.mubr.f32.mxu0 %v7480
        %v7482 = vand.u32 %v994, 4294901760
        %v7483 = vsub.f32 %v994, %v7482
        %v7484 = vand.u32 %v7483, 4294901760
        %7485 = vmatmul.mubr.f32.gmra.mrb[0].mxu0 %v7484
        %v7486 = vpop.f32.mrb[0].mxu0
        %v7487 = vadd.f32 %v7048, %v7486
        %v7488 = vpop.f32.mrb[0].mxu0
        %v7489 = vand.u32 %v999, 4294901760
        %v7490 = vsub.f32 %v999, %v7489
        %v7491 = vand.u32 %v7490, 4294901760
        %7492 = vmatprep.mubr.f32.mxu0 %v7491
        %v7493 = vand.u32 %v998, 4294901760
        %v7494 = vsub.f32 %v998, %v7493
        %v7495 = vand.u32 %v7494, 4294901760
        %7496 = vmatmul.mubr.f32.gmra.mrb[0].mxu0 %v7495
        %v7497 = vpop.f32.mrb[0].mxu0
        %v7498 = vadd.f32 %v7057, %v7497
        %v7499 = vpop.f32.mrb[0].mxu0
        %v7500 = vand.u32 %v1003, 4294901760
        %v7501 = vsub.f32 %v1003, %v7500
        %v7502 = vand.u32 %v7501, 4294901760
        %7503 = vmatprep.mubr.f32.mxu0 %v7502
        %v7504 = vand.u32 %v1002, 4294901760
        %v7505 = vsub.f32 %v1002, %v7504
        %v7506 = vand.u32 %v7505, 4294901760
        %7507 = vmatmul.mubr.f32.gmra.mrb[0].mxu0 %v7506
        %v7508 = vpop.f32.mrb[0].mxu0
        %v7509 = vadd.f32 %v7066, %v7508
        %v7510 = vpop.f32.mrb[0].mxu0
        %v7511 = vand.u32 %v1007, 4294901760
        %v7512 = vsub.f32 %v1007, %v7511
        %v7513 = vand.u32 %v7512, 4294901760
        %7514 = vmatprep.mubr.f32.mxu0 %v7513
        %v7515 = vand.u32 %v1006, 4294901760
        %v7516 = vsub.f32 %v1006, %v7515
        %v7517 = vand.u32 %v7516, 4294901760
        %7518 = vmatmul.mubr.f32.gmra.mrb[0].mxu0 %v7517
        %v7519 = vpop.f32.mrb[0].mxu0
        %v7520 = vadd.f32 %v7075, %v7519
        %v7521 = vpop.f32.mrb[0].mxu0
        %v7522 = vand.u32 %v1011, 4294901760
        %v7523 = vsub.f32 %v1011, %v7522
        %v7524 = vand.u32 %v7523, 4294901760
        %7525 = vmatprep.mubr.f32.mxu0 %v7524
        %v7526 = vand.u32 %v1010, 4294901760
        %v7527 = vsub.f32 %v1010, %v7526
        %v7528 = vand.u32 %v7527, 4294901760
        %7529 = vmatmul.mubr.f32.gmra.mrb[0].mxu0 %v7528
        %v7530 = vpop.f32.mrb[0].mxu0
        %v7531 = vadd.f32 %v7084, %v7530
        %v7532 = vpop.f32.mrb[0].mxu0
        %v7533 = vand.u32 %v1015, 4294901760
        %v7534 = vsub.f32 %v1015, %v7533
        %v7535 = vand.u32 %v7534, 4294901760
        %7536 = vmatprep.mubr.f32.mxu0 %v7535
        %v7537 = vand.u32 %v1014, 4294901760
        %v7538 = vsub.f32 %v1014, %v7537
        %v7539 = vand.u32 %v7538, 4294901760
        %7540 = vmatmul.mubr.f32.gmra.mrb[0].mxu0 %v7539
        %v7541 = vpop.f32.mrb[0].mxu0
        %v7542 = vadd.f32 %v7093, %v7541
        %v7543 = vpop.f32.mrb[0].mxu0
        %7544 = vdwg.mxu0
        %7545 = vmatprep.subr.mxu0 0.0
        %v7546 = vand.u32 %v3023, 4294901760
        %v7547 = vsub.f32 %v3023, %v7546
        %v7548 = vand.u32 %v7547, 4294901760
        %7549 = vmatpush1.msra.mxu0 %v7548
        %7550 = vmatprep.subr.mxu0 0.0
        %v7551 = vand.u32 %v3024, 4294901760
        %v7552 = vsub.f32 %v3024, %v7551
        %v7553 = vand.u32 %v7552, 4294901760
        %7554 = vmatpush1.msra.mxu0 %v7553
        %7555 = vmatprep.subr.mxu0 0.0
        %v7556 = vand.u32 %v3025, 4294901760
        %v7557 = vsub.f32 %v3025, %v7556
        %v7558 = vand.u32 %v7557, 4294901760
        %7559 = vmatpush1.msra.mxu0 %v7558
        %7560 = vmatprep.subr.mxu0 0.0
        %v7561 = vand.u32 %v3026, 4294901760
        %v7562 = vsub.f32 %v3026, %v7561
        %v7563 = vand.u32 %v7562, 4294901760
        %7564 = vmatpush1.msra.mxu0 %v7563
        %7565 = vmatprep.subr.mxu0 0.0
        %v7566 = vand.u32 %v3027, 4294901760
        %v7567 = vsub.f32 %v3027, %v7566
        %v7568 = vand.u32 %v7567, 4294901760
        %7569 = vmatpush1.msra.mxu0 %v7568
        %7570 = vmatprep.subr.mxu0 0.0
        %v7571 = vand.u32 %v3028, 4294901760
        %v7572 = vsub.f32 %v3028, %v7571
        %v7573 = vand.u32 %v7572, 4294901760
        %7574 = vmatpush1.msra.mxu0 %v7573
        %7575 = vmatprep.subr.mxu0 0.0
        %v7576 = vand.u32 %v3029, 4294901760
        %v7577 = vsub.f32 %v3029, %v7576
        %v7578 = vand.u32 %v7577, 4294901760
        %7579 = vmatpush1.msra.mxu0 %v7578
        %7580 = vmatprep.subr.mxu0 0.0
        %v7581 = vand.u32 %v3030, 4294901760
        %v7582 = vsub.f32 %v3030, %v7581
        %v7583 = vand.u32 %v7582, 4294901760
        %7584 = vmatpush1.msra.mxu0 %v7583
        %7585 = vmatprep.subr.mxu0 0.0
        %v7586 = vand.u32 %v3031, 4294901760
        %v7587 = vsub.f32 %v3031, %v7586
        %v7588 = vand.u32 %v7587, 4294901760
        %7589 = vmatpush1.msra.mxu0 %v7588
        %7590 = vmatprep.subr.mxu0 0.0
        %v7591 = vand.u32 %v3032, 4294901760
        %v7592 = vsub.f32 %v3032, %v7591
        %v7593 = vand.u32 %v7592, 4294901760
        %7594 = vmatpush1.msra.mxu0 %v7593
        %7595 = vmatprep.subr.mxu0 0.0
        %v7596 = vand.u32 %v3033, 4294901760
        %v7597 = vsub.f32 %v3033, %v7596
        %v7598 = vand.u32 %v7597, 4294901760
        %7599 = vmatpush1.msra.mxu0 %v7598
        %7600 = vmatprep.subr.mxu0 0.0
        %v7601 = vand.u32 %v3034, 4294901760
        %v7602 = vsub.f32 %v3034, %v7601
        %v7603 = vand.u32 %v7602, 4294901760
        %7604 = vmatpush1.msra.mxu0 %v7603
        %7605 = vmatprep.subr.mxu0 0.0
        %v7606 = vand.u32 %v3035, 4294901760
        %v7607 = vsub.f32 %v3035, %v7606
        %v7608 = vand.u32 %v7607, 4294901760
        %7609 = vmatpush1.msra.mxu0 %v7608
        %7610 = vmatprep.subr.mxu0 0.0
        %v7611 = vand.u32 %v3036, 4294901760
        %v7612 = vsub.f32 %v3036, %v7611
        %v7613 = vand.u32 %v7612, 4294901760
        %7614 = vmatpush1.msra.mxu0 %v7613
        %7615 = vmatprep.subr.mxu0 0.0
        %v7616 = vand.u32 %v3037, 4294901760
        %v7617 = vsub.f32 %v3037, %v7616
        %v7618 = vand.u32 %v7617, 4294901760
        %7619 = vmatpush1.msra.mxu0 %v7618
        %7620 = vmatprep.subr.mxu0 0.0
        %v7621 = vand.u32 %v3038, 4294901760
        %v7622 = vsub.f32 %v3038, %v7621
        %v7623 = vand.u32 %v7622, 4294901760
        %7624 = vmatpush1.msra.mxu0 %v7623
        %7625 = vmatprep.subr.mxu0 0.0
        %v7626 = vand.u32 %v3039, 4294901760
        %v7627 = vsub.f32 %v3039, %v7626
        %v7628 = vand.u32 %v7627, 4294901760
        %7629 = vmatpush1.msra.mxu0 %v7628
        %7630 = vmatprep.subr.mxu0 0.0
        %v7631 = vand.u32 %v3040, 4294901760
        %v7632 = vsub.f32 %v3040, %v7631
        %v7633 = vand.u32 %v7632, 4294901760
        %7634 = vmatpush1.msra.mxu0 %v7633
        %7635 = vmatprep.subr.mxu0 0.0
        %v7636 = vand.u32 %v3041, 4294901760
        %v7637 = vsub.f32 %v3041, %v7636
        %v7638 = vand.u32 %v7637, 4294901760
        %7639 = vmatpush1.msra.mxu0 %v7638
        %7640 = vmatprep.subr.mxu0 0.0
        %v7641 = vand.u32 %v3042, 4294901760
        %v7642 = vsub.f32 %v3042, %v7641
        %v7643 = vand.u32 %v7642, 4294901760
        %7644 = vmatpush1.msra.mxu0 %v7643
        %7645 = vmatprep.subr.mxu0 0.0
        %v7646 = vand.u32 %v3043, 4294901760
        %v7647 = vsub.f32 %v3043, %v7646
        %v7648 = vand.u32 %v7647, 4294901760
        %7649 = vmatpush1.msra.mxu0 %v7648
        %7650 = vmatprep.subr.mxu0 0.0
        %v7651 = vand.u32 %v3044, 4294901760
        %v7652 = vsub.f32 %v3044, %v7651
        %v7653 = vand.u32 %v7652, 4294901760
        %7654 = vmatpush1.msra.mxu0 %v7653
        %7655 = vmatprep.subr.mxu0 0.0
        %v7656 = vand.u32 %v3045, 4294901760
        %v7657 = vsub.f32 %v3045, %v7656
        %v7658 = vand.u32 %v7657, 4294901760
        %7659 = vmatpush1.msra.mxu0 %v7658
        %7660 = vmatprep.subr.mxu0 0.0
        %v7661 = vand.u32 %v3046, 4294901760
        %v7662 = vsub.f32 %v3046, %v7661
        %v7663 = vand.u32 %v7662, 4294901760
        %7664 = vmatpush1.msra.mxu0 %v7663
        %7665 = vmatprep.subr.mxu0 0.0
        %v7666 = vand.u32 %v3047, 4294901760
        %v7667 = vsub.f32 %v3047, %v7666
        %v7668 = vand.u32 %v7667, 4294901760
        %7669 = vmatpush1.msra.mxu0 %v7668
        %7670 = vmatprep.subr.mxu0 0.0
        %v7671 = vand.u32 %v3048, 4294901760
        %v7672 = vsub.f32 %v3048, %v7671
        %v7673 = vand.u32 %v7672, 4294901760
        %7674 = vmatpush1.msra.mxu0 %v7673
        %7675 = vmatprep.subr.mxu0 0.0
        %v7676 = vand.u32 %v3049, 4294901760
        %v7677 = vsub.f32 %v3049, %v7676
        %v7678 = vand.u32 %v7677, 4294901760
        %7679 = vmatpush1.msra.mxu0 %v7678
        %7680 = vmatprep.subr.mxu0 0.0
        %v7681 = vand.u32 %v3050, 4294901760
        %v7682 = vsub.f32 %v3050, %v7681
        %v7683 = vand.u32 %v7682, 4294901760
        %7684 = vmatpush1.msra.mxu0 %v7683
        %7685 = vmatprep.subr.mxu0 0.0
        %v7686 = vand.u32 %v3051, 4294901760
        %v7687 = vsub.f32 %v3051, %v7686
        %v7688 = vand.u32 %v7687, 4294901760
        %7689 = vmatpush1.msra.mxu0 %v7688
        %7690 = vmatprep.subr.mxu0 0.0
        %v7691 = vand.u32 %v3052, 4294901760
        %v7692 = vsub.f32 %v3052, %v7691
        %v7693 = vand.u32 %v7692, 4294901760
        %7694 = vmatpush1.msra.mxu0 %v7693
        %7695 = vmatprep.subr.mxu0 0.0
        %v7696 = vand.u32 %v3053, 4294901760
        %v7697 = vsub.f32 %v3053, %v7696
        %v7698 = vand.u32 %v7697, 4294901760
        %7699 = vmatpush1.msra.mxu0 %v7698
        %7700 = vmatprep.subr.mxu0 0.0
        %v7701 = vand.u32 %v3054, 4294901760
        %v7702 = vsub.f32 %v3054, %v7701
        %v7703 = vand.u32 %v7702, 4294901760
        %7704 = vmatpush1.msra.mxu0 %v7703
        %v7705 = vand.u32 %v891, 4294901760
        %7706 = vmatprep.mubr.f32.mxu0 %v7705
        %v7707 = vand.u32 %v890, 4294901760
        %7708 = vmatmul.mubr.f32.gmra.mrb[0].mxu0 %v7707
        %v7709 = vpop.f32.mrb[0].mxu0
        %v7710 = vadd.f32 %v7201, %v7709
        %v7711 = vpop.f32.mrb[0].mxu0
        %v7712 = vand.u32 %v895, 4294901760
        %7713 = vmatprep.mubr.f32.mxu0 %v7712
        %v7714 = vand.u32 %v894, 4294901760
        %7715 = vmatmul.mubr.f32.gmra.mrb[0].mxu0 %v7714
        %v7716 = vpop.f32.mrb[0].mxu0
        %v7717 = vadd.f32 %v7212, %v7716
        %v7718 = vpop.f32.mrb[0].mxu0
        %v7719 = vand.u32 %v899, 4294901760
        %7720 = vmatprep.mubr.f32.mxu0 %v7719
        %v7721 = vand.u32 %v898, 4294901760
        %7722 = vmatmul.mubr.f32.gmra.mrb[0].mxu0 %v7721
        %v7723 = vpop.f32.mrb[0].mxu0
        %v7724 = vadd.f32 %v7223, %v7723
        %v7725 = vpop.f32.mrb[0].mxu0
        %v7726 = vand.u32 %v903, 4294901760
        %7727 = vmatprep.mubr.f32.mxu0 %v7726
        %v7728 = vand.u32 %v902, 4294901760
        %7729 = vmatmul.mubr.f32.gmra.mrb[0].mxu0 %v7728
        %v7730 = vpop.f32.mrb[0].mxu0
        %v7731 = vadd.f32 %v7234, %v7730
        %v7732 = vpop.f32.mrb[0].mxu0
        %v7733 = vand.u32 %v907, 4294901760
        %7734 = vmatprep.mubr.f32.mxu0 %v7733
        %v7735 = vand.u32 %v906, 4294901760
        %7736 = vmatmul.mubr.f32.gmra.mrb[0].mxu0 %v7735
        %v7737 = vpop.f32.mrb[0].mxu0
        %v7738 = vadd.f32 %v7245, %v7737
        %v7739 = vpop.f32.mrb[0].mxu0
        %v7740 = vand.u32 %v911, 4294901760
        %7741 = vmatprep.mubr.f32.mxu0 %v7740
        %v7742 = vand.u32 %v910, 4294901760
        %7743 = vmatmul.mubr.f32.gmra.mrb[0].mxu0 %v7742
        %v7744 = vpop.f32.mrb[0].mxu0
        %v7745 = vadd.f32 %v7256, %v7744
        %v7746 = vpop.f32.mrb[0].mxu0
        %v7747 = vand.u32 %v915, 4294901760
        %7748 = vmatprep.mubr.f32.mxu0 %v7747
        %v7749 = vand.u32 %v914, 4294901760
        %7750 = vmatmul.mubr.f32.gmra.mrb[0].mxu0 %v7749
        %v7751 = vpop.f32.mrb[0].mxu0
        %v7752 = vadd.f32 %v7267, %v7751
        %v7753 = vpop.f32.mrb[0].mxu0
        %v7754 = vand.u32 %v919, 4294901760
        %7755 = vmatprep.mubr.f32.mxu0 %v7754
        %v7756 = vand.u32 %v918, 4294901760
        %7757 = vmatmul.mubr.f32.gmra.mrb[0].mxu0 %v7756
        %v7758 = vpop.f32.mrb[0].mxu0
        %v7759 = vadd.f32 %v7278, %v7758
        %v7760 = vpop.f32.mrb[0].mxu0
        %v7761 = vand.u32 %v923, 4294901760
        %7762 = vmatprep.mubr.f32.mxu0 %v7761
        %v7763 = vand.u32 %v922, 4294901760
        %7764 = vmatmul.mubr.f32.gmra.mrb[0].mxu0 %v7763
        %v7765 = vpop.f32.mrb[0].mxu0
        %v7766 = vadd.f32 %v7289, %v7765
        %v7767 = vpop.f32.mrb[0].mxu0
        %v7768 = vand.u32 %v927, 4294901760
        %7769 = vmatprep.mubr.f32.mxu0 %v7768
        %v7770 = vand.u32 %v926, 4294901760
        %7771 = vmatmul.mubr.f32.gmra.mrb[0].mxu0 %v7770
        %v7772 = vpop.f32.mrb[0].mxu0
        %v7773 = vadd.f32 %v7300, %v7772
        %v7774 = vpop.f32.mrb[0].mxu0
        %v7775 = vand.u32 %v931, 4294901760
        %7776 = vmatprep.mubr.f32.mxu0 %v7775
        %v7777 = vand.u32 %v930, 4294901760
        %7778 = vmatmul.mubr.f32.gmra.mrb[0].mxu0 %v7777
        %v7779 = vpop.f32.mrb[0].mxu0
        %v7780 = vadd.f32 %v7311, %v7779
        %v7781 = vpop.f32.mrb[0].mxu0
        %v7782 = vand.u32 %v935, 4294901760
        %7783 = vmatprep.mubr.f32.mxu0 %v7782
        %v7784 = vand.u32 %v934, 4294901760
        %7785 = vmatmul.mubr.f32.gmra.mrb[0].mxu0 %v7784
        %v7786 = vpop.f32.mrb[0].mxu0
        %v7787 = vadd.f32 %v7322, %v7786
        %v7788 = vpop.f32.mrb[0].mxu0
        %v7789 = vand.u32 %v939, 4294901760
        %7790 = vmatprep.mubr.f32.mxu0 %v7789
        %v7791 = vand.u32 %v938, 4294901760
        %7792 = vmatmul.mubr.f32.gmra.mrb[0].mxu0 %v7791
        %v7793 = vpop.f32.mrb[0].mxu0
        %v7794 = vadd.f32 %v7333, %v7793
        %v7795 = vpop.f32.mrb[0].mxu0
        %v7796 = vand.u32 %v943, 4294901760
        %7797 = vmatprep.mubr.f32.mxu0 %v7796
        %v7798 = vand.u32 %v942, 4294901760
        %7799 = vmatmul.mubr.f32.gmra.mrb[0].mxu0 %v7798
        %v7800 = vpop.f32.mrb[0].mxu0
        %v7801 = vadd.f32 %v7344, %v7800
        %v7802 = vpop.f32.mrb[0].mxu0
        %v7803 = vand.u32 %v947, 4294901760
        %7804 = vmatprep.mubr.f32.mxu0 %v7803
        %v7805 = vand.u32 %v946, 4294901760
        %7806 = vmatmul.mubr.f32.gmra.mrb[0].mxu0 %v7805
        %v7807 = vpop.f32.mrb[0].mxu0
        %v7808 = vadd.f32 %v7355, %v7807
        %v7809 = vpop.f32.mrb[0].mxu0
        %v7810 = vand.u32 %v951, 4294901760
        %7811 = vmatprep.mubr.f32.mxu0 %v7810
        %v7812 = vand.u32 %v950, 4294901760
        %7813 = vmatmul.mubr.f32.gmra.mrb[0].mxu0 %v7812
        %v7814 = vpop.f32.mrb[0].mxu0
        %v7815 = vadd.f32 %v7366, %v7814
        %v7816 = vpop.f32.mrb[0].mxu0
        %v7817 = vand.u32 %v955, 4294901760
        %7818 = vmatprep.mubr.f32.mxu0 %v7817
        %v7819 = vand.u32 %v954, 4294901760
        %7820 = vmatmul.mubr.f32.gmra.mrb[0].mxu0 %v7819
        %v7821 = vpop.f32.mrb[0].mxu0
        %v7822 = vadd.f32 %v7377, %v7821
        %v7823 = vpop.f32.mrb[0].mxu0
        %v7824 = vand.u32 %v959, 4294901760
        %7825 = vmatprep.mubr.f32.mxu0 %v7824
        %v7826 = vand.u32 %v958, 4294901760
        %7827 = vmatmul.mubr.f32.gmra.mrb[0].mxu0 %v7826
        %v7828 = vpop.f32.mrb[0].mxu0
        %v7829 = vadd.f32 %v7388, %v7828
        %v7830 = vpop.f32.mrb[0].mxu0
        %v7831 = vand.u32 %v963, 4294901760
        %7832 = vmatprep.mubr.f32.mxu0 %v7831
        %v7833 = vand.u32 %v962, 4294901760
        %7834 = vmatmul.mubr.f32.gmra.mrb[0].mxu0 %v7833
        %v7835 = vpop.f32.mrb[0].mxu0
        %v7836 = vadd.f32 %v7399, %v7835
        %v7837 = vpop.f32.mrb[0].mxu0
        %v7838 = vand.u32 %v967, 4294901760
        %7839 = vmatprep.mubr.f32.mxu0 %v7838
        %v7840 = vand.u32 %v966, 4294901760
        %7841 = vmatmul.mubr.f32.gmra.mrb[0].mxu0 %v7840
        %v7842 = vpop.f32.mrb[0].mxu0
        %v7843 = vadd.f32 %v7410, %v7842
        %v7844 = vpop.f32.mrb[0].mxu0
        %v7845 = vand.u32 %v971, 4294901760
        %7846 = vmatprep.mubr.f32.mxu0 %v7845
        %v7847 = vand.u32 %v970, 4294901760
        %7848 = vmatmul.mubr.f32.gmra.mrb[0].mxu0 %v7847
        %v7849 = vpop.f32.mrb[0].mxu0
        %v7850 = vadd.f32 %v7421, %v7849
        %v7851 = vpop.f32.mrb[0].mxu0
        %v7852 = vand.u32 %v975, 4294901760
        %7853 = vmatprep.mubr.f32.mxu0 %v7852
        %v7854 = vand.u32 %v974, 4294901760
        %7855 = vmatmul.mubr.f32.gmra.mrb[0].mxu0 %v7854
        %v7856 = vpop.f32.mrb[0].mxu0
        %v7857 = vadd.f32 %v7432, %v7856
        %v7858 = vpop.f32.mrb[0].mxu0
        %v7859 = vand.u32 %v979, 4294901760
        %7860 = vmatprep.mubr.f32.mxu0 %v7859
        %v7861 = vand.u32 %v978, 4294901760
        %7862 = vmatmul.mubr.f32.gmra.mrb[0].mxu0 %v7861
        %v7863 = vpop.f32.mrb[0].mxu0
        %v7864 = vadd.f32 %v7443, %v7863
        %v7865 = vpop.f32.mrb[0].mxu0
        %v7866 = vand.u32 %v983, 4294901760
        %7867 = vmatprep.mubr.f32.mxu0 %v7866
        %v7868 = vand.u32 %v982, 4294901760
        %7869 = vmatmul.mubr.f32.gmra.mrb[0].mxu0 %v7868
        %v7870 = vpop.f32.mrb[0].mxu0
        %v7871 = vadd.f32 %v7454, %v7870
        %v7872 = vpop.f32.mrb[0].mxu0
        %v7873 = vand.u32 %v987, 4294901760
        %7874 = vmatprep.mubr.f32.mxu0 %v7873
        %v7875 = vand.u32 %v986, 4294901760
        %7876 = vmatmul.mubr.f32.gmra.mrb[0].mxu0 %v7875
        %v7877 = vpop.f32.mrb[0].mxu0
        %v7878 = vadd.f32 %v7465, %v7877
        %v7879 = vpop.f32.mrb[0].mxu0
        %v7880 = vand.u32 %v991, 4294901760
        %7881 = vmatprep.mubr.f32.mxu0 %v7880
        %v7882 = vand.u32 %v990, 4294901760
        %7883 = vmatmul.mubr.f32.gmra.mrb[0].mxu0 %v7882
        %v7884 = vpop.f32.mrb[0].mxu0
        %v7885 = vadd.f32 %v7476, %v7884
        %v7886 = vpop.f32.mrb[0].mxu0
        %v7887 = vand.u32 %v995, 4294901760
        %7888 = vmatprep.mubr.f32.mxu0 %v7887
        %v7889 = vand.u32 %v994, 4294901760
        %7890 = vmatmul.mubr.f32.gmra.mrb[0].mxu0 %v7889
        %v7891 = vpop.f32.mrb[0].mxu0
        %v7892 = vadd.f32 %v7487, %v7891
        %v7893 = vpop.f32.mrb[0].mxu0
        %v7894 = vand.u32 %v999, 4294901760
        %7895 = vmatprep.mubr.f32.mxu0 %v7894
        %v7896 = vand.u32 %v998, 4294901760
        %7897 = vmatmul.mubr.f32.gmra.mrb[0].mxu0 %v7896
        %v7898 = vpop.f32.mrb[0].mxu0
        %v7899 = vadd.f32 %v7498, %v7898
        %v7900 = vpop.f32.mrb[0].mxu0
        %v7901 = vand.u32 %v1003, 4294901760
        %7902 = vmatprep.mubr.f32.mxu0 %v7901
        %v7903 = vand.u32 %v1002, 4294901760
        %7904 = vmatmul.mubr.f32.gmra.mrb[0].mxu0 %v7903
        %v7905 = vpop.f32.mrb[0].mxu0
        %v7906 = vadd.f32 %v7509, %v7905
        %v7907 = vpop.f32.mrb[0].mxu0
        %v7908 = vand.u32 %v1007, 4294901760
        %7909 = vmatprep.mubr.f32.mxu0 %v7908
        %v7910 = vand.u32 %v1006, 4294901760
        %7911 = vmatmul.mubr.f32.gmra.mrb[0].mxu0 %v7910
        %v7912 = vpop.f32.mrb[0].mxu0
        %v7913 = vadd.f32 %v7520, %v7912
        %v7914 = vpop.f32.mrb[0].mxu0
        %v7915 = vand.u32 %v1011, 4294901760
        %7916 = vmatprep.mubr.f32.mxu0 %v7915
        %v7917 = vand.u32 %v1010, 4294901760
        %7918 = vmatmul.mubr.f32.gmra.mrb[0].mxu0 %v7917
        %v7919 = vpop.f32.mrb[0].mxu0
        %v7920 = vadd.f32 %v7531, %v7919
        %v7921 = vpop.f32.mrb[0].mxu0
        %v7922 = vand.u32 %v1015, 4294901760
        %7923 = vmatprep.mubr.f32.mxu0 %v7922
        %v7924 = vand.u32 %v1014, 4294901760
        %7925 = vmatmul.mubr.f32.gmra.mrb[0].mxu0 %v7924
        %v7926 = vpop.f32.mrb[0].mxu0
        %v7927 = vadd.f32 %v7542, %v7926
        %v7928 = vpop.f32.mrb[0].mxu0
        %7929 = vdwg.mxu0
        %7930 = vmatprep.subr.mxu0 0.0
        %v7931 = vand.u32 %v3023, 4294901760
        %7932 = vmatpush1.msra.mxu0 %v7931
        %7933 = vmatprep.subr.mxu0 0.0
        %v7934 = vand.u32 %v3024, 4294901760
        %7935 = vmatpush1.msra.mxu0 %v7934
        %7936 = vmatprep.subr.mxu0 0.0
        %v7937 = vand.u32 %v3025, 4294901760
        %7938 = vmatpush1.msra.mxu0 %v7937
        %7939 = vmatprep.subr.mxu0 0.0
        %v7940 = vand.u32 %v3026, 4294901760
        %7941 = vmatpush1.msra.mxu0 %v7940
        %7942 = vmatprep.subr.mxu0 0.0
        %v7943 = vand.u32 %v3027, 4294901760
        %7944 = vmatpush1.msra.mxu0 %v7943
        %7945 = vmatprep.subr.mxu0 0.0
        %v7946 = vand.u32 %v3028, 4294901760
        %7947 = vmatpush1.msra.mxu0 %v7946
        %7948 = vmatprep.subr.mxu0 0.0
        %v7949 = vand.u32 %v3029, 4294901760
        %7950 = vmatpush1.msra.mxu0 %v7949
        %7951 = vmatprep.subr.mxu0 0.0
        %v7952 = vand.u32 %v3030, 4294901760
        %7953 = vmatpush1.msra.mxu0 %v7952
        %7954 = vmatprep.subr.mxu0 0.0
        %v7955 = vand.u32 %v3031, 4294901760
        %7956 = vmatpush1.msra.mxu0 %v7955
        %7957 = vmatprep.subr.mxu0 0.0
        %v7958 = vand.u32 %v3032, 4294901760
        %7959 = vmatpush1.msra.mxu0 %v7958
        %7960 = vmatprep.subr.mxu0 0.0
        %v7961 = vand.u32 %v3033, 4294901760
        %7962 = vmatpush1.msra.mxu0 %v7961
        %7963 = vmatprep.subr.mxu0 0.0
        %v7964 = vand.u32 %v3034, 4294901760
        %7965 = vmatpush1.msra.mxu0 %v7964
        %7966 = vmatprep.subr.mxu0 0.0
        %v7967 = vand.u32 %v3035, 4294901760
        %7968 = vmatpush1.msra.mxu0 %v7967
        %7969 = vmatprep.subr.mxu0 0.0
        %v7970 = vand.u32 %v3036, 4294901760
        %7971 = vmatpush1.msra.mxu0 %v7970
        %7972 = vmatprep.subr.mxu0 0.0
        %v7973 = vand.u32 %v3037, 4294901760
        %7974 = vmatpush1.msra.mxu0 %v7973
        %7975 = vmatprep.subr.mxu0 0.0
        %v7976 = vand.u32 %v3038, 4294901760
        %7977 = vmatpush1.msra.mxu0 %v7976
        %7978 = vmatprep.subr.mxu0 0.0
        %v7979 = vand.u32 %v3039, 4294901760
        %7980 = vmatpush1.msra.mxu0 %v7979
        %7981 = vmatprep.subr.mxu0 0.0
        %v7982 = vand.u32 %v3040, 4294901760
        %7983 = vmatpush1.msra.mxu0 %v7982
        %7984 = vmatprep.subr.mxu0 0.0
        %v7985 = vand.u32 %v3041, 4294901760
        %7986 = vmatpush1.msra.mxu0 %v7985
        %7987 = vmatprep.subr.mxu0 0.0
        %v7988 = vand.u32 %v3042, 4294901760
        %7989 = vmatpush1.msra.mxu0 %v7988
        %7990 = vmatprep.subr.mxu0 0.0
        %v7991 = vand.u32 %v3043, 4294901760
        %7992 = vmatpush1.msra.mxu0 %v7991
        %7993 = vmatprep.subr.mxu0 0.0
        %v7994 = vand.u32 %v3044, 4294901760
        %7995 = vmatpush1.msra.mxu0 %v7994
        %7996 = vmatprep.subr.mxu0 0.0
        %v7997 = vand.u32 %v3045, 4294901760
        %7998 = vmatpush1.msra.mxu0 %v7997
        %7999 = vmatprep.subr.mxu0 0.0
        %v8000 = vand.u32 %v3046, 4294901760
        %8001 = vmatpush1.msra.mxu0 %v8000
        %8002 = vmatprep.subr.mxu0 0.0
        %v8003 = vand.u32 %v3047, 4294901760
        %8004 = vmatpush1.msra.mxu0 %v8003
        %8005 = vmatprep.subr.mxu0 0.0
        %v8006 = vand.u32 %v3048, 4294901760
        %8007 = vmatpush1.msra.mxu0 %v8006
        %8008 = vmatprep.subr.mxu0 0.0
        %v8009 = vand.u32 %v3049, 4294901760
        %8010 = vmatpush1.msra.mxu0 %v8009
        %8011 = vmatprep.subr.mxu0 0.0
        %v8012 = vand.u32 %v3050, 4294901760
        %8013 = vmatpush1.msra.mxu0 %v8012
        %8014 = vmatprep.subr.mxu0 0.0
        %v8015 = vand.u32 %v3051, 4294901760
        %8016 = vmatpush1.msra.mxu0 %v8015
        %8017 = vmatprep.subr.mxu0 0.0
        %v8018 = vand.u32 %v3052, 4294901760
        %8019 = vmatpush1.msra.mxu0 %v8018
        %8020 = vmatprep.subr.mxu0 0.0
        %v8021 = vand.u32 %v3053, 4294901760
        %8022 = vmatpush1.msra.mxu0 %v8021
        %8023 = vmatprep.subr.mxu0 0.0
        %v8024 = vand.u32 %v3054, 4294901760
        %8025 = vmatpush1.msra.mxu0 %v8024
        %v8026 = vand.u32 %v891, 4294901760
        %8027 = vmatprep.mubr.f32.mxu0 %v8026
        %v8028 = vand.u32 %v890, 4294901760
        %8029 = vmatmul.mubr.f32.gmra.mrb[0].mxu0 %v8028
        %v8030 = vpop.f32.mrb[0].mxu0
        %v8031 = vadd.f32 %v7710, %v8030
        %v8032 = vpop.f32.mrb[0].mxu0
        %v8033 = vand.u32 %v895, 4294901760
        %8034 = vmatprep.mubr.f32.mxu0 %v8033
        %v8035 = vand.u32 %v894, 4294901760
        %8036 = vmatmul.mubr.f32.gmra.mrb[0].mxu0 %v8035
        %v8037 = vpop.f32.mrb[0].mxu0
        %v8038 = vadd.f32 %v7717, %v8037
        %v8039 = vpop.f32.mrb[0].mxu0
        %v8040 = vand.u32 %v899, 4294901760
        %8041 = vmatprep.mubr.f32.mxu0 %v8040
        %v8042 = vand.u32 %v898, 4294901760
        %8043 = vmatmul.mubr.f32.gmra.mrb[0].mxu0 %v8042
        %v8044 = vpop.f32.mrb[0].mxu0
        %v8045 = vadd.f32 %v7724, %v8044
        %v8046 = vpop.f32.mrb[0].mxu0
        %v8047 = vand.u32 %v903, 4294901760
        %8048 = vmatprep.mubr.f32.mxu0 %v8047
        %v8049 = vand.u32 %v902, 4294901760
        %8050 = vmatmul.mubr.f32.gmra.mrb[0].mxu0 %v8049
        %v8051 = vpop.f32.mrb[0].mxu0
        %v8052 = vadd.f32 %v7731, %v8051
        %v8053 = vpop.f32.mrb[0].mxu0
        %v8054 = vand.u32 %v907, 4294901760
        %8055 = vmatprep.mubr.f32.mxu0 %v8054
        %v8056 = vand.u32 %v906, 4294901760
        %8057 = vmatmul.mubr.f32.gmra.mrb[0].mxu0 %v8056
        %v8058 = vpop.f32.mrb[0].mxu0
        %v8059 = vadd.f32 %v7738, %v8058
        %v8060 = vpop.f32.mrb[0].mxu0
        %v8061 = vand.u32 %v911, 4294901760
        %8062 = vmatprep.mubr.f32.mxu0 %v8061
        %v8063 = vand.u32 %v910, 4294901760
        %8064 = vmatmul.mubr.f32.gmra.mrb[0].mxu0 %v8063
        %v8065 = vpop.f32.mrb[0].mxu0
        %v8066 = vadd.f32 %v7745, %v8065
        %v8067 = vpop.f32.mrb[0].mxu0
        %v8068 = vand.u32 %v915, 4294901760
        %8069 = vmatprep.mubr.f32.mxu0 %v8068
        %v8070 = vand.u32 %v914, 4294901760
        %8071 = vmatmul.mubr.f32.gmra.mrb[0].mxu0 %v8070
        %v8072 = vpop.f32.mrb[0].mxu0
        %v8073 = vadd.f32 %v7752, %v8072
        %v8074 = vpop.f32.mrb[0].mxu0
        %v8075 = vand.u32 %v919, 4294901760
        %8076 = vmatprep.mubr.f32.mxu0 %v8075
        %v8077 = vand.u32 %v918, 4294901760
        %8078 = vmatmul.mubr.f32.gmra.mrb[0].mxu0 %v8077
        %v8079 = vpop.f32.mrb[0].mxu0
        %v8080 = vadd.f32 %v7759, %v8079
        %v8081 = vpop.f32.mrb[0].mxu0
        %v8082 = vand.u32 %v923, 4294901760
        %8083 = vmatprep.mubr.f32.mxu0 %v8082
        %v8084 = vand.u32 %v922, 4294901760
        %8085 = vmatmul.mubr.f32.gmra.mrb[0].mxu0 %v8084
        %v8086 = vpop.f32.mrb[0].mxu0
        %v8087 = vadd.f32 %v7766, %v8086
        %v8088 = vpop.f32.mrb[0].mxu0
        %v8089 = vand.u32 %v927, 4294901760
        %8090 = vmatprep.mubr.f32.mxu0 %v8089
        %v8091 = vand.u32 %v926, 4294901760
        %8092 = vmatmul.mubr.f32.gmra.mrb[0].mxu0 %v8091
        %v8093 = vpop.f32.mrb[0].mxu0
        %v8094 = vadd.f32 %v7773, %v8093
        %v8095 = vpop.f32.mrb[0].mxu0
        %v8096 = vand.u32 %v931, 4294901760
        %8097 = vmatprep.mubr.f32.mxu0 %v8096
        %v8098 = vand.u32 %v930, 4294901760
        %8099 = vmatmul.mubr.f32.gmra.mrb[0].mxu0 %v8098
        %v8100 = vpop.f32.mrb[0].mxu0
        %v8101 = vadd.f32 %v7780, %v8100
        %v8102 = vpop.f32.mrb[0].mxu0
        %v8103 = vand.u32 %v935, 4294901760
        %8104 = vmatprep.mubr.f32.mxu0 %v8103
        %v8105 = vand.u32 %v934, 4294901760
        %8106 = vmatmul.mubr.f32.gmra.mrb[0].mxu0 %v8105
        %v8107 = vpop.f32.mrb[0].mxu0
        %v8108 = vadd.f32 %v7787, %v8107
        %v8109 = vpop.f32.mrb[0].mxu0
        %v8110 = vand.u32 %v939, 4294901760
        %8111 = vmatprep.mubr.f32.mxu0 %v8110
        %v8112 = vand.u32 %v938, 4294901760
        %8113 = vmatmul.mubr.f32.gmra.mrb[0].mxu0 %v8112
        %v8114 = vpop.f32.mrb[0].mxu0
        %v8115 = vadd.f32 %v7794, %v8114
        %v8116 = vpop.f32.mrb[0].mxu0
        %v8117 = vand.u32 %v943, 4294901760
        %8118 = vmatprep.mubr.f32.mxu0 %v8117
        %v8119 = vand.u32 %v942, 4294901760
        %8120 = vmatmul.mubr.f32.gmra.mrb[0].mxu0 %v8119
        %v8121 = vpop.f32.mrb[0].mxu0
        %v8122 = vadd.f32 %v7801, %v8121
        %v8123 = vpop.f32.mrb[0].mxu0
        %v8124 = vand.u32 %v947, 4294901760
        %8125 = vmatprep.mubr.f32.mxu0 %v8124
        %v8126 = vand.u32 %v946, 4294901760
        %8127 = vmatmul.mubr.f32.gmra.mrb[0].mxu0 %v8126
        %v8128 = vpop.f32.mrb[0].mxu0
        %v8129 = vadd.f32 %v7808, %v8128
        %v8130 = vpop.f32.mrb[0].mxu0
        %v8131 = vand.u32 %v951, 4294901760
        %8132 = vmatprep.mubr.f32.mxu0 %v8131
        %v8133 = vand.u32 %v950, 4294901760
        %8134 = vmatmul.mubr.f32.gmra.mrb[0].mxu0 %v8133
        %v8135 = vpop.f32.mrb[0].mxu0
        %v8136 = vadd.f32 %v7815, %v8135
        %v8137 = vpop.f32.mrb[0].mxu0
        %v8138 = vand.u32 %v955, 4294901760
        %8139 = vmatprep.mubr.f32.mxu0 %v8138
        %v8140 = vand.u32 %v954, 4294901760
        %8141 = vmatmul.mubr.f32.gmra.mrb[0].mxu0 %v8140
        %v8142 = vpop.f32.mrb[0].mxu0
        %v8143 = vadd.f32 %v7822, %v8142
        %v8144 = vpop.f32.mrb[0].mxu0
        %v8145 = vand.u32 %v959, 4294901760
        %8146 = vmatprep.mubr.f32.mxu0 %v8145
        %v8147 = vand.u32 %v958, 4294901760
        %8148 = vmatmul.mubr.f32.gmra.mrb[0].mxu0 %v8147
        %v8149 = vpop.f32.mrb[0].mxu0
        %v8150 = vadd.f32 %v7829, %v8149
        %v8151 = vpop.f32.mrb[0].mxu0
        %v8152 = vand.u32 %v963, 4294901760
        %8153 = vmatprep.mubr.f32.mxu0 %v8152
        %v8154 = vand.u32 %v962, 4294901760
        %8155 = vmatmul.mubr.f32.gmra.mrb[0].mxu0 %v8154
        %v8156 = vpop.f32.mrb[0].mxu0
        %v8157 = vadd.f32 %v7836, %v8156
        %v8158 = vpop.f32.mrb[0].mxu0
        %v8159 = vand.u32 %v967, 4294901760
        %8160 = vmatprep.mubr.f32.mxu0 %v8159
        %v8161 = vand.u32 %v966, 4294901760
        %8162 = vmatmul.mubr.f32.gmra.mrb[0].mxu0 %v8161
        %v8163 = vpop.f32.mrb[0].mxu0
        %v8164 = vadd.f32 %v7843, %v8163
        %v8165 = vpop.f32.mrb[0].mxu0
        %v8166 = vand.u32 %v971, 4294901760
        %8167 = vmatprep.mubr.f32.mxu0 %v8166
        %v8168 = vand.u32 %v970, 4294901760
        %8169 = vmatmul.mubr.f32.gmra.mrb[0].mxu0 %v8168
        %v8170 = vpop.f32.mrb[0].mxu0
        %v8171 = vadd.f32 %v7850, %v8170
        %v8172 = vpop.f32.mrb[0].mxu0
        %v8173 = vand.u32 %v975, 4294901760
        %8174 = vmatprep.mubr.f32.mxu0 %v8173
        %v8175 = vand.u32 %v974, 4294901760
        %8176 = vmatmul.mubr.f32.gmra.mrb[0].mxu0 %v8175
        %v8177 = vpop.f32.mrb[0].mxu0
        %v8178 = vadd.f32 %v7857, %v8177
        %v8179 = vpop.f32.mrb[0].mxu0
        %v8180 = vand.u32 %v979, 4294901760
        %8181 = vmatprep.mubr.f32.mxu0 %v8180
        %v8182 = vand.u32 %v978, 4294901760
        %8183 = vmatmul.mubr.f32.gmra.mrb[0].mxu0 %v8182
        %v8184 = vpop.f32.mrb[0].mxu0
        %v8185 = vadd.f32 %v7864, %v8184
        %v8186 = vpop.f32.mrb[0].mxu0
        %v8187 = vand.u32 %v983, 4294901760
        %8188 = vmatprep.mubr.f32.mxu0 %v8187
        %v8189 = vand.u32 %v982, 4294901760
        %8190 = vmatmul.mubr.f32.gmra.mrb[0].mxu0 %v8189
        %v8191 = vpop.f32.mrb[0].mxu0
        %v8192 = vadd.f32 %v7871, %v8191
        %v8193 = vpop.f32.mrb[0].mxu0
        %v8194 = vand.u32 %v987, 4294901760
        %8195 = vmatprep.mubr.f32.mxu0 %v8194
        %v8196 = vand.u32 %v986, 4294901760
        %8197 = vmatmul.mubr.f32.gmra.mrb[0].mxu0 %v8196
        %v8198 = vpop.f32.mrb[0].mxu0
        %v8199 = vadd.f32 %v7878, %v8198
        %v8200 = vpop.f32.mrb[0].mxu0
        %v8201 = vand.u32 %v991, 4294901760
        %8202 = vmatprep.mubr.f32.mxu0 %v8201
        %v8203 = vand.u32 %v990, 4294901760
        %8204 = vmatmul.mubr.f32.gmra.mrb[0].mxu0 %v8203
        %v8205 = vpop.f32.mrb[0].mxu0
        %v8206 = vadd.f32 %v7885, %v8205
        %v8207 = vpop.f32.mrb[0].mxu0
        %v8208 = vand.u32 %v995, 4294901760
        %8209 = vmatprep.mubr.f32.mxu0 %v8208
        %v8210 = vand.u32 %v994, 4294901760
        %8211 = vmatmul.mubr.f32.gmra.mrb[0].mxu0 %v8210
        %v8212 = vpop.f32.mrb[0].mxu0
        %v8213 = vadd.f32 %v7892, %v8212
        %v8214 = vpop.f32.mrb[0].mxu0
        %v8215 = vand.u32 %v999, 4294901760
        %8216 = vmatprep.mubr.f32.mxu0 %v8215
        %v8217 = vand.u32 %v998, 4294901760
        %8218 = vmatmul.mubr.f32.gmra.mrb[0].mxu0 %v8217
        %v8219 = vpop.f32.mrb[0].mxu0
        %v8220 = vadd.f32 %v7899, %v8219
        %v8221 = vpop.f32.mrb[0].mxu0
        %v8222 = vand.u32 %v1003, 4294901760
        %8223 = vmatprep.mubr.f32.mxu0 %v8222
        %v8224 = vand.u32 %v1002, 4294901760
        %8225 = vmatmul.mubr.f32.gmra.mrb[0].mxu0 %v8224
        %v8226 = vpop.f32.mrb[0].mxu0
        %v8227 = vadd.f32 %v7906, %v8226
        %v8228 = vpop.f32.mrb[0].mxu0
        %v8229 = vand.u32 %v1007, 4294901760
        %8230 = vmatprep.mubr.f32.mxu0 %v8229
        %v8231 = vand.u32 %v1006, 4294901760
        %8232 = vmatmul.mubr.f32.gmra.mrb[0].mxu0 %v8231
        %v8233 = vpop.f32.mrb[0].mxu0
        %v8234 = vadd.f32 %v7913, %v8233
        %v8235 = vpop.f32.mrb[0].mxu0
        %v8236 = vand.u32 %v1011, 4294901760
        %8237 = vmatprep.mubr.f32.mxu0 %v8236
        %v8238 = vand.u32 %v1010, 4294901760
        %8239 = vmatmul.mubr.f32.gmra.mrb[0].mxu0 %v8238
        %v8240 = vpop.f32.mrb[0].mxu0
        %v8241 = vadd.f32 %v7920, %v8240
        %v8242 = vpop.f32.mrb[0].mxu0
        %v8243 = vand.u32 %v1015, 4294901760
        %8244 = vmatprep.mubr.f32.mxu0 %v8243
        %v8245 = vand.u32 %v1014, 4294901760
        %8246 = vmatmul.mubr.f32.gmra.mrb[0].mxu0 %v8245
        %v8247 = vpop.f32.mrb[0].mxu0
        %v8248 = vadd.f32 %v7927, %v8247
        %v8249 = vpop.f32.mrb[0].mxu0
        %8250 = vdwg.mxu0
        %v8251 = vmul.f32 %v2802, 11.313708
        %v8252 = vmul.f32 %v2808, 11.313708
        %v8253 = vmul.f32 %v2814, 11.313708
        %v8254 = vmul.f32 %v2820, 11.313708
        %v8255 = vmul.f32 %v2826, 11.313708
        %v8256 = vmul.f32 %v2832, 11.313708
        %v8257 = vmul.f32 %v2838, 11.313708
        %v8258 = vmul.f32 %v2844, 11.313708
        %v8259 = vmul.f32 %v2850, 11.313708
        %v8260 = vmul.f32 %v2856, 11.313708
        %v8261 = vmul.f32 %v2862, 11.313708
        %v8262 = vmul.f32 %v2868, 11.313708
        %v8263 = vmul.f32 %v2874, 11.313708
        %v8264 = vmul.f32 %v2880, 11.313708
        %v8265 = vmul.f32 %v2886, 11.313708
        %v8266 = vmul.f32 %v2892, 11.313708
        %v8267 = vmul.f32 %v2898, 11.313708
        %v8268 = vmul.f32 %v2904, 11.313708
        %v8269 = vmul.f32 %v2910, 11.313708
        %v8270 = vmul.f32 %v2916, 11.313708
        %v8271 = vmul.f32 %v2922, 11.313708
        %v8272 = vmul.f32 %v2928, 11.313708
        %v8273 = vmul.f32 %v2934, 11.313708
        %v8274 = vmul.f32 %v2940, 11.313708
        %v8275 = vmul.f32 %v2946, 11.313708
        %v8276 = vmul.f32 %v2952, 11.313708
        %v8277 = vmul.f32 %v2958, 11.313708
        %v8278 = vmul.f32 %v2964, 11.313708
        %v8279 = vmul.f32 %v2970, 11.313708
        %v8280 = vmul.f32 %v2976, 11.313708
        %v8281 = vmul.f32 %v2982, 11.313708
        %v8282 = vmul.f32 %v2988, 11.313708
        %v8283 = vadd.f32 %v8251, %v8031
        %v8284 = vadd.f32 %v8252, %v8038
        %v8285 = vadd.f32 %v8253, %v8045
        %v8286 = vadd.f32 %v8254, %v8052
        %v8287 = vadd.f32 %v8255, %v8059
        %v8288 = vadd.f32 %v8256, %v8066
        %v8289 = vadd.f32 %v8257, %v8073
        %v8290 = vadd.f32 %v8258, %v8080
        %v8291 = vadd.f32 %v8259, %v8087
        %v8292 = vadd.f32 %v8260, %v8094
        %v8293 = vadd.f32 %v8261, %v8101
        %v8294 = vadd.f32 %v8262, %v8108
        %v8295 = vadd.f32 %v8263, %v8115
        %v8296 = vadd.f32 %v8264, %v8122
        %v8297 = vadd.f32 %v8265, %v8129
        %v8298 = vadd.f32 %v8266, %v8136
        %v8299 = vadd.f32 %v8267, %v8143
        %v8300 = vadd.f32 %v8268, %v8150
        %v8301 = vadd.f32 %v8269, %v8157
        %v8302 = vadd.f32 %v8270, %v8164
        %v8303 = vadd.f32 %v8271, %v8171
        %v8304 = vadd.f32 %v8272, %v8178
        %v8305 = vadd.f32 %v8273, %v8185
        %v8306 = vadd.f32 %v8274, %v8192
        %v8307 = vadd.f32 %v8275, %v8199
        %v8308 = vadd.f32 %v8276, %v8206
        %v8309 = vadd.f32 %v8277, %v8213
        %v8310 = vadd.f32 %v8278, %v8220
        %v8311 = vadd.f32 %v8279, %v8227
        %v8312 = vadd.f32 %v8280, %v8234
        %v8313 = vadd.f32 %v8281, %v8241
        %v8314 = vadd.f32 %v8282, %v8248
        %8315 = vadd.xlane.f32.xlu0 %v8283
        %v8316 = vpop.xlane.xlu0 %8315
        %8317 = vadd.xlane.f32.xlu0 %v8284
        %v8318 = vpop.xlane.xlu0 %8317
        %8319 = vadd.xlane.f32.xlu0 %v8285
        %v8320 = vpop.xlane.xlu0 %8319
        %8321 = vadd.xlane.f32.xlu0 %v8286
        %v8322 = vpop.xlane.xlu0 %8321
        %8323 = vadd.xlane.f32.xlu0 %v8287
        %v8324 = vpop.xlane.xlu0 %8323
        %8325 = vadd.xlane.f32.xlu0 %v8288
        %v8326 = vpop.xlane.xlu0 %8325
        %8327 = vadd.xlane.f32.xlu0 %v8289
        %v8328 = vpop.xlane.xlu0 %8327
        %8329 = vadd.xlane.f32.xlu0 %v8290
        %v8330 = vpop.xlane.xlu0 %8329
        %8331 = vadd.xlane.f32.xlu0 %v8291
        %v8332 = vpop.xlane.xlu0 %8331
        %8333 = vadd.xlane.f32.xlu0 %v8292
        %v8334 = vpop.xlane.xlu0 %8333
        %8335 = vadd.xlane.f32.xlu0 %v8293
        %v8336 = vpop.xlane.xlu0 %8335
        %8337 = vadd.xlane.f32.xlu0 %v8294
        %v8338 = vpop.xlane.xlu0 %8337
        %8339 = vadd.xlane.f32.xlu0 %v8295
        %v8340 = vpop.xlane.xlu0 %8339
        %8341 = vadd.xlane.f32.xlu0 %v8296
        %v8342 = vpop.xlane.xlu0 %8341
        %8343 = vadd.xlane.f32.xlu0 %v8297
        %v8344 = vpop.xlane.xlu0 %8343
        %8345 = vadd.xlane.f32.xlu0 %v8298
        %v8346 = vpop.xlane.xlu0 %8345
        %8347 = vadd.xlane.f32.xlu0 %v8299
        %v8348 = vpop.xlane.xlu0 %8347
        %8349 = vadd.xlane.f32.xlu0 %v8300
        %v8350 = vpop.xlane.xlu0 %8349
        %8351 = vadd.xlane.f32.xlu0 %v8301
        %v8352 = vpop.xlane.xlu0 %8351
        %8353 = vadd.xlane.f32.xlu0 %v8302
        %v8354 = vpop.xlane.xlu0 %8353
        %8355 = vadd.xlane.f32.xlu0 %v8303
        %v8356 = vpop.xlane.xlu0 %8355
        %8357 = vadd.xlane.f32.xlu0 %v8304
        %v8358 = vpop.xlane.xlu0 %8357
        %8359 = vadd.xlane.f32.xlu0 %v8305
        %v8360 = vpop.xlane.xlu0 %8359
        %8361 = vadd.xlane.f32.xlu0 %v8306
        %v8362 = vpop.xlane.xlu0 %8361
        %8363 = vadd.xlane.f32.xlu0 %v8307
        %v8364 = vpop.xlane.xlu0 %8363
        %8365 = vadd.xlane.f32.xlu0 %v8308
        %v8366 = vpop.xlane.xlu0 %8365
        %8367 = vadd.xlane.f32.xlu0 %v8309
        %v8368 = vpop.xlane.xlu0 %8367
        %8369 = vadd.xlane.f32.xlu0 %v8310
        %v8370 = vpop.xlane.xlu0 %8369
        %8371 = vadd.xlane.f32.xlu0 %v8311
        %v8372 = vpop.xlane.xlu0 %8371
        %8373 = vadd.xlane.f32.xlu0 %v8312
        %v8374 = vpop.xlane.xlu0 %8373
        %8375 = vadd.xlane.f32.xlu0 %v8313
        %v8376 = vpop.xlane.xlu0 %8375
        %8377 = vadd.xlane.f32.xlu0 %v8314
        %v8378 = vpop.xlane.xlu0 %8377
        %v8379 = vrcp.pop 128.0
        %v8380 = vmul.f32 %v8316, %v8379
        %v8381 = vmul.f32 %v8318, %v8379
        %v8382 = vmul.f32 %v8320, %v8379
        %v8383 = vmul.f32 %v8322, %v8379
        %v8384 = vmul.f32 %v8324, %v8379
        %v8385 = vmul.f32 %v8326, %v8379
        %v8386 = vmul.f32 %v8328, %v8379
        %v8387 = vmul.f32 %v8330, %v8379
        %v8388 = vmul.f32 %v8332, %v8379
        %v8389 = vmul.f32 %v8334, %v8379
        %v8390 = vmul.f32 %v8336, %v8379
        %v8391 = vmul.f32 %v8338, %v8379
        %v8392 = vmul.f32 %v8340, %v8379
        %v8393 = vmul.f32 %v8342, %v8379
        %v8394 = vmul.f32 %v8344, %v8379
        %v8395 = vmul.f32 %v8346, %v8379
        %v8396 = vmul.f32 %v8348, %v8379
        %v8397 = vmul.f32 %v8350, %v8379
        %v8398 = vmul.f32 %v8352, %v8379
        %v8399 = vmul.f32 %v8354, %v8379
        %v8400 = vmul.f32 %v8356, %v8379
        %v8401 = vmul.f32 %v8358, %v8379
        %v8402 = vmul.f32 %v8360, %v8379
        %v8403 = vmul.f32 %v8362, %v8379
        %v8404 = vmul.f32 %v8364, %v8379
        %v8405 = vmul.f32 %v8366, %v8379
        %v8406 = vmul.f32 %v8368, %v8379
        %v8407 = vmul.f32 %v8370, %v8379
        %v8408 = vmul.f32 %v8372, %v8379
        %v8409 = vmul.f32 %v8374, %v8379
        %v8410 = vmul.f32 %v8376, %v8379
        %v8411 = vmul.f32 %v8378, %v8379
        %v8412 = vsub.f32 %v8283, %v8380
        %v8413 = vsub.f32 %v8284, %v8381
        %v8414 = vsub.f32 %v8285, %v8382
        %v8415 = vsub.f32 %v8286, %v8383
        %v8416 = vsub.f32 %v8287, %v8384
        %v8417 = vsub.f32 %v8288, %v8385
        %v8418 = vsub.f32 %v8289, %v8386
        %v8419 = vsub.f32 %v8290, %v8387
        %v8420 = vsub.f32 %v8291, %v8388
        %v8421 = vsub.f32 %v8292, %v8389
        %v8422 = vsub.f32 %v8293, %v8390
        %v8423 = vsub.f32 %v8294, %v8391
        %v8424 = vsub.f32 %v8295, %v8392
        %v8425 = vsub.f32 %v8296, %v8393
        %v8426 = vsub.f32 %v8297, %v8394
        %v8427 = vsub.f32 %v8298, %v8395
        %v8428 = vsub.f32 %v8299, %v8396
        %v8429 = vsub.f32 %v8300, %v8397
        %v8430 = vsub.f32 %v8301, %v8398
        %v8431 = vsub.f32 %v8302, %v8399
        %v8432 = vsub.f32 %v8303, %v8400
        %v8433 = vsub.f32 %v8304, %v8401
        %v8434 = vsub.f32 %v8305, %v8402
        %v8435 = vsub.f32 %v8306, %v8403
        %v8436 = vsub.f32 %v8307, %v8404
        %v8437 = vsub.f32 %v8308, %v8405
        %v8438 = vsub.f32 %v8309, %v8406
        %v8439 = vsub.f32 %v8310, %v8407
        %v8440 = vsub.f32 %v8311, %v8408
        %v8441 = vsub.f32 %v8312, %v8409
        %v8442 = vsub.f32 %v8313, %v8410
        %v8443 = vsub.f32 %v8314, %v8411
        %v8444 = vmul.f32 %v8412, %v8412
        %v8445 = vmul.f32 %v8413, %v8413
        %v8446 = vmul.f32 %v8414, %v8414
        %v8447 = vmul.f32 %v8415, %v8415
        %v8448 = vmul.f32 %v8416, %v8416
        %v8449 = vmul.f32 %v8417, %v8417
        %v8450 = vmul.f32 %v8418, %v8418
        %v8451 = vmul.f32 %v8419, %v8419
        %v8452 = vmul.f32 %v8420, %v8420
        %v8453 = vmul.f32 %v8421, %v8421
        %v8454 = vmul.f32 %v8422, %v8422
        %v8455 = vmul.f32 %v8423, %v8423
        %v8456 = vmul.f32 %v8424, %v8424
        %v8457 = vmul.f32 %v8425, %v8425
        %v8458 = vmul.f32 %v8426, %v8426
        %v8459 = vmul.f32 %v8427, %v8427
        %v8460 = vmul.f32 %v8428, %v8428
        %v8461 = vmul.f32 %v8429, %v8429
        %v8462 = vmul.f32 %v8430, %v8430
        %v8463 = vmul.f32 %v8431, %v8431
        %v8464 = vmul.f32 %v8432, %v8432
        %v8465 = vmul.f32 %v8433, %v8433
        %v8466 = vmul.f32 %v8434, %v8434
        %v8467 = vmul.f32 %v8435, %v8435
        %v8468 = vmul.f32 %v8436, %v8436
        %v8469 = vmul.f32 %v8437, %v8437
        %v8470 = vmul.f32 %v8438, %v8438
        %v8471 = vmul.f32 %v8439, %v8439
        %v8472 = vmul.f32 %v8440, %v8440
        %v8473 = vmul.f32 %v8441, %v8441
        %v8474 = vmul.f32 %v8442, %v8442
        %v8475 = vmul.f32 %v8443, %v8443
        %8476 = vadd.xlane.f32.xlu0 %v8444
        %v8477 = vpop.xlane.xlu0 %8476
        %8478 = vadd.xlane.f32.xlu0 %v8445
        %v8479 = vpop.xlane.xlu0 %8478
        %8480 = vadd.xlane.f32.xlu0 %v8446
        %v8481 = vpop.xlane.xlu0 %8480
        %8482 = vadd.xlane.f32.xlu0 %v8447
        %v8483 = vpop.xlane.xlu0 %8482
        %8484 = vadd.xlane.f32.xlu0 %v8448
        %v8485 = vpop.xlane.xlu0 %8484
        %8486 = vadd.xlane.f32.xlu0 %v8449
        %v8487 = vpop.xlane.xlu0 %8486
        %8488 = vadd.xlane.f32.xlu0 %v8450
        %v8489 = vpop.xlane.xlu0 %8488
        %8490 = vadd.xlane.f32.xlu0 %v8451
        %v8491 = vpop.xlane.xlu0 %8490
        %8492 = vadd.xlane.f32.xlu0 %v8452
        %v8493 = vpop.xlane.xlu0 %8492
        %8494 = vadd.xlane.f32.xlu0 %v8453
        %v8495 = vpop.xlane.xlu0 %8494
        %8496 = vadd.xlane.f32.xlu0 %v8454
        %v8497 = vpop.xlane.xlu0 %8496
        %8498 = vadd.xlane.f32.xlu0 %v8455
        %v8499 = vpop.xlane.xlu0 %8498
        %8500 = vadd.xlane.f32.xlu0 %v8456
        %v8501 = vpop.xlane.xlu0 %8500
        %8502 = vadd.xlane.f32.xlu0 %v8457
        %v8503 = vpop.xlane.xlu0 %8502
        %8504 = vadd.xlane.f32.xlu0 %v8458
        %v8505 = vpop.xlane.xlu0 %8504
        %8506 = vadd.xlane.f32.xlu0 %v8459
        %v8507 = vpop.xlane.xlu0 %8506
        %8508 = vadd.xlane.f32.xlu0 %v8460
        %v8509 = vpop.xlane.xlu0 %8508
        %8510 = vadd.xlane.f32.xlu0 %v8461
        %v8511 = vpop.xlane.xlu0 %8510
        %8512 = vadd.xlane.f32.xlu0 %v8462
        %v8513 = vpop.xlane.xlu0 %8512
        %8514 = vadd.xlane.f32.xlu0 %v8463
        %v8515 = vpop.xlane.xlu0 %8514
        %8516 = vadd.xlane.f32.xlu0 %v8464
        %v8517 = vpop.xlane.xlu0 %8516
        %8518 = vadd.xlane.f32.xlu0 %v8465
        %v8519 = vpop.xlane.xlu0 %8518
        %8520 = vadd.xlane.f32.xlu0 %v8466
        %v8521 = vpop.xlane.xlu0 %8520
        %8522 = vadd.xlane.f32.xlu0 %v8467
        %v8523 = vpop.xlane.xlu0 %8522
        %8524 = vadd.xlane.f32.xlu0 %v8468
        %v8525 = vpop.xlane.xlu0 %8524
        %8526 = vadd.xlane.f32.xlu0 %v8469
        %v8527 = vpop.xlane.xlu0 %8526
        %8528 = vadd.xlane.f32.xlu0 %v8470
        %v8529 = vpop.xlane.xlu0 %8528
        %8530 = vadd.xlane.f32.xlu0 %v8471
        %v8531 = vpop.xlane.xlu0 %8530
        %8532 = vadd.xlane.f32.xlu0 %v8472
        %v8533 = vpop.xlane.xlu0 %8532
        %8534 = vadd.xlane.f32.xlu0 %v8473
        %v8535 = vpop.xlane.xlu0 %8534
        %8536 = vadd.xlane.f32.xlu0 %v8474
        %v8537 = vpop.xlane.xlu0 %8536
        %8538 = vadd.xlane.f32.xlu0 %v8475
        %v8539 = vpop.xlane.xlu0 %8538
        %v8540 = vmul.f32 %v8477, %v8379
        %v8541 = vmul.f32 %v8479, %v8379
        %v8542 = vmul.f32 %v8481, %v8379
        %v8543 = vmul.f32 %v8483, %v8379
        %v8544 = vmul.f32 %v8485, %v8379
        %v8545 = vmul.f32 %v8487, %v8379
        %v8546 = vmul.f32 %v8489, %v8379
        %v8547 = vmul.f32 %v8491, %v8379
        %v8548 = vmul.f32 %v8493, %v8379
        %v8549 = vmul.f32 %v8495, %v8379
        %v8550 = vmul.f32 %v8497, %v8379
        %v8551 = vmul.f32 %v8499, %v8379
        %v8552 = vmul.f32 %v8501, %v8379
        %v8553 = vmul.f32 %v8503, %v8379
        %v8554 = vmul.f32 %v8505, %v8379
        %v8555 = vmul.f32 %v8507, %v8379
        %v8556 = vmul.f32 %v8509, %v8379
        %v8557 = vmul.f32 %v8511, %v8379
        %v8558 = vmul.f32 %v8513, %v8379
        %v8559 = vmul.f32 %v8515, %v8379
        %v8560 = vmul.f32 %v8517, %v8379
        %v8561 = vmul.f32 %v8519, %v8379
        %v8562 = vmul.f32 %v8521, %v8379
        %v8563 = vmul.f32 %v8523, %v8379
        %v8564 = vmul.f32 %v8525, %v8379
        %v8565 = vmul.f32 %v8527, %v8379
        %v8566 = vmul.f32 %v8529, %v8379
        %v8567 = vmul.f32 %v8531, %v8379
        %v8568 = vmul.f32 %v8533, %v8379
        %v8569 = vmul.f32 %v8535, %v8379
        %v8570 = vmul.f32 %v8537, %v8379
        %v8571 = vmul.f32 %v8539, %v8379
        %v8572 = vadd.f32 %v8540, 1e-05
        %v8573 = vadd.f32 %v8541, 1e-05
        %v8574 = vadd.f32 %v8542, 1e-05
        %v8575 = vadd.f32 %v8543, 1e-05
        %v8576 = vadd.f32 %v8544, 1e-05
        %v8577 = vadd.f32 %v8545, 1e-05
        %v8578 = vadd.f32 %v8546, 1e-05
        %v8579 = vadd.f32 %v8547, 1e-05
        %v8580 = vadd.f32 %v8548, 1e-05
        %v8581 = vadd.f32 %v8549, 1e-05
        %v8582 = vadd.f32 %v8550, 1e-05
        %v8583 = vadd.f32 %v8551, 1e-05
        %v8584 = vadd.f32 %v8552, 1e-05
        %v8585 = vadd.f32 %v8553, 1e-05
        %v8586 = vadd.f32 %v8554, 1e-05
        %v8587 = vadd.f32 %v8555, 1e-05
        %v8588 = vadd.f32 %v8556, 1e-05
        %v8589 = vadd.f32 %v8557, 1e-05
        %v8590 = vadd.f32 %v8558, 1e-05
        %v8591 = vadd.f32 %v8559, 1e-05
        %v8592 = vadd.f32 %v8560, 1e-05
        %v8593 = vadd.f32 %v8561, 1e-05
        %v8594 = vadd.f32 %v8562, 1e-05
        %v8595 = vadd.f32 %v8563, 1e-05
        %v8596 = vadd.f32 %v8564, 1e-05
        %v8597 = vadd.f32 %v8565, 1e-05
        %v8598 = vadd.f32 %v8566, 1e-05
        %v8599 = vadd.f32 %v8567, 1e-05
        %v8600 = vadd.f32 %v8568, 1e-05
        %v8601 = vadd.f32 %v8569, 1e-05
        %v8602 = vadd.f32 %v8570, 1e-05
        %v8603 = vadd.f32 %v8571, 1e-05
        %v8604 = vrsqrt.pop %v8572
        %v8605 = vrsqrt.pop %v8573
        %v8606 = vrsqrt.pop %v8574
        %v8607 = vrsqrt.pop %v8575
        %v8608 = vrsqrt.pop %v8576
        %v8609 = vrsqrt.pop %v8577
        %v8610 = vrsqrt.pop %v8578
        %v8611 = vrsqrt.pop %v8579
        %v8612 = vrsqrt.pop %v8580
        %v8613 = vrsqrt.pop %v8581
        %v8614 = vrsqrt.pop %v8582
        %v8615 = vrsqrt.pop %v8583
        %v8616 = vrsqrt.pop %v8584
        %v8617 = vrsqrt.pop %v8585
        %v8618 = vrsqrt.pop %v8586
        %v8619 = vrsqrt.pop %v8587
        %v8620 = vrsqrt.pop %v8588
        %v8621 = vrsqrt.pop %v8589
        %v8622 = vrsqrt.pop %v8590
        %v8623 = vrsqrt.pop %v8591
        %v8624 = vrsqrt.pop %v8592
        %v8625 = vrsqrt.pop %v8593
        %v8626 = vrsqrt.pop %v8594
        %v8627 = vrsqrt.pop %v8595
        %v8628 = vrsqrt.pop %v8596
        %v8629 = vrsqrt.pop %v8597
        %v8630 = vrsqrt.pop %v8598
        %v8631 = vrsqrt.pop %v8599
        %v8632 = vrsqrt.pop %v8600
        %v8633 = vrsqrt.pop %v8601
        %v8634 = vrsqrt.pop %v8602
        %v8635 = vrsqrt.pop %v8603
        %v8636 = vmul.f32 %v8412, %v8604
        %v8637 = vmul.f32 %v8413, %v8605
        %v8638 = vmul.f32 %v8414, %v8606
        %v8639 = vmul.f32 %v8415, %v8607
        %v8640 = vmul.f32 %v8416, %v8608
        %v8641 = vmul.f32 %v8417, %v8609
        %v8642 = vmul.f32 %v8418, %v8610
        %v8643 = vmul.f32 %v8419, %v8611
        %v8644 = vmul.f32 %v8420, %v8612
        %v8645 = vmul.f32 %v8421, %v8613
        %v8646 = vmul.f32 %v8422, %v8614
        %v8647 = vmul.f32 %v8423, %v8615
        %v8648 = vmul.f32 %v8424, %v8616
        %v8649 = vmul.f32 %v8425, %v8617
        %v8650 = vmul.f32 %v8426, %v8618
        %v8651 = vmul.f32 %v8427, %v8619
        %v8652 = vmul.f32 %v8428, %v8620
        %v8653 = vmul.f32 %v8429, %v8621
        %v8654 = vmul.f32 %v8430, %v8622
        %v8655 = vmul.f32 %v8431, %v8623
        %v8656 = vmul.f32 %v8432, %v8624
        %v8657 = vmul.f32 %v8433, %v8625
        %v8658 = vmul.f32 %v8434, %v8626
        %v8659 = vmul.f32 %v8435, %v8627
        %v8660 = vmul.f32 %v8436, %v8628
        %v8661 = vmul.f32 %v8437, %v8629
        %v8662 = vmul.f32 %v8438, %v8630
        %v8663 = vmul.f32 %v8439, %v8631
        %v8664 = vmul.f32 %v8440, %v8632
        %v8665 = vmul.f32 %v8441, %v8633
        %v8666 = vmul.f32 %v8442, %v8634
        %v8667 = vmul.f32 %v8443, %v8635
        %v8668 = vld [vmem:[%s4] sm:$0x1]
        %v8670 = vlaneseq
        %v8671 = vshrl.u32 %v8670, 7
        %v8672 = vsub.s32 0, %v8671
        %v8673 = vrot.slane %v8668, %v8672
        %v8675 = vmul.f32 %v8636, %v8673
        %v8676 = vmul.f32 %v8637, %v8673
        %v8677 = vmul.f32 %v8638, %v8673
        %v8678 = vmul.f32 %v8639, %v8673
        %v8679 = vmul.f32 %v8640, %v8673
        %v8680 = vmul.f32 %v8641, %v8673
        %v8681 = vmul.f32 %v8642, %v8673
        %v8682 = vmul.f32 %v8643, %v8673
        %v8683 = vmul.f32 %v8644, %v8673
        %v8684 = vmul.f32 %v8645, %v8673
        %v8685 = vmul.f32 %v8646, %v8673
        %v8686 = vmul.f32 %v8647, %v8673
        %v8687 = vmul.f32 %v8648, %v8673
        %v8688 = vmul.f32 %v8649, %v8673
        %v8689 = vmul.f32 %v8650, %v8673
        %v8690 = vmul.f32 %v8651, %v8673
        %v8691 = vmul.f32 %v8652, %v8673
        %v8692 = vmul.f32 %v8653, %v8673
        %v8693 = vmul.f32 %v8654, %v8673
        %v8694 = vmul.f32 %v8655, %v8673
        %v8695 = vmul.f32 %v8656, %v8673
        %v8696 = vmul.f32 %v8657, %v8673
        %v8697 = vmul.f32 %v8658, %v8673
        %v8698 = vmul.f32 %v8659, %v8673
        %v8699 = vmul.f32 %v8660, %v8673
        %v8700 = vmul.f32 %v8661, %v8673
        %v8701 = vmul.f32 %v8662, %v8673
        %v8702 = vmul.f32 %v8663, %v8673
        %v8703 = vmul.f32 %v8664, %v8673
        %v8704 = vmul.f32 %v8665, %v8673
        %v8705 = vmul.f32 %v8666, %v8673
        %v8706 = vmul.f32 %v8667, %v8673
        %v8707 = vld [vmem:[%s5] sm:$0x1]
        %v8709 = vlaneseq
        %v8710 = vshrl.u32 %v8709, 7
        %v8711 = vsub.s32 0, %v8710
        %v8712 = vrot.slane %v8707, %v8711
        %v8714 = vadd.f32 %v8675, %v8712
        %v8715 = vadd.f32 %v8676, %v8712
        %v8716 = vadd.f32 %v8677, %v8712
        %v8717 = vadd.f32 %v8678, %v8712
        %v8718 = vadd.f32 %v8679, %v8712
        %v8719 = vadd.f32 %v8680, %v8712
        %v8720 = vadd.f32 %v8681, %v8712
        %v8721 = vadd.f32 %v8682, %v8712
        %v8722 = vadd.f32 %v8683, %v8712
        %v8723 = vadd.f32 %v8684, %v8712
        %v8724 = vadd.f32 %v8685, %v8712
        %v8725 = vadd.f32 %v8686, %v8712
        %v8726 = vadd.f32 %v8687, %v8712
        %v8727 = vadd.f32 %v8688, %v8712
        %v8728 = vadd.f32 %v8689, %v8712
        %v8729 = vadd.f32 %v8690, %v8712
        %v8730 = vadd.f32 %v8691, %v8712
        %v8731 = vadd.f32 %v8692, %v8712
        %v8732 = vadd.f32 %v8693, %v8712
        %v8733 = vadd.f32 %v8694, %v8712
        %v8734 = vadd.f32 %v8695, %v8712
        %v8735 = vadd.f32 %v8696, %v8712
        %v8736 = vadd.f32 %v8697, %v8712
        %v8737 = vadd.f32 %v8698, %v8712
        %v8738 = vadd.f32 %v8699, %v8712
        %v8739 = vadd.f32 %v8700, %v8712
        %v8740 = vadd.f32 %v8701, %v8712
        %v8741 = vadd.f32 %v8702, %v8712
        %v8742 = vadd.f32 %v8703, %v8712
        %v8743 = vadd.f32 %v8704, %v8712
        %v8744 = vadd.f32 %v8705, %v8712
        %v8745 = vadd.f32 %v8706, %v8712
        %8746 = vst [vmem:[%s261] sm:$0xff] %v8714
        %8747 = vst [vmem:[%s261 + $0x8] sm:$0xff] %v8715
        %8748 = vst [vmem:[%s261 + $0x10] sm:$0xff] %v8716
        %8749 = vst [vmem:[%s261 + $0x18] sm:$0xff] %v8717
        %8750 = vst [vmem:[%s261 + $0x20] sm:$0xff] %v8718
        %8751 = vst [vmem:[%s261 + $0x28] sm:$0xff] %v8719
        %8752 = vst [vmem:[%s261 + $0x30] sm:$0xff] %v8720
        %8753 = vst [vmem:[%s261 + $0x38] sm:$0xff] %v8721
        %8754 = vst [vmem:[%s261 + $0x40] sm:$0xff] %v8722
        %8755 = vst [vmem:[%s261 + $0x48] sm:$0xff] %v8723
        %8756 = vst [vmem:[%s261 + $0x50] sm:$0xff] %v8724
        %8757 = vst [vmem:[%s261 + $0x58] sm:$0xff] %v8725
        %8758 = vst [vmem:[%s261 + $0x60] sm:$0xff] %v8726
        %8759 = vst [vmem:[%s261 + $0x68] sm:$0xff] %v8727
        %8760 = vst [vmem:[%s261 + $0x70] sm:$0xff] %v8728
        %8761 = vst [vmem:[%s261 + $0x78] sm:$0xff] %v8729
        %8762 = vst [vmem:[%s261 + $0x80] sm:$0xff] %v8730
        %8763 = vst [vmem:[%s261 + $0x88] sm:$0xff] %v8731
        %8764 = vst [vmem:[%s261 + $0x90] sm:$0xff] %v8732
        %8765 = vst [vmem:[%s261 + $0x98] sm:$0xff] %v8733
        %8766 = vst [vmem:[%s261 + $0xa0] sm:$0xff] %v8734
        %8767 = vst [vmem:[%s261 + $0xa8] sm:$0xff] %v8735
        %8768 = vst [vmem:[%s261 + $0xb0] sm:$0xff] %v8736
        %8769 = vst [vmem:[%s261 + $0xb8] sm:$0xff] %v8737
        %8770 = vst [vmem:[%s261 + $0xc0] sm:$0xff] %v8738
        %8771 = vst [vmem:[%s261 + $0xc8] sm:$0xff] %v8739
        %8772 = vst [vmem:[%s261 + $0xd0] sm:$0xff] %v8740
        %8773 = vst [vmem:[%s261 + $0xd8] sm:$0xff] %v8741
        %8774 = vst [vmem:[%s261 + $0xe0] sm:$0xff] %v8742
        %8775 = vst [vmem:[%s261 + $0xe8] sm:$0xff] %v8743
        %8776 = vst [vmem:[%s261 + $0xf0] sm:$0xff] %v8744
        %8777 = vst [vmem:[%s261 + $0xf8] sm:$0xff] %v8745
        %s8778 = sand.u32 %s164, 1
        %s8779 = scalar_lea.sflag [#allocation3], %s8778
        %s8780 = sand.u32 %s164, 1
        %s8781 = smul.addr %s8780, 256
        %s8782 = scalar_lea.vmem [#allocation2], %s8781
        // Predicated region
        $region45: #{tpu_custom_call.1} parent=43 // pred_check
          %p8783 = pneg %p174
        $region46: #{tpu_custom_call.1} parent=43 // pred_check_branch
          %8785 = sbr.rel (%p8783) target = $region48
        $region47: #{tpu_custom_call.1} parent=43 // pred_region
          %s8786 = smul.u32 32, %s20
          %s8788 = ssub.s32 4096, 4096
          %8789 = vsyncadd %s8779, %s8788
          %s8790 = smul.addr %s8786, 128
          %s8791 = scalar_lea.hbm %s6, %s8790
          %s8792 = sshll.u32 %s8782, 4
          %s8793 = int_to_ptr.vmem [resolvable:$true] %s8792
          %8798 = dma.vmem_to_hbm [thread:$0]  %s8793, 4096, %s8791, %s8779, 128, 128, 8
        $region48: #{tpu_custom_call.1} parent=43 // pred_fallthru
          _
      $region44: #{tpu_custom_call.1} parent=5 // pred_fallthru
        _
      %p8799 = scmp.le.s32.totalorder 2, %s15
      // Predicated region
      $region49: #{tpu_custom_call.1} parent=5 // pred_check
        %p8800 = pneg %p8799
      $region50: #{tpu_custom_call.1} parent=5 // pred_check_branch
        %8802 = sbr.rel (%p8800) target = $region52
      $region51: #{tpu_custom_call.1} parent=5 // pred_region
        %s8803 = ssub.s32 %s15, 2
        // Predicated region
        $region53: #{tpu_custom_call.1} parent=51 // pred_check
          %p8804 = pneg %p180
        $region54: #{tpu_custom_call.1} parent=51 // pred_check_branch
          %8806 = sbr.rel (%p8804) target = $region56
        $region55: #{tpu_custom_call.1} parent=51 // pred_region
          %s8807 = sand.u32 %s165, 1
          %s8808 = scalar_lea.sflag [#allocation3], %s8807
          %s8809 = sand.u32 %s165, 1
          %s8810 = smul.addr %s8809, 256
          %s8811 = scalar_lea.vmem [#allocation2], %s8810
          %8812 = dma.done %s8808, 4096
        $region56: #{tpu_custom_call.1} parent=51 // pred_fallthru
          _
      $region52: #{tpu_custom_call.1} parent=5 // pred_fallthru
        _
    $region6: #{tpu_custom_call.1} parent=1 // loop_footer
      %s19 = sadd.s32 1, %s15
    $region7: #{tpu_custom_call.1} parent=1 // loop_footer_branch
      %14 = sbr.rel target = $region3
    $region8: #{tpu_custom_call.1} parent=1 // loop_exit
      _
    %8813 = vsyncpa [#allocation3], 1
    %s8814 = scalar_lea.sflag [#allocation3], 1
    %8815 = vsyncpa %s8814, 1

</llo_original>
